<compile_context>
chip_gen: v7x
topology: tpu7x:2x2x1
jax: 0.10.0
libtpu: 0.0.40
codegen_flags: <defaults>
</compile_context>

<pallas_src>
import math
from functools import partial

import jax
import jax.numpy as jnp
from jax import lax
from jax.experimental import pallas as pl
from jax.experimental.pallas import tpu as pltpu

_NEG = -1e30  # pooling pad sentinel (inputs to pools are post-ReLU, >= 0)


def _round_up(x, m):
    return (x + m - 1) // m * m


def _row_plan(rows, max_tile=512):
    """Pick a row tile (multiple of 8) and the padded row count it divides."""
    if rows >= max_tile:
        return _round_up(rows, max_tile), max_tile
    t = _round_up(rows, 8)
    return t, t


# ----------------------------------------------------------------------------
# Pallas kernels
# ----------------------------------------------------------------------------

def _conv_bias_kernel(x_ref, w_ref, b_ref, o_ref):
    """(TR, K*Cin) bf16 @ (K*Cin, Cout) bf16 -> f32, + bias."""
    acc = jnp.dot(x_ref[...], w_ref[...], preferred_element_type=jnp.float32)
    o_ref[...] = acc + b_ref[...]


def _conv_stats_kernel(x_ref, w_ref, o_ref, s_ref):
    """Conv matmul (no bias) + per-tile channel sum / sumsq for BatchNorm."""
    acc = jnp.dot(x_ref[...], w_ref[...], preferred_element_type=jnp.float32)
    o_ref[...] = acc
    s = jnp.sum(acc, axis=0, keepdims=True)
    ss = jnp.sum(acc * acc, axis=0, keepdims=True)
    s_ref[...] = jnp.concatenate([s, ss], axis=0)          # (2, Cout)


def _bn_relu_pool_kernel(x_ref, sc_ref, sh_ref, o_ref, *, win, c):
    """Fused BN-apply + ReLU + max over `win` window slots (lane-grouped)."""
    x = x_ref[...]                                          # (TR, win*c)
    y = jnp.maximum(x * sc_ref[...] + sh_ref[...], 0.0)
    y = jnp.where(x <= _NEG * 0.5, 0.0, y)                  # mask pool padding
    m = y[:, 0:c]
    for i in range(1, win):
        m = jnp.maximum(m, y[:, i * c:(i + 1) * c])
    o_ref[...] = m


def _scale_shift_relu_kernel(x_ref, sc_ref, sh_ref, o_ref):
    o_ref[...] = jnp.maximum(x_ref[...] * sc_ref[...] + sh_ref[...], 0.0)


def _add4_relu_kernel(a_ref, b_ref, c_ref, d_ref, o_ref):
    o_ref[...] = jnp.maximum(a_ref[...] + b_ref[...] + c_ref[...] + d_ref[...], 0.0)


def _maxpool3s1_kernel(x0_ref, x1_ref, x2_ref, o_ref, *, ho, wo, c):
    """3x3x3 / stride-1 / pad-1 max-pool for one (n, depth) slice.

    The three inputs are depth-shifted views (d, d+1, d+2) of the padded
    tensor; the 3x3 H/W window is reduced via static slices of the VMEM tile.
    """
    a = jnp.maximum(jnp.maximum(x0_ref[...], x1_ref[...]), x2_ref[...])  # (Hp, Wp*C)
    m = a[0:ho, 0:wo * c]
    for dh in range(3):
        for dw in range(3):
            if dh == 0 and dw == 0:
                continue
            m = jnp.maximum(m, a[dh:dh + ho, dw * c:dw * c + wo * c])
    o_ref[...] = m


# ----------------------------------------------------------------------------
# Conv3d (stride 1, zero padding) as a single tap-folded matmul per row tile
# ----------------------------------------------------------------------------

def _im2col(x, ksize, padding):
    """x: (N,D,H,W,Cin) f32 -> (Rows, K*Cin) bf16 patch matrix (built once)."""
    N, D, H, W, Cin = x.shape
    KD, KH, KW = ksize
    pd, ph, pw = padding
    Do, Ho, Wo = D + 2 * pd - KD + 1, H + 2 * ph - KH + 1, W + 2 * pw - KW + 1
    xb = x.astype(jnp.bfloat16)
    if (KD, KH, KW) == (1, 1, 1) and (pd, ph, pw) == (0, 0, 0):
        return xb.reshape(-1, Cin), (Do, Ho, Wo)
    xp = jnp.pad(xb, ((0, 0), (pd, pd), (ph, ph), (pw, pw), (0, 0)))
    cols = []
    for kd in range(KD):
        for kh in range(KH):
            for kw in range(KW):
                v = xp[:, kd:kd + Do, kh:kh + Ho, kw:kw + Wo, :]
                cols.append(v.reshape(-1, Cin))
    return jnp.concatenate(cols, axis=-1), (Do, Ho, Wo)


def _conv_core(x, w, padding, bias=None, max_tile=512):
    """If bias is None: return (flat_out_padded, rows, out_shape, (sum, sumsq))
    for a following BatchNorm (bias dropped - cancelled by mean subtraction).
    Else: return the NDHWC conv+bias output."""
    N = x.shape[0]
    Cout, Cin, KD, KH, KW = w.shape
    patches, (Do, Ho, Wo) = _im2col(x, (KD, KH, KW), padding)
    rows, kc = patches.shape
    rows_p, tr = _row_plan(rows, max_tile)
    if rows_p != rows:
        patches = jnp.pad(patches, ((0, rows_p - rows), (0, 0)))
    wk = jnp.transpose(w, (2, 3, 4, 1, 0)).reshape(kc, Cout).astype(jnp.bfloat16)
    grid = (rows_p // tr,)
    cparams = pltpu.CompilerParams(dimension_semantics=("parallel",))
    # Note: layer1 (Cin=1, K*Cin=27) underfills the MXU, but it is a negligible
    # fraction of total FLOPs; left on the matmul path for simplicity.

    if bias is None:
        out, stats = pl.pallas_call(
            _conv_stats_kernel,
            out_shape=(jax.ShapeDtypeStruct((rows_p, Cout), jnp.float32),
                       jax.ShapeDtypeStruct((grid[0], 2, Cout), jnp.float32)),
            grid_spec=pltpu.PrefetchScalarGridSpec(
                num_scalar_prefetch=0, grid=grid,
                in_specs=[pl.BlockSpec((tr, kc), lambda i: (i, 0)),
                          pl.BlockSpec((kc, Cout), lambda i: (0, 0))],
                out_specs=[pl.BlockSpec((tr, Cout), lambda i: (i, 0)),
                           pl.BlockSpec((None, 2, Cout), lambda i: (i, 0, 0))]),
            compiler_params=cparams,
        )(patches, wk)
        ssum = jnp.sum(stats[:, 0, :], axis=0)   # zero-padded rows contribute 0
        ssq = jnp.sum(stats[:, 1, :], axis=0)
        return out, rows, (N, Do, Ho, Wo, Cout), (ssum, ssq)

    bb = bias.reshape(1, Cout).astype(jnp.float32)
    out = pl.pallas_call(
        _conv_bias_kernel,
        out_shape=jax.ShapeDtypeStruct((rows_p, Cout), jnp.float32),
        grid_spec=pltpu.PrefetchScalarGridSpec(
            num_scalar_prefetch=0, grid=grid,
            in_specs=[pl.BlockSpec((tr, kc), lambda i: (i, 0)),
                      pl.BlockSpec((kc, Cout), lambda i: (0, 0)),
                      pl.BlockSpec((1, Cout), lambda i: (0, 0))],
            out_specs=pl.BlockSpec((tr, Cout), lambda i: (i, 0))),
        compiler_params=cparams,
    )(patches, wk, bb)
    return out[:rows].reshape(N, Do, Ho, Wo, Cout)


# ----------------------------------------------------------------------------
# Fused BN + ReLU (+ MaxPool) and other elementwise ops
# ----------------------------------------------------------------------------

def _bn_scale_shift(stats, rows, gamma, beta, eps=1e-5):
    ssum, ssq = stats
    mean = ssum / rows
    var = jnp.maximum(ssq / rows - mean * mean, 0.0)   # biased (train-mode) var
    scale = gamma * lax.rsqrt(var + eps)
    shift = beta - mean * scale
    return scale.astype(jnp.float32), shift.astype(jnp.float32)


def bn_relu_maxpool422(conv_flat, rows, shape, stats, gamma, beta):
    """BatchNorm (batch stats) + ReLU + MaxPool3d(k=(4,2,2), s=(4,2,2), pad=1)."""
    N, D, H, W, C = shape
    scale, shift = _bn_scale_shift(stats, rows, gamma, beta)
    Do = (D + 2 - 4) // 4 + 1
    Ho = (H + 2 - 2) // 2 + 1
    Wo = (W + 2 - 2) // 2 + 1

    # Gather the 4*2*2 (non-overlapping) window slots into the last axis:
    # one XLA formatting pass, ~1x the input size (no duplication).
    y = conv_flat[:rows].reshape(N, D, H, W, C)
    yp = jnp.pad(y, ((0, 0), (1, 1), (1, 1), (1, 1), (0, 0)), constant_values=_NEG)
    yp = yp[:, :4 * Do, :2 * Ho, :2 * Wo, :]
    g = yp.reshape(N, Do, 4, Ho, 2, Wo, 2, C)
    g = jnp.transpose(g, (0, 1, 3, 5, 2, 4, 6, 7)).reshape(N * Do * Ho * Wo, 16 * C)

    rows_o = g.shape[0]
    rows_p, tr = _row_plan(rows_o)
    if rows_p != rows_o:
        g = jnp.pad(g, ((0, rows_p - rows_o), (0, 0)), constant_values=_NEG)
    sc = jnp.tile(scale, 16).reshape(1, 16 * C)
    sh = jnp.tile(shift, 16).reshape(1, 16 * C)

    out = pl.pallas_call(
        partial(_bn_relu_pool_kernel, win=16, c=C),
        out_shape=jax.ShapeDtypeStruct((rows_p, C), jnp.float32),
        grid_spec=pltpu.PrefetchScalarGridSpec(
            num_scalar_prefetch=0, grid=(rows_p // tr,),
            in_specs=[pl.BlockSpec((tr, 16 * C), lambda i: (i, 0)),
                      pl.BlockSpec((1, 16 * C), lambda i: (0, 0)),
                      pl.BlockSpec((1, 16 * C), lambda i: (0, 0))],
            out_specs=pl.BlockSpec((tr, C), lambda i: (i, 0))),
        compiler_params=pltpu.CompilerParams(dimension_semantics=("parallel",)),
    )(g, sc, sh)
    return out[:rows_o].reshape(N, Do, Ho, Wo, C)


def bn_relu(conv_flat, rows, shape, stats, gamma, beta):
    """BatchNorm (batch stats) + ReLU in a lane-dense (rows, 128) layout."""
    N, D, H, W, C = shape
    scale, shift = _bn_scale_shift(stats, rows, gamma, beta)
    lanes = 128
    assert lanes % C == 0   # C in {8,16,32,64}: channel pattern repeats per 128 lanes
    e = rows * C
    fr = -(-e // lanes)
    fr_p, tr = _row_plan(fr)
    flat = jnp.pad(conv_flat[:rows].reshape(-1), (0, fr_p * lanes - e))
    flat = flat.reshape(fr_p, lanes)
    sc = jnp.tile(scale, lanes // C).reshape(1, lanes)
    sh = jnp.tile(shift, lanes // C).reshape(1, lanes)

    out = pl.pallas_call(
        _scale_shift_relu_kernel,
        out_shape=jax.ShapeDtypeStruct((fr_p, lanes), jnp.float32),
        grid_spec=pltpu.PrefetchScalarGridSpec(
            num_scalar_prefetch=0, grid=(fr_p // tr,),
            in_specs=[pl.BlockSpec((tr, lanes), lambda i: (i, 0)),
                      pl.BlockSpec((1, lanes), lambda i: (0, 0)),
                      pl.BlockSpec((1, lanes), lambda i: (0, 0))],
            out_specs=pl.BlockSpec((tr, lanes), lambda i: (i, 0))),
        compiler_params=pltpu.CompilerParams(dimension_semantics=("parallel",)),
    )(flat, sc, sh)
    return out.reshape(-1)[:e].reshape(N, D, H, W, C)


def add4_relu(a, b, c, d):
    """ReLU(a+b+c+d), flattened to a lane-dense (rows, 128) layout."""
    shape = a.shape
    e = a.size
    lanes = 128
    fr = -(-e // lanes)
    fr_p, tr = _row_plan(fr)

    def prep(t):
        return jnp.pad(t.reshape(-1), (0, fr_p * lanes - e)).reshape(fr_p, lanes)

    out = pl.pallas_call(
        _add4_relu_kernel,
        out_shape=jax.ShapeDtypeStruct((fr_p, lanes), jnp.float32),
        grid_spec=pltpu.PrefetchScalarGridSpec(
            num_scalar_prefetch=0, grid=(fr_p // tr,),
            in_specs=[pl.BlockSpec((tr, lanes), lambda i: (i, 0))] * 4,
            out_specs=pl.BlockSpec((tr, lanes), lambda i: (i, 0))),
        compiler_params=pltpu.CompilerParams(dimension_semantics=("parallel",)),
    )(prep(a), prep(b), prep(c), prep(d))
    return out.reshape(-1)[:e].reshape(shape)


def maxpool3d_3x3s1(x):
    """MaxPool3d kernel (3,3,3), stride 1, padding 1 (PyTorch semantics)."""
    N, D, H, W, C = x.shape
    xp = jnp.pad(x, ((0, 0), (1, 1), (1, 1), (1, 1), (0, 0)), constant_values=_NEG)
    Dp, Hp, Wp = D + 2, H + 2, W + 2
    xp = xp.reshape(N, Dp, Hp, Wp * C)

    def in_spec(off):
        return pl.BlockSpec((None, None, Hp, Wp * C),
                            lambda n, d, o=off: (n, d + o, 0, 0))

    out = pl.pallas_call(
        partial(_maxpool3s1_kernel, ho=H, wo=W, c=C),
        out_shape=jax.ShapeDtypeStruct((N, D, H, W * C), jnp.float32),
        grid_spec=pltpu.PrefetchScalarGridSpec(
            num_scalar_prefetch=0, grid=(N, D),
            in_specs=[in_spec(0), in_spec(1), in_spec(2)],
            out_specs=pl.BlockSpec((None, None, H, W * C),
                                   lambda n, d: (n, d, 0, 0))),
        compiler_params=pltpu.CompilerParams(
            dimension_semantics=("parallel", "parallel")),
    )(xp, xp, xp)
    return out.reshape(N, D, H, W, C)


# ----------------------------------------------------------------------------
# Parameters (deterministic, PyTorch-style fan-in uniform init)
# ----------------------------------------------------------------------------

def init_params(key):
    keys = iter(jax.random.split(key, 64))
    p = {}

    def conv(name, cout, cin, k):
        kw_, kb_ = jax.random.split(next(keys))
        fan_in = cin * k[0] * k[1] * k[2]
        bound = 1.0 / math.sqrt(fan_in)
        p[name + "_w"] = jax.random.uniform(kw_, (cout, cin) + k, jnp.float32,
                                            -bound, bound)
        p[name + "_b"] = jax.random.uniform(kb_, (cout,), jnp.float32,
                                            -bound, bound)

    def bn(name, c):
        kg, kb_ = jax.random.split(next(keys))
        p[name + "_g"] = 1.0 + 0.1 * jax.random.normal(kg, (c,), jnp.float32)
        p[name + "_be"] = 0.1 * jax.random.normal(kb_, (c,), jnp.float32)

    conv("l1", 8, 1, (3, 3, 3));    bn("l1", 8)
    conv("l2", 16, 8, (3, 3, 3));   bn("l2", 16)
    conv("l3_c1", 16, 16, (1, 1, 1))
    conv("l3_c21", 16, 16, (1, 1, 1))
    conv("l3_c22", 16, 16, (3, 3, 3))
    conv("l3_c31", 16, 16, (1, 1, 1))
    conv("l3_c32", 16, 16, (5, 5, 5))
    conv("l3_c42", 16, 16, (1, 1, 1))
    conv("l4_c1", 16, 16, (1, 1, 1))
    conv("l4_c21", 16, 16, (1, 1, 1))
    conv("l4_c31", 16, 16, (1, 1, 1))
    conv("l5", 32, 16, (3, 3, 3));  bn("l5", 32)
    conv("l6", 64, 32, (3, 3, 3));  bn("l6", 64)
    return p


# ----------------------------------------------------------------------------
# Forward pass (matches CNNEncoder.forward, including layer4's reuse of
# layer3_conv_2_2 / layer3_conv_3_2 / layer3_conv_4_2 weights)
# ----------------------------------------------------------------------------

def cnn_encoder_forward(x_ncdhw, p):
    x = jnp.transpose(x_ncdhw, (0, 2, 3, 4, 1)).astype(jnp.float32)  # -> NDHWC

    def conv_bn_relu_pool(y, name):
        # Conv bias is dropped (cancelled by BN mean subtraction); BN stats are
        # emitted by the conv kernel itself and the BN+ReLU+pool is one kernel.
        flat, rows, shape, stats = _conv_core(y, p[name + "_w"], (1, 1, 1), bias=None)
        return bn_relu_maxpool422(flat, rows, shape, stats,
                                  p[name + "_g"], p[name + "_be"])

    out = conv_bn_relu_pool(x, "l1")          # layer1
    out = conv_bn_relu_pool(out, "l2")        # layer2

    def inception(y, c1, c21, c31):
        b1 = _conv_core(y, p[c1 + "_w"], (0, 0, 0), bias=p[c1 + "_b"])
        b2 = _conv_core(
            _conv_core(y, p[c21 + "_w"], (0, 0, 0), bias=p[c21 + "_b"]),
            p["l3_c22_w"], (1, 1, 1), bias=p["l3_c22_b"])
        b3 = _conv_core(
            _conv_core(y, p[c31 + "_w"], (0, 0, 0), bias=p[c31 + "_b"]),
            p["l3_c32_w"], (2, 2, 2), bias=p["l3_c32_b"])
        b4 = _conv_core(maxpool3d_3x3s1(y),
                        p["l3_c42_w"], (0, 0, 0), bias=p["l3_c42_b"])
        return add4_relu(b1, b2, b3, b4)

    out = inception(out, "l3_c1", "l3_c21", "l3_c31")   # layer3
    out = inception(out, "l4_c1", "l4_c21", "l4_c31")   # layer4 (shares l3 3x3/5x5/1x1-after-pool weights)

    out = conv_bn_relu_pool(out, "l5")        # layer5

    # layer6: conv -> BN -> ReLU (no pool)
    flat, rows, shape, stats = _conv_core(out, p["l6_w"], (1, 1, 1), bias=None)
    out = bn_relu(flat, rows, shape, stats, p["l6_g"], p["l6_be"])

    return jnp.transpose(out, (0, 4, 1, 2, 3))  # back to NCDHW


# ----------------------------------------------------------------------------

if __name__ == "__main__":
    key = jax.random.PRNGKey(0)
    kx, kp = jax.random.split(key)
    # Small but valid shape: D must survive three (4,2,2)-stride-(4,2,2) pools.
    x = jax.random.normal(kx, (2, 1, 24, 8, 8), dtype=jnp.float32)  # NCDHW
    params = init_params(kp)

    fwd = jax.jit(cnn_encoder_forward)
    out = jax.block_until_ready(fwd(x, params))

    assert out.shape == (2, 64, 1, 2, 2), out.shape
    assert bool(jnp.all(jnp.isfinite(out)))
    print("KERNEL_OK")
</pallas_src>

<mosaic_0001>
module attributes {stable_mosaic.version = 11 : i64} {
  func.func @_conv_stats_kernel(%arg0: i32, %arg1: memref<512x27xbf16, #tpu.memory_space<vmem>>, %arg2: memref<27x8xbf16, #tpu.memory_space<vmem>>, %arg3: memref<512x8xf32, #tpu.memory_space<vmem>>, %arg4: memref<1x2x8xf32, #tpu.memory_space<vmem>>) attributes {dimension_semantics = [#tpu.dimension_semantics<parallel>], iteration_bounds = array<i64: 6>, scalar_prefetch = 0 : i64, scratch_operands = 0 : i64, tpu.core_type = #tpu.core_type<tc>, window_params = [{transform_indices = @transform_0, window_bounds = array<i64: 512, 27>}, {pipeline_mode = #tpu.pipeline_mode<synchronous>, transform_indices = @transform_1, window_bounds = array<i64: 27, 8>}, {transform_indices = @transform_2, window_bounds = array<i64: 512, 8>}, {transform_indices = @transform_3, window_bounds = array<i64: 1, 2, 8>}]} {
    %c0 = arith.constant 0 : index
    %c0_0 = arith.constant 0 : index
    %0 = vector.load %arg1[%c0, %c0_0] : memref<512x27xbf16, #tpu.memory_space<vmem>>, vector<512x27xbf16>
    %c0_1 = arith.constant 0 : index
    %c0_2 = arith.constant 0 : index
    %1 = vector.load %arg2[%c0_1, %c0_2] : memref<27x8xbf16, #tpu.memory_space<vmem>>, vector<27x8xbf16>
    %cst = arith.constant dense<0.000000e+00> : vector<512x8xf32>
    %2 = tpu.matmul %0, %1, %cst {dimension_numbers = #tpu.dot_dimension_numbers<[1], [0], [0], [1], [0, 0, 1, 1], [], []>} : vector<512x27xbf16>, vector<27x8xbf16>, vector<512x8xf32> -> vector<512x8xf32>
    %c0_3 = arith.constant 0 : index
    %c0_4 = arith.constant 0 : index
    %3 = vector.load %arg3[%c0_3, %c0_4] : memref<512x8xf32, #tpu.memory_space<vmem>>, vector<512x8xf32>
    tpu.vector_store %arg3[%c0_3, %c0_4], %2 {strides = array<i32>} : memref<512x8xf32, #tpu.memory_space<vmem>>, vector<512x8xf32>,
    %cst_5 = arith.constant dense<0.000000e+00> : vector<8xf32>
    %4 = vector.multi_reduction <add>, %2, %cst_5 [0] : vector<512x8xf32> to vector<8xf32>
    %5 = vector.shape_cast %4 : vector<8xf32> to vector<1x8xf32>
    %6 = arith.mulf %2, %2 : vector<512x8xf32>
    %cst_6 = arith.constant dense<0.000000e+00> : vector<8xf32>
    %7 = vector.multi_reduction <add>, %6, %cst_6 [0] : vector<512x8xf32> to vector<8xf32>
    %8 = vector.shape_cast %7 : vector<8xf32> to vector<1x8xf32>
    %9 = tpu.concatenate %5, %8 in 0 : vector<1x8xf32>, vector<1x8xf32> -> vector<2x8xf32>
    %c0_7 = arith.constant 0 : index
    %c0_8 = arith.constant 0 : index
    %c0_9 = arith.constant 0 : index
    %10 = vector.load %arg4[%c0_7, %c0_8, %c0_9] : memref<1x2x8xf32, #tpu.memory_space<vmem>>, vector<1x2x8xf32>
    %11 = vector.shape_cast %10 : vector<1x2x8xf32> to vector<2x8xf32>
    %12 = vector.shape_cast %9 : vector<2x8xf32> to vector<1x2x8xf32>
    tpu.vector_store %arg4[%c0_7, %c0_8, %c0_9], %12 {strides = array<i32>} : memref<1x2x8xf32, #tpu.memory_space<vmem>>, vector<1x2x8xf32>,
    return
  }
  func.func @transform_0(%arg0: i32) -> (i32, i32) {
    %c0_i32 = arith.constant 0 : i32
    %c0_i32_0 = arith.constant 0 : i32
    return %arg0, %c0_i32 : i32, i32
  }
  func.func @transform_1(%arg0: i32) -> (i32, i32) {
    %c0_i32 = arith.constant 0 : i32
    %c0_i32_0 = arith.constant 0 : i32
    %c0_i32_1 = arith.constant 0 : i32
    return %c0_i32, %c0_i32_0 : i32, i32
  }
  func.func @transform_2(%arg0: i32) -> (i32, i32) {
    %c0_i32 = arith.constant 0 : i32
    %c0_i32_0 = arith.constant 0 : i32
    return %arg0, %c0_i32 : i32, i32
  }
  func.func @transform_3(%arg0: i32) -> (i32, i32, i32) {
    %c0_i32 = arith.constant 0 : i32
    %c0_i32_0 = arith.constant 0 : i32
    %c0_i32_1 = arith.constant 0 : i32
    return %arg0, %c0_i32, %c0_i32_0 : i32, i32, i32
  }
}

module attributes {stable_mosaic.version = 11 : i64} {
  func.func @_bn_relu_pool_kernel(%arg0: i32, %arg1: memref<304x128xf32, #tpu.memory_space<vmem>>, %arg2: memref<1x128xf32, #tpu.memory_space<vmem>>, %arg3: memref<1x128xf32, #tpu.memory_space<vmem>>, %arg4: memref<304x8xf32, #tpu.memory_space<vmem>>) attributes {dimension_semantics = [#tpu.dimension_semantics<parallel>], iteration_bounds = array<i64: 1>, scalar_prefetch = 0 : i64, scratch_operands = 0 : i64, tpu.core_type = #tpu.core_type<tc>, window_params = [{transform_indices = @transform_0, window_bounds = array<i64: 304, 128>}, {pipeline_mode = #tpu.pipeline_mode<synchronous>, transform_indices = @transform_1, window_bounds = array<i64: 1, 128>}, {pipeline_mode = #tpu.pipeline_mode<synchronous>, transform_indices = @transform_2, window_bounds = array<i64: 1, 128>}, {transform_indices = @transform_3, window_bounds = array<i64: 304, 8>}]} {
    %c0 = arith.constant 0 : index
    %c0_0 = arith.constant 0 : index
    %0 = vector.load %arg1[%c0, %c0_0] : memref<304x128xf32, #tpu.memory_space<vmem>>, vector<304x128xf32>
    %c0_1 = arith.constant 0 : index
    %c0_2 = arith.constant 0 : index
    %1 = vector.load %arg2[%c0_1, %c0_2] : memref<1x128xf32, #tpu.memory_space<vmem>>, vector<1x128xf32>
    %2 = vector.broadcast %1 : vector<1x128xf32> to vector<304x128xf32>
    %3 = arith.mulf %0, %2 : vector<304x128xf32>
    %c0_3 = arith.constant 0 : index
    %c0_4 = arith.constant 0 : index
    %4 = vector.load %arg3[%c0_3, %c0_4] : memref<1x128xf32, #tpu.memory_space<vmem>>, vector<1x128xf32>
    %5 = vector.broadcast %4 : vector<1x128xf32> to vector<304x128xf32>
    %6 = arith.addf %3, %5 : vector<304x128xf32>
    %cst = arith.constant 0.000000e+00 : f32
    %7 = vector.broadcast %cst : f32 to vector<304x128xf32>
    %8 = arith.maximumf %6, %7 : vector<304x128xf32>
    %cst_5 = arith.constant -5.000000e+29 : f32
    %9 = vector.broadcast %cst_5 : f32 to vector<304x128xf32>
    %10 = arith.cmpf ole, %0, %9 : vector<304x128xf32>
    %cst_6 = arith.constant 0.000000e+00 : f32
    %11 = vector.broadcast %cst_6 : f32 to vector<304x128xf32>
    %12 = arith.select %10, %11, %8 : vector<304x128xi1>, vector<304x128xf32>
    %13 = vector.extract_strided_slice %12 {offsets = [0, 0], sizes = [304, 8], strides = [1, 1]} : vector<304x128xf32> to vector<304x8xf32>
    %14 = vector.extract_strided_slice %12 {offsets = [0, 8], sizes = [304, 8], strides = [1, 1]} : vector<304x128xf32> to vector<304x8xf32>
    %15 = arith.maximumf %13, %14 : vector<304x8xf32>
    %16 = vector.extract_strided_slice %12 {offsets = [0, 16], sizes = [304, 8], strides = [1, 1]} : vector<304x128xf32> to vector<304x8xf32>
    %17 = arith.maximumf %15, %16 : vector<304x8xf32>
    %18 = vector.extract_strided_slice %12 {offsets = [0, 24], sizes = [304, 8], strides = [1, 1]} : vector<304x128xf32> to vector<304x8xf32>
    %19 = arith.maximumf %17, %18 : vector<304x8xf32>
    %20 = vector.extract_strided_slice %12 {offsets = [0, 32], sizes = [304, 8], strides = [1, 1]} : vector<304x128xf32> to vector<304x8xf32>
    %21 = arith.maximumf %19, %20 : vector<304x8xf32>
    %22 = vector.extract_strided_slice %12 {offsets = [0, 40], sizes = [304, 8], strides = [1, 1]} : vector<304x128xf32> to vector<304x8xf32>
    %23 = arith.maximumf %21, %22 : vector<304x8xf32>
    %24 = vector.extract_strided_slice %12 {offsets = [0, 48], sizes = [304, 8], strides = [1, 1]} : vector<304x128xf32> to vector<304x8xf32>
    %25 = arith.maximumf %23, %24 : vector<304x8xf32>
    %26 = vector.extract_strided_slice %12 {offsets = [0, 56], sizes = [304, 8], strides = [1, 1]} : vector<304x128xf32> to vector<304x8xf32>
    %27 = arith.maximumf %25, %26 : vector<304x8xf32>
    %28 = vector.extract_strided_slice %12 {offsets = [0, 64], sizes = [304, 8], strides = [1, 1]} : vector<304x128xf32> to vector<304x8xf32>
    %29 = arith.maximumf %27, %28 : vector<304x8xf32>
    %30 = vector.extract_strided_slice %12 {offsets = [0, 72], sizes = [304, 8], strides = [1, 1]} : vector<304x128xf32> to vector<304x8xf32>
    %31 = arith.maximumf %29, %30 : vector<304x8xf32>
    %32 = vector.extract_strided_slice %12 {offsets = [0, 80], sizes = [304, 8], strides = [1, 1]} : vector<304x128xf32> to vector<304x8xf32>
    %33 = arith.maximumf %31, %32 : vector<304x8xf32>
    %34 = vector.extract_strided_slice %12 {offsets = [0, 88], sizes = [304, 8], strides = [1, 1]} : vector<304x128xf32> to vector<304x8xf32>
    %35 = arith.maximumf %33, %34 : vector<304x8xf32>
    %36 = vector.extract_strided_slice %12 {offsets = [0, 96], sizes = [304, 8], strides = [1, 1]} : vector<304x128xf32> to vector<304x8xf32>
    %37 = arith.maximumf %35, %36 : vector<304x8xf32>
    %38 = vector.extract_strided_slice %12 {offsets = [0, 104], sizes = [304, 8], strides = [1, 1]} : vector<304x128xf32> to vector<304x8xf32>
    %39 = arith.maximumf %37, %38 : vector<304x8xf32>
    %40 = vector.extract_strided_slice %12 {offsets = [0, 112], sizes = [304, 8], strides = [1, 1]} : vector<304x128xf32> to vector<304x8xf32>
    %41 = arith.maximumf %39, %40 : vector<304x8xf32>
    %42 = vector.extract_strided_slice %12 {offsets = [0, 120], sizes = [304, 8], strides = [1, 1]} : vector<304x128xf32> to vector<304x8xf32>
    %43 = arith.maximumf %41, %42 : vector<304x8xf32>
    %c0_7 = arith.constant 0 : index
    %c0_8 = arith.constant 0 : index
    %44 = vector.load %arg4[%c0_7, %c0_8] : memref<304x8xf32, #tpu.memory_space<vmem>>, vector<304x8xf32>
    tpu.vector_store %arg4[%c0_7, %c0_8], %43 {strides = array<i32>} : memref<304x8xf32, #tpu.memory_space<vmem>>, vector<304x8xf32>,
    return
  }
  func.func @transform_0(%arg0: i32) -> (i32, i32) {
    %c0_i32 = arith.constant 0 : i32
    %c0_i32_0 = arith.constant 0 : i32
    return %arg0, %c0_i32 : i32, i32
  }
  func.func @transform_1(%arg0: i32) -> (i32, i32) {
    %c0_i32 = arith.constant 0 : i32
    %c0_i32_0 = arith.constant 0 : i32
    %c0_i32_1 = arith.constant 0 : i32
    return %c0_i32, %c0_i32_0 : i32, i32
  }
  func.func @transform_2(%arg0: i32) -> (i32, i32) {
    %c0_i32 = arith.constant 0 : i32
    %c0_i32_0 = arith.constant 0 : i32
    %c0_i32_1 = arith.constant 0 : i32
    return %c0_i32, %c0_i32_0 : i32, i32
  }
  func.func @transform_3(%arg0: i32) -> (i32, i32) {
    %c0_i32 = arith.constant 0 : i32
    %c0_i32_0 = arith.constant 0 : i32
    return %arg0, %c0_i32 : i32, i32
  }
}

module attributes {stable_mosaic.version = 11 : i64} {
  func.func @_conv_stats_kernel(%arg0: i32, %arg1: memref<304x216xbf16, #tpu.memory_space<vmem>>, %arg2: memref<216x16xbf16, #tpu.memory_space<vmem>>, %arg3: memref<304x16xf32, #tpu.memory_space<vmem>>, %arg4: memref<1x2x16xf32, #tpu.memory_space<vmem>>) attributes {dimension_semantics = [#tpu.dimension_semantics<parallel>], iteration_bounds = array<i64: 1>, scalar_prefetch = 0 : i64, scratch_operands = 0 : i64, tpu.core_type = #tpu.core_type<tc>, window_params = [{transform_indices = @transform_0, window_bounds = array<i64: 304, 216>}, {pipeline_mode = #tpu.pipeline_mode<synchronous>, transform_indices = @transform_1, window_bounds = array<i64: 216, 16>}, {transform_indices = @transform_2, window_bounds = array<i64: 304, 16>}, {transform_indices = @transform_3, window_bounds = array<i64: 1, 2, 16>}]} {
    %c0 = arith.constant 0 : index
    %c0_0 = arith.constant 0 : index
    %0 = vector.load %arg1[%c0, %c0_0] : memref<304x216xbf16, #tpu.memory_space<vmem>>, vector<304x216xbf16>
    %c0_1 = arith.constant 0 : index
    %c0_2 = arith.constant 0 : index
    %1 = vector.load %arg2[%c0_1, %c0_2] : memref<216x16xbf16, #tpu.memory_space<vmem>>, vector<216x16xbf16>
    %cst = arith.constant dense<0.000000e+00> : vector<304x16xf32>
    %2 = tpu.matmul %0, %1, %cst {dimension_numbers = #tpu.dot_dimension_numbers<[1], [0], [0], [1], [0, 0, 1, 1], [], []>} : vector<304x216xbf16>, vector<216x16xbf16>, vector<304x16xf32> -> vector<304x16xf32>
    %c0_3 = arith.constant 0 : index
    %c0_4 = arith.constant 0 : index
    %3 = vector.load %arg3[%c0_3, %c0_4] : memref<304x16xf32, #tpu.memory_space<vmem>>, vector<304x16xf32>
    tpu.vector_store %arg3[%c0_3, %c0_4], %2 {strides = array<i32>} : memref<304x16xf32, #tpu.memory_space<vmem>>, vector<304x16xf32>,
    %cst_5 = arith.constant dense<0.000000e+00> : vector<16xf32>
    %4 = vector.multi_reduction <add>, %2, %cst_5 [0] : vector<304x16xf32> to vector<16xf32>
    %5 = vector.shape_cast %4 : vector<16xf32> to vector<1x16xf32>
    %6 = arith.mulf %2, %2 : vector<304x16xf32>
    %cst_6 = arith.constant dense<0.000000e+00> : vector<16xf32>
    %7 = vector.multi_reduction <add>, %6, %cst_6 [0] : vector<304x16xf32> to vector<16xf32>
    %8 = vector.shape_cast %7 : vector<16xf32> to vector<1x16xf32>
    %9 = tpu.concatenate %5, %8 in 0 : vector<1x16xf32>, vector<1x16xf32> -> vector<2x16xf32>
    %c0_7 = arith.constant 0 : index
    %c0_8 = arith.constant 0 : index
    %c0_9 = arith.constant 0 : index
    %10 = vector.load %arg4[%c0_7, %c0_8, %c0_9] : memref<1x2x16xf32, #tpu.memory_space<vmem>>, vector<1x2x16xf32>
    %11 = vector.shape_cast %10 : vector<1x2x16xf32> to vector<2x16xf32>
    %12 = vector.shape_cast %9 : vector<2x16xf32> to vector<1x2x16xf32>
    tpu.vector_store %arg4[%c0_7, %c0_8, %c0_9], %12 {strides = array<i32>} : memref<1x2x16xf32, #tpu.memory_space<vmem>>, vector<1x2x16xf32>,
    return
  }
  func.func @transform_0(%arg0: i32) -> (i32, i32) {
    %c0_i32 = arith.constant 0 : i32
    %c0_i32_0 = arith.constant 0 : i32
    return %arg0, %c0_i32 : i32, i32
  }
  func.func @transform_1(%arg0: i32) -> (i32, i32) {
    %c0_i32 = arith.constant 0 : i32
    %c0_i32_0 = arith.constant 0 : i32
    %c0_i32_1 = arith.constant 0 : i32
    return %c0_i32, %c0_i32_0 : i32, i32
  }
  func.func @transform_2(%arg0: i32) -> (i32, i32) {
    %c0_i32 = arith.constant 0 : i32
    %c0_i32_0 = arith.constant 0 : i32
    return %arg0, %c0_i32 : i32, i32
  }
  func.func @transform_3(%arg0: i32) -> (i32, i32, i32) {
    %c0_i32 = arith.constant 0 : i32
    %c0_i32_0 = arith.constant 0 : i32
    %c0_i32_1 = arith.constant 0 : i32
    return %arg0, %c0_i32, %c0_i32_0 : i32, i32, i32
  }
}

module attributes {stable_mosaic.version = 11 : i64} {
  func.func @_bn_relu_pool_kernel(%arg0: i32, %arg1: memref<40x256xf32, #tpu.memory_space<vmem>>, %arg2: memref<1x256xf32, #tpu.memory_space<vmem>>, %arg3: memref<1x256xf32, #tpu.memory_space<vmem>>, %arg4: memref<40x16xf32, #tpu.memory_space<vmem>>) attributes {dimension_semantics = [#tpu.dimension_semantics<parallel>], iteration_bounds = array<i64: 1>, scalar_prefetch = 0 : i64, scratch_operands = 0 : i64, tpu.core_type = #tpu.core_type<tc>, window_params = [{transform_indices = @transform_0, window_bounds = array<i64: 40, 256>}, {pipeline_mode = #tpu.pipeline_mode<synchronous>, transform_indices = @transform_1, window_bounds = array<i64: 1, 256>}, {pipeline_mode = #tpu.pipeline_mode<synchronous>, transform_indices = @transform_2, window_bounds = array<i64: 1, 256>}, {transform_indices = @transform_3, window_bounds = array<i64: 40, 16>}]} {
    %c0 = arith.constant 0 : index
    %c0_0 = arith.constant 0 : index
    %0 = vector.load %arg1[%c0, %c0_0] : memref<40x256xf32, #tpu.memory_space<vmem>>, vector<40x256xf32>
    %c0_1 = arith.constant 0 : index
    %c0_2 = arith.constant 0 : index
    %1 = vector.load %arg2[%c0_1, %c0_2] : memref<1x256xf32, #tpu.memory_space<vmem>>, vector<1x256xf32>
    %2 = vector.broadcast %1 : vector<1x256xf32> to vector<40x256xf32>
    %3 = arith.mulf %0, %2 : vector<40x256xf32>
    %c0_3 = arith.constant 0 : index
    %c0_4 = arith.constant 0 : index
    %4 = vector.load %arg3[%c0_3, %c0_4] : memref<1x256xf32, #tpu.memory_space<vmem>>, vector<1x256xf32>
    %5 = vector.broadcast %4 : vector<1x256xf32> to vector<40x256xf32>
    %6 = arith.addf %3, %5 : vector<40x256xf32>
    %cst = arith.constant 0.000000e+00 : f32
    %7 = vector.broadcast %cst : f32 to vector<40x256xf32>
    %8 = arith.maximumf %6, %7 : vector<40x256xf32>
    %cst_5 = arith.constant -5.000000e+29 : f32
    %9 = vector.broadcast %cst_5 : f32 to vector<40x256xf32>
    %10 = arith.cmpf ole, %0, %9 : vector<40x256xf32>
    %cst_6 = arith.constant 0.000000e+00 : f32
    %11 = vector.broadcast %cst_6 : f32 to vector<40x256xf32>
    %12 = arith.select %10, %11, %8 : vector<40x256xi1>, vector<40x256xf32>
    %13 = vector.extract_strided_slice %12 {offsets = [0, 0], sizes = [40, 16], strides = [1, 1]} : vector<40x256xf32> to vector<40x16xf32>
    %14 = vector.extract_strided_slice %12 {offsets = [0, 16], sizes = [40, 16], strides = [1, 1]} : vector<40x256xf32> to vector<40x16xf32>
    %15 = arith.maximumf %13, %14 : vector<40x16xf32>
    %16 = vector.extract_strided_slice %12 {offsets = [0, 32], sizes = [40, 16], strides = [1, 1]} : vector<40x256xf32> to vector<40x16xf32>
    %17 = arith.maximumf %15, %16 : vector<40x16xf32>
    %18 = vector.extract_strided_slice %12 {offsets = [0, 48], sizes = [40, 16], strides = [1, 1]} : vector<40x256xf32> to vector<40x16xf32>
    %19 = arith.maximumf %17, %18 : vector<40x16xf32>
    %20 = vector.extract_strided_slice %12 {offsets = [0, 64], sizes = [40, 16], strides = [1, 1]} : vector<40x256xf32> to vector<40x16xf32>
    %21 = arith.maximumf %19, %20 : vector<40x16xf32>
    %22 = vector.extract_strided_slice %12 {offsets = [0, 80], sizes = [40, 16], strides = [1, 1]} : vector<40x256xf32> to vector<40x16xf32>
    %23 = arith.maximumf %21, %22 : vector<40x16xf32>
    %24 = vector.extract_strided_slice %12 {offsets = [0, 96], sizes = [40, 16], strides = [1, 1]} : vector<40x256xf32> to vector<40x16xf32>
    %25 = arith.maximumf %23, %24 : vector<40x16xf32>
    %26 = vector.extract_strided_slice %12 {offsets = [0, 112], sizes = [40, 16], strides = [1, 1]} : vector<40x256xf32> to vector<40x16xf32>
    %27 = arith.maximumf %25, %26 : vector<40x16xf32>
    %28 = vector.extract_strided_slice %12 {offsets = [0, 128], sizes = [40, 16], strides = [1, 1]} : vector<40x256xf32> to vector<40x16xf32>
    %29 = arith.maximumf %27, %28 : vector<40x16xf32>
    %30 = vector.extract_strided_slice %12 {offsets = [0, 144], sizes = [40, 16], strides = [1, 1]} : vector<40x256xf32> to vector<40x16xf32>
    %31 = arith.maximumf %29, %30 : vector<40x16xf32>
    %32 = vector.extract_strided_slice %12 {offsets = [0, 160], sizes = [40, 16], strides = [1, 1]} : vector<40x256xf32> to vector<40x16xf32>
    %33 = arith.maximumf %31, %32 : vector<40x16xf32>
    %34 = vector.extract_strided_slice %12 {offsets = [0, 176], sizes = [40, 16], strides = [1, 1]} : vector<40x256xf32> to vector<40x16xf32>
    %35 = arith.maximumf %33, %34 : vector<40x16xf32>
    %36 = vector.extract_strided_slice %12 {offsets = [0, 192], sizes = [40, 16], strides = [1, 1]} : vector<40x256xf32> to vector<40x16xf32>
    %37 = arith.maximumf %35, %36 : vector<40x16xf32>
    %38 = vector.extract_strided_slice %12 {offsets = [0, 208], sizes = [40, 16], strides = [1, 1]} : vector<40x256xf32> to vector<40x16xf32>
    %39 = arith.maximumf %37, %38 : vector<40x16xf32>
    %40 = vector.extract_strided_slice %12 {offsets = [0, 224], sizes = [40, 16], strides = [1, 1]} : vector<40x256xf32> to vector<40x16xf32>
    %41 = arith.maximumf %39, %40 : vector<40x16xf32>
    %42 = vector.extract_strided_slice %12 {offsets = [0, 240], sizes = [40, 16], strides = [1, 1]} : vector<40x256xf32> to vector<40x16xf32>
    %43 = arith.maximumf %41, %42 : vector<40x16xf32>
    %c0_7 = arith.constant 0 : index
    %c0_8 = arith.constant 0 : index
    %44 = vector.load %arg4[%c0_7, %c0_8] : memref<40x16xf32, #tpu.memory_space<vmem>>, vector<40x16xf32>
    tpu.vector_store %arg4[%c0_7, %c0_8], %43 {strides = array<i32>} : memref<40x16xf32, #tpu.memory_space<vmem>>, vector<40x16xf32>,
    return
  }
  func.func @transform_0(%arg0: i32) -> (i32, i32) {
    %c0_i32 = arith.constant 0 : i32
    %c0_i32_0 = arith.constant 0 : i32
    return %arg0, %c0_i32 : i32, i32
  }
  func.func @transform_1(%arg0: i32) -> (i32, i32) {
    %c0_i32 = arith.constant 0 : i32
    %c0_i32_0 = arith.constant 0 : i32
    %c0_i32_1 = arith.constant 0 : i32
    return %c0_i32, %c0_i32_0 : i32, i32
  }
  func.func @transform_2(%arg0: i32) -> (i32, i32) {
    %c0_i32 = arith.constant 0 : i32
    %c0_i32_0 = arith.constant 0 : i32
    %c0_i32_1 = arith.constant 0 : i32
    return %c0_i32, %c0_i32_0 : i32, i32
  }
  func.func @transform_3(%arg0: i32) -> (i32, i32) {
    %c0_i32 = arith.constant 0 : i32
    %c0_i32_0 = arith.constant 0 : i32
    return %arg0, %c0_i32 : i32, i32
  }
}

module attributes {stable_mosaic.version = 11 : i64} {
  func.func @_conv_bias_kernel(%arg0: i32, %arg1: memref<40x16xbf16, #tpu.memory_space<vmem>>, %arg2: memref<16x16xbf16, #tpu.memory_space<vmem>>, %arg3: memref<1x16xf32, #tpu.memory_space<vmem>>, %arg4: memref<40x16xf32, #tpu.memory_space<vmem>>) attributes {dimension_semantics = [#tpu.dimension_semantics<parallel>], iteration_bounds = array<i64: 1>, scalar_prefetch = 0 : i64, scratch_operands = 0 : i64, tpu.core_type = #tpu.core_type<tc>, window_params = [{transform_indices = @transform_0, window_bounds = array<i64: 40, 16>}, {pipeline_mode = #tpu.pipeline_mode<synchronous>, transform_indices = @transform_1, window_bounds = array<i64: 16, 16>}, {pipeline_mode = #tpu.pipeline_mode<synchronous>, transform_indices = @transform_2, window_bounds = array<i64: 1, 16>}, {transform_indices = @transform_3, window_bounds = array<i64: 40, 16>}]} {
    %c0 = arith.constant 0 : index
    %c0_0 = arith.constant 0 : index
    %0 = vector.load %arg1[%c0, %c0_0] : memref<40x16xbf16, #tpu.memory_space<vmem>>, vector<40x16xbf16>
    %c0_1 = arith.constant 0 : index
    %c0_2 = arith.constant 0 : index
    %1 = vector.load %arg2[%c0_1, %c0_2] : memref<16x16xbf16, #tpu.memory_space<vmem>>, vector<16x16xbf16>
    %cst = arith.constant dense<0.000000e+00> : vector<40x16xf32>
    %2 = tpu.matmul %0, %1, %cst {dimension_numbers = #tpu.dot_dimension_numbers<[1], [0], [0], [1], [0, 0, 1, 1], [], []>} : vector<40x16xbf16>, vector<16x16xbf16>, vector<40x16xf32> -> vector<40x16xf32>
    %c0_3 = arith.constant 0 : index
    %c0_4 = arith.constant 0 : index
    %3 = vector.load %arg3[%c0_3, %c0_4] : memref<1x16xf32, #tpu.memory_space<vmem>>, vector<1x16xf32>
    %4 = vector.broadcast %3 : vector<1x16xf32> to vector<40x16xf32>
    %5 = arith.addf %2, %4 : vector<40x16xf32>
    %c0_5 = arith.constant 0 : index
    %c0_6 = arith.constant 0 : index
    %6 = vector.load %arg4[%c0_5, %c0_6] : memref<40x16xf32, #tpu.memory_space<vmem>>, vector<40x16xf32>
    tpu.vector_store %arg4[%c0_5, %c0_6], %5 {strides = array<i32>} : memref<40x16xf32, #tpu.memory_space<vmem>>, vector<40x16xf32>,
    return
  }
  func.func @transform_0(%arg0: i32) -> (i32, i32) {
    %c0_i32 = arith.constant 0 : i32
    %c0_i32_0 = arith.constant 0 : i32
    return %arg0, %c0_i32 : i32, i32
  }
  func.func @transform_1(%arg0: i32) -> (i32, i32) {
    %c0_i32 = arith.constant 0 : i32
    %c0_i32_0 = arith.constant 0 : i32
    %c0_i32_1 = arith.constant 0 : i32
    return %c0_i32, %c0_i32_0 : i32, i32
  }
  func.func @transform_2(%arg0: i32) -> (i32, i32) {
    %c0_i32 = arith.constant 0 : i32
    %c0_i32_0 = arith.constant 0 : i32
    %c0_i32_1 = arith.constant 0 : i32
    return %c0_i32, %c0_i32_0 : i32, i32
  }
  func.func @transform_3(%arg0: i32) -> (i32, i32) {
    %c0_i32 = arith.constant 0 : i32
    %c0_i32_0 = arith.constant 0 : i32
    return %arg0, %c0_i32 : i32, i32
  }
}

module attributes {stable_mosaic.version = 11 : i64} {
  func.func @_conv_bias_kernel(%arg0: i32, %arg1: memref<40x2000xbf16, #tpu.memory_space<vmem>>, %arg2: memref<2000x16xbf16, #tpu.memory_space<vmem>>, %arg3: memref<1x16xf32, #tpu.memory_space<vmem>>, %arg4: memref<40x16xf32, #tpu.memory_space<vmem>>) attributes {dimension_semantics = [#tpu.dimension_semantics<parallel>], iteration_bounds = array<i64: 1>, scalar_prefetch = 0 : i64, scratch_operands = 0 : i64, tpu.core_type = #tpu.core_type<tc>, window_params = [{transform_indices = @transform_0, window_bounds = array<i64: 40, 2000>}, {pipeline_mode = #tpu.pipeline_mode<synchronous>, transform_indices = @transform_1, window_bounds = array<i64: 2000, 16>}, {pipeline_mode = #tpu.pipeline_mode<synchronous>, transform_indices = @transform_2, window_bounds = array<i64: 1, 16>}, {transform_indices = @transform_3, window_bounds = array<i64: 40, 16>}]} {
    %c0 = arith.constant 0 : index
    %c0_0 = arith.constant 0 : index
    %0 = vector.load %arg1[%c0, %c0_0] : memref<40x2000xbf16, #tpu.memory_space<vmem>>, vector<40x2000xbf16>
    %c0_1 = arith.constant 0 : index
    %c0_2 = arith.constant 0 : index
    %1 = vector.load %arg2[%c0_1, %c0_2] : memref<2000x16xbf16, #tpu.memory_space<vmem>>, vector<2000x16xbf16>
    %cst = arith.constant dense<0.000000e+00> : vector<40x16xf32>
    %2 = tpu.matmul %0, %1, %cst {dimension_numbers = #tpu.dot_dimension_numbers<[1], [0], [0], [1], [0, 0, 1, 1], [], []>} : vector<40x2000xbf16>, vector<2000x16xbf16>, vector<40x16xf32> -> vector<40x16xf32>
    %c0_3 = arith.constant 0 : index
    %c0_4 = arith.constant 0 : index
    %3 = vector.load %arg3[%c0_3, %c0_4] : memref<1x16xf32, #tpu.memory_space<vmem>>, vector<1x16xf32>
    %4 = vector.broadcast %3 : vector<1x16xf32> to vector<40x16xf32>
    %5 = arith.addf %2, %4 : vector<40x16xf32>
    %c0_5 = arith.constant 0 : index
    %c0_6 = arith.constant 0 : index
    %6 = vector.load %arg4[%c0_5, %c0_6] : memref<40x16xf32, #tpu.memory_space<vmem>>, vector<40x16xf32>
    tpu.vector_store %arg4[%c0_5, %c0_6], %5 {strides = array<i32>} : memref<40x16xf32, #tpu.memory_space<vmem>>, vector<40x16xf32>,
    return
  }
  func.func @transform_0(%arg0: i32) -> (i32, i32) {
    %c0_i32 = arith.constant 0 : i32
    %c0_i32_0 = arith.constant 0 : i32
    return %arg0, %c0_i32 : i32, i32
  }
  func.func @transform_1(%arg0: i32) -> (i32, i32) {
    %c0_i32 = arith.constant 0 : i32
    %c0_i32_0 = arith.constant 0 : i32
    %c0_i32_1 = arith.constant 0 : i32
    return %c0_i32, %c0_i32_0 : i32, i32
  }
  func.func @transform_2(%arg0: i32) -> (i32, i32) {
    %c0_i32 = arith.constant 0 : i32
    %c0_i32_0 = arith.constant 0 : i32
    %c0_i32_1 = arith.constant 0 : i32
    return %c0_i32, %c0_i32_0 : i32, i32
  }
  func.func @transform_3(%arg0: i32) -> (i32, i32) {
    %c0_i32 = arith.constant 0 : i32
    %c0_i32_0 = arith.constant 0 : i32
    return %arg0, %c0_i32 : i32, i32
  }
}

module attributes {stable_mosaic.version = 11 : i64} {
  func.func @_maxpool3s1_kernel(%arg0: i32, %arg1: i32, %arg2: memref<1x1x5x80xf32, #tpu.memory_space<vmem>>, %arg3: memref<1x1x5x80xf32, #tpu.memory_space<vmem>>, %arg4: memref<1x1x5x80xf32, #tpu.memory_space<vmem>>, %arg5: memref<1x1x3x48xf32, #tpu.memory_space<vmem>>) attributes {dimension_semantics = [#tpu.dimension_semantics<parallel>, #tpu.dimension_semantics<parallel>], iteration_bounds = array<i64: 2, 2>, scalar_prefetch = 0 : i64, scratch_operands = 0 : i64, tpu.core_type = #tpu.core_type<tc>, window_params = [{transform_indices = @transform_0, window_bounds = array<i64: 1, 1, 5, 80>}, {transform_indices = @transform_1, window_bounds = array<i64: 1, 1, 5, 80>}, {transform_indices = @transform_2, window_bounds = array<i64: 1, 1, 5, 80>}, {transform_indices = @transform_3, window_bounds = array<i64: 1, 1, 3, 48>}]} {
    %c0 = arith.constant 0 : index
    %c0_0 = arith.constant 0 : index
    %c0_1 = arith.constant 0 : index
    %c0_2 = arith.constant 0 : index
    %0 = vector.load %arg2[%c0, %c0_0, %c0_1, %c0_2] : memref<1x1x5x80xf32, #tpu.memory_space<vmem>>, vector<1x1x5x80xf32>
    %1 = vector.shape_cast %0 : vector<1x1x5x80xf32> to vector<5x80xf32>
    %c0_3 = arith.constant 0 : index
    %c0_4 = arith.constant 0 : index
    %c0_5 = arith.constant 0 : index
    %c0_6 = arith.constant 0 : index
    %2 = vector.load %arg3[%c0_3, %c0_4, %c0_5, %c0_6] : memref<1x1x5x80xf32, #tpu.memory_space<vmem>>, vector<1x1x5x80xf32>
    %3 = vector.shape_cast %2 : vector<1x1x5x80xf32> to vector<5x80xf32>
    %4 = arith.maximumf %1, %3 : vector<5x80xf32>
    %c0_7 = arith.constant 0 : index
    %c0_8 = arith.constant 0 : index
    %c0_9 = arith.constant 0 : index
    %c0_10 = arith.constant 0 : index
    %5 = vector.load %arg4[%c0_7, %c0_8, %c0_9, %c0_10] : memref<1x1x5x80xf32, #tpu.memory_space<vmem>>, vector<1x1x5x80xf32>
    %6 = vector.shape_cast %5 : vector<1x1x5x80xf32> to vector<5x80xf32>
    %7 = arith.maximumf %4, %6 : vector<5x80xf32>
    %8 = vector.extract_strided_slice %7 {offsets = [0, 0], sizes = [3, 48], strides = [1, 1]} : vector<5x80xf32> to vector<3x48xf32>
    %9 = vector.extract_strided_slice %7 {offsets = [0, 16], sizes = [3, 48], strides = [1, 1]} : vector<5x80xf32> to vector<3x48xf32>
    %10 = arith.maximumf %8, %9 : vector<3x48xf32>
    %11 = vector.extract_strided_slice %7 {offsets = [0, 32], sizes = [3, 48], strides = [1, 1]} : vector<5x80xf32> to vector<3x48xf32>
    %12 = arith.maximumf %10, %11 : vector<3x48xf32>
    %13 = vector.extract_strided_slice %7 {offsets = [1, 0], sizes = [3, 48], strides = [1, 1]} : vector<5x80xf32> to vector<3x48xf32>
    %14 = arith.maximumf %12, %13 : vector<3x48xf32>
    %15 = vector.extract_strided_slice %7 {offsets = [1, 16], sizes = [3, 48], strides = [1, 1]} : vector<5x80xf32> to vector<3x48xf32>
    %16 = arith.maximumf %14, %15 : vector<3x48xf32>
    %17 = vector.extract_strided_slice %7 {offsets = [1, 32], sizes = [3, 48], strides = [1, 1]} : vector<5x80xf32> to vector<3x48xf32>
    %18 = arith.maximumf %16, %17 : vector<3x48xf32>
    %19 = vector.extract_strided_slice %7 {offsets = [2, 0], sizes = [3, 48], strides = [1, 1]} : vector<5x80xf32> to vector<3x48xf32>
    %20 = arith.maximumf %18, %19 : vector<3x48xf32>
    %21 = vector.extract_strided_slice %7 {offsets = [2, 16], sizes = [3, 48], strides = [1, 1]} : vector<5x80xf32> to vector<3x48xf32>
    %22 = arith.maximumf %20, %21 : vector<3x48xf32>
    %23 = vector.extract_strided_slice %7 {offsets = [2, 32], sizes = [3, 48], strides = [1, 1]} : vector<5x80xf32> to vector<3x48xf32>
    %24 = arith.maximumf %22, %23 : vector<3x48xf32>
    %c0_11 = arith.constant 0 : index
    %c0_12 = arith.constant 0 : index
    %c0_13 = arith.constant 0 : index
    %c0_14 = arith.constant 0 : index
    %25 = vector.load %arg5[%c0_11, %c0_12, %c0_13, %c0_14] : memref<1x1x3x48xf32, #tpu.memory_space<vmem>>, vector<1x1x3x48xf32>
    %26 = vector.shape_cast %25 : vector<1x1x3x48xf32> to vector<3x48xf32>
    %27 = vector.shape_cast %24 : vector<3x48xf32> to vector<1x1x3x48xf32>
    tpu.vector_store %arg5[%c0_11, %c0_12, %c0_13, %c0_14], %27 {strides = array<i32>} : memref<1x1x3x48xf32, #tpu.memory_space<vmem>>, vector<1x1x3x48xf32>,
    return
  }
  func.func @transform_0(%arg0: i32, %arg1: i32) -> (i32, i32, i32, i32) {
    %c0_i32 = arith.constant 0 : i32
    %0 = arith.addi %arg1, %c0_i32 : i32
    %c0_i32_0 = arith.constant 0 : i32
    %c0_i32_1 = arith.constant 0 : i32
    %c0_i32_2 = arith.constant 0 : i32
    return %arg0, %0, %c0_i32_0, %c0_i32_1 : i32, i32, i32, i32
  }
  func.func @transform_1(%arg0: i32, %arg1: i32) -> (i32, i32, i32, i32) {
    %c1_i32 = arith.constant 1 : i32
    %0 = arith.addi %arg1, %c1_i32 : i32
    %c0_i32 = arith.constant 0 : i32
    %c0_i32_0 = arith.constant 0 : i32
    %c0_i32_1 = arith.constant 0 : i32
    return %arg0, %0, %c0_i32, %c0_i32_0 : i32, i32, i32, i32
  }
  func.func @transform_2(%arg0: i32, %arg1: i32) -> (i32, i32, i32, i32) {
    %c2_i32 = arith.constant 2 : i32
    %0 = arith.addi %arg1, %c2_i32 : i32
    %c0_i32 = arith.constant 0 : i32
    %c0_i32_0 = arith.constant 0 : i32
    %c0_i32_1 = arith.constant 0 : i32
    return %arg0, %0, %c0_i32, %c0_i32_0 : i32, i32, i32, i32
  }
  func.func @transform_3(%arg0: i32, %arg1: i32) -> (i32, i32, i32, i32) {
    %c0_i32 = arith.constant 0 : i32
    %c0_i32_0 = arith.constant 0 : i32
    %c0_i32_1 = arith.constant 0 : i32
    return %arg0, %arg1, %c0_i32, %c0_i32_0 : i32, i32, i32, i32
  }
}

module attributes {stable_mosaic.version = 11 : i64} {
  func.func @_add4_relu_kernel(%arg0: i32, %arg1: memref<8x128xf32, #tpu.memory_space<vmem>>, %arg2: memref<8x128xf32, #tpu.memory_space<vmem>>, %arg3: memref<8x128xf32, #tpu.memory_space<vmem>>, %arg4: memref<8x128xf32, #tpu.memory_space<vmem>>, %arg5: memref<8x128xf32, #tpu.memory_space<vmem>>) attributes {dimension_semantics = [#tpu.dimension_semantics<parallel>], iteration_bounds = array<i64: 1>, scalar_prefetch = 0 : i64, scratch_operands = 0 : i64, tpu.core_type = #tpu.core_type<tc>, window_params = [{transform_indices = @transform_0, window_bounds = array<i64: 8, 128>}, {transform_indices = @transform_1, window_bounds = array<i64: 8, 128>}, {transform_indices = @transform_2, window_bounds = array<i64: 8, 128>}, {transform_indices = @transform_3, window_bounds = array<i64: 8, 128>}, {transform_indices = @transform_4, window_bounds = array<i64: 8, 128>}]} {
    %c0 = arith.constant 0 : index
    %c0_0 = arith.constant 0 : index
    %0 = vector.load %arg1[%c0, %c0_0] : memref<8x128xf32, #tpu.memory_space<vmem>>, vector<8x128xf32>
    %c0_1 = arith.constant 0 : index
    %c0_2 = arith.constant 0 : index
    %1 = vector.load %arg2[%c0_1, %c0_2] : memref<8x128xf32, #tpu.memory_space<vmem>>, vector<8x128xf32>
    %2 = arith.addf %0, %1 : vector<8x128xf32>
    %c0_3 = arith.constant 0 : index
    %c0_4 = arith.constant 0 : index
    %3 = vector.load %arg3[%c0_3, %c0_4] : memref<8x128xf32, #tpu.memory_space<vmem>>, vector<8x128xf32>
    %4 = arith.addf %2, %3 : vector<8x128xf32>
    %c0_5 = arith.constant 0 : index
    %c0_6 = arith.constant 0 : index
    %5 = vector.load %arg4[%c0_5, %c0_6] : memref<8x128xf32, #tpu.memory_space<vmem>>, vector<8x128xf32>
    %6 = arith.addf %4, %5 : vector<8x128xf32>
    %cst = arith.constant 0.000000e+00 : f32
    %7 = vector.broadcast %cst : f32 to vector<8x128xf32>
    %8 = arith.maximumf %6, %7 : vector<8x128xf32>
    %c0_7 = arith.constant 0 : index
    %c0_8 = arith.constant 0 : index
    %9 = vector.load %arg5[%c0_7, %c0_8] : memref<8x128xf32, #tpu.memory_space<vmem>>, vector<8x128xf32>
    tpu.vector_store %arg5[%c0_7, %c0_8], %8 {strides = array<i32>} : memref<8x128xf32, #tpu.memory_space<vmem>>, vector<8x128xf32>,
    return
  }
  func.func @transform_0(%arg0: i32) -> (i32, i32) {
    %c0_i32 = arith.constant 0 : i32
    %c0_i32_0 = arith.constant 0 : i32
    return %arg0, %c0_i32 : i32, i32
  }
  func.func @transform_1(%arg0: i32) -> (i32, i32) {
    %c0_i32 = arith.constant 0 : i32
    %c0_i32_0 = arith.constant 0 : i32
    return %arg0, %c0_i32 : i32, i32
  }
  func.func @transform_2(%arg0: i32) -> (i32, i32) {
    %c0_i32 = arith.constant 0 : i32
    %c0_i32_0 = arith.constant 0 : i32
    return %arg0, %c0_i32 : i32, i32
  }
  func.func @transform_3(%arg0: i32) -> (i32, i32) {
    %c0_i32 = arith.constant 0 : i32
    %c0_i32_0 = arith.constant 0 : i32
    return %arg0, %c0_i32 : i32, i32
  }
  func.func @transform_4(%arg0: i32) -> (i32, i32) {
    %c0_i32 = arith.constant 0 : i32
    %c0_i32_0 = arith.constant 0 : i32
    return %arg0, %c0_i32 : i32, i32
  }
}

module attributes {stable_mosaic.version = 11 : i64} {
  func.func @_conv_bias_kernel(%arg0: i32, %arg1: memref<40x432xbf16, #tpu.memory_space<vmem>>, %arg2: memref<432x16xbf16, #tpu.memory_space<vmem>>, %arg3: memref<1x16xf32, #tpu.memory_space<vmem>>, %arg4: memref<40x16xf32, #tpu.memory_space<vmem>>) attributes {dimension_semantics = [#tpu.dimension_semantics<parallel>], iteration_bounds = array<i64: 1>, scalar_prefetch = 0 : i64, scratch_operands = 0 : i64, tpu.core_type = #tpu.core_type<tc>, window_params = [{transform_indices = @transform_0, window_bounds = array<i64: 40, 432>}, {pipeline_mode = #tpu.pipeline_mode<synchronous>, transform_indices = @transform_1, window_bounds = array<i64: 432, 16>}, {pipeline_mode = #tpu.pipeline_mode<synchronous>, transform_indices = @transform_2, window_bounds = array<i64: 1, 16>}, {transform_indices = @transform_3, window_bounds = array<i64: 40, 16>}]} {
    %c0 = arith.constant 0 : index
    %c0_0 = arith.constant 0 : index
    %0 = vector.load %arg1[%c0, %c0_0] : memref<40x432xbf16, #tpu.memory_space<vmem>>, vector<40x432xbf16>
    %c0_1 = arith.constant 0 : index
    %c0_2 = arith.constant 0 : index
    %1 = vector.load %arg2[%c0_1, %c0_2] : memref<432x16xbf16, #tpu.memory_space<vmem>>, vector<432x16xbf16>
    %cst = arith.constant dense<0.000000e+00> : vector<40x16xf32>
    %2 = tpu.matmul %0, %1, %cst {dimension_numbers = #tpu.dot_dimension_numbers<[1], [0], [0], [1], [0, 0, 1, 1], [], []>} : vector<40x432xbf16>, vector<432x16xbf16>, vector<40x16xf32> -> vector<40x16xf32>
    %c0_3 = arith.constant 0 : index
    %c0_4 = arith.constant 0 : index
    %3 = vector.load %arg3[%c0_3, %c0_4] : memref<1x16xf32, #tpu.memory_space<vmem>>, vector<1x16xf32>
    %4 = vector.broadcast %3 : vector<1x16xf32> to vector<40x16xf32>
    %5 = arith.addf %2, %4 : vector<40x16xf32>
    %c0_5 = arith.constant 0 : index
    %c0_6 = arith.constant 0 : index
    %6 = vector.load %arg4[%c0_5, %c0_6] : memref<40x16xf32, #tpu.memory_space<vmem>>, vector<40x16xf32>
    tpu.vector_store %arg4[%c0_5, %c0_6], %5 {strides = array<i32>} : memref<40x16xf32, #tpu.memory_space<vmem>>, vector<40x16xf32>,
    return
  }
  func.func @transform_0(%arg0: i32) -> (i32, i32) {
    %c0_i32 = arith.constant 0 : i32
    %c0_i32_0 = arith.constant 0 : i32
    return %arg0, %c0_i32 : i32, i32
  }
  func.func @transform_1(%arg0: i32) -> (i32, i32) {
    %c0_i32 = arith.constant 0 : i32
    %c0_i32_0 = arith.constant 0 : i32
    %c0_i32_1 = arith.constant 0 : i32
    return %c0_i32, %c0_i32_0 : i32, i32
  }
  func.func @transform_2(%arg0: i32) -> (i32, i32) {
    %c0_i32 = arith.constant 0 : i32
    %c0_i32_0 = arith.constant 0 : i32
    %c0_i32_1 = arith.constant 0 : i32
    return %c0_i32, %c0_i32_0 : i32, i32
  }
  func.func @transform_3(%arg0: i32) -> (i32, i32) {
    %c0_i32 = arith.constant 0 : i32
    %c0_i32_0 = arith.constant 0 : i32
    return %arg0, %c0_i32 : i32, i32
  }
}

module attributes {stable_mosaic.version = 11 : i64} {
  func.func @_conv_stats_kernel(%arg0: i32, %arg1: memref<40x432xbf16, #tpu.memory_space<vmem>>, %arg2: memref<432x32xbf16, #tpu.memory_space<vmem>>, %arg3: memref<40x32xf32, #tpu.memory_space<vmem>>, %arg4: memref<1x2x32xf32, #tpu.memory_space<vmem>>) attributes {dimension_semantics = [#tpu.dimension_semantics<parallel>], iteration_bounds = array<i64: 1>, scalar_prefetch = 0 : i64, scratch_operands = 0 : i64, tpu.core_type = #tpu.core_type<tc>, window_params = [{transform_indices = @transform_0, window_bounds = array<i64: 40, 432>}, {pipeline_mode = #tpu.pipeline_mode<synchronous>, transform_indices = @transform_1, window_bounds = array<i64: 432, 32>}, {transform_indices = @transform_2, window_bounds = array<i64: 40, 32>}, {transform_indices = @transform_3, window_bounds = array<i64: 1, 2, 32>}]} {
    %c0 = arith.constant 0 : index
    %c0_0 = arith.constant 0 : index
    %0 = vector.load %arg1[%c0, %c0_0] : memref<40x432xbf16, #tpu.memory_space<vmem>>, vector<40x432xbf16>
    %c0_1 = arith.constant 0 : index
    %c0_2 = arith.constant 0 : index
    %1 = vector.load %arg2[%c0_1, %c0_2] : memref<432x32xbf16, #tpu.memory_space<vmem>>, vector<432x32xbf16>
    %cst = arith.constant dense<0.000000e+00> : vector<40x32xf32>
    %2 = tpu.matmul %0, %1, %cst {dimension_numbers = #tpu.dot_dimension_numbers<[1], [0], [0], [1], [0, 0, 1, 1], [], []>} : vector<40x432xbf16>, vector<432x32xbf16>, vector<40x32xf32> -> vector<40x32xf32>
    %c0_3 = arith.constant 0 : index
    %c0_4 = arith.constant 0 : index
    %3 = vector.load %arg3[%c0_3, %c0_4] : memref<40x32xf32, #tpu.memory_space<vmem>>, vector<40x32xf32>
    tpu.vector_store %arg3[%c0_3, %c0_4], %2 {strides = array<i32>} : memref<40x32xf32, #tpu.memory_space<vmem>>, vector<40x32xf32>,
    %cst_5 = arith.constant dense<0.000000e+00> : vector<32xf32>
    %4 = vector.multi_reduction <add>, %2, %cst_5 [0] : vector<40x32xf32> to vector<32xf32>
    %5 = vector.shape_cast %4 : vector<32xf32> to vector<1x32xf32>
    %6 = arith.mulf %2, %2 : vector<40x32xf32>
    %cst_6 = arith.constant dense<0.000000e+00> : vector<32xf32>
    %7 = vector.multi_reduction <add>, %6, %cst_6 [0] : vector<40x32xf32> to vector<32xf32>
    %8 = vector.shape_cast %7 : vector<32xf32> to vector<1x32xf32>
    %9 = tpu.concatenate %5, %8 in 0 : vector<1x32xf32>, vector<1x32xf32> -> vector<2x32xf32>
    %c0_7 = arith.constant 0 : index
    %c0_8 = arith.constant 0 : index
    %c0_9 = arith.constant 0 : index
    %10 = vector.load %arg4[%c0_7, %c0_8, %c0_9] : memref<1x2x32xf32, #tpu.memory_space<vmem>>, vector<1x2x32xf32>
    %11 = vector.shape_cast %10 : vector<1x2x32xf32> to vector<2x32xf32>
    %12 = vector.shape_cast %9 : vector<2x32xf32> to vector<1x2x32xf32>
    tpu.vector_store %arg4[%c0_7, %c0_8, %c0_9], %12 {strides = array<i32>} : memref<1x2x32xf32, #tpu.memory_space<vmem>>, vector<1x2x32xf32>,
    return
  }
  func.func @transform_0(%arg0: i32) -> (i32, i32) {
    %c0_i32 = arith.constant 0 : i32
    %c0_i32_0 = arith.constant 0 : i32
    return %arg0, %c0_i32 : i32, i32
  }
  func.func @transform_1(%arg0: i32) -> (i32, i32) {
    %c0_i32 = arith.constant 0 : i32
    %c0_i32_0 = arith.constant 0 : i32
    %c0_i32_1 = arith.constant 0 : i32
    return %c0_i32, %c0_i32_0 : i32, i32
  }
  func.func @transform_2(%arg0: i32) -> (i32, i32) {
    %c0_i32 = arith.constant 0 : i32
    %c0_i32_0 = arith.constant 0 : i32
    return %arg0, %c0_i32 : i32, i32
  }
  func.func @transform_3(%arg0: i32) -> (i32, i32, i32) {
    %c0_i32 = arith.constant 0 : i32
    %c0_i32_0 = arith.constant 0 : i32
    %c0_i32_1 = arith.constant 0 : i32
    return %arg0, %c0_i32, %c0_i32_0 : i32, i32, i32
  }
}

module attributes {stable_mosaic.version = 11 : i64} {
  func.func @_bn_relu_pool_kernel(%arg0: i32, %arg1: memref<8x512xf32, #tpu.memory_space<vmem>>, %arg2: memref<1x512xf32, #tpu.memory_space<vmem>>, %arg3: memref<1x512xf32, #tpu.memory_space<vmem>>, %arg4: memref<8x32xf32, #tpu.memory_space<vmem>>) attributes {dimension_semantics = [#tpu.dimension_semantics<parallel>], iteration_bounds = array<i64: 1>, scalar_prefetch = 0 : i64, scratch_operands = 0 : i64, tpu.core_type = #tpu.core_type<tc>, window_params = [{transform_indices = @transform_0, window_bounds = array<i64: 8, 512>}, {pipeline_mode = #tpu.pipeline_mode<synchronous>, transform_indices = @transform_1, window_bounds = array<i64: 1, 512>}, {pipeline_mode = #tpu.pipeline_mode<synchronous>, transform_indices = @transform_2, window_bounds = array<i64: 1, 512>}, {transform_indices = @transform_3, window_bounds = array<i64: 8, 32>}]} {
    %c0 = arith.constant 0 : index
    %c0_0 = arith.constant 0 : index
    %0 = vector.load %arg1[%c0, %c0_0] : memref<8x512xf32, #tpu.memory_space<vmem>>, vector<8x512xf32>
    %c0_1 = arith.constant 0 : index
    %c0_2 = arith.constant 0 : index
    %1 = vector.load %arg2[%c0_1, %c0_2] : memref<1x512xf32, #tpu.memory_space<vmem>>, vector<1x512xf32>
    %2 = vector.broadcast %1 : vector<1x512xf32> to vector<8x512xf32>
    %3 = arith.mulf %0, %2 : vector<8x512xf32>
    %c0_3 = arith.constant 0 : index
    %c0_4 = arith.constant 0 : index
    %4 = vector.load %arg3[%c0_3, %c0_4] : memref<1x512xf32, #tpu.memory_space<vmem>>, vector<1x512xf32>
    %5 = vector.broadcast %4 : vector<1x512xf32> to vector<8x512xf32>
    %6 = arith.addf %3, %5 : vector<8x512xf32>
    %cst = arith.constant 0.000000e+00 : f32
    %7 = vector.broadcast %cst : f32 to vector<8x512xf32>
    %8 = arith.maximumf %6, %7 : vector<8x512xf32>
    %cst_5 = arith.constant -5.000000e+29 : f32
    %9 = vector.broadcast %cst_5 : f32 to vector<8x512xf32>
    %10 = arith.cmpf ole, %0, %9 : vector<8x512xf32>
    %cst_6 = arith.constant 0.000000e+00 : f32
    %11 = vector.broadcast %cst_6 : f32 to vector<8x512xf32>
    %12 = arith.select %10, %11, %8 : vector<8x512xi1>, vector<8x512xf32>
    %13 = vector.extract_strided_slice %12 {offsets = [0, 0], sizes = [8, 32], strides = [1, 1]} : vector<8x512xf32> to vector<8x32xf32>
    %14 = vector.extract_strided_slice %12 {offsets = [0, 32], sizes = [8, 32], strides = [1, 1]} : vector<8x512xf32> to vector<8x32xf32>
    %15 = arith.maximumf %13, %14 : vector<8x32xf32>
    %16 = vector.extract_strided_slice %12 {offsets = [0, 64], sizes = [8, 32], strides = [1, 1]} : vector<8x512xf32> to vector<8x32xf32>
    %17 = arith.maximumf %15, %16 : vector<8x32xf32>
    %18 = vector.extract_strided_slice %12 {offsets = [0, 96], sizes = [8, 32], strides = [1, 1]} : vector<8x512xf32> to vector<8x32xf32>
    %19 = arith.maximumf %17, %18 : vector<8x32xf32>
    %20 = vector.extract_strided_slice %12 {offsets = [0, 128], sizes = [8, 32], strides = [1, 1]} : vector<8x512xf32> to vector<8x32xf32>
    %21 = arith.maximumf %19, %20 : vector<8x32xf32>
    %22 = vector.extract_strided_slice %12 {offsets = [0, 160], sizes = [8, 32], strides = [1, 1]} : vector<8x512xf32> to vector<8x32xf32>
    %23 = arith.maximumf %21, %22 : vector<8x32xf32>
    %24 = vector.extract_strided_slice %12 {offsets = [0, 192], sizes = [8, 32], strides = [1, 1]} : vector<8x512xf32> to vector<8x32xf32>
    %25 = arith.maximumf %23, %24 : vector<8x32xf32>
    %26 = vector.extract_strided_slice %12 {offsets = [0, 224], sizes = [8, 32], strides = [1, 1]} : vector<8x512xf32> to vector<8x32xf32>
    %27 = arith.maximumf %25, %26 : vector<8x32xf32>
    %28 = vector.extract_strided_slice %12 {offsets = [0, 256], sizes = [8, 32], strides = [1, 1]} : vector<8x512xf32> to vector<8x32xf32>
    %29 = arith.maximumf %27, %28 : vector<8x32xf32>
    %30 = vector.extract_strided_slice %12 {offsets = [0, 288], sizes = [8, 32], strides = [1, 1]} : vector<8x512xf32> to vector<8x32xf32>
    %31 = arith.maximumf %29, %30 : vector<8x32xf32>
    %32 = vector.extract_strided_slice %12 {offsets = [0, 320], sizes = [8, 32], strides = [1, 1]} : vector<8x512xf32> to vector<8x32xf32>
    %33 = arith.maximumf %31, %32 : vector<8x32xf32>
    %34 = vector.extract_strided_slice %12 {offsets = [0, 352], sizes = [8, 32], strides = [1, 1]} : vector<8x512xf32> to vector<8x32xf32>
    %35 = arith.maximumf %33, %34 : vector<8x32xf32>
    %36 = vector.extract_strided_slice %12 {offsets = [0, 384], sizes = [8, 32], strides = [1, 1]} : vector<8x512xf32> to vector<8x32xf32>
    %37 = arith.maximumf %35, %36 : vector<8x32xf32>
    %38 = vector.extract_strided_slice %12 {offsets = [0, 416], sizes = [8, 32], strides = [1, 1]} : vector<8x512xf32> to vector<8x32xf32>
    %39 = arith.maximumf %37, %38 : vector<8x32xf32>
    %40 = vector.extract_strided_slice %12 {offsets = [0, 448], sizes = [8, 32], strides = [1, 1]} : vector<8x512xf32> to vector<8x32xf32>
    %41 = arith.maximumf %39, %40 : vector<8x32xf32>
    %42 = vector.extract_strided_slice %12 {offsets = [0, 480], sizes = [8, 32], strides = [1, 1]} : vector<8x512xf32> to vector<8x32xf32>
    %43 = arith.maximumf %41, %42 : vector<8x32xf32>
    %c0_7 = arith.constant 0 : index
    %c0_8 = arith.constant 0 : index
    %44 = vector.load %arg4[%c0_7, %c0_8] : memref<8x32xf32, #tpu.memory_space<vmem>>, vector<8x32xf32>
    tpu.vector_store %arg4[%c0_7, %c0_8], %43 {strides = array<i32>} : memref<8x32xf32, #tpu.memory_space<vmem>>, vector<8x32xf32>,
    return
  }
  func.func @transform_0(%arg0: i32) -> (i32, i32) {
    %c0_i32 = arith.constant 0 : i32
    %c0_i32_0 = arith.constant 0 : i32
    return %arg0, %c0_i32 : i32, i32
  }
  func.func @transform_1(%arg0: i32) -> (i32, i32) {
    %c0_i32 = arith.constant 0 : i32
    %c0_i32_0 = arith.constant 0 : i32
    %c0_i32_1 = arith.constant 0 : i32
    return %c0_i32, %c0_i32_0 : i32, i32
  }
  func.func @transform_2(%arg0: i32) -> (i32, i32) {
    %c0_i32 = arith.constant 0 : i32
    %c0_i32_0 = arith.constant 0 : i32
    %c0_i32_1 = arith.constant 0 : i32
    return %c0_i32, %c0_i32_0 : i32, i32
  }
  func.func @transform_3(%arg0: i32) -> (i32, i32) {
    %c0_i32 = arith.constant 0 : i32
    %c0_i32_0 = arith.constant 0 : i32
    return %arg0, %c0_i32 : i32, i32
  }
}

module attributes {stable_mosaic.version = 11 : i64} {
  func.func @_conv_stats_kernel(%arg0: i32, %arg1: memref<8x864xbf16, #tpu.memory_space<vmem>>, %arg2: memref<864x64xbf16, #tpu.memory_space<vmem>>, %arg3: memref<8x64xf32, #tpu.memory_space<vmem>>, %arg4: memref<1x2x64xf32, #tpu.memory_space<vmem>>) attributes {dimension_semantics = [#tpu.dimension_semantics<parallel>], iteration_bounds = array<i64: 1>, scalar_prefetch = 0 : i64, scratch_operands = 0 : i64, tpu.core_type = #tpu.core_type<tc>, window_params = [{transform_indices = @transform_0, window_bounds = array<i64: 8, 864>}, {pipeline_mode = #tpu.pipeline_mode<synchronous>, transform_indices = @transform_1, window_bounds = array<i64: 864, 64>}, {transform_indices = @transform_2, window_bounds = array<i64: 8, 64>}, {transform_indices = @transform_3, window_bounds = array<i64: 1, 2, 64>}]} {
    %c0 = arith.constant 0 : index
    %c0_0 = arith.constant 0 : index
    %0 = vector.load %arg1[%c0, %c0_0] : memref<8x864xbf16, #tpu.memory_space<vmem>>, vector<8x864xbf16>
    %c0_1 = arith.constant 0 : index
    %c0_2 = arith.constant 0 : index
    %1 = vector.load %arg2[%c0_1, %c0_2] : memref<864x64xbf16, #tpu.memory_space<vmem>>, vector<864x64xbf16>
    %cst = arith.constant dense<0.000000e+00> : vector<8x64xf32>
    %2 = tpu.matmul %0, %1, %cst {dimension_numbers = #tpu.dot_dimension_numbers<[1], [0], [0], [1], [0, 0, 1, 1], [], []>} : vector<8x864xbf16>, vector<864x64xbf16>, vector<8x64xf32> -> vector<8x64xf32>
    %c0_3 = arith.constant 0 : index
    %c0_4 = arith.constant 0 : index
    %3 = vector.load %arg3[%c0_3, %c0_4] : memref<8x64xf32, #tpu.memory_space<vmem>>, vector<8x64xf32>
    tpu.vector_store %arg3[%c0_3, %c0_4], %2 {strides = array<i32>} : memref<8x64xf32, #tpu.memory_space<vmem>>, vector<8x64xf32>,
    %cst_5 = arith.constant dense<0.000000e+00> : vector<64xf32>
    %4 = vector.multi_reduction <add>, %2, %cst_5 [0] : vector<8x64xf32> to vector<64xf32>
    %5 = vector.shape_cast %4 : vector<64xf32> to vector<1x64xf32>
    %6 = arith.mulf %2, %2 : vector<8x64xf32>
    %cst_6 = arith.constant dense<0.000000e+00> : vector<64xf32>
    %7 = vector.multi_reduction <add>, %6, %cst_6 [0] : vector<8x64xf32> to vector<64xf32>
    %8 = vector.shape_cast %7 : vector<64xf32> to vector<1x64xf32>
    %9 = tpu.concatenate %5, %8 in 0 : vector<1x64xf32>, vector<1x64xf32> -> vector<2x64xf32>
    %c0_7 = arith.constant 0 : index
    %c0_8 = arith.constant 0 : index
    %c0_9 = arith.constant 0 : index
    %10 = vector.load %arg4[%c0_7, %c0_8, %c0_9] : memref<1x2x64xf32, #tpu.memory_space<vmem>>, vector<1x2x64xf32>
    %11 = vector.shape_cast %10 : vector<1x2x64xf32> to vector<2x64xf32>
    %12 = vector.shape_cast %9 : vector<2x64xf32> to vector<1x2x64xf32>
    tpu.vector_store %arg4[%c0_7, %c0_8, %c0_9], %12 {strides = array<i32>} : memref<1x2x64xf32, #tpu.memory_space<vmem>>, vector<1x2x64xf32>,
    return
  }
  func.func @transform_0(%arg0: i32) -> (i32, i32) {
    %c0_i32 = arith.constant 0 : i32
    %c0_i32_0 = arith.constant 0 : i32
    return %arg0, %c0_i32 : i32, i32
  }
  func.func @transform_1(%arg0: i32) -> (i32, i32) {
    %c0_i32 = arith.constant 0 : i32
    %c0_i32_0 = arith.constant 0 : i32
    %c0_i32_1 = arith.constant 0 : i32
    return %c0_i32, %c0_i32_0 : i32, i32
  }
  func.func @transform_2(%arg0: i32) -> (i32, i32) {
    %c0_i32 = arith.constant 0 : i32
    %c0_i32_0 = arith.constant 0 : i32
    return %arg0, %c0_i32 : i32, i32
  }
  func.func @transform_3(%arg0: i32) -> (i32, i32, i32) {
    %c0_i32 = arith.constant 0 : i32
    %c0_i32_0 = arith.constant 0 : i32
    %c0_i32_1 = arith.constant 0 : i32
    return %arg0, %c0_i32, %c0_i32_0 : i32, i32, i32
  }
}

module attributes {stable_mosaic.version = 11 : i64} {
  func.func @_scale_shift_relu_kernel(%arg0: i32, %arg1: memref<8x128xf32, #tpu.memory_space<vmem>>, %arg2: memref<1x128xf32, #tpu.memory_space<vmem>>, %arg3: memref<1x128xf32, #tpu.memory_space<vmem>>, %arg4: memref<8x128xf32, #tpu.memory_space<vmem>>) attributes {dimension_semantics = [#tpu.dimension_semantics<parallel>], iteration_bounds = array<i64: 1>, scalar_prefetch = 0 : i64, scratch_operands = 0 : i64, tpu.core_type = #tpu.core_type<tc>, window_params = [{transform_indices = @transform_0, window_bounds = array<i64: 8, 128>}, {pipeline_mode = #tpu.pipeline_mode<synchronous>, transform_indices = @transform_1, window_bounds = array<i64: 1, 128>}, {pipeline_mode = #tpu.pipeline_mode<synchronous>, transform_indices = @transform_2, window_bounds = array<i64: 1, 128>}, {transform_indices = @transform_3, window_bounds = array<i64: 8, 128>}]} {
    %c0 = arith.constant 0 : index
    %c0_0 = arith.constant 0 : index
    %0 = vector.load %arg1[%c0, %c0_0] : memref<8x128xf32, #tpu.memory_space<vmem>>, vector<8x128xf32>
    %c0_1 = arith.constant 0 : index
    %c0_2 = arith.constant 0 : index
    %1 = vector.load %arg2[%c0_1, %c0_2] : memref<1x128xf32, #tpu.memory_space<vmem>>, vector<1x128xf32>
    %2 = vector.broadcast %1 : vector<1x128xf32> to vector<8x128xf32>
    %3 = arith.mulf %0, %2 : vector<8x128xf32>
    %c0_3 = arith.constant 0 : index
    %c0_4 = arith.constant 0 : index
    %4 = vector.load %arg3[%c0_3, %c0_4] : memref<1x128xf32, #tpu.memory_space<vmem>>, vector<1x128xf32>
    %5 = vector.broadcast %4 : vector<1x128xf32> to vector<8x128xf32>
    %6 = arith.addf %3, %5 : vector<8x128xf32>
    %cst = arith.constant 0.000000e+00 : f32
    %7 = vector.broadcast %cst : f32 to vector<8x128xf32>
    %8 = arith.maximumf %6, %7 : vector<8x128xf32>
    %c0_5 = arith.constant 0 : index
    %c0_6 = arith.constant 0 : index
    %9 = vector.load %arg4[%c0_5, %c0_6] : memref<8x128xf32, #tpu.memory_space<vmem>>, vector<8x128xf32>
    tpu.vector_store %arg4[%c0_5, %c0_6], %8 {strides = array<i32>} : memref<8x128xf32, #tpu.memory_space<vmem>>, vector<8x128xf32>,
    return
  }
  func.func @transform_0(%arg0: i32) -> (i32, i32) {
    %c0_i32 = arith.constant 0 : i32
    %c0_i32_0 = arith.constant 0 : i32
    return %arg0, %c0_i32 : i32, i32
  }
  func.func @transform_1(%arg0: i32) -> (i32, i32) {
    %c0_i32 = arith.constant 0 : i32
    %c0_i32_0 = arith.constant 0 : i32
    %c0_i32_1 = arith.constant 0 : i32
    return %c0_i32, %c0_i32_0 : i32, i32
  }
  func.func @transform_2(%arg0: i32) -> (i32, i32) {
    %c0_i32 = arith.constant 0 : i32
    %c0_i32_0 = arith.constant 0 : i32
    %c0_i32_1 = arith.constant 0 : i32
    return %c0_i32, %c0_i32_0 : i32, i32
  }
  func.func @transform_3(%arg0: i32) -> (i32, i32) {
    %c0_i32 = arith.constant 0 : i32
    %c0_i32_0 = arith.constant 0 : i32
    return %arg0, %c0_i32 : i32, i32
  }
}

</mosaic_0001>

<llo_original>
// kernel: tile.43
$region0: #{tile.43}
  #allocation0 [shape = 's32[1]{0}', space=sflag, size = 0x4, scoped, tag = 'scoped memory for tile.43']
  %s0 = inlined_call_operand.vmem [shape: f32[8], index: 0, kind: input, shape index: {}]
  %s1 = inlined_call_operand.vmem [shape: f32[16,8], index: 1, kind: output, shape index: {}]
  // Predicated region
  $region2: #{tile.43} parent=0 // pred_check
    _
  $region3: #{tile.43} parent=0 // pred_check_branch
    %3 = sbr.rel (0) target = $region5
  $region4: #{tile.43} parent=0 // pred_region
    _
  $region5: #{tile.43} parent=0 // pred_fallthru
    _
  %v4 = vld [vmem:[%s0] ss:$0 sm:$0xff]
  %5 = vst [vmem:[%s1] sm:$0xff] %v4
  %s6 = scalar_lea.vmem %s1, 8
  %7 = vst [vmem:[%s6] sm:$0xff] %v4

// kernel: tile.44
$region0: #{tile.44}
  %s0 = inlined_call_operand.vmem [shape: f32[16,8], index: 0, kind: input, shape index: {}]
  %s1 = inlined_call_operand.vmem [shape: f32[1,128], index: 1, kind: output, shape index: {}]
  $region1: #{tile.44} parent=0
    #allocation0 [shape = 'u8[4096]{0}', space=vmem, size = 0x1000, scoped, tag = 'scoped mem for output reshape']
    %v2 = vld [vmem:[%s0] sm:$0x1]
    %vm3 = vcmask 64512
    %4 = vst.msk [vmem:[#allocation0] sm:$0x1] %vm3, %v2
    %s5 = scalar_lea.vmem %s0, 15
    %v6 = vld [vmem:[%s5] sm:$0x1]
    %7 = vrot.lane.b32.xlu0 %v6, 120
    %v8 = vpop.permute.xlu0 %7
    %vm9 = vcmask 1048512
    %10 = vst.msk [vmem:[#allocation0] sm:$0x1] %vm9, %v8
    %s11 = scalar_lea.vmem %s0, 14
    %v12 = vld [vmem:[%s11] sm:$0x1]
    %13 = vrot.lane.b32.xlu0 %v12, 112
    %v14 = vpop.permute.xlu0 %13
    %vm15 = vcmask 982912
    %16 = vst.msk [vmem:[#allocation0] sm:$0x1] %vm15, %v14
    %s17 = scalar_lea.vmem %s0, 13
    %v18 = vld [vmem:[%s17] sm:$0x1]
    %19 = vrot.lane.b32.xlu0 %v18, 104
    %v20 = vpop.permute.xlu0 %19
    %vm21 = vcmask 917312
    %22 = vst.msk [vmem:[#allocation0] sm:$0x1] %vm21, %v20
    %s23 = scalar_lea.vmem %s0, 12
    %v24 = vld [vmem:[%s23] sm:$0x1]
    %25 = vrot.lane.b32.xlu0 %v24, 96
    %v26 = vpop.permute.xlu0 %25
    %vm27 = vcmask 851712
    %28 = vst.msk [vmem:[#allocation0] sm:$0x1] %vm27, %v26
    %s29 = scalar_lea.vmem %s0, 11
    %v30 = vld [vmem:[%s29] sm:$0x1]
    %31 = vrot.lane.b32.xlu0 %v30, 88
    %v32 = vpop.permute.xlu0 %31
    %vm33 = vcmask 786112
    %34 = vst.msk [vmem:[#allocation0] sm:$0x1] %vm33, %v32
    %s35 = scalar_lea.vmem %s0, 10
    %v36 = vld [vmem:[%s35] sm:$0x1]
    %37 = vrot.lane.b32.xlu0 %v36, 80
    %v38 = vpop.permute.xlu0 %37
    %vm39 = vcmask 720512
    %40 = vst.msk [vmem:[#allocation0] sm:$0x1] %vm39, %v38
    %s41 = scalar_lea.vmem %s0, 9
    %v42 = vld [vmem:[%s41] sm:$0x1]
    %43 = vrot.lane.b32.xlu0 %v42, 72
    %v44 = vpop.permute.xlu0 %43
    %vm45 = vcmask 654912
    %46 = vst.msk [vmem:[#allocation0] sm:$0x1] %vm45, %v44
    %s47 = scalar_lea.vmem %s0, 8
    %v48 = vld [vmem:[%s47] sm:$0x1]
    %49 = vrot.lane.b32.xlu0 %v48, 64
    %v50 = vpop.permute.xlu0 %49
    %vm51 = vcmask 589312
    %52 = vst.msk [vmem:[#allocation0] sm:$0x1] %vm51, %v50
    %s53 = scalar_lea.vmem %s0, 7
    %v54 = vld [vmem:[%s53] sm:$0x1]
    %55 = vrot.lane.b32.xlu0 %v54, 56
    %v56 = vpop.permute.xlu0 %55
    %vm57 = vcmask 523712
    %58 = vst.msk [vmem:[#allocation0] sm:$0x1] %vm57, %v56
    %s59 = scalar_lea.vmem %s0, 6
    %v60 = vld [vmem:[%s59] sm:$0x1]
    %61 = vrot.lane.b32.xlu0 %v60, 48
    %v62 = vpop.permute.xlu0 %61
    %vm63 = vcmask 458112
    %64 = vst.msk [vmem:[#allocation0] sm:$0x1] %vm63, %v62
    %s65 = scalar_lea.vmem %s0, 5
    %v66 = vld [vmem:[%s65] sm:$0x1]
    %67 = vrot.lane.b32.xlu0 %v66, 40
    %v68 = vpop.permute.xlu0 %67
    %vm69 = vcmask 392512
    %70 = vst.msk [vmem:[#allocation0] sm:$0x1] %vm69, %v68
    %s71 = scalar_lea.vmem %s0, 4
    %v72 = vld [vmem:[%s71] sm:$0x1]
    %73 = vrot.lane.b32.xlu0 %v72, 32
    %v74 = vpop.permute.xlu0 %73
    %vm75 = vcmask 326912
    %76 = vst.msk [vmem:[#allocation0] sm:$0x1] %vm75, %v74
    %s77 = scalar_lea.vmem %s0, 3
    %v78 = vld [vmem:[%s77] sm:$0x1]
    %79 = vrot.lane.b32.xlu0 %v78, 24
    %v80 = vpop.permute.xlu0 %79
    %vm81 = vcmask 261312
    %82 = vst.msk [vmem:[#allocation0] sm:$0x1] %vm81, %v80
    %s83 = scalar_lea.vmem %s0, 2
    %v84 = vld [vmem:[%s83] sm:$0x1]
    %85 = vrot.lane.b32.xlu0 %v84, 16
    %v86 = vpop.permute.xlu0 %85
    %vm87 = vcmask 195712
    %88 = vst.msk [vmem:[#allocation0] sm:$0x1] %vm87, %v86
    %s89 = scalar_lea.vmem %s0, 1
    %v90 = vld [vmem:[%s89] sm:$0x1]
    %91 = vrot.lane.b32.xlu0 %v90, 8
    %v92 = vpop.permute.xlu0 %91
    %vm93 = vcmask 130112
    %94 = vst.msk [vmem:[#allocation0] sm:$0x1] %vm93, %v92
    %s96 = sshllo.u32 0, 1
    %v98 = vld [vmem:[#allocation0] sm:%s96]
    %s99 = sshllo.u32 0, 1
    %100 = vst [vmem:[%s1] sm:%s99] %v98

// kernel: cnn_encoder_forward.24
$region0: #{cnn_encoder_forward.24}
  #allocation0 [shape = 'u32[]', space=smem, size = 0x4, offset = 0x4, fixed_abs, tag = 'smem constant byte address 0x4 - core index']
  #allocation1 [shape = 'u32[144,128]{1,0:T(1,128)}', space=vmem, size = 0x12000, scoped, tag = 'internal scratch']
  %s0 = inlined_call_operand.vmem [shape: bf16[3072,27], index: 0, kind: input, shape index: {}]
  %s1 = inlined_call_operand.vmem [shape: bf16[27,8], index: 1, kind: input, shape index: {}]
  %s2 = inlined_call_operand.vmem [shape: f32[3072,8], index: 2, kind: output, shape index: {0}]
  %s3 = inlined_call_operand.vmem [shape: f32[6,2,8], index: 3, kind: output, shape index: {1}]
  %4 = xla_tuple %s2, %s3
  %s5 = sld [smem:[#allocation0]]
  $region49: #{cnn_encoder_forward.24} parent=0
    _
  %s7 = ssub.s32 1, %s5
  %s8 = scalar_select 0, %s7, %s5
  loop: start=0, step=1, limit=8
  $region2: #{cnn_encoder_forward.24} parent=0 // loop_pre_header
    _
  $region3: #{cnn_encoder_forward.24} parent=0 // loop_header
    %s10 = sphi 0, %s14
    %p11 = scmp.ge.s32.totalorder %s10, 8
    %s20 = sphi 0, %s22
    %s23 = sphi 0, %s20
    %s24 = sphi 0, %s23
    %s40 = sphi 0, %s24
    %s44 = sphi 0, %s44
    %s46 = sphi 0, %s44
    %s47 = sphi 0, %s46
    %s61 = sphi 0, %s47
    %s67 = sphi 0, %s69
    %s70 = sphi 0, %s67
    %s71 = sphi 0, %s70
    %s87 = sphi 0, %s71
    %s93 = sphi 0, %s95
    %s96 = sphi 0, %s93
    %s97 = sphi 0, %s96
    %s113 = sphi 0, %s97
  $region4: #{cnn_encoder_forward.24} parent=0 // loop_header_branch
    %13 = sbr.rel (%p11) target = $region8
  $region5: #{cnn_encoder_forward.24} parent=0 // loop_body
    %s15 = ssub.s32 %s10, 1
    %s16 = ssub.s32 %s10, 2
    %s17 = sadd.s32 %s10, 1
    %s18 = ssub.s32 %s10, %s17
    %p19 = scmp.eq.s32.totalorder %s18, 0
    %s21 = sadd.s32 %s20, 1
    %s22 = scalar_select %p19, %s20, %s21
    %p25 = pneg %p19
    %p26 = scmp.eq.s32.totalorder %s10, 5
    %p27 = por %p25, %p26
    %p28 = scmp.ne.s32.totalorder %s20, %s23
    %p29 = scmp.eq.s32.totalorder %s10, 0
    %p30 = por %p28, %p29
    %p31 = scmp.ne.s32.totalorder %s20, %s23
    %p32 = scmp.eq.s32.totalorder %s15, 5
    %p33 = por %p31, %p32
    %p34 = scmp.ne.s32.totalorder %s23, %s24
    %p35 = scmp.eq.s32.totalorder %s15, 0
    %p36 = por %p34, %p35
    %p37 = scmp.ne.s32.totalorder %s23, %s24
    %p38 = scmp.eq.s32.totalorder %s16, 5
    %p39 = por %p37, %p38
    %p41 = scmp.ne.s32.totalorder %s24, %s40
    %p42 = scmp.eq.s32.totalorder %s16, 0
    %p43 = por %p41, %p42
    %s45 = sadd.s32 %s44, 1
    %p48 = scmp.eq.s32.totalorder %s10, 5
    %p49 = scmp.ne.s32.totalorder %s44, %s46
    %p50 = scmp.eq.s32.totalorder %s10, 0
    %p51 = por %p49, %p50
    %p52 = scmp.ne.s32.totalorder %s44, %s46
    %p53 = scmp.eq.s32.totalorder %s15, 5
    %p54 = por %p52, %p53
    %p55 = scmp.ne.s32.totalorder %s46, %s47
    %p56 = scmp.eq.s32.totalorder %s15, 0
    %p57 = por %p55, %p56
    %p58 = scmp.ne.s32.totalorder %s46, %s47
    %p59 = scmp.eq.s32.totalorder %s16, 5
    %p60 = por %p58, %p59
    %p62 = scmp.ne.s32.totalorder %s47, %s61
    %p63 = scmp.eq.s32.totalorder %s16, 0
    %p64 = por %p62, %p63
    %s65 = ssub.s32 %s10, %s17
    %p66 = scmp.eq.s32.totalorder %s65, 0
    %s68 = sadd.s32 %s67, 1
    %s69 = scalar_select %p66, %s67, %s68
    %p72 = pneg %p66
    %p73 = scmp.eq.s32.totalorder %s10, 5
    %p74 = por %p72, %p73
    %p75 = scmp.ne.s32.totalorder %s67, %s70
    %p76 = scmp.eq.s32.totalorder %s10, 0
    %p77 = por %p75, %p76
    %p78 = scmp.ne.s32.totalorder %s67, %s70
    %p79 = scmp.eq.s32.totalorder %s15, 5
    %p80 = por %p78, %p79
    %p81 = scmp.ne.s32.totalorder %s70, %s71
    %p82 = scmp.eq.s32.totalorder %s15, 0
    %p83 = por %p81, %p82
    %p84 = scmp.ne.s32.totalorder %s70, %s71
    %p85 = scmp.eq.s32.totalorder %s16, 5
    %p86 = por %p84, %p85
    %p88 = scmp.ne.s32.totalorder %s71, %s87
    %p89 = scmp.eq.s32.totalorder %s16, 0
    %p90 = por %p88, %p89
    %s91 = ssub.s32 %s10, %s17
    %p92 = scmp.eq.s32.totalorder %s91, 0
    %s94 = sadd.s32 %s93, 1
    %s95 = scalar_select %p92, %s93, %s94
    %p98 = pneg %p92
    %p99 = scmp.eq.s32.totalorder %s10, 5
    %p100 = por %p98, %p99
    %p101 = scmp.ne.s32.totalorder %s93, %s96
    %p102 = scmp.eq.s32.totalorder %s10, 0
    %p103 = por %p101, %p102
    %p104 = scmp.ne.s32.totalorder %s93, %s96
    %p105 = scmp.eq.s32.totalorder %s15, 5
    %p106 = por %p104, %p105
    %p107 = scmp.ne.s32.totalorder %s96, %s97
    %p108 = scmp.eq.s32.totalorder %s15, 0
    %p109 = por %p107, %p108
    %p110 = scmp.ne.s32.totalorder %s96, %s97
    %p111 = scmp.eq.s32.totalorder %s16, 5
    %p112 = por %p110, %p111
    %p114 = scmp.ne.s32.totalorder %s97, %s113
    %p115 = scmp.eq.s32.totalorder %s16, 0
    %p116 = por %p114, %p115
    %p117 = scmp.le.s32.totalorder 1, %s10
    %p118 = scmp.lt.s32.totalorder %s10, 7
    %p119 = pnand %p117, %p118
    %p120 = pneg %p119
    // Predicated region
    $region9: #{cnn_encoder_forward.24} parent=5 // pred_check
      _
    $region10: #{cnn_encoder_forward.24} parent=5 // pred_check_branch
      %122 = sbr.rel (%p119) target = $region12
    $region11: #{cnn_encoder_forward.24} parent=5 // pred_region
      %s123 = ssub.s32 %s10, 1
      // Predicated region
      $region13: #{cnn_encoder_forward.24} parent=11 // pred_check
        %p124 = pneg %p57
      $region14: #{cnn_encoder_forward.24} parent=11 // pred_check_branch
        %126 = sbr.rel (%p124) target = $region16
      $region15: #{cnn_encoder_forward.24} parent=11 // pred_region
        _
      $region16: #{cnn_encoder_forward.24} parent=11 // pred_fallthru
        _
    $region12: #{cnn_encoder_forward.24} parent=5 // pred_fallthru
      _
    %p127 = scmp.lt.s32.totalorder %s10, 6
    // Predicated region
    $region17: #{cnn_encoder_forward.24} parent=5 // pred_check
      %p128 = pneg %p127
    $region18: #{cnn_encoder_forward.24} parent=5 // pred_check_branch
      %130 = sbr.rel (%p128) target = $region20
    $region19: #{cnn_encoder_forward.24} parent=5 // pred_region
      // Predicated region
      $region21: #{cnn_encoder_forward.24} parent=19 // pred_check
        %p131 = pneg %p30
      $region22: #{cnn_encoder_forward.24} parent=19 // pred_check_branch
        %133 = sbr.rel (%p131) target = $region24
      $region23: #{cnn_encoder_forward.24} parent=19 // pred_region
        %s134 = smul.u32 64, %s10
        %p135 = scmp.lt.s32.totalorder %s134, 383
        %s136 = scalar_select %p135, %s134, 383
        %s137 = smul.addr %s136, 4
        %s138 = scalar_lea.vmem %s0, %s137
        %s139 = smul.u32 64, %s10
      $region24: #{cnn_encoder_forward.24} parent=19 // pred_fallthru
        _
    $region20: #{cnn_encoder_forward.24} parent=5 // pred_fallthru
      _
    %p140 = scmp.le.s32.totalorder 1, %s10
    %p141 = scmp.lt.s32.totalorder %s10, 7
    %p142 = pnand %p140, %p141
    %p143 = pneg %p142
    // Predicated region
    $region25: #{cnn_encoder_forward.24} parent=5 // pred_check
      _
    $region26: #{cnn_encoder_forward.24} parent=5 // pred_check_branch
      %145 = sbr.rel (%p142) target = $region28
    $region27: #{cnn_encoder_forward.24} parent=5 // pred_region
      %s146 = ssub.s32 %s10, 1
      %s147 = smul.u32 64, %s15
      %p148 = scmp.lt.s32.totalorder %s147, 383
      %s149 = scalar_select %p148, %s147, 383
      %s150 = smul.addr %s149, 4
      %s151 = scalar_lea.vmem %s0, %s150
      %p152 = pneg %p36
      %p153 = pneg %p33
      %p154 = pneg %p57
      %p155 = pneg %p54
      %p156 = pneg %p83
      %p157 = pneg %p80
      %s158 = smul.u32 64, %s15
      %p159 = scmp.lt.s32.totalorder %s158, 383
      %s160 = scalar_select %p159, %s158, 383
      %s161 = smul.addr %s160, 8
      %s162 = scalar_lea.vmem %s2, %s161
      %p163 = pneg %p109
      %p164 = pneg %p106
      %p165 = scmp.lt.s32.totalorder %s15, 5
      %s166 = scalar_select %p165, %s15, 5
      %s167 = smul.addr %s166, 2
      %s168 = scalar_lea.vmem %s3, %s167
      %s169 = smul.u32 64, %s15
      %p170 = scmp.lt.s32.totalorder %s169, 383
      %s171 = scalar_select %p170, %s169, 383
      %s172 = smul.addr %s171, 4
      %s173 = scalar_lea.vmem %s0, %s172
      %s174 = smul.u32 64, %s15
      %s175 = smul.u32 64, %s15
      %p176 = scmp.lt.s32.totalorder %s175, 383
      %s177 = scalar_select %p176, %s175, 383
      %s178 = smul.addr %s177, 8
      %s179 = scalar_lea.vmem %s2, %s178
      %s180 = smul.u32 64, %s15
      %p181 = scmp.lt.s32.totalorder %s15, 5
      %s182 = scalar_select %p181, %s15, 5
      %s183 = smul.addr %s182, 2
      %s184 = scalar_lea.vmem %s3, %s183
      %v186 = vld [vmem:[%s173] sm:$0xf]
      %v187 = vld [vmem:[%s173 + $0x4] sm:$0xf]
      %v188 = vld [vmem:[%s173 + $0x8] sm:$0xf]
      %v189 = vld [vmem:[%s173 + $0xc] sm:$0xf]
      %v190 = vld [vmem:[%s173 + $0x10] sm:$0xf]
      %v191 = vld [vmem:[%s173 + $0x14] sm:$0xf]
      %v192 = vld [vmem:[%s173 + $0x18] sm:$0xf]
      %v193 = vld [vmem:[%s173 + $0x1c] sm:$0xf]
      %v194 = vld [vmem:[%s173 + $0x20] sm:$0xf]
      %v195 = vld [vmem:[%s173 + $0x24] sm:$0xf]
      %v196 = vld [vmem:[%s173 + $0x28] sm:$0xf]
      %v197 = vld [vmem:[%s173 + $0x2c] sm:$0xf]
      %v198 = vld [vmem:[%s173 + $0x30] sm:$0xf]
      %v199 = vld [vmem:[%s173 + $0x34] sm:$0xf]
      %v200 = vld [vmem:[%s173 + $0x38] sm:$0xf]
      %v201 = vld [vmem:[%s173 + $0x3c] sm:$0xf]
      %v202 = vld [vmem:[%s173 + $0x40] sm:$0xf]
      %v203 = vld [vmem:[%s173 + $0x44] sm:$0xf]
      %v204 = vld [vmem:[%s173 + $0x48] sm:$0xf]
      %v205 = vld [vmem:[%s173 + $0x4c] sm:$0xf]
      %v206 = vld [vmem:[%s173 + $0x50] sm:$0xf]
      %v207 = vld [vmem:[%s173 + $0x54] sm:$0xf]
      %v208 = vld [vmem:[%s173 + $0x58] sm:$0xf]
      %v209 = vld [vmem:[%s173 + $0x5c] sm:$0xf]
      %v210 = vld [vmem:[%s173 + $0x60] sm:$0xf]
      %v211 = vld [vmem:[%s173 + $0x64] sm:$0xf]
      %v212 = vld [vmem:[%s173 + $0x68] sm:$0xf]
      %v213 = vld [vmem:[%s173 + $0x6c] sm:$0xf]
      %v214 = vld [vmem:[%s173 + $0x70] sm:$0xf]
      %v215 = vld [vmem:[%s173 + $0x74] sm:$0xf]
      %v216 = vld [vmem:[%s173 + $0x78] sm:$0xf]
      %v217 = vld [vmem:[%s173 + $0x7c] sm:$0xf]
      %v218 = vld [vmem:[%s173 + $0x80] sm:$0xf]
      %v219 = vld [vmem:[%s173 + $0x84] sm:$0xf]
      %v220 = vld [vmem:[%s173 + $0x88] sm:$0xf]
      %v221 = vld [vmem:[%s173 + $0x8c] sm:$0xf]
      %v222 = vld [vmem:[%s173 + $0x90] sm:$0xf]
      %v223 = vld [vmem:[%s173 + $0x94] sm:$0xf]
      %v224 = vld [vmem:[%s173 + $0x98] sm:$0xf]
      %v225 = vld [vmem:[%s173 + $0x9c] sm:$0xf]
      %v226 = vld [vmem:[%s173 + $0xa0] sm:$0xf]
      %v227 = vld [vmem:[%s173 + $0xa4] sm:$0xf]
      %v228 = vld [vmem:[%s173 + $0xa8] sm:$0xf]
      %v229 = vld [vmem:[%s173 + $0xac] sm:$0xf]
      %v230 = vld [vmem:[%s173 + $0xb0] sm:$0xf]
      %v231 = vld [vmem:[%s173 + $0xb4] sm:$0xf]
      %v232 = vld [vmem:[%s173 + $0xb8] sm:$0xf]
      %v233 = vld [vmem:[%s173 + $0xbc] sm:$0xf]
      %v234 = vld [vmem:[%s173 + $0xc0] sm:$0xf]
      %v235 = vld [vmem:[%s173 + $0xc4] sm:$0xf]
      %v236 = vld [vmem:[%s173 + $0xc8] sm:$0xf]
      %v237 = vld [vmem:[%s173 + $0xcc] sm:$0xf]
      %v238 = vld [vmem:[%s173 + $0xd0] sm:$0xf]
      %v239 = vld [vmem:[%s173 + $0xd4] sm:$0xf]
      %v240 = vld [vmem:[%s173 + $0xd8] sm:$0xf]
      %v241 = vld [vmem:[%s173 + $0xdc] sm:$0xf]
      %v242 = vld [vmem:[%s173 + $0xe0] sm:$0xf]
      %v243 = vld [vmem:[%s173 + $0xe4] sm:$0xf]
      %v244 = vld [vmem:[%s173 + $0xe8] sm:$0xf]
      %v245 = vld [vmem:[%s173 + $0xec] sm:$0xf]
      %v246 = vld [vmem:[%s173 + $0xf0] sm:$0xf]
      %v247 = vld [vmem:[%s173 + $0xf4] sm:$0xf]
      %v248 = vld [vmem:[%s173 + $0xf8] sm:$0xf]
      %v249 = vld [vmem:[%s173 + $0xfc] sm:$0xf]
      %v250 = vld [vmem:[%s1] sm:$0xf]
      %v251 = vld [vmem:[%s1 + $0x4] sm:$0xf]
      %v252 = vld [vmem:[%s1 + $0x8] sm:$0xf]
      %v253 = vld [vmem:[%s1 + $0xc] sm:$0x3]
      %v318 = vunpack.c.l.b16 %v186
      %v319 = vunpack.c.l.b16 %v187
      %v320 = vunpack.c.l.b16 %v188
      %v321 = vunpack.c.l.b16 %v189
      %v322 = vunpack.c.l.b16 %v190
      %v323 = vunpack.c.l.b16 %v191
      %v324 = vunpack.c.l.b16 %v192
      %v325 = vunpack.c.l.b16 %v193
      %v326 = vunpack.c.l.b16 %v194
      %v327 = vunpack.c.l.b16 %v195
      %v328 = vunpack.c.l.b16 %v196
      %v329 = vunpack.c.l.b16 %v197
      %v330 = vunpack.c.l.b16 %v198
      %v331 = vunpack.c.l.b16 %v199
      %v332 = vunpack.c.l.b16 %v200
      %v333 = vunpack.c.l.b16 %v201
      %v334 = vunpack.c.l.b16 %v202
      %v335 = vunpack.c.l.b16 %v203
      %v336 = vunpack.c.l.b16 %v204
      %v337 = vunpack.c.l.b16 %v205
      %v338 = vunpack.c.l.b16 %v206
      %v339 = vunpack.c.l.b16 %v207
      %v340 = vunpack.c.l.b16 %v208
      %v341 = vunpack.c.l.b16 %v209
      %v342 = vunpack.c.l.b16 %v210
      %v343 = vunpack.c.l.b16 %v211
      %v344 = vunpack.c.l.b16 %v212
      %v345 = vunpack.c.l.b16 %v213
      %v346 = vunpack.c.l.b16 %v214
      %v347 = vunpack.c.l.b16 %v215
      %v348 = vunpack.c.l.b16 %v216
      %v349 = vunpack.c.l.b16 %v217
      %v350 = vunpack.c.l.b16 %v218
      %v351 = vunpack.c.l.b16 %v219
      %v352 = vunpack.c.l.b16 %v220
      %v353 = vunpack.c.l.b16 %v221
      %v354 = vunpack.c.l.b16 %v222
      %v355 = vunpack.c.l.b16 %v223
      %v356 = vunpack.c.l.b16 %v224
      %v357 = vunpack.c.l.b16 %v225
      %v358 = vunpack.c.l.b16 %v226
      %v359 = vunpack.c.l.b16 %v227
      %v360 = vunpack.c.l.b16 %v228
      %v361 = vunpack.c.l.b16 %v229
      %v362 = vunpack.c.l.b16 %v230
      %v363 = vunpack.c.l.b16 %v231
      %v364 = vunpack.c.l.b16 %v232
      %v365 = vunpack.c.l.b16 %v233
      %v366 = vunpack.c.l.b16 %v234
      %v367 = vunpack.c.l.b16 %v235
      %v368 = vunpack.c.l.b16 %v236
      %v369 = vunpack.c.l.b16 %v237
      %v370 = vunpack.c.l.b16 %v238
      %v371 = vunpack.c.l.b16 %v239
      %v372 = vunpack.c.l.b16 %v240
      %v373 = vunpack.c.l.b16 %v241
      %v374 = vunpack.c.l.b16 %v242
      %v375 = vunpack.c.l.b16 %v243
      %v376 = vunpack.c.l.b16 %v244
      %v377 = vunpack.c.l.b16 %v245
      %v378 = vunpack.c.l.b16 %v246
      %v379 = vunpack.c.l.b16 %v247
      %v380 = vunpack.c.l.b16 %v248
      %v381 = vunpack.c.l.b16 %v249
      %v382 = vpack.c.b16 %v319, %v318
      %v383 = vpack.c.b16 %v321, %v320
      %v384 = vpack.c.b16 %v323, %v322
      %v385 = vpack.c.b16 %v325, %v324
      %v386 = vpack.c.b16 %v327, %v326
      %v387 = vpack.c.b16 %v329, %v328
      %v388 = vpack.c.b16 %v331, %v330
      %v389 = vpack.c.b16 %v333, %v332
      %v390 = vpack.c.b16 %v335, %v334
      %v391 = vpack.c.b16 %v337, %v336
      %v392 = vpack.c.b16 %v339, %v338
      %v393 = vpack.c.b16 %v341, %v340
      %v394 = vpack.c.b16 %v343, %v342
      %v395 = vpack.c.b16 %v345, %v344
      %v396 = vpack.c.b16 %v347, %v346
      %v397 = vpack.c.b16 %v349, %v348
      %v398 = vpack.c.b16 %v351, %v350
      %v399 = vpack.c.b16 %v353, %v352
      %v400 = vpack.c.b16 %v355, %v354
      %v401 = vpack.c.b16 %v357, %v356
      %v402 = vpack.c.b16 %v359, %v358
      %v403 = vpack.c.b16 %v361, %v360
      %v404 = vpack.c.b16 %v363, %v362
      %v405 = vpack.c.b16 %v365, %v364
      %v406 = vpack.c.b16 %v367, %v366
      %v407 = vpack.c.b16 %v369, %v368
      %v408 = vpack.c.b16 %v371, %v370
      %v409 = vpack.c.b16 %v373, %v372
      %v410 = vpack.c.b16 %v375, %v374
      %v411 = vpack.c.b16 %v377, %v376
      %v412 = vpack.c.b16 %v379, %v378
      %v413 = vpack.c.b16 %v381, %v380
      %v418 = vunpack.c.l.b16 %v250
      %v419 = vunpack.c.l.b16 %v251
      %v420 = vunpack.c.l.b16 %v252
      %v421 = vunpack.c.l.b16 %v253
      %v422 = vpack.c.b16 %v419, %v418
      %v423 = vpack.c.b16 %v421, %v420
      %vm425 = vcmask 220160
      %v427 = vsel %vm425, %v382, 0
      %v430 = vsel %vm425, %v383, 0
      %v433 = vsel %vm425, %v384, 0
      %v436 = vsel %vm425, %v385, 0
      %v439 = vsel %vm425, %v386, 0
      %v442 = vsel %vm425, %v387, 0
      %v445 = vsel %vm425, %v388, 0
      %v448 = vsel %vm425, %v389, 0
      %v451 = vsel %vm425, %v390, 0
      %v454 = vsel %vm425, %v391, 0
      %v457 = vsel %vm425, %v392, 0
      %v460 = vsel %vm425, %v393, 0
      %v463 = vsel %vm425, %v394, 0
      %v466 = vsel %vm425, %v395, 0
      %v469 = vsel %vm425, %v396, 0
      %v472 = vsel %vm425, %v397, 0
      %v475 = vsel %vm425, %v398, 0
      %v478 = vsel %vm425, %v399, 0
      %v481 = vsel %vm425, %v400, 0
      %v484 = vsel %vm425, %v401, 0
      %v487 = vsel %vm425, %v402, 0
      %v490 = vsel %vm425, %v403, 0
      %v493 = vsel %vm425, %v404, 0
      %v496 = vsel %vm425, %v405, 0
      %v499 = vsel %vm425, %v406, 0
      %v502 = vsel %vm425, %v407, 0
      %v505 = vsel %vm425, %v408, 0
      %v508 = vsel %vm425, %v409, 0
      %v511 = vsel %vm425, %v410, 0
      %v514 = vsel %vm425, %v411, 0
      %v517 = vsel %vm425, %v412, 0
      %v520 = vsel %vm425, %v413, 0
      %vm522 = vcmask 1044480
      %vm523 = vcmask 1045504
      %v524 = vsel %vm522, 4294967295, 65535
      %v525 = vsel %vm523, %v524, 0
      %v527 = vand.u32 %v423, %v525
      %529 = vmatprep.subr.bf16.mxu0 0
      %530 = vmatpush1.bf16.msra.mxu0 %v422
      %531 = vmatprep.subr.bf16.mxu0 0
      %532 = vmatpush1.bf16.msra.mxu0 %v527
      %533 = vmatprep.subr.bf16.mxu0 0
      %534 = vmatpush1.bf16.msra.mxu0 0
      %535 = vmatprep.subr.bf16.mxu0 0
      %536 = vmatpush1.bf16.msra.mxu0 0
      %537 = vmatprep.subr.bf16.mxu0 0
      %538 = vmatpush1.bf16.msra.mxu0 0
      %539 = vmatprep.subr.bf16.mxu0 0
      %540 = vmatpush1.bf16.msra.mxu0 0
      %541 = vmatprep.subr.bf16.mxu0 0
      %542 = vmatpush1.bf16.msra.mxu0 0
      %543 = vmatprep.subr.bf16.mxu0 0
      %544 = vmatpush1.bf16.msra.mxu0 0
      %545 = vmatprep.subr.bf16.mxu0 0
      %546 = vmatpush1.bf16.msra.mxu0 0
      %547 = vmatprep.subr.bf16.mxu0 0
      %548 = vmatpush1.bf16.msra.mxu0 0
      %549 = vmatprep.subr.bf16.mxu0 0
      %550 = vmatpush1.bf16.msra.mxu0 0
      %551 = vmatprep.subr.bf16.mxu0 0
      %552 = vmatpush1.bf16.msra.mxu0 0
      %553 = vmatprep.subr.bf16.mxu0 0
      %554 = vmatpush1.bf16.msra.mxu0 0
      %555 = vmatprep.subr.bf16.mxu0 0
      %556 = vmatpush1.bf16.msra.mxu0 0
      %557 = vmatprep.subr.bf16.mxu0 0
      %558 = vmatpush1.bf16.msra.mxu0 0
      %559 = vmatprep.subr.bf16.mxu0 0
      %560 = vmatpush1.bf16.msra.mxu0 0
      %561 = vmatprep.mubr.bf16.mxu0 0
      %562 = vmatmul.mubr.bf16.gmra.mrb[0].mxu0 %v427
      %v563 = vpop.f32.mrb[0].mxu0
      %v564 = vadd.f32 0.0, %v563
      %v565 = vpop.f32.mrb[0].mxu0
      %v566 = vpop.f32.mrb[0].mxu0
      %v567 = vadd.f32 0.0, %v566
      %v568 = vpop.f32.mrb[0].mxu0
      %569 = vmatprep.mubr.bf16.mxu0 0
      %570 = vmatmul.mubr.bf16.gmra.mrb[0].mxu0 %v430
      %v571 = vpop.f32.mrb[0].mxu0
      %v572 = vadd.f32 0.0, %v571
      %v573 = vpop.f32.mrb[0].mxu0
      %v574 = vpop.f32.mrb[0].mxu0
      %v575 = vadd.f32 0.0, %v574
      %v576 = vpop.f32.mrb[0].mxu0
      %577 = vmatprep.mubr.bf16.mxu0 0
      %578 = vmatmul.mubr.bf16.gmra.mrb[0].mxu0 %v433
      %v579 = vpop.f32.mrb[0].mxu0
      %v580 = vadd.f32 0.0, %v579
      %v581 = vpop.f32.mrb[0].mxu0
      %v582 = vpop.f32.mrb[0].mxu0
      %v583 = vadd.f32 0.0, %v582
      %v584 = vpop.f32.mrb[0].mxu0
      %585 = vmatprep.mubr.bf16.mxu0 0
      %586 = vmatmul.mubr.bf16.gmra.mrb[0].mxu0 %v436
      %v587 = vpop.f32.mrb[0].mxu0
      %v588 = vadd.f32 0.0, %v587
      %v589 = vpop.f32.mrb[0].mxu0
      %v590 = vpop.f32.mrb[0].mxu0
      %v591 = vadd.f32 0.0, %v590
      %v592 = vpop.f32.mrb[0].mxu0
      %593 = vmatprep.mubr.bf16.mxu0 0
      %594 = vmatmul.mubr.bf16.gmra.mrb[0].mxu0 %v439
      %v595 = vpop.f32.mrb[0].mxu0
      %v596 = vadd.f32 0.0, %v595
      %v597 = vpop.f32.mrb[0].mxu0
      %v598 = vpop.f32.mrb[0].mxu0
      %v599 = vadd.f32 0.0, %v598
      %v600 = vpop.f32.mrb[0].mxu0
      %601 = vmatprep.mubr.bf16.mxu0 0
      %602 = vmatmul.mubr.bf16.gmra.mrb[0].mxu0 %v442
      %v603 = vpop.f32.mrb[0].mxu0
      %v604 = vadd.f32 0.0, %v603
      %v605 = vpop.f32.mrb[0].mxu0
      %v606 = vpop.f32.mrb[0].mxu0
      %v607 = vadd.f32 0.0, %v606
      %v608 = vpop.f32.mrb[0].mxu0
      %609 = vmatprep.mubr.bf16.mxu0 0
      %610 = vmatmul.mubr.bf16.gmra.mrb[0].mxu0 %v445
      %v611 = vpop.f32.mrb[0].mxu0
      %v612 = vadd.f32 0.0, %v611
      %v613 = vpop.f32.mrb[0].mxu0
      %v614 = vpop.f32.mrb[0].mxu0
      %v615 = vadd.f32 0.0, %v614
      %v616 = vpop.f32.mrb[0].mxu0
      %617 = vmatprep.mubr.bf16.mxu0 0
      %618 = vmatmul.mubr.bf16.gmra.mrb[0].mxu0 %v448
      %v619 = vpop.f32.mrb[0].mxu0
      %v620 = vadd.f32 0.0, %v619
      %v621 = vpop.f32.mrb[0].mxu0
      %v622 = vpop.f32.mrb[0].mxu0
      %v623 = vadd.f32 0.0, %v622
      %v624 = vpop.f32.mrb[0].mxu0
      %625 = vmatprep.mubr.bf16.mxu0 0
      %626 = vmatmul.mubr.bf16.gmra.mrb[0].mxu0 %v451
      %v627 = vpop.f32.mrb[0].mxu0
      %v628 = vadd.f32 0.0, %v627
      %v629 = vpop.f32.mrb[0].mxu0
      %v630 = vpop.f32.mrb[0].mxu0
      %v631 = vadd.f32 0.0, %v630
      %v632 = vpop.f32.mrb[0].mxu0
      %633 = vmatprep.mubr.bf16.mxu0 0
      %634 = vmatmul.mubr.bf16.gmra.mrb[0].mxu0 %v454
      %v635 = vpop.f32.mrb[0].mxu0
      %v636 = vadd.f32 0.0, %v635
      %v637 = vpop.f32.mrb[0].mxu0
      %v638 = vpop.f32.mrb[0].mxu0
      %v639 = vadd.f32 0.0, %v638
      %v640 = vpop.f32.mrb[0].mxu0
      %641 = vmatprep.mubr.bf16.mxu0 0
      %642 = vmatmul.mubr.bf16.gmra.mrb[0].mxu0 %v457
      %v643 = vpop.f32.mrb[0].mxu0
      %v644 = vadd.f32 0.0, %v643
      %v645 = vpop.f32.mrb[0].mxu0
      %v646 = vpop.f32.mrb[0].mxu0
      %v647 = vadd.f32 0.0, %v646
      %v648 = vpop.f32.mrb[0].mxu0
      %649 = vmatprep.mubr.bf16.mxu0 0
      %650 = vmatmul.mubr.bf16.gmra.mrb[0].mxu0 %v460
      %v651 = vpop.f32.mrb[0].mxu0
      %v652 = vadd.f32 0.0, %v651
      %v653 = vpop.f32.mrb[0].mxu0
      %v654 = vpop.f32.mrb[0].mxu0
      %v655 = vadd.f32 0.0, %v654
      %v656 = vpop.f32.mrb[0].mxu0
      %657 = vmatprep.mubr.bf16.mxu0 0
      %658 = vmatmul.mubr.bf16.gmra.mrb[0].mxu0 %v463
      %v659 = vpop.f32.mrb[0].mxu0
      %v660 = vadd.f32 0.0, %v659
      %v661 = vpop.f32.mrb[0].mxu0
      %v662 = vpop.f32.mrb[0].mxu0
      %v663 = vadd.f32 0.0, %v662
      %v664 = vpop.f32.mrb[0].mxu0
      %665 = vmatprep.mubr.bf16.mxu0 0
      %666 = vmatmul.mubr.bf16.gmra.mrb[0].mxu0 %v466
      %v667 = vpop.f32.mrb[0].mxu0
      %v668 = vadd.f32 0.0, %v667
      %v669 = vpop.f32.mrb[0].mxu0
      %v670 = vpop.f32.mrb[0].mxu0
      %v671 = vadd.f32 0.0, %v670
      %v672 = vpop.f32.mrb[0].mxu0
      %673 = vmatprep.mubr.bf16.mxu0 0
      %674 = vmatmul.mubr.bf16.gmra.mrb[0].mxu0 %v469
      %v675 = vpop.f32.mrb[0].mxu0
      %v676 = vadd.f32 0.0, %v675
      %v677 = vpop.f32.mrb[0].mxu0
      %v678 = vpop.f32.mrb[0].mxu0
      %v679 = vadd.f32 0.0, %v678
      %v680 = vpop.f32.mrb[0].mxu0
      %681 = vmatprep.mubr.bf16.mxu0 0
      %682 = vmatmul.mubr.bf16.gmra.mrb[0].mxu0 %v472
      %v683 = vpop.f32.mrb[0].mxu0
      %v684 = vadd.f32 0.0, %v683
      %v685 = vpop.f32.mrb[0].mxu0
      %v686 = vpop.f32.mrb[0].mxu0
      %v687 = vadd.f32 0.0, %v686
      %v688 = vpop.f32.mrb[0].mxu0
      %689 = vmatprep.mubr.bf16.mxu0 0
      %690 = vmatmul.mubr.bf16.gmra.mrb[0].mxu0 %v475
      %v691 = vpop.f32.mrb[0].mxu0
      %v692 = vadd.f32 0.0, %v691
      %v693 = vpop.f32.mrb[0].mxu0
      %v694 = vpop.f32.mrb[0].mxu0
      %v695 = vadd.f32 0.0, %v694
      %v696 = vpop.f32.mrb[0].mxu0
      %697 = vmatprep.mubr.bf16.mxu0 0
      %698 = vmatmul.mubr.bf16.gmra.mrb[0].mxu0 %v478
      %v699 = vpop.f32.mrb[0].mxu0
      %v700 = vadd.f32 0.0, %v699
      %v701 = vpop.f32.mrb[0].mxu0
      %v702 = vpop.f32.mrb[0].mxu0
      %v703 = vadd.f32 0.0, %v702
      %v704 = vpop.f32.mrb[0].mxu0
      %705 = vmatprep.mubr.bf16.mxu0 0
      %706 = vmatmul.mubr.bf16.gmra.mrb[0].mxu0 %v481
      %v707 = vpop.f32.mrb[0].mxu0
      %v708 = vadd.f32 0.0, %v707
      %v709 = vpop.f32.mrb[0].mxu0
      %v710 = vpop.f32.mrb[0].mxu0
      %v711 = vadd.f32 0.0, %v710
      %v712 = vpop.f32.mrb[0].mxu0
      %713 = vmatprep.mubr.bf16.mxu0 0
      %714 = vmatmul.mubr.bf16.gmra.mrb[0].mxu0 %v484
      %v715 = vpop.f32.mrb[0].mxu0
      %v716 = vadd.f32 0.0, %v715
      %v717 = vpop.f32.mrb[0].mxu0
      %v718 = vpop.f32.mrb[0].mxu0
      %v719 = vadd.f32 0.0, %v718
      %v720 = vpop.f32.mrb[0].mxu0
      %721 = vmatprep.mubr.bf16.mxu0 0
      %722 = vmatmul.mubr.bf16.gmra.mrb[0].mxu0 %v487
      %v723 = vpop.f32.mrb[0].mxu0
      %v724 = vadd.f32 0.0, %v723
      %v725 = vpop.f32.mrb[0].mxu0
      %v726 = vpop.f32.mrb[0].mxu0
      %v727 = vadd.f32 0.0, %v726
      %v728 = vpop.f32.mrb[0].mxu0
      %729 = vmatprep.mubr.bf16.mxu0 0
      %730 = vmatmul.mubr.bf16.gmra.mrb[0].mxu0 %v490
      %v731 = vpop.f32.mrb[0].mxu0
      %v732 = vadd.f32 0.0, %v731
      %v733 = vpop.f32.mrb[0].mxu0
      %v734 = vpop.f32.mrb[0].mxu0
      %v735 = vadd.f32 0.0, %v734
      %v736 = vpop.f32.mrb[0].mxu0
      %737 = vmatprep.mubr.bf16.mxu0 0
      %738 = vmatmul.mubr.bf16.gmra.mrb[0].mxu0 %v493
      %v739 = vpop.f32.mrb[0].mxu0
      %v740 = vadd.f32 0.0, %v739
      %v741 = vpop.f32.mrb[0].mxu0
      %v742 = vpop.f32.mrb[0].mxu0
      %v743 = vadd.f32 0.0, %v742
      %v744 = vpop.f32.mrb[0].mxu0
      %745 = vmatprep.mubr.bf16.mxu0 0
      %746 = vmatmul.mubr.bf16.gmra.mrb[0].mxu0 %v496
      %v747 = vpop.f32.mrb[0].mxu0
      %v748 = vadd.f32 0.0, %v747
      %v749 = vpop.f32.mrb[0].mxu0
      %v750 = vpop.f32.mrb[0].mxu0
      %v751 = vadd.f32 0.0, %v750
      %v752 = vpop.f32.mrb[0].mxu0
      %753 = vmatprep.mubr.bf16.mxu0 0
      %754 = vmatmul.mubr.bf16.gmra.mrb[0].mxu0 %v499
      %v755 = vpop.f32.mrb[0].mxu0
      %v756 = vadd.f32 0.0, %v755
      %v757 = vpop.f32.mrb[0].mxu0
      %v758 = vpop.f32.mrb[0].mxu0
      %v759 = vadd.f32 0.0, %v758
      %v760 = vpop.f32.mrb[0].mxu0
      %761 = vmatprep.mubr.bf16.mxu0 0
      %762 = vmatmul.mubr.bf16.gmra.mrb[0].mxu0 %v502
      %v763 = vpop.f32.mrb[0].mxu0
      %v764 = vadd.f32 0.0, %v763
      %v765 = vpop.f32.mrb[0].mxu0
      %v766 = vpop.f32.mrb[0].mxu0
      %v767 = vadd.f32 0.0, %v766
      %v768 = vpop.f32.mrb[0].mxu0
      %769 = vmatprep.mubr.bf16.mxu0 0
      %770 = vmatmul.mubr.bf16.gmra.mrb[0].mxu0 %v505
      %v771 = vpop.f32.mrb[0].mxu0
      %v772 = vadd.f32 0.0, %v771
      %v773 = vpop.f32.mrb[0].mxu0
      %v774 = vpop.f32.mrb[0].mxu0
      %v775 = vadd.f32 0.0, %v774
      %v776 = vpop.f32.mrb[0].mxu0
      %777 = vmatprep.mubr.bf16.mxu0 0
      %778 = vmatmul.mubr.bf16.gmra.mrb[0].mxu0 %v508
      %v779 = vpop.f32.mrb[0].mxu0
      %v780 = vadd.f32 0.0, %v779
      %v781 = vpop.f32.mrb[0].mxu0
      %v782 = vpop.f32.mrb[0].mxu0
      %v783 = vadd.f32 0.0, %v782
      %v784 = vpop.f32.mrb[0].mxu0
      %785 = vmatprep.mubr.bf16.mxu0 0
      %786 = vmatmul.mubr.bf16.gmra.mrb[0].mxu0 %v511
      %v787 = vpop.f32.mrb[0].mxu0
      %v788 = vadd.f32 0.0, %v787
      %v789 = vpop.f32.mrb[0].mxu0
      %v790 = vpop.f32.mrb[0].mxu0
      %v791 = vadd.f32 0.0, %v790
      %v792 = vpop.f32.mrb[0].mxu0
      %793 = vmatprep.mubr.bf16.mxu0 0
      %794 = vmatmul.mubr.bf16.gmra.mrb[0].mxu0 %v514
      %v795 = vpop.f32.mrb[0].mxu0
      %v796 = vadd.f32 0.0, %v795
      %v797 = vpop.f32.mrb[0].mxu0
      %v798 = vpop.f32.mrb[0].mxu0
      %v799 = vadd.f32 0.0, %v798
      %v800 = vpop.f32.mrb[0].mxu0
      %801 = vmatprep.mubr.bf16.mxu0 0
      %802 = vmatmul.mubr.bf16.gmra.mrb[0].mxu0 %v517
      %v803 = vpop.f32.mrb[0].mxu0
      %v804 = vadd.f32 0.0, %v803
      %v805 = vpop.f32.mrb[0].mxu0
      %v806 = vpop.f32.mrb[0].mxu0
      %v807 = vadd.f32 0.0, %v806
      %v808 = vpop.f32.mrb[0].mxu0
      %809 = vmatprep.mubr.bf16.mxu0 0
      %810 = vmatmul.mubr.bf16.gmra.mrb[0].mxu0 %v520
      %v811 = vpop.f32.mrb[0].mxu0
      %v812 = vadd.f32 0.0, %v811
      %v813 = vpop.f32.mrb[0].mxu0
      %v814 = vpop.f32.mrb[0].mxu0
      %v815 = vadd.f32 0.0, %v814
      %v816 = vpop.f32.mrb[0].mxu0
      %817 = vdwg.mxu0
      %vm818 = vcmask 64512
      %819 = vst.msk [vmem:[%s179] sm:$0xff] %vm818, %v564
      %820 = vst.msk [vmem:[%s179 + $0x8] sm:$0xff] %vm818, %v567
      %821 = vst.msk [vmem:[%s179 + $0x10] sm:$0xff] %vm818, %v572
      %822 = vst.msk [vmem:[%s179 + $0x18] sm:$0xff] %vm818, %v575
      %823 = vst.msk [vmem:[%s179 + $0x20] sm:$0xff] %vm818, %v580
      %824 = vst.msk [vmem:[%s179 + $0x28] sm:$0xff] %vm818, %v583
      %825 = vst.msk [vmem:[%s179 + $0x30] sm:$0xff] %vm818, %v588
      %826 = vst.msk [vmem:[%s179 + $0x38] sm:$0xff] %vm818, %v591
      %827 = vst.msk [vmem:[%s179 + $0x40] sm:$0xff] %vm818, %v596
      %828 = vst.msk [vmem:[%s179 + $0x48] sm:$0xff] %vm818, %v599
      %829 = vst.msk [vmem:[%s179 + $0x50] sm:$0xff] %vm818, %v604
      %830 = vst.msk [vmem:[%s179 + $0x58] sm:$0xff] %vm818, %v607
      %831 = vst.msk [vmem:[%s179 + $0x60] sm:$0xff] %vm818, %v612
      %832 = vst.msk [vmem:[%s179 + $0x68] sm:$0xff] %vm818, %v615
      %833 = vst.msk [vmem:[%s179 + $0x70] sm:$0xff] %vm818, %v620
      %834 = vst.msk [vmem:[%s179 + $0x78] sm:$0xff] %vm818, %v623
      %835 = vst.msk [vmem:[%s179 + $0x80] sm:$0xff] %vm818, %v628
      %836 = vst.msk [vmem:[%s179 + $0x88] sm:$0xff] %vm818, %v631
      %837 = vst.msk [vmem:[%s179 + $0x90] sm:$0xff] %vm818, %v636
      %838 = vst.msk [vmem:[%s179 + $0x98] sm:$0xff] %vm818, %v639
      %839 = vst.msk [vmem:[%s179 + $0xa0] sm:$0xff] %vm818, %v644
      %840 = vst.msk [vmem:[%s179 + $0xa8] sm:$0xff] %vm818, %v647
      %841 = vst.msk [vmem:[%s179 + $0xb0] sm:$0xff] %vm818, %v652
      %842 = vst.msk [vmem:[%s179 + $0xb8] sm:$0xff] %vm818, %v655
      %843 = vst.msk [vmem:[%s179 + $0xc0] sm:$0xff] %vm818, %v660
      %844 = vst.msk [vmem:[%s179 + $0xc8] sm:$0xff] %vm818, %v663
      %845 = vst.msk [vmem:[%s179 + $0xd0] sm:$0xff] %vm818, %v668
      %846 = vst.msk [vmem:[%s179 + $0xd8] sm:$0xff] %vm818, %v671
      %847 = vst.msk [vmem:[%s179 + $0xe0] sm:$0xff] %vm818, %v676
      %848 = vst.msk [vmem:[%s179 + $0xe8] sm:$0xff] %vm818, %v679
      %849 = vst.msk [vmem:[%s179 + $0xf0] sm:$0xff] %vm818, %v684
      %850 = vst.msk [vmem:[%s179 + $0xf8] sm:$0xff] %vm818, %v687
      %851 = vst.msk [vmem:[%s179 + $0x100] sm:$0xff] %vm818, %v692
      %852 = vst.msk [vmem:[%s179 + $0x108] sm:$0xff] %vm818, %v695
      %853 = vst.msk [vmem:[%s179 + $0x110] sm:$0xff] %vm818, %v700
      %854 = vst.msk [vmem:[%s179 + $0x118] sm:$0xff] %vm818, %v703
      %855 = vst.msk [vmem:[%s179 + $0x120] sm:$0xff] %vm818, %v708
      %856 = vst.msk [vmem:[%s179 + $0x128] sm:$0xff] %vm818, %v711
      %857 = vst.msk [vmem:[%s179 + $0x130] sm:$0xff] %vm818, %v716
      %858 = vst.msk [vmem:[%s179 + $0x138] sm:$0xff] %vm818, %v719
      %859 = vst.msk [vmem:[%s179 + $0x140] sm:$0xff] %vm818, %v724
      %860 = vst.msk [vmem:[%s179 + $0x148] sm:$0xff] %vm818, %v727
      %861 = vst.msk [vmem:[%s179 + $0x150] sm:$0xff] %vm818, %v732
      %862 = vst.msk [vmem:[%s179 + $0x158] sm:$0xff] %vm818, %v735
      %863 = vst.msk [vmem:[%s179 + $0x160] sm:$0xff] %vm818, %v740
      %864 = vst.msk [vmem:[%s179 + $0x168] sm:$0xff] %vm818, %v743
      %865 = vst.msk [vmem:[%s179 + $0x170] sm:$0xff] %vm818, %v748
      %866 = vst.msk [vmem:[%s179 + $0x178] sm:$0xff] %vm818, %v751
      %867 = vst.msk [vmem:[%s179 + $0x180] sm:$0xff] %vm818, %v756
      %868 = vst.msk [vmem:[%s179 + $0x188] sm:$0xff] %vm818, %v759
      %869 = vst.msk [vmem:[%s179 + $0x190] sm:$0xff] %vm818, %v764
      %870 = vst.msk [vmem:[%s179 + $0x198] sm:$0xff] %vm818, %v767
      %871 = vst.msk [vmem:[%s179 + $0x1a0] sm:$0xff] %vm818, %v772
      %872 = vst.msk [vmem:[%s179 + $0x1a8] sm:$0xff] %vm818, %v775
      %873 = vst.msk [vmem:[%s179 + $0x1b0] sm:$0xff] %vm818, %v780
      %874 = vst.msk [vmem:[%s179 + $0x1b8] sm:$0xff] %vm818, %v783
      %875 = vst.msk [vmem:[%s179 + $0x1c0] sm:$0xff] %vm818, %v788
      %876 = vst.msk [vmem:[%s179 + $0x1c8] sm:$0xff] %vm818, %v791
      %877 = vst.msk [vmem:[%s179 + $0x1d0] sm:$0xff] %vm818, %v796
      %878 = vst.msk [vmem:[%s179 + $0x1d8] sm:$0xff] %vm818, %v799
      %879 = vst.msk [vmem:[%s179 + $0x1e0] sm:$0xff] %vm818, %v804
      %880 = vst.msk [vmem:[%s179 + $0x1e8] sm:$0xff] %vm818, %v807
      %881 = vst.msk [vmem:[%s179 + $0x1f0] sm:$0xff] %vm818, %v812
      %882 = vst.msk [vmem:[%s179 + $0x1f8] sm:$0xff] %vm818, %v815
      %v883 = vsel %vm818, %v564, 0.0
      %v884 = vsel %vm818, %v567, 0.0
      %v885 = vadd.f32 %v883, %v884
      %v886 = vsel %vm818, %v572, 0.0
      %v887 = vadd.f32 %v885, %v886
      %v888 = vsel %vm818, %v575, 0.0
      %v889 = vadd.f32 %v887, %v888
      %v890 = vsel %vm818, %v580, 0.0
      %v891 = vadd.f32 %v889, %v890
      %v892 = vsel %vm818, %v583, 0.0
      %v893 = vadd.f32 %v891, %v892
      %v894 = vsel %vm818, %v588, 0.0
      %v895 = vadd.f32 %v893, %v894
      %v896 = vsel %vm818, %v591, 0.0
      %v897 = vadd.f32 %v895, %v896
      %v898 = vsel %vm818, %v596, 0.0
      %v899 = vadd.f32 %v897, %v898
      %v900 = vsel %vm818, %v599, 0.0
      %v901 = vadd.f32 %v899, %v900
      %v902 = vsel %vm818, %v604, 0.0
      %v903 = vadd.f32 %v901, %v902
      %v904 = vsel %vm818, %v607, 0.0
      %v905 = vadd.f32 %v903, %v904
      %v906 = vsel %vm818, %v612, 0.0
      %v907 = vadd.f32 %v905, %v906
      %v908 = vsel %vm818, %v615, 0.0
      %v909 = vadd.f32 %v907, %v908
      %v910 = vsel %vm818, %v620, 0.0
      %v911 = vadd.f32 %v909, %v910
      %v912 = vsel %vm818, %v623, 0.0
      %v913 = vadd.f32 %v911, %v912
      %v914 = vsel %vm818, %v628, 0.0
      %v915 = vadd.f32 %v913, %v914
      %v916 = vsel %vm818, %v631, 0.0
      %v917 = vadd.f32 %v915, %v916
      %v918 = vsel %vm818, %v636, 0.0
      %v919 = vadd.f32 %v917, %v918
      %v920 = vsel %vm818, %v639, 0.0
      %v921 = vadd.f32 %v919, %v920
      %v922 = vsel %vm818, %v644, 0.0
      %v923 = vadd.f32 %v921, %v922
      %v924 = vsel %vm818, %v647, 0.0
      %v925 = vadd.f32 %v923, %v924
      %v926 = vsel %vm818, %v652, 0.0
      %v927 = vadd.f32 %v925, %v926
      %v928 = vsel %vm818, %v655, 0.0
      %v929 = vadd.f32 %v927, %v928
      %v930 = vsel %vm818, %v660, 0.0
      %v931 = vadd.f32 %v929, %v930
      %v932 = vsel %vm818, %v663, 0.0
      %v933 = vadd.f32 %v931, %v932
      %v934 = vsel %vm818, %v668, 0.0
      %v935 = vadd.f32 %v933, %v934
      %v936 = vsel %vm818, %v671, 0.0
      %v937 = vadd.f32 %v935, %v936
      %v938 = vsel %vm818, %v676, 0.0
      %v939 = vadd.f32 %v937, %v938
      %v940 = vsel %vm818, %v679, 0.0
      %v941 = vadd.f32 %v939, %v940
      %v942 = vsel %vm818, %v684, 0.0
      %v943 = vadd.f32 %v941, %v942
      %v944 = vsel %vm818, %v687, 0.0
      %v945 = vadd.f32 %v943, %v944
      %v946 = vsel %vm818, %v692, 0.0
      %v947 = vadd.f32 %v945, %v946
      %v948 = vsel %vm818, %v695, 0.0
      %v949 = vadd.f32 %v947, %v948
      %v950 = vsel %vm818, %v700, 0.0
      %v951 = vadd.f32 %v949, %v950
      %v952 = vsel %vm818, %v703, 0.0
      %v953 = vadd.f32 %v951, %v952
      %v954 = vsel %vm818, %v708, 0.0
      %v955 = vadd.f32 %v953, %v954
      %v956 = vsel %vm818, %v711, 0.0
      %v957 = vadd.f32 %v955, %v956
      %v958 = vsel %vm818, %v716, 0.0
      %v959 = vadd.f32 %v957, %v958
      %v960 = vsel %vm818, %v719, 0.0
      %v961 = vadd.f32 %v959, %v960
      %v962 = vsel %vm818, %v724, 0.0
      %v963 = vadd.f32 %v961, %v962
      %v964 = vsel %vm818, %v727, 0.0
      %v965 = vadd.f32 %v963, %v964
      %v966 = vsel %vm818, %v732, 0.0
      %v967 = vadd.f32 %v965, %v966
      %v968 = vsel %vm818, %v735, 0.0
      %v969 = vadd.f32 %v967, %v968
      %v970 = vsel %vm818, %v740, 0.0
      %v971 = vadd.f32 %v969, %v970
      %v972 = vsel %vm818, %v743, 0.0
      %v973 = vadd.f32 %v971, %v972
      %v974 = vsel %vm818, %v748, 0.0
      %v975 = vadd.f32 %v973, %v974
      %v976 = vsel %vm818, %v751, 0.0
      %v977 = vadd.f32 %v975, %v976
      %v978 = vsel %vm818, %v756, 0.0
      %v979 = vadd.f32 %v977, %v978
      %v980 = vsel %vm818, %v759, 0.0
      %v981 = vadd.f32 %v979, %v980
      %v982 = vsel %vm818, %v764, 0.0
      %v983 = vadd.f32 %v981, %v982
      %v984 = vsel %vm818, %v767, 0.0
      %v985 = vadd.f32 %v983, %v984
      %v986 = vsel %vm818, %v772, 0.0
      %v987 = vadd.f32 %v985, %v986
      %v988 = vsel %vm818, %v775, 0.0
      %v989 = vadd.f32 %v987, %v988
      %v990 = vsel %vm818, %v780, 0.0
      %v991 = vadd.f32 %v989, %v990
      %v992 = vsel %vm818, %v783, 0.0
      %v993 = vadd.f32 %v991, %v992
      %v994 = vsel %vm818, %v788, 0.0
      %v995 = vadd.f32 %v993, %v994
      %v996 = vsel %vm818, %v791, 0.0
      %v997 = vadd.f32 %v995, %v996
      %v998 = vsel %vm818, %v796, 0.0
      %v999 = vadd.f32 %v997, %v998
      %v1000 = vsel %vm818, %v799, 0.0
      %v1001 = vadd.f32 %v999, %v1000
      %v1002 = vsel %vm818, %v804, 0.0
      %v1003 = vadd.f32 %v1001, %v1002
      %v1004 = vsel %vm818, %v807, 0.0
      %v1005 = vadd.f32 %v1003, %v1004
      %v1006 = vsel %vm818, %v812, 0.0
      %v1007 = vadd.f32 %v1005, %v1006
      %v1008 = vsel %vm818, %v815, 0.0
      %v1009 = vadd.f32 %v1007, %v1008
      %v1010 = vrot.slane %v1009, 4
      %v1011 = vadd.f32 %v1009, %v1010
      %v1012 = vrot.slane %v1011, 2
      %v1013 = vadd.f32 %v1011, %v1012
      %v1014 = vrot.slane %v1013, 1
      %v1015 = vadd.f32 %v1013, %v1014
      %v1016 = vmul.f32 %v564, %v564
      %v1017 = vmul.f32 %v567, %v567
      %v1018 = vmul.f32 %v572, %v572
      %v1019 = vmul.f32 %v575, %v575
      %v1020 = vmul.f32 %v580, %v580
      %v1021 = vmul.f32 %v583, %v583
      %v1022 = vmul.f32 %v588, %v588
      %v1023 = vmul.f32 %v591, %v591
      %v1024 = vmul.f32 %v596, %v596
      %v1025 = vmul.f32 %v599, %v599
      %v1026 = vmul.f32 %v604, %v604
      %v1027 = vmul.f32 %v607, %v607
      %v1028 = vmul.f32 %v612, %v612
      %v1029 = vmul.f32 %v615, %v615
      %v1030 = vmul.f32 %v620, %v620
      %v1031 = vmul.f32 %v623, %v623
      %v1032 = vmul.f32 %v628, %v628
      %v1033 = vmul.f32 %v631, %v631
      %v1034 = vmul.f32 %v636, %v636
      %v1035 = vmul.f32 %v639, %v639
      %v1036 = vmul.f32 %v644, %v644
      %v1037 = vmul.f32 %v647, %v647
      %v1038 = vmul.f32 %v652, %v652
      %v1039 = vmul.f32 %v655, %v655
      %v1040 = vmul.f32 %v660, %v660
      %v1041 = vmul.f32 %v663, %v663
      %v1042 = vmul.f32 %v668, %v668
      %v1043 = vmul.f32 %v671, %v671
      %v1044 = vmul.f32 %v676, %v676
      %v1045 = vmul.f32 %v679, %v679
      %v1046 = vmul.f32 %v684, %v684
      %v1047 = vmul.f32 %v687, %v687
      %v1048 = vmul.f32 %v692, %v692
      %v1049 = vmul.f32 %v695, %v695
      %v1050 = vmul.f32 %v700, %v700
      %v1051 = vmul.f32 %v703, %v703
      %v1052 = vmul.f32 %v708, %v708
      %v1053 = vmul.f32 %v711, %v711
      %v1054 = vmul.f32 %v716, %v716
      %v1055 = vmul.f32 %v719, %v719
      %v1056 = vmul.f32 %v724, %v724
      %v1057 = vmul.f32 %v727, %v727
      %v1058 = vmul.f32 %v732, %v732
      %v1059 = vmul.f32 %v735, %v735
      %v1060 = vmul.f32 %v740, %v740
      %v1061 = vmul.f32 %v743, %v743
      %v1062 = vmul.f32 %v748, %v748
      %v1063 = vmul.f32 %v751, %v751
      %v1064 = vmul.f32 %v756, %v756
      %v1065 = vmul.f32 %v759, %v759
      %v1066 = vmul.f32 %v764, %v764
      %v1067 = vmul.f32 %v767, %v767
      %v1068 = vmul.f32 %v772, %v772
      %v1069 = vmul.f32 %v775, %v775
      %v1070 = vmul.f32 %v780, %v780
      %v1071 = vmul.f32 %v783, %v783
      %v1072 = vmul.f32 %v788, %v788
      %v1073 = vmul.f32 %v791, %v791
      %v1074 = vmul.f32 %v796, %v796
      %v1075 = vmul.f32 %v799, %v799
      %v1076 = vmul.f32 %v804, %v804
      %v1077 = vmul.f32 %v807, %v807
      %v1078 = vmul.f32 %v812, %v812
      %v1079 = vmul.f32 %v815, %v815
      %v1080 = vsel %vm818, %v1016, 0.0
      %v1081 = vsel %vm818, %v1017, 0.0
      %v1082 = vadd.f32 %v1080, %v1081
      %v1083 = vsel %vm818, %v1018, 0.0
      %v1084 = vadd.f32 %v1082, %v1083
      %v1085 = vsel %vm818, %v1019, 0.0
      %v1086 = vadd.f32 %v1084, %v1085
      %v1087 = vsel %vm818, %v1020, 0.0
      %v1088 = vadd.f32 %v1086, %v1087
      %v1089 = vsel %vm818, %v1021, 0.0
      %v1090 = vadd.f32 %v1088, %v1089
      %v1091 = vsel %vm818, %v1022, 0.0
      %v1092 = vadd.f32 %v1090, %v1091
      %v1093 = vsel %vm818, %v1023, 0.0
      %v1094 = vadd.f32 %v1092, %v1093
      %v1095 = vsel %vm818, %v1024, 0.0
      %v1096 = vadd.f32 %v1094, %v1095
      %v1097 = vsel %vm818, %v1025, 0.0
      %v1098 = vadd.f32 %v1096, %v1097
      %v1099 = vsel %vm818, %v1026, 0.0
      %v1100 = vadd.f32 %v1098, %v1099
      %v1101 = vsel %vm818, %v1027, 0.0
      %v1102 = vadd.f32 %v1100, %v1101
      %v1103 = vsel %vm818, %v1028, 0.0
      %v1104 = vadd.f32 %v1102, %v1103
      %v1105 = vsel %vm818, %v1029, 0.0
      %v1106 = vadd.f32 %v1104, %v1105
      %v1107 = vsel %vm818, %v1030, 0.0
      %v1108 = vadd.f32 %v1106, %v1107
      %v1109 = vsel %vm818, %v1031, 0.0
      %v1110 = vadd.f32 %v1108, %v1109
      %v1111 = vsel %vm818, %v1032, 0.0
      %v1112 = vadd.f32 %v1110, %v1111
      %v1113 = vsel %vm818, %v1033, 0.0
      %v1114 = vadd.f32 %v1112, %v1113
      %v1115 = vsel %vm818, %v1034, 0.0
      %v1116 = vadd.f32 %v1114, %v1115
      %v1117 = vsel %vm818, %v1035, 0.0
      %v1118 = vadd.f32 %v1116, %v1117
      %v1119 = vsel %vm818, %v1036, 0.0
      %v1120 = vadd.f32 %v1118, %v1119
      %v1121 = vsel %vm818, %v1037, 0.0
      %v1122 = vadd.f32 %v1120, %v1121
      %v1123 = vsel %vm818, %v1038, 0.0
      %v1124 = vadd.f32 %v1122, %v1123
      %v1125 = vsel %vm818, %v1039, 0.0
      %v1126 = vadd.f32 %v1124, %v1125
      %v1127 = vsel %vm818, %v1040, 0.0
      %v1128 = vadd.f32 %v1126, %v1127
      %v1129 = vsel %vm818, %v1041, 0.0
      %v1130 = vadd.f32 %v1128, %v1129
      %v1131 = vsel %vm818, %v1042, 0.0
      %v1132 = vadd.f32 %v1130, %v1131
      %v1133 = vsel %vm818, %v1043, 0.0
      %v1134 = vadd.f32 %v1132, %v1133
      %v1135 = vsel %vm818, %v1044, 0.0
      %v1136 = vadd.f32 %v1134, %v1135
      %v1137 = vsel %vm818, %v1045, 0.0
      %v1138 = vadd.f32 %v1136, %v1137
      %v1139 = vsel %vm818, %v1046, 0.0
      %v1140 = vadd.f32 %v1138, %v1139
      %v1141 = vsel %vm818, %v1047, 0.0
      %v1142 = vadd.f32 %v1140, %v1141
      %v1143 = vsel %vm818, %v1048, 0.0
      %v1144 = vadd.f32 %v1142, %v1143
      %v1145 = vsel %vm818, %v1049, 0.0
      %v1146 = vadd.f32 %v1144, %v1145
      %v1147 = vsel %vm818, %v1050, 0.0
      %v1148 = vadd.f32 %v1146, %v1147
      %v1149 = vsel %vm818, %v1051, 0.0
      %v1150 = vadd.f32 %v1148, %v1149
      %v1151 = vsel %vm818, %v1052, 0.0
      %v1152 = vadd.f32 %v1150, %v1151
      %v1153 = vsel %vm818, %v1053, 0.0
      %v1154 = vadd.f32 %v1152, %v1153
      %v1155 = vsel %vm818, %v1054, 0.0
      %v1156 = vadd.f32 %v1154, %v1155
      %v1157 = vsel %vm818, %v1055, 0.0
      %v1158 = vadd.f32 %v1156, %v1157
      %v1159 = vsel %vm818, %v1056, 0.0
      %v1160 = vadd.f32 %v1158, %v1159
      %v1161 = vsel %vm818, %v1057, 0.0
      %v1162 = vadd.f32 %v1160, %v1161
      %v1163 = vsel %vm818, %v1058, 0.0
      %v1164 = vadd.f32 %v1162, %v1163
      %v1165 = vsel %vm818, %v1059, 0.0
      %v1166 = vadd.f32 %v1164, %v1165
      %v1167 = vsel %vm818, %v1060, 0.0
      %v1168 = vadd.f32 %v1166, %v1167
      %v1169 = vsel %vm818, %v1061, 0.0
      %v1170 = vadd.f32 %v1168, %v1169
      %v1171 = vsel %vm818, %v1062, 0.0
      %v1172 = vadd.f32 %v1170, %v1171
      %v1173 = vsel %vm818, %v1063, 0.0
      %v1174 = vadd.f32 %v1172, %v1173
      %v1175 = vsel %vm818, %v1064, 0.0
      %v1176 = vadd.f32 %v1174, %v1175
      %v1177 = vsel %vm818, %v1065, 0.0
      %v1178 = vadd.f32 %v1176, %v1177
      %v1179 = vsel %vm818, %v1066, 0.0
      %v1180 = vadd.f32 %v1178, %v1179
      %v1181 = vsel %vm818, %v1067, 0.0
      %v1182 = vadd.f32 %v1180, %v1181
      %v1183 = vsel %vm818, %v1068, 0.0
      %v1184 = vadd.f32 %v1182, %v1183
      %v1185 = vsel %vm818, %v1069, 0.0
      %v1186 = vadd.f32 %v1184, %v1185
      %v1187 = vsel %vm818, %v1070, 0.0
      %v1188 = vadd.f32 %v1186, %v1187
      %v1189 = vsel %vm818, %v1071, 0.0
      %v1190 = vadd.f32 %v1188, %v1189
      %v1191 = vsel %vm818, %v1072, 0.0
      %v1192 = vadd.f32 %v1190, %v1191
      %v1193 = vsel %vm818, %v1073, 0.0
      %v1194 = vadd.f32 %v1192, %v1193
      %v1195 = vsel %vm818, %v1074, 0.0
      %v1196 = vadd.f32 %v1194, %v1195
      %v1197 = vsel %vm818, %v1075, 0.0
      %v1198 = vadd.f32 %v1196, %v1197
      %v1199 = vsel %vm818, %v1076, 0.0
      %v1200 = vadd.f32 %v1198, %v1199
      %v1201 = vsel %vm818, %v1077, 0.0
      %v1202 = vadd.f32 %v1200, %v1201
      %v1203 = vsel %vm818, %v1078, 0.0
      %v1204 = vadd.f32 %v1202, %v1203
      %v1205 = vsel %vm818, %v1079, 0.0
      %v1206 = vadd.f32 %v1204, %v1205
      %v1207 = vrot.slane %v1206, 4
      %v1208 = vadd.f32 %v1206, %v1207
      %v1209 = vrot.slane %v1208, 2
      %v1210 = vadd.f32 %v1208, %v1209
      %v1211 = vrot.slane %v1210, 1
      %v1212 = vadd.f32 %v1210, %v1211
      %vm1213 = vcmask 1040384
      %v1214 = vsel %vm1213, %v1015, %v1212
      %vm1215 = vcmask 58368
      %1216 = vst.msk [vmem:[%s184] sm:$0x3] %vm1215, %v1214
      %s1217 = smul.u32 64, %s15
      %p1218 = scmp.lt.s32.totalorder %s1217, 383
      %s1219 = scalar_select %p1218, %s1217, 383
      %s1220 = smul.addr %s1219, 8
      %s1221 = scalar_lea.vmem %s2, %s1220
      %p1222 = scmp.lt.s32.totalorder %s15, 5
      %s1223 = scalar_select %p1222, %s15, 5
      %s1224 = smul.addr %s1223, 2
      %s1225 = scalar_lea.vmem %s3, %s1224
      // Predicated region
      $region29: #{cnn_encoder_forward.24} parent=27 // pred_check
        %p1226 = pneg %p80
      $region30: #{cnn_encoder_forward.24} parent=27 // pred_check_branch
        %1228 = sbr.rel (%p1226) target = $region32
      $region31: #{cnn_encoder_forward.24} parent=27 // pred_region
        %s1229 = smul.u32 64, %s15
      $region32: #{cnn_encoder_forward.24} parent=27 // pred_fallthru
        _
      // Predicated region
      $region33: #{cnn_encoder_forward.24} parent=27 // pred_check
        %p1230 = pneg %p106
      $region34: #{cnn_encoder_forward.24} parent=27 // pred_check_branch
        %1232 = sbr.rel (%p1230) target = $region36
      $region35: #{cnn_encoder_forward.24} parent=27 // pred_region
        _
      $region36: #{cnn_encoder_forward.24} parent=27 // pred_fallthru
        _
    $region28: #{cnn_encoder_forward.24} parent=5 // pred_fallthru
      _
    %p1233 = scmp.le.s32.totalorder 2, %s10
    // Predicated region
    $region37: #{cnn_encoder_forward.24} parent=5 // pred_check
      %p1234 = pneg %p1233
    $region38: #{cnn_encoder_forward.24} parent=5 // pred_check_branch
      %1236 = sbr.rel (%p1234) target = $region40
    $region39: #{cnn_encoder_forward.24} parent=5 // pred_region
      %s1237 = ssub.s32 %s10, 2
      // Predicated region
      $region41: #{cnn_encoder_forward.24} parent=39 // pred_check
        %p1238 = pneg %p86
      $region42: #{cnn_encoder_forward.24} parent=39 // pred_check_branch
        %1240 = sbr.rel (%p1238) target = $region44
      $region43: #{cnn_encoder_forward.24} parent=39 // pred_region
        %s1241 = smul.u32 64, %s16
        %p1242 = scmp.lt.s32.totalorder %s1241, 383
        %s1243 = scalar_select %p1242, %s1241, 383
        %s1244 = smul.addr %s1243, 8
        %s1245 = scalar_lea.vmem %s2, %s1244
      $region44: #{cnn_encoder_forward.24} parent=39 // pred_fallthru
        _
      // Predicated region
      $region45: #{cnn_encoder_forward.24} parent=39 // pred_check
        %p1246 = pneg %p112
      $region46: #{cnn_encoder_forward.24} parent=39 // pred_check_branch
        %1248 = sbr.rel (%p1246) target = $region48
      $region47: #{cnn_encoder_forward.24} parent=39 // pred_region
        %p1249 = scmp.lt.s32.totalorder %s16, 5
        %s1250 = scalar_select %p1249, %s16, 5
        %s1251 = smul.addr %s1250, 2
        %s1252 = scalar_lea.vmem %s3, %s1251
      $region48: #{cnn_encoder_forward.24} parent=39 // pred_fallthru
        _
    $region40: #{cnn_encoder_forward.24} parent=5 // pred_fallthru
      _
  $region6: #{cnn_encoder_forward.24} parent=0 // loop_footer
    %s14 = sadd.s32 1, %s10
  $region7: #{cnn_encoder_forward.24} parent=0 // loop_footer_branch
    %9 = sbr.rel target = $region3
  $region8: #{cnn_encoder_forward.24} parent=0 // loop_exit
    _

// kernel: cnn_encoder_forward.25
$region0: #{cnn_encoder_forward.25}
  #allocation0 [shape = 'u32[]', space=smem, size = 0x4, offset = 0x4, fixed_abs, tag = 'smem constant byte address 0x4 - core index']
  #allocation1 [shape = 'u32[144,128]{1,0:T(1,128)}', space=vmem, size = 0x12000, scoped, tag = 'internal scratch']
  %s0 = inlined_call_operand.vmem [shape: f32[304,128], index: 0, kind: input, shape index: {}]
  %s1 = inlined_call_operand.vmem [shape: f32[1,128], index: 1, kind: input, shape index: {}]
  %s2 = inlined_call_operand.vmem [shape: f32[1,128], index: 2, kind: input, shape index: {}]
  %s3 = inlined_call_operand.vmem [shape: f32[304,8], index: 3, kind: output, shape index: {}]
  %s4 = sld [smem:[#allocation0]]
  $region22: #{cnn_encoder_forward.25} parent=0
    _
  %s6 = ssub.s32 1, %s4
  %s7 = scalar_select 0, %s6, %s4
  // Predicated region
  $region2: #{cnn_encoder_forward.25} parent=0 // pred_check
    _
  $region3: #{cnn_encoder_forward.25} parent=0 // pred_check_branch
    %9 = sbr.rel (0) target = $region5
  $region4: #{cnn_encoder_forward.25} parent=0 // pred_region
    _
  $region5: #{cnn_encoder_forward.25} parent=0 // pred_fallthru
    _
  // Predicated region
  $region6: #{cnn_encoder_forward.25} parent=0 // pred_check
    _
  $region7: #{cnn_encoder_forward.25} parent=0 // pred_check_branch
    %11 = sbr.rel (0) target = $region9
  $region8: #{cnn_encoder_forward.25} parent=0 // pred_region
    _
  $region9: #{cnn_encoder_forward.25} parent=0 // pred_fallthru
    _
  // Predicated region
  $region10: #{cnn_encoder_forward.25} parent=0 // pred_check
    _
  $region11: #{cnn_encoder_forward.25} parent=0 // pred_check_branch
    %13 = sbr.rel (0) target = $region13
  $region12: #{cnn_encoder_forward.25} parent=0 // pred_region
    _
  $region13: #{cnn_encoder_forward.25} parent=0 // pred_fallthru
    _
  %v14 = vld [vmem:[%s0] sm:$0xff]
  %v15 = vld [vmem:[%s0 + $0x8] sm:$0xff]
  %v16 = vld [vmem:[%s0 + $0x10] sm:$0xff]
  %v17 = vld [vmem:[%s0 + $0x18] sm:$0xff]
  %v18 = vld [vmem:[%s0 + $0x20] sm:$0xff]
  %v19 = vld [vmem:[%s0 + $0x28] sm:$0xff]
  %v20 = vld [vmem:[%s0 + $0x30] sm:$0xff]
  %v21 = vld [vmem:[%s0 + $0x38] sm:$0xff]
  %v22 = vld [vmem:[%s0 + $0x40] sm:$0xff]
  %v23 = vld [vmem:[%s0 + $0x48] sm:$0xff]
  %v24 = vld [vmem:[%s0 + $0x50] sm:$0xff]
  %v25 = vld [vmem:[%s0 + $0x58] sm:$0xff]
  %v26 = vld [vmem:[%s0 + $0x60] sm:$0xff]
  %v27 = vld [vmem:[%s0 + $0x68] sm:$0xff]
  %v28 = vld [vmem:[%s0 + $0x70] sm:$0xff]
  %v29 = vld [vmem:[%s0 + $0x78] sm:$0xff]
  %v30 = vld [vmem:[%s0 + $0x80] sm:$0xff]
  %v31 = vld [vmem:[%s0 + $0x88] sm:$0xff]
  %v32 = vld [vmem:[%s0 + $0x90] sm:$0xff]
  %v33 = vld [vmem:[%s0 + $0x98] sm:$0xff]
  %v34 = vld [vmem:[%s0 + $0xa0] sm:$0xff]
  %v35 = vld [vmem:[%s0 + $0xa8] sm:$0xff]
  %v36 = vld [vmem:[%s0 + $0xb0] sm:$0xff]
  %v37 = vld [vmem:[%s0 + $0xb8] sm:$0xff]
  %v38 = vld [vmem:[%s0 + $0xc0] sm:$0xff]
  %v39 = vld [vmem:[%s0 + $0xc8] sm:$0xff]
  %v40 = vld [vmem:[%s0 + $0xd0] sm:$0xff]
  %v41 = vld [vmem:[%s0 + $0xd8] sm:$0xff]
  %v42 = vld [vmem:[%s0 + $0xe0] sm:$0xff]
  %v43 = vld [vmem:[%s0 + $0xe8] sm:$0xff]
  %v44 = vld [vmem:[%s0 + $0xf0] sm:$0xff]
  %v45 = vld [vmem:[%s0 + $0xf8] sm:$0xff]
  %v46 = vld [vmem:[%s0 + $0x100] sm:$0xff]
  %v47 = vld [vmem:[%s0 + $0x108] sm:$0xff]
  %v48 = vld [vmem:[%s0 + $0x110] sm:$0xff]
  %v49 = vld [vmem:[%s0 + $0x118] sm:$0xff]
  %v50 = vld [vmem:[%s0 + $0x120] sm:$0xff]
  %v51 = vld [vmem:[%s0 + $0x128] sm:$0xff]
  %v52 = vld [vmem:[%s1] sm:$0x1]
  %v54 = vlaneseq
  %v55 = vshrl.u32 %v54, 7
  %v56 = vsub.s32 0, %v55
  %v57 = vrot.slane %v52, %v56
  %v59 = vmul.f32 %v14, %v57
  %v60 = vmul.f32 %v15, %v57
  %v61 = vmul.f32 %v16, %v57
  %v62 = vmul.f32 %v17, %v57
  %v63 = vmul.f32 %v18, %v57
  %v64 = vmul.f32 %v19, %v57
  %v65 = vmul.f32 %v20, %v57
  %v66 = vmul.f32 %v21, %v57
  %v67 = vmul.f32 %v22, %v57
  %v68 = vmul.f32 %v23, %v57
  %v69 = vmul.f32 %v24, %v57
  %v70 = vmul.f32 %v25, %v57
  %v71 = vmul.f32 %v26, %v57
  %v72 = vmul.f32 %v27, %v57
  %v73 = vmul.f32 %v28, %v57
  %v74 = vmul.f32 %v29, %v57
  %v75 = vmul.f32 %v30, %v57
  %v76 = vmul.f32 %v31, %v57
  %v77 = vmul.f32 %v32, %v57
  %v78 = vmul.f32 %v33, %v57
  %v79 = vmul.f32 %v34, %v57
  %v80 = vmul.f32 %v35, %v57
  %v81 = vmul.f32 %v36, %v57
  %v82 = vmul.f32 %v37, %v57
  %v83 = vmul.f32 %v38, %v57
  %v84 = vmul.f32 %v39, %v57
  %v85 = vmul.f32 %v40, %v57
  %v86 = vmul.f32 %v41, %v57
  %v87 = vmul.f32 %v42, %v57
  %v88 = vmul.f32 %v43, %v57
  %v89 = vmul.f32 %v44, %v57
  %v90 = vmul.f32 %v45, %v57
  %v91 = vmul.f32 %v46, %v57
  %v92 = vmul.f32 %v47, %v57
  %v93 = vmul.f32 %v48, %v57
  %v94 = vmul.f32 %v49, %v57
  %v95 = vmul.f32 %v50, %v57
  %v96 = vmul.f32 %v51, %v57
  %v97 = vld [vmem:[%s2] sm:$0x1]
  %v99 = vlaneseq
  %v100 = vshrl.u32 %v99, 7
  %v101 = vsub.s32 0, %v100
  %v102 = vrot.slane %v97, %v101
  %v104 = vadd.f32 %v59, %v102
  %v105 = vadd.f32 %v60, %v102
  %v106 = vadd.f32 %v61, %v102
  %v107 = vadd.f32 %v62, %v102
  %v108 = vadd.f32 %v63, %v102
  %v109 = vadd.f32 %v64, %v102
  %v110 = vadd.f32 %v65, %v102
  %v111 = vadd.f32 %v66, %v102
  %v112 = vadd.f32 %v67, %v102
  %v113 = vadd.f32 %v68, %v102
  %v114 = vadd.f32 %v69, %v102
  %v115 = vadd.f32 %v70, %v102
  %v116 = vadd.f32 %v71, %v102
  %v117 = vadd.f32 %v72, %v102
  %v118 = vadd.f32 %v73, %v102
  %v119 = vadd.f32 %v74, %v102
  %v120 = vadd.f32 %v75, %v102
  %v121 = vadd.f32 %v76, %v102
  %v122 = vadd.f32 %v77, %v102
  %v123 = vadd.f32 %v78, %v102
  %v124 = vadd.f32 %v79, %v102
  %v125 = vadd.f32 %v80, %v102
  %v126 = vadd.f32 %v81, %v102
  %v127 = vadd.f32 %v82, %v102
  %v128 = vadd.f32 %v83, %v102
  %v129 = vadd.f32 %v84, %v102
  %v130 = vadd.f32 %v85, %v102
  %v131 = vadd.f32 %v86, %v102
  %v132 = vadd.f32 %v87, %v102
  %v133 = vadd.f32 %v88, %v102
  %v134 = vadd.f32 %v89, %v102
  %v135 = vadd.f32 %v90, %v102
  %v136 = vadd.f32 %v91, %v102
  %v137 = vadd.f32 %v92, %v102
  %v138 = vadd.f32 %v93, %v102
  %v139 = vadd.f32 %v94, %v102
  %v140 = vadd.f32 %v95, %v102
  %v141 = vadd.f32 %v96, %v102
  %v142 = vmax.f32 %v104, 0.0
  %v143 = vmax.f32 %v105, 0.0
  %v144 = vmax.f32 %v106, 0.0
  %v145 = vmax.f32 %v107, 0.0
  %v146 = vmax.f32 %v108, 0.0
  %v147 = vmax.f32 %v109, 0.0
  %v148 = vmax.f32 %v110, 0.0
  %v149 = vmax.f32 %v111, 0.0
  %v150 = vmax.f32 %v112, 0.0
  %v151 = vmax.f32 %v113, 0.0
  %v152 = vmax.f32 %v114, 0.0
  %v153 = vmax.f32 %v115, 0.0
  %v154 = vmax.f32 %v116, 0.0
  %v155 = vmax.f32 %v117, 0.0
  %v156 = vmax.f32 %v118, 0.0
  %v157 = vmax.f32 %v119, 0.0
  %v158 = vmax.f32 %v120, 0.0
  %v159 = vmax.f32 %v121, 0.0
  %v160 = vmax.f32 %v122, 0.0
  %v161 = vmax.f32 %v123, 0.0
  %v162 = vmax.f32 %v124, 0.0
  %v163 = vmax.f32 %v125, 0.0
  %v164 = vmax.f32 %v126, 0.0
  %v165 = vmax.f32 %v127, 0.0
  %v166 = vmax.f32 %v128, 0.0
  %v167 = vmax.f32 %v129, 0.0
  %v168 = vmax.f32 %v130, 0.0
  %v169 = vmax.f32 %v131, 0.0
  %v170 = vmax.f32 %v132, 0.0
  %v171 = vmax.f32 %v133, 0.0
  %v172 = vmax.f32 %v134, 0.0
  %v173 = vmax.f32 %v135, 0.0
  %v174 = vmax.f32 %v136, 0.0
  %v175 = vmax.f32 %v137, 0.0
  %v176 = vmax.f32 %v138, 0.0
  %v177 = vmax.f32 %v139, 0.0
  %v178 = vmax.f32 %v140, 0.0
  %v179 = vmax.f32 %v141, 0.0
  %vm180 = vcmp.le.f32.partialorder %v14, -5e+29
  %vm181 = vcmp.le.f32.partialorder %v15, -5e+29
  %vm182 = vcmp.le.f32.partialorder %v16, -5e+29
  %vm183 = vcmp.le.f32.partialorder %v17, -5e+29
  %vm184 = vcmp.le.f32.partialorder %v18, -5e+29
  %vm185 = vcmp.le.f32.partialorder %v19, -5e+29
  %vm186 = vcmp.le.f32.partialorder %v20, -5e+29
  %vm187 = vcmp.le.f32.partialorder %v21, -5e+29
  %vm188 = vcmp.le.f32.partialorder %v22, -5e+29
  %vm189 = vcmp.le.f32.partialorder %v23, -5e+29
  %vm190 = vcmp.le.f32.partialorder %v24, -5e+29
  %vm191 = vcmp.le.f32.partialorder %v25, -5e+29
  %vm192 = vcmp.le.f32.partialorder %v26, -5e+29
  %vm193 = vcmp.le.f32.partialorder %v27, -5e+29
  %vm194 = vcmp.le.f32.partialorder %v28, -5e+29
  %vm195 = vcmp.le.f32.partialorder %v29, -5e+29
  %vm196 = vcmp.le.f32.partialorder %v30, -5e+29
  %vm197 = vcmp.le.f32.partialorder %v31, -5e+29
  %vm198 = vcmp.le.f32.partialorder %v32, -5e+29
  %vm199 = vcmp.le.f32.partialorder %v33, -5e+29
  %vm200 = vcmp.le.f32.partialorder %v34, -5e+29
  %vm201 = vcmp.le.f32.partialorder %v35, -5e+29
  %vm202 = vcmp.le.f32.partialorder %v36, -5e+29
  %vm203 = vcmp.le.f32.partialorder %v37, -5e+29
  %vm204 = vcmp.le.f32.partialorder %v38, -5e+29
  %vm205 = vcmp.le.f32.partialorder %v39, -5e+29
  %vm206 = vcmp.le.f32.partialorder %v40, -5e+29
  %vm207 = vcmp.le.f32.partialorder %v41, -5e+29
  %vm208 = vcmp.le.f32.partialorder %v42, -5e+29
  %vm209 = vcmp.le.f32.partialorder %v43, -5e+29
  %vm210 = vcmp.le.f32.partialorder %v44, -5e+29
  %vm211 = vcmp.le.f32.partialorder %v45, -5e+29
  %vm212 = vcmp.le.f32.partialorder %v46, -5e+29
  %vm213 = vcmp.le.f32.partialorder %v47, -5e+29
  %vm214 = vcmp.le.f32.partialorder %v48, -5e+29
  %vm215 = vcmp.le.f32.partialorder %v49, -5e+29
  %vm216 = vcmp.le.f32.partialorder %v50, -5e+29
  %vm217 = vcmp.le.f32.partialorder %v51, -5e+29
  %v218 = vsel %vm180, 0.0, %v142
  %v219 = vsel %vm181, 0.0, %v143
  %v220 = vsel %vm182, 0.0, %v144
  %v221 = vsel %vm183, 0.0, %v145
  %v222 = vsel %vm184, 0.0, %v146
  %v223 = vsel %vm185, 0.0, %v147
  %v224 = vsel %vm186, 0.0, %v148
  %v225 = vsel %vm187, 0.0, %v149
  %v226 = vsel %vm188, 0.0, %v150
  %v227 = vsel %vm189, 0.0, %v151
  %v228 = vsel %vm190, 0.0, %v152
  %v229 = vsel %vm191, 0.0, %v153
  %v230 = vsel %vm192, 0.0, %v154
  %v231 = vsel %vm193, 0.0, %v155
  %v232 = vsel %vm194, 0.0, %v156
  %v233 = vsel %vm195, 0.0, %v157
  %v234 = vsel %vm196, 0.0, %v158
  %v235 = vsel %vm197, 0.0, %v159
  %v236 = vsel %vm198, 0.0, %v160
  %v237 = vsel %vm199, 0.0, %v161
  %v238 = vsel %vm200, 0.0, %v162
  %v239 = vsel %vm201, 0.0, %v163
  %v240 = vsel %vm202, 0.0, %v164
  %v241 = vsel %vm203, 0.0, %v165
  %v242 = vsel %vm204, 0.0, %v166
  %v243 = vsel %vm205, 0.0, %v167
  %v244 = vsel %vm206, 0.0, %v168
  %v245 = vsel %vm207, 0.0, %v169
  %v246 = vsel %vm208, 0.0, %v170
  %v247 = vsel %vm209, 0.0, %v171
  %v248 = vsel %vm210, 0.0, %v172
  %v249 = vsel %vm211, 0.0, %v173
  %v250 = vsel %vm212, 0.0, %v174
  %v251 = vsel %vm213, 0.0, %v175
  %v252 = vsel %vm214, 0.0, %v176
  %v253 = vsel %vm215, 0.0, %v177
  %v254 = vsel %vm216, 0.0, %v178
  %v255 = vsel %vm217, 0.0, %v179
  %294 = vrot.lane.b32.xlu0 %v218, 120
  %v295 = vpop.permute.xlu0 %294
  %296 = vrot.lane.b32.xlu0 %v219, 120
  %v297 = vpop.permute.xlu0 %296
  %298 = vrot.lane.b32.xlu0 %v220, 120
  %v299 = vpop.permute.xlu0 %298
  %300 = vrot.lane.b32.xlu0 %v221, 120
  %v301 = vpop.permute.xlu0 %300
  %302 = vrot.lane.b32.xlu0 %v222, 120
  %v303 = vpop.permute.xlu0 %302
  %304 = vrot.lane.b32.xlu0 %v223, 120
  %v305 = vpop.permute.xlu0 %304
  %306 = vrot.lane.b32.xlu0 %v224, 120
  %v307 = vpop.permute.xlu0 %306
  %308 = vrot.lane.b32.xlu0 %v225, 120
  %v309 = vpop.permute.xlu0 %308
  %310 = vrot.lane.b32.xlu0 %v226, 120
  %v311 = vpop.permute.xlu0 %310
  %312 = vrot.lane.b32.xlu0 %v227, 120
  %v313 = vpop.permute.xlu0 %312
  %314 = vrot.lane.b32.xlu0 %v228, 120
  %v315 = vpop.permute.xlu0 %314
  %316 = vrot.lane.b32.xlu0 %v229, 120
  %v317 = vpop.permute.xlu0 %316
  %318 = vrot.lane.b32.xlu0 %v230, 120
  %v319 = vpop.permute.xlu0 %318
  %320 = vrot.lane.b32.xlu0 %v231, 120
  %v321 = vpop.permute.xlu0 %320
  %322 = vrot.lane.b32.xlu0 %v232, 120
  %v323 = vpop.permute.xlu0 %322
  %324 = vrot.lane.b32.xlu0 %v233, 120
  %v325 = vpop.permute.xlu0 %324
  %326 = vrot.lane.b32.xlu0 %v234, 120
  %v327 = vpop.permute.xlu0 %326
  %328 = vrot.lane.b32.xlu0 %v235, 120
  %v329 = vpop.permute.xlu0 %328
  %330 = vrot.lane.b32.xlu0 %v236, 120
  %v331 = vpop.permute.xlu0 %330
  %332 = vrot.lane.b32.xlu0 %v237, 120
  %v333 = vpop.permute.xlu0 %332
  %334 = vrot.lane.b32.xlu0 %v238, 120
  %v335 = vpop.permute.xlu0 %334
  %336 = vrot.lane.b32.xlu0 %v239, 120
  %v337 = vpop.permute.xlu0 %336
  %338 = vrot.lane.b32.xlu0 %v240, 120
  %v339 = vpop.permute.xlu0 %338
  %340 = vrot.lane.b32.xlu0 %v241, 120
  %v341 = vpop.permute.xlu0 %340
  %342 = vrot.lane.b32.xlu0 %v242, 120
  %v343 = vpop.permute.xlu0 %342
  %344 = vrot.lane.b32.xlu0 %v243, 120
  %v345 = vpop.permute.xlu0 %344
  %346 = vrot.lane.b32.xlu0 %v244, 120
  %v347 = vpop.permute.xlu0 %346
  %348 = vrot.lane.b32.xlu0 %v245, 120
  %v349 = vpop.permute.xlu0 %348
  %350 = vrot.lane.b32.xlu0 %v246, 120
  %v351 = vpop.permute.xlu0 %350
  %352 = vrot.lane.b32.xlu0 %v247, 120
  %v353 = vpop.permute.xlu0 %352
  %354 = vrot.lane.b32.xlu0 %v248, 120
  %v355 = vpop.permute.xlu0 %354
  %356 = vrot.lane.b32.xlu0 %v249, 120
  %v357 = vpop.permute.xlu0 %356
  %358 = vrot.lane.b32.xlu0 %v250, 120
  %v359 = vpop.permute.xlu0 %358
  %360 = vrot.lane.b32.xlu0 %v251, 120
  %v361 = vpop.permute.xlu0 %360
  %362 = vrot.lane.b32.xlu0 %v252, 120
  %v363 = vpop.permute.xlu0 %362
  %364 = vrot.lane.b32.xlu0 %v253, 120
  %v365 = vpop.permute.xlu0 %364
  %366 = vrot.lane.b32.xlu0 %v254, 120
  %v367 = vpop.permute.xlu0 %366
  %368 = vrot.lane.b32.xlu0 %v255, 120
  %v369 = vpop.permute.xlu0 %368
  %v408 = vmax.f32 %v218, %v295
  %v409 = vmax.f32 %v219, %v297
  %v410 = vmax.f32 %v220, %v299
  %v411 = vmax.f32 %v221, %v301
  %v412 = vmax.f32 %v222, %v303
  %v413 = vmax.f32 %v223, %v305
  %v414 = vmax.f32 %v224, %v307
  %v415 = vmax.f32 %v225, %v309
  %v416 = vmax.f32 %v226, %v311
  %v417 = vmax.f32 %v227, %v313
  %v418 = vmax.f32 %v228, %v315
  %v419 = vmax.f32 %v229, %v317
  %v420 = vmax.f32 %v230, %v319
  %v421 = vmax.f32 %v231, %v321
  %v422 = vmax.f32 %v232, %v323
  %v423 = vmax.f32 %v233, %v325
  %v424 = vmax.f32 %v234, %v327
  %v425 = vmax.f32 %v235, %v329
  %v426 = vmax.f32 %v236, %v331
  %v427 = vmax.f32 %v237, %v333
  %v428 = vmax.f32 %v238, %v335
  %v429 = vmax.f32 %v239, %v337
  %v430 = vmax.f32 %v240, %v339
  %v431 = vmax.f32 %v241, %v341
  %v432 = vmax.f32 %v242, %v343
  %v433 = vmax.f32 %v243, %v345
  %v434 = vmax.f32 %v244, %v347
  %v435 = vmax.f32 %v245, %v349
  %v436 = vmax.f32 %v246, %v351
  %v437 = vmax.f32 %v247, %v353
  %v438 = vmax.f32 %v248, %v355
  %v439 = vmax.f32 %v249, %v357
  %v440 = vmax.f32 %v250, %v359
  %v441 = vmax.f32 %v251, %v361
  %v442 = vmax.f32 %v252, %v363
  %v443 = vmax.f32 %v253, %v365
  %v444 = vmax.f32 %v254, %v367
  %v445 = vmax.f32 %v255, %v369
  %446 = vrot.lane.b32.xlu0 %v218, 112
  %v447 = vpop.permute.xlu0 %446
  %448 = vrot.lane.b32.xlu0 %v219, 112
  %v449 = vpop.permute.xlu0 %448
  %450 = vrot.lane.b32.xlu0 %v220, 112
  %v451 = vpop.permute.xlu0 %450
  %452 = vrot.lane.b32.xlu0 %v221, 112
  %v453 = vpop.permute.xlu0 %452
  %454 = vrot.lane.b32.xlu0 %v222, 112
  %v455 = vpop.permute.xlu0 %454
  %456 = vrot.lane.b32.xlu0 %v223, 112
  %v457 = vpop.permute.xlu0 %456
  %458 = vrot.lane.b32.xlu0 %v224, 112
  %v459 = vpop.permute.xlu0 %458
  %460 = vrot.lane.b32.xlu0 %v225, 112
  %v461 = vpop.permute.xlu0 %460
  %462 = vrot.lane.b32.xlu0 %v226, 112
  %v463 = vpop.permute.xlu0 %462
  %464 = vrot.lane.b32.xlu0 %v227, 112
  %v465 = vpop.permute.xlu0 %464
  %466 = vrot.lane.b32.xlu0 %v228, 112
  %v467 = vpop.permute.xlu0 %466
  %468 = vrot.lane.b32.xlu0 %v229, 112
  %v469 = vpop.permute.xlu0 %468
  %470 = vrot.lane.b32.xlu0 %v230, 112
  %v471 = vpop.permute.xlu0 %470
  %472 = vrot.lane.b32.xlu0 %v231, 112
  %v473 = vpop.permute.xlu0 %472
  %474 = vrot.lane.b32.xlu0 %v232, 112
  %v475 = vpop.permute.xlu0 %474
  %476 = vrot.lane.b32.xlu0 %v233, 112
  %v477 = vpop.permute.xlu0 %476
  %478 = vrot.lane.b32.xlu0 %v234, 112
  %v479 = vpop.permute.xlu0 %478
  %480 = vrot.lane.b32.xlu0 %v235, 112
  %v481 = vpop.permute.xlu0 %480
  %482 = vrot.lane.b32.xlu0 %v236, 112
  %v483 = vpop.permute.xlu0 %482
  %484 = vrot.lane.b32.xlu0 %v237, 112
  %v485 = vpop.permute.xlu0 %484
  %486 = vrot.lane.b32.xlu0 %v238, 112
  %v487 = vpop.permute.xlu0 %486
  %488 = vrot.lane.b32.xlu0 %v239, 112
  %v489 = vpop.permute.xlu0 %488
  %490 = vrot.lane.b32.xlu0 %v240, 112
  %v491 = vpop.permute.xlu0 %490
  %492 = vrot.lane.b32.xlu0 %v241, 112
  %v493 = vpop.permute.xlu0 %492
  %494 = vrot.lane.b32.xlu0 %v242, 112
  %v495 = vpop.permute.xlu0 %494
  %496 = vrot.lane.b32.xlu0 %v243, 112
  %v497 = vpop.permute.xlu0 %496
  %498 = vrot.lane.b32.xlu0 %v244, 112
  %v499 = vpop.permute.xlu0 %498
  %500 = vrot.lane.b32.xlu0 %v245, 112
  %v501 = vpop.permute.xlu0 %500
  %502 = vrot.lane.b32.xlu0 %v246, 112
  %v503 = vpop.permute.xlu0 %502
  %504 = vrot.lane.b32.xlu0 %v247, 112
  %v505 = vpop.permute.xlu0 %504
  %506 = vrot.lane.b32.xlu0 %v248, 112
  %v507 = vpop.permute.xlu0 %506
  %508 = vrot.lane.b32.xlu0 %v249, 112
  %v509 = vpop.permute.xlu0 %508
  %510 = vrot.lane.b32.xlu0 %v250, 112
  %v511 = vpop.permute.xlu0 %510
  %512 = vrot.lane.b32.xlu0 %v251, 112
  %v513 = vpop.permute.xlu0 %512
  %514 = vrot.lane.b32.xlu0 %v252, 112
  %v515 = vpop.permute.xlu0 %514
  %516 = vrot.lane.b32.xlu0 %v253, 112
  %v517 = vpop.permute.xlu0 %516
  %518 = vrot.lane.b32.xlu0 %v254, 112
  %v519 = vpop.permute.xlu0 %518
  %520 = vrot.lane.b32.xlu0 %v255, 112
  %v521 = vpop.permute.xlu0 %520
  %v560 = vmax.f32 %v408, %v447
  %v561 = vmax.f32 %v409, %v449
  %v562 = vmax.f32 %v410, %v451
  %v563 = vmax.f32 %v411, %v453
  %v564 = vmax.f32 %v412, %v455
  %v565 = vmax.f32 %v413, %v457
  %v566 = vmax.f32 %v414, %v459
  %v567 = vmax.f32 %v415, %v461
  %v568 = vmax.f32 %v416, %v463
  %v569 = vmax.f32 %v417, %v465
  %v570 = vmax.f32 %v418, %v467
  %v571 = vmax.f32 %v419, %v469
  %v572 = vmax.f32 %v420, %v471
  %v573 = vmax.f32 %v421, %v473
  %v574 = vmax.f32 %v422, %v475
  %v575 = vmax.f32 %v423, %v477
  %v576 = vmax.f32 %v424, %v479
  %v577 = vmax.f32 %v425, %v481
  %v578 = vmax.f32 %v426, %v483
  %v579 = vmax.f32 %v427, %v485
  %v580 = vmax.f32 %v428, %v487
  %v581 = vmax.f32 %v429, %v489
  %v582 = vmax.f32 %v430, %v491
  %v583 = vmax.f32 %v431, %v493
  %v584 = vmax.f32 %v432, %v495
  %v585 = vmax.f32 %v433, %v497
  %v586 = vmax.f32 %v434, %v499
  %v587 = vmax.f32 %v435, %v501
  %v588 = vmax.f32 %v436, %v503
  %v589 = vmax.f32 %v437, %v505
  %v590 = vmax.f32 %v438, %v507
  %v591 = vmax.f32 %v439, %v509
  %v592 = vmax.f32 %v440, %v511
  %v593 = vmax.f32 %v441, %v513
  %v594 = vmax.f32 %v442, %v515
  %v595 = vmax.f32 %v443, %v517
  %v596 = vmax.f32 %v444, %v519
  %v597 = vmax.f32 %v445, %v521
  %598 = vrot.lane.b32.xlu0 %v218, 104
  %v599 = vpop.permute.xlu0 %598
  %600 = vrot.lane.b32.xlu0 %v219, 104
  %v601 = vpop.permute.xlu0 %600
  %602 = vrot.lane.b32.xlu0 %v220, 104
  %v603 = vpop.permute.xlu0 %602
  %604 = vrot.lane.b32.xlu0 %v221, 104
  %v605 = vpop.permute.xlu0 %604
  %606 = vrot.lane.b32.xlu0 %v222, 104
  %v607 = vpop.permute.xlu0 %606
  %608 = vrot.lane.b32.xlu0 %v223, 104
  %v609 = vpop.permute.xlu0 %608
  %610 = vrot.lane.b32.xlu0 %v224, 104
  %v611 = vpop.permute.xlu0 %610
  %612 = vrot.lane.b32.xlu0 %v225, 104
  %v613 = vpop.permute.xlu0 %612
  %614 = vrot.lane.b32.xlu0 %v226, 104
  %v615 = vpop.permute.xlu0 %614
  %616 = vrot.lane.b32.xlu0 %v227, 104
  %v617 = vpop.permute.xlu0 %616
  %618 = vrot.lane.b32.xlu0 %v228, 104
  %v619 = vpop.permute.xlu0 %618
  %620 = vrot.lane.b32.xlu0 %v229, 104
  %v621 = vpop.permute.xlu0 %620
  %622 = vrot.lane.b32.xlu0 %v230, 104
  %v623 = vpop.permute.xlu0 %622
  %624 = vrot.lane.b32.xlu0 %v231, 104
  %v625 = vpop.permute.xlu0 %624
  %626 = vrot.lane.b32.xlu0 %v232, 104
  %v627 = vpop.permute.xlu0 %626
  %628 = vrot.lane.b32.xlu0 %v233, 104
  %v629 = vpop.permute.xlu0 %628
  %630 = vrot.lane.b32.xlu0 %v234, 104
  %v631 = vpop.permute.xlu0 %630
  %632 = vrot.lane.b32.xlu0 %v235, 104
  %v633 = vpop.permute.xlu0 %632
  %634 = vrot.lane.b32.xlu0 %v236, 104
  %v635 = vpop.permute.xlu0 %634
  %636 = vrot.lane.b32.xlu0 %v237, 104
  %v637 = vpop.permute.xlu0 %636
  %638 = vrot.lane.b32.xlu0 %v238, 104
  %v639 = vpop.permute.xlu0 %638
  %640 = vrot.lane.b32.xlu0 %v239, 104
  %v641 = vpop.permute.xlu0 %640
  %642 = vrot.lane.b32.xlu0 %v240, 104
  %v643 = vpop.permute.xlu0 %642
  %644 = vrot.lane.b32.xlu0 %v241, 104
  %v645 = vpop.permute.xlu0 %644
  %646 = vrot.lane.b32.xlu0 %v242, 104
  %v647 = vpop.permute.xlu0 %646
  %648 = vrot.lane.b32.xlu0 %v243, 104
  %v649 = vpop.permute.xlu0 %648
  %650 = vrot.lane.b32.xlu0 %v244, 104
  %v651 = vpop.permute.xlu0 %650
  %652 = vrot.lane.b32.xlu0 %v245, 104
  %v653 = vpop.permute.xlu0 %652
  %654 = vrot.lane.b32.xlu0 %v246, 104
  %v655 = vpop.permute.xlu0 %654
  %656 = vrot.lane.b32.xlu0 %v247, 104
  %v657 = vpop.permute.xlu0 %656
  %658 = vrot.lane.b32.xlu0 %v248, 104
  %v659 = vpop.permute.xlu0 %658
  %660 = vrot.lane.b32.xlu0 %v249, 104
  %v661 = vpop.permute.xlu0 %660
  %662 = vrot.lane.b32.xlu0 %v250, 104
  %v663 = vpop.permute.xlu0 %662
  %664 = vrot.lane.b32.xlu0 %v251, 104
  %v665 = vpop.permute.xlu0 %664
  %666 = vrot.lane.b32.xlu0 %v252, 104
  %v667 = vpop.permute.xlu0 %666
  %668 = vrot.lane.b32.xlu0 %v253, 104
  %v669 = vpop.permute.xlu0 %668
  %670 = vrot.lane.b32.xlu0 %v254, 104
  %v671 = vpop.permute.xlu0 %670
  %672 = vrot.lane.b32.xlu0 %v255, 104
  %v673 = vpop.permute.xlu0 %672
  %v712 = vmax.f32 %v560, %v599
  %v713 = vmax.f32 %v561, %v601
  %v714 = vmax.f32 %v562, %v603
  %v715 = vmax.f32 %v563, %v605
  %v716 = vmax.f32 %v564, %v607
  %v717 = vmax.f32 %v565, %v609
  %v718 = vmax.f32 %v566, %v611
  %v719 = vmax.f32 %v567, %v613
  %v720 = vmax.f32 %v568, %v615
  %v721 = vmax.f32 %v569, %v617
  %v722 = vmax.f32 %v570, %v619
  %v723 = vmax.f32 %v571, %v621
  %v724 = vmax.f32 %v572, %v623
  %v725 = vmax.f32 %v573, %v625
  %v726 = vmax.f32 %v574, %v627
  %v727 = vmax.f32 %v575, %v629
  %v728 = vmax.f32 %v576, %v631
  %v729 = vmax.f32 %v577, %v633
  %v730 = vmax.f32 %v578, %v635
  %v731 = vmax.f32 %v579, %v637
  %v732 = vmax.f32 %v580, %v639
  %v733 = vmax.f32 %v581, %v641
  %v734 = vmax.f32 %v582, %v643
  %v735 = vmax.f32 %v583, %v645
  %v736 = vmax.f32 %v584, %v647
  %v737 = vmax.f32 %v585, %v649
  %v738 = vmax.f32 %v586, %v651
  %v739 = vmax.f32 %v587, %v653
  %v740 = vmax.f32 %v588, %v655
  %v741 = vmax.f32 %v589, %v657
  %v742 = vmax.f32 %v590, %v659
  %v743 = vmax.f32 %v591, %v661
  %v744 = vmax.f32 %v592, %v663
  %v745 = vmax.f32 %v593, %v665
  %v746 = vmax.f32 %v594, %v667
  %v747 = vmax.f32 %v595, %v669
  %v748 = vmax.f32 %v596, %v671
  %v749 = vmax.f32 %v597, %v673
  %750 = vrot.lane.b32.xlu0 %v218, 96
  %v751 = vpop.permute.xlu0 %750
  %752 = vrot.lane.b32.xlu0 %v219, 96
  %v753 = vpop.permute.xlu0 %752
  %754 = vrot.lane.b32.xlu0 %v220, 96
  %v755 = vpop.permute.xlu0 %754
  %756 = vrot.lane.b32.xlu0 %v221, 96
  %v757 = vpop.permute.xlu0 %756
  %758 = vrot.lane.b32.xlu0 %v222, 96
  %v759 = vpop.permute.xlu0 %758
  %760 = vrot.lane.b32.xlu0 %v223, 96
  %v761 = vpop.permute.xlu0 %760
  %762 = vrot.lane.b32.xlu0 %v224, 96
  %v763 = vpop.permute.xlu0 %762
  %764 = vrot.lane.b32.xlu0 %v225, 96
  %v765 = vpop.permute.xlu0 %764
  %766 = vrot.lane.b32.xlu0 %v226, 96
  %v767 = vpop.permute.xlu0 %766
  %768 = vrot.lane.b32.xlu0 %v227, 96
  %v769 = vpop.permute.xlu0 %768
  %770 = vrot.lane.b32.xlu0 %v228, 96
  %v771 = vpop.permute.xlu0 %770
  %772 = vrot.lane.b32.xlu0 %v229, 96
  %v773 = vpop.permute.xlu0 %772
  %774 = vrot.lane.b32.xlu0 %v230, 96
  %v775 = vpop.permute.xlu0 %774
  %776 = vrot.lane.b32.xlu0 %v231, 96
  %v777 = vpop.permute.xlu0 %776
  %778 = vrot.lane.b32.xlu0 %v232, 96
  %v779 = vpop.permute.xlu0 %778
  %780 = vrot.lane.b32.xlu0 %v233, 96
  %v781 = vpop.permute.xlu0 %780
  %782 = vrot.lane.b32.xlu0 %v234, 96
  %v783 = vpop.permute.xlu0 %782
  %784 = vrot.lane.b32.xlu0 %v235, 96
  %v785 = vpop.permute.xlu0 %784
  %786 = vrot.lane.b32.xlu0 %v236, 96
  %v787 = vpop.permute.xlu0 %786
  %788 = vrot.lane.b32.xlu0 %v237, 96
  %v789 = vpop.permute.xlu0 %788
  %790 = vrot.lane.b32.xlu0 %v238, 96
  %v791 = vpop.permute.xlu0 %790
  %792 = vrot.lane.b32.xlu0 %v239, 96
  %v793 = vpop.permute.xlu0 %792
  %794 = vrot.lane.b32.xlu0 %v240, 96
  %v795 = vpop.permute.xlu0 %794
  %796 = vrot.lane.b32.xlu0 %v241, 96
  %v797 = vpop.permute.xlu0 %796
  %798 = vrot.lane.b32.xlu0 %v242, 96
  %v799 = vpop.permute.xlu0 %798
  %800 = vrot.lane.b32.xlu0 %v243, 96
  %v801 = vpop.permute.xlu0 %800
  %802 = vrot.lane.b32.xlu0 %v244, 96
  %v803 = vpop.permute.xlu0 %802
  %804 = vrot.lane.b32.xlu0 %v245, 96
  %v805 = vpop.permute.xlu0 %804
  %806 = vrot.lane.b32.xlu0 %v246, 96
  %v807 = vpop.permute.xlu0 %806
  %808 = vrot.lane.b32.xlu0 %v247, 96
  %v809 = vpop.permute.xlu0 %808
  %810 = vrot.lane.b32.xlu0 %v248, 96
  %v811 = vpop.permute.xlu0 %810
  %812 = vrot.lane.b32.xlu0 %v249, 96
  %v813 = vpop.permute.xlu0 %812
  %814 = vrot.lane.b32.xlu0 %v250, 96
  %v815 = vpop.permute.xlu0 %814
  %816 = vrot.lane.b32.xlu0 %v251, 96
  %v817 = vpop.permute.xlu0 %816
  %818 = vrot.lane.b32.xlu0 %v252, 96
  %v819 = vpop.permute.xlu0 %818
  %820 = vrot.lane.b32.xlu0 %v253, 96
  %v821 = vpop.permute.xlu0 %820
  %822 = vrot.lane.b32.xlu0 %v254, 96
  %v823 = vpop.permute.xlu0 %822
  %824 = vrot.lane.b32.xlu0 %v255, 96
  %v825 = vpop.permute.xlu0 %824
  %v864 = vmax.f32 %v712, %v751
  %v865 = vmax.f32 %v713, %v753
  %v866 = vmax.f32 %v714, %v755
  %v867 = vmax.f32 %v715, %v757
  %v868 = vmax.f32 %v716, %v759
  %v869 = vmax.f32 %v717, %v761
  %v870 = vmax.f32 %v718, %v763
  %v871 = vmax.f32 %v719, %v765
  %v872 = vmax.f32 %v720, %v767
  %v873 = vmax.f32 %v721, %v769
  %v874 = vmax.f32 %v722, %v771
  %v875 = vmax.f32 %v723, %v773
  %v876 = vmax.f32 %v724, %v775
  %v877 = vmax.f32 %v725, %v777
  %v878 = vmax.f32 %v726, %v779
  %v879 = vmax.f32 %v727, %v781
  %v880 = vmax.f32 %v728, %v783
  %v881 = vmax.f32 %v729, %v785
  %v882 = vmax.f32 %v730, %v787
  %v883 = vmax.f32 %v731, %v789
  %v884 = vmax.f32 %v732, %v791
  %v885 = vmax.f32 %v733, %v793
  %v886 = vmax.f32 %v734, %v795
  %v887 = vmax.f32 %v735, %v797
  %v888 = vmax.f32 %v736, %v799
  %v889 = vmax.f32 %v737, %v801
  %v890 = vmax.f32 %v738, %v803
  %v891 = vmax.f32 %v739, %v805
  %v892 = vmax.f32 %v740, %v807
  %v893 = vmax.f32 %v741, %v809
  %v894 = vmax.f32 %v742, %v811
  %v895 = vmax.f32 %v743, %v813
  %v896 = vmax.f32 %v744, %v815
  %v897 = vmax.f32 %v745, %v817
  %v898 = vmax.f32 %v746, %v819
  %v899 = vmax.f32 %v747, %v821
  %v900 = vmax.f32 %v748, %v823
  %v901 = vmax.f32 %v749, %v825
  %902 = vrot.lane.b32.xlu0 %v218, 88
  %v903 = vpop.permute.xlu0 %902
  %904 = vrot.lane.b32.xlu0 %v219, 88
  %v905 = vpop.permute.xlu0 %904
  %906 = vrot.lane.b32.xlu0 %v220, 88
  %v907 = vpop.permute.xlu0 %906
  %908 = vrot.lane.b32.xlu0 %v221, 88
  %v909 = vpop.permute.xlu0 %908
  %910 = vrot.lane.b32.xlu0 %v222, 88
  %v911 = vpop.permute.xlu0 %910
  %912 = vrot.lane.b32.xlu0 %v223, 88
  %v913 = vpop.permute.xlu0 %912
  %914 = vrot.lane.b32.xlu0 %v224, 88
  %v915 = vpop.permute.xlu0 %914
  %916 = vrot.lane.b32.xlu0 %v225, 88
  %v917 = vpop.permute.xlu0 %916
  %918 = vrot.lane.b32.xlu0 %v226, 88
  %v919 = vpop.permute.xlu0 %918
  %920 = vrot.lane.b32.xlu0 %v227, 88
  %v921 = vpop.permute.xlu0 %920
  %922 = vrot.lane.b32.xlu0 %v228, 88
  %v923 = vpop.permute.xlu0 %922
  %924 = vrot.lane.b32.xlu0 %v229, 88
  %v925 = vpop.permute.xlu0 %924
  %926 = vrot.lane.b32.xlu0 %v230, 88
  %v927 = vpop.permute.xlu0 %926
  %928 = vrot.lane.b32.xlu0 %v231, 88
  %v929 = vpop.permute.xlu0 %928
  %930 = vrot.lane.b32.xlu0 %v232, 88
  %v931 = vpop.permute.xlu0 %930
  %932 = vrot.lane.b32.xlu0 %v233, 88
  %v933 = vpop.permute.xlu0 %932
  %934 = vrot.lane.b32.xlu0 %v234, 88
  %v935 = vpop.permute.xlu0 %934
  %936 = vrot.lane.b32.xlu0 %v235, 88
  %v937 = vpop.permute.xlu0 %936
  %938 = vrot.lane.b32.xlu0 %v236, 88
  %v939 = vpop.permute.xlu0 %938
  %940 = vrot.lane.b32.xlu0 %v237, 88
  %v941 = vpop.permute.xlu0 %940
  %942 = vrot.lane.b32.xlu0 %v238, 88
  %v943 = vpop.permute.xlu0 %942
  %944 = vrot.lane.b32.xlu0 %v239, 88
  %v945 = vpop.permute.xlu0 %944
  %946 = vrot.lane.b32.xlu0 %v240, 88
  %v947 = vpop.permute.xlu0 %946
  %948 = vrot.lane.b32.xlu0 %v241, 88
  %v949 = vpop.permute.xlu0 %948
  %950 = vrot.lane.b32.xlu0 %v242, 88
  %v951 = vpop.permute.xlu0 %950
  %952 = vrot.lane.b32.xlu0 %v243, 88
  %v953 = vpop.permute.xlu0 %952
  %954 = vrot.lane.b32.xlu0 %v244, 88
  %v955 = vpop.permute.xlu0 %954
  %956 = vrot.lane.b32.xlu0 %v245, 88
  %v957 = vpop.permute.xlu0 %956
  %958 = vrot.lane.b32.xlu0 %v246, 88
  %v959 = vpop.permute.xlu0 %958
  %960 = vrot.lane.b32.xlu0 %v247, 88
  %v961 = vpop.permute.xlu0 %960
  %962 = vrot.lane.b32.xlu0 %v248, 88
  %v963 = vpop.permute.xlu0 %962
  %964 = vrot.lane.b32.xlu0 %v249, 88
  %v965 = vpop.permute.xlu0 %964
  %966 = vrot.lane.b32.xlu0 %v250, 88
  %v967 = vpop.permute.xlu0 %966
  %968 = vrot.lane.b32.xlu0 %v251, 88
  %v969 = vpop.permute.xlu0 %968
  %970 = vrot.lane.b32.xlu0 %v252, 88
  %v971 = vpop.permute.xlu0 %970
  %972 = vrot.lane.b32.xlu0 %v253, 88
  %v973 = vpop.permute.xlu0 %972
  %974 = vrot.lane.b32.xlu0 %v254, 88
  %v975 = vpop.permute.xlu0 %974
  %976 = vrot.lane.b32.xlu0 %v255, 88
  %v977 = vpop.permute.xlu0 %976
  %v1016 = vmax.f32 %v864, %v903
  %v1017 = vmax.f32 %v865, %v905
  %v1018 = vmax.f32 %v866, %v907
  %v1019 = vmax.f32 %v867, %v909
  %v1020 = vmax.f32 %v868, %v911
  %v1021 = vmax.f32 %v869, %v913
  %v1022 = vmax.f32 %v870, %v915
  %v1023 = vmax.f32 %v871, %v917
  %v1024 = vmax.f32 %v872, %v919
  %v1025 = vmax.f32 %v873, %v921
  %v1026 = vmax.f32 %v874, %v923
  %v1027 = vmax.f32 %v875, %v925
  %v1028 = vmax.f32 %v876, %v927
  %v1029 = vmax.f32 %v877, %v929
  %v1030 = vmax.f32 %v878, %v931
  %v1031 = vmax.f32 %v879, %v933
  %v1032 = vmax.f32 %v880, %v935
  %v1033 = vmax.f32 %v881, %v937
  %v1034 = vmax.f32 %v882, %v939
  %v1035 = vmax.f32 %v883, %v941
  %v1036 = vmax.f32 %v884, %v943
  %v1037 = vmax.f32 %v885, %v945
  %v1038 = vmax.f32 %v886, %v947
  %v1039 = vmax.f32 %v887, %v949
  %v1040 = vmax.f32 %v888, %v951
  %v1041 = vmax.f32 %v889, %v953
  %v1042 = vmax.f32 %v890, %v955
  %v1043 = vmax.f32 %v891, %v957
  %v1044 = vmax.f32 %v892, %v959
  %v1045 = vmax.f32 %v893, %v961
  %v1046 = vmax.f32 %v894, %v963
  %v1047 = vmax.f32 %v895, %v965
  %v1048 = vmax.f32 %v896, %v967
  %v1049 = vmax.f32 %v897, %v969
  %v1050 = vmax.f32 %v898, %v971
  %v1051 = vmax.f32 %v899, %v973
  %v1052 = vmax.f32 %v900, %v975
  %v1053 = vmax.f32 %v901, %v977
  %1054 = vrot.lane.b32.xlu0 %v218, 80
  %v1055 = vpop.permute.xlu0 %1054
  %1056 = vrot.lane.b32.xlu0 %v219, 80
  %v1057 = vpop.permute.xlu0 %1056
  %1058 = vrot.lane.b32.xlu0 %v220, 80
  %v1059 = vpop.permute.xlu0 %1058
  %1060 = vrot.lane.b32.xlu0 %v221, 80
  %v1061 = vpop.permute.xlu0 %1060
  %1062 = vrot.lane.b32.xlu0 %v222, 80
  %v1063 = vpop.permute.xlu0 %1062
  %1064 = vrot.lane.b32.xlu0 %v223, 80
  %v1065 = vpop.permute.xlu0 %1064
  %1066 = vrot.lane.b32.xlu0 %v224, 80
  %v1067 = vpop.permute.xlu0 %1066
  %1068 = vrot.lane.b32.xlu0 %v225, 80
  %v1069 = vpop.permute.xlu0 %1068
  %1070 = vrot.lane.b32.xlu0 %v226, 80
  %v1071 = vpop.permute.xlu0 %1070
  %1072 = vrot.lane.b32.xlu0 %v227, 80
  %v1073 = vpop.permute.xlu0 %1072
  %1074 = vrot.lane.b32.xlu0 %v228, 80
  %v1075 = vpop.permute.xlu0 %1074
  %1076 = vrot.lane.b32.xlu0 %v229, 80
  %v1077 = vpop.permute.xlu0 %1076
  %1078 = vrot.lane.b32.xlu0 %v230, 80
  %v1079 = vpop.permute.xlu0 %1078
  %1080 = vrot.lane.b32.xlu0 %v231, 80
  %v1081 = vpop.permute.xlu0 %1080
  %1082 = vrot.lane.b32.xlu0 %v232, 80
  %v1083 = vpop.permute.xlu0 %1082
  %1084 = vrot.lane.b32.xlu0 %v233, 80
  %v1085 = vpop.permute.xlu0 %1084
  %1086 = vrot.lane.b32.xlu0 %v234, 80
  %v1087 = vpop.permute.xlu0 %1086
  %1088 = vrot.lane.b32.xlu0 %v235, 80
  %v1089 = vpop.permute.xlu0 %1088
  %1090 = vrot.lane.b32.xlu0 %v236, 80
  %v1091 = vpop.permute.xlu0 %1090
  %1092 = vrot.lane.b32.xlu0 %v237, 80
  %v1093 = vpop.permute.xlu0 %1092
  %1094 = vrot.lane.b32.xlu0 %v238, 80
  %v1095 = vpop.permute.xlu0 %1094
  %1096 = vrot.lane.b32.xlu0 %v239, 80
  %v1097 = vpop.permute.xlu0 %1096
  %1098 = vrot.lane.b32.xlu0 %v240, 80
  %v1099 = vpop.permute.xlu0 %1098
  %1100 = vrot.lane.b32.xlu0 %v241, 80
  %v1101 = vpop.permute.xlu0 %1100
  %1102 = vrot.lane.b32.xlu0 %v242, 80
  %v1103 = vpop.permute.xlu0 %1102
  %1104 = vrot.lane.b32.xlu0 %v243, 80
  %v1105 = vpop.permute.xlu0 %1104
  %1106 = vrot.lane.b32.xlu0 %v244, 80
  %v1107 = vpop.permute.xlu0 %1106
  %1108 = vrot.lane.b32.xlu0 %v245, 80
  %v1109 = vpop.permute.xlu0 %1108
  %1110 = vrot.lane.b32.xlu0 %v246, 80
  %v1111 = vpop.permute.xlu0 %1110
  %1112 = vrot.lane.b32.xlu0 %v247, 80
  %v1113 = vpop.permute.xlu0 %1112
  %1114 = vrot.lane.b32.xlu0 %v248, 80
  %v1115 = vpop.permute.xlu0 %1114
  %1116 = vrot.lane.b32.xlu0 %v249, 80
  %v1117 = vpop.permute.xlu0 %1116
  %1118 = vrot.lane.b32.xlu0 %v250, 80
  %v1119 = vpop.permute.xlu0 %1118
  %1120 = vrot.lane.b32.xlu0 %v251, 80
  %v1121 = vpop.permute.xlu0 %1120
  %1122 = vrot.lane.b32.xlu0 %v252, 80
  %v1123 = vpop.permute.xlu0 %1122
  %1124 = vrot.lane.b32.xlu0 %v253, 80
  %v1125 = vpop.permute.xlu0 %1124
  %1126 = vrot.lane.b32.xlu0 %v254, 80
  %v1127 = vpop.permute.xlu0 %1126
  %1128 = vrot.lane.b32.xlu0 %v255, 80
  %v1129 = vpop.permute.xlu0 %1128
  %v1168 = vmax.f32 %v1016, %v1055
  %v1169 = vmax.f32 %v1017, %v1057
  %v1170 = vmax.f32 %v1018, %v1059
  %v1171 = vmax.f32 %v1019, %v1061
  %v1172 = vmax.f32 %v1020, %v1063
  %v1173 = vmax.f32 %v1021, %v1065
  %v1174 = vmax.f32 %v1022, %v1067
  %v1175 = vmax.f32 %v1023, %v1069
  %v1176 = vmax.f32 %v1024, %v1071
  %v1177 = vmax.f32 %v1025, %v1073
  %v1178 = vmax.f32 %v1026, %v1075
  %v1179 = vmax.f32 %v1027, %v1077
  %v1180 = vmax.f32 %v1028, %v1079
  %v1181 = vmax.f32 %v1029, %v1081
  %v1182 = vmax.f32 %v1030, %v1083
  %v1183 = vmax.f32 %v1031, %v1085
  %v1184 = vmax.f32 %v1032, %v1087
  %v1185 = vmax.f32 %v1033, %v1089
  %v1186 = vmax.f32 %v1034, %v1091
  %v1187 = vmax.f32 %v1035, %v1093
  %v1188 = vmax.f32 %v1036, %v1095
  %v1189 = vmax.f32 %v1037, %v1097
  %v1190 = vmax.f32 %v1038, %v1099
  %v1191 = vmax.f32 %v1039, %v1101
  %v1192 = vmax.f32 %v1040, %v1103
  %v1193 = vmax.f32 %v1041, %v1105
  %v1194 = vmax.f32 %v1042, %v1107
  %v1195 = vmax.f32 %v1043, %v1109
  %v1196 = vmax.f32 %v1044, %v1111
  %v1197 = vmax.f32 %v1045, %v1113
  %v1198 = vmax.f32 %v1046, %v1115
  %v1199 = vmax.f32 %v1047, %v1117
  %v1200 = vmax.f32 %v1048, %v1119
  %v1201 = vmax.f32 %v1049, %v1121
  %v1202 = vmax.f32 %v1050, %v1123
  %v1203 = vmax.f32 %v1051, %v1125
  %v1204 = vmax.f32 %v1052, %v1127
  %v1205 = vmax.f32 %v1053, %v1129
  %1206 = vrot.lane.b32.xlu0 %v218, 72
  %v1207 = vpop.permute.xlu0 %1206
  %1208 = vrot.lane.b32.xlu0 %v219, 72
  %v1209 = vpop.permute.xlu0 %1208
  %1210 = vrot.lane.b32.xlu0 %v220, 72
  %v1211 = vpop.permute.xlu0 %1210
  %1212 = vrot.lane.b32.xlu0 %v221, 72
  %v1213 = vpop.permute.xlu0 %1212
  %1214 = vrot.lane.b32.xlu0 %v222, 72
  %v1215 = vpop.permute.xlu0 %1214
  %1216 = vrot.lane.b32.xlu0 %v223, 72
  %v1217 = vpop.permute.xlu0 %1216
  %1218 = vrot.lane.b32.xlu0 %v224, 72
  %v1219 = vpop.permute.xlu0 %1218
  %1220 = vrot.lane.b32.xlu0 %v225, 72
  %v1221 = vpop.permute.xlu0 %1220
  %1222 = vrot.lane.b32.xlu0 %v226, 72
  %v1223 = vpop.permute.xlu0 %1222
  %1224 = vrot.lane.b32.xlu0 %v227, 72
  %v1225 = vpop.permute.xlu0 %1224
  %1226 = vrot.lane.b32.xlu0 %v228, 72
  %v1227 = vpop.permute.xlu0 %1226
  %1228 = vrot.lane.b32.xlu0 %v229, 72
  %v1229 = vpop.permute.xlu0 %1228
  %1230 = vrot.lane.b32.xlu0 %v230, 72
  %v1231 = vpop.permute.xlu0 %1230
  %1232 = vrot.lane.b32.xlu0 %v231, 72
  %v1233 = vpop.permute.xlu0 %1232
  %1234 = vrot.lane.b32.xlu0 %v232, 72
  %v1235 = vpop.permute.xlu0 %1234
  %1236 = vrot.lane.b32.xlu0 %v233, 72
  %v1237 = vpop.permute.xlu0 %1236
  %1238 = vrot.lane.b32.xlu0 %v234, 72
  %v1239 = vpop.permute.xlu0 %1238
  %1240 = vrot.lane.b32.xlu0 %v235, 72
  %v1241 = vpop.permute.xlu0 %1240
  %1242 = vrot.lane.b32.xlu0 %v236, 72
  %v1243 = vpop.permute.xlu0 %1242
  %1244 = vrot.lane.b32.xlu0 %v237, 72
  %v1245 = vpop.permute.xlu0 %1244
  %1246 = vrot.lane.b32.xlu0 %v238, 72
  %v1247 = vpop.permute.xlu0 %1246
  %1248 = vrot.lane.b32.xlu0 %v239, 72
  %v1249 = vpop.permute.xlu0 %1248
  %1250 = vrot.lane.b32.xlu0 %v240, 72
  %v1251 = vpop.permute.xlu0 %1250
  %1252 = vrot.lane.b32.xlu0 %v241, 72
  %v1253 = vpop.permute.xlu0 %1252
  %1254 = vrot.lane.b32.xlu0 %v242, 72
  %v1255 = vpop.permute.xlu0 %1254
  %1256 = vrot.lane.b32.xlu0 %v243, 72
  %v1257 = vpop.permute.xlu0 %1256
  %1258 = vrot.lane.b32.xlu0 %v244, 72
  %v1259 = vpop.permute.xlu0 %1258
  %1260 = vrot.lane.b32.xlu0 %v245, 72
  %v1261 = vpop.permute.xlu0 %1260
  %1262 = vrot.lane.b32.xlu0 %v246, 72
  %v1263 = vpop.permute.xlu0 %1262
  %1264 = vrot.lane.b32.xlu0 %v247, 72
  %v1265 = vpop.permute.xlu0 %1264
  %1266 = vrot.lane.b32.xlu0 %v248, 72
  %v1267 = vpop.permute.xlu0 %1266
  %1268 = vrot.lane.b32.xlu0 %v249, 72
  %v1269 = vpop.permute.xlu0 %1268
  %1270 = vrot.lane.b32.xlu0 %v250, 72
  %v1271 = vpop.permute.xlu0 %1270
  %1272 = vrot.lane.b32.xlu0 %v251, 72
  %v1273 = vpop.permute.xlu0 %1272
  %1274 = vrot.lane.b32.xlu0 %v252, 72
  %v1275 = vpop.permute.xlu0 %1274
  %1276 = vrot.lane.b32.xlu0 %v253, 72
  %v1277 = vpop.permute.xlu0 %1276
  %1278 = vrot.lane.b32.xlu0 %v254, 72
  %v1279 = vpop.permute.xlu0 %1278
  %1280 = vrot.lane.b32.xlu0 %v255, 72
  %v1281 = vpop.permute.xlu0 %1280
  %v1320 = vmax.f32 %v1168, %v1207
  %v1321 = vmax.f32 %v1169, %v1209
  %v1322 = vmax.f32 %v1170, %v1211
  %v1323 = vmax.f32 %v1171, %v1213
  %v1324 = vmax.f32 %v1172, %v1215
  %v1325 = vmax.f32 %v1173, %v1217
  %v1326 = vmax.f32 %v1174, %v1219
  %v1327 = vmax.f32 %v1175, %v1221
  %v1328 = vmax.f32 %v1176, %v1223
  %v1329 = vmax.f32 %v1177, %v1225
  %v1330 = vmax.f32 %v1178, %v1227
  %v1331 = vmax.f32 %v1179, %v1229
  %v1332 = vmax.f32 %v1180, %v1231
  %v1333 = vmax.f32 %v1181, %v1233
  %v1334 = vmax.f32 %v1182, %v1235
  %v1335 = vmax.f32 %v1183, %v1237
  %v1336 = vmax.f32 %v1184, %v1239
  %v1337 = vmax.f32 %v1185, %v1241
  %v1338 = vmax.f32 %v1186, %v1243
  %v1339 = vmax.f32 %v1187, %v1245
  %v1340 = vmax.f32 %v1188, %v1247
  %v1341 = vmax.f32 %v1189, %v1249
  %v1342 = vmax.f32 %v1190, %v1251
  %v1343 = vmax.f32 %v1191, %v1253
  %v1344 = vmax.f32 %v1192, %v1255
  %v1345 = vmax.f32 %v1193, %v1257
  %v1346 = vmax.f32 %v1194, %v1259
  %v1347 = vmax.f32 %v1195, %v1261
  %v1348 = vmax.f32 %v1196, %v1263
  %v1349 = vmax.f32 %v1197, %v1265
  %v1350 = vmax.f32 %v1198, %v1267
  %v1351 = vmax.f32 %v1199, %v1269
  %v1352 = vmax.f32 %v1200, %v1271
  %v1353 = vmax.f32 %v1201, %v1273
  %v1354 = vmax.f32 %v1202, %v1275
  %v1355 = vmax.f32 %v1203, %v1277
  %v1356 = vmax.f32 %v1204, %v1279
  %v1357 = vmax.f32 %v1205, %v1281
  %1358 = vrot.lane.b32.xlu0 %v218, 64
  %v1359 = vpop.permute.xlu0 %1358
  %1360 = vrot.lane.b32.xlu0 %v219, 64
  %v1361 = vpop.permute.xlu0 %1360
  %1362 = vrot.lane.b32.xlu0 %v220, 64
  %v1363 = vpop.permute.xlu0 %1362
  %1364 = vrot.lane.b32.xlu0 %v221, 64
  %v1365 = vpop.permute.xlu0 %1364
  %1366 = vrot.lane.b32.xlu0 %v222, 64
  %v1367 = vpop.permute.xlu0 %1366
  %1368 = vrot.lane.b32.xlu0 %v223, 64
  %v1369 = vpop.permute.xlu0 %1368
  %1370 = vrot.lane.b32.xlu0 %v224, 64
  %v1371 = vpop.permute.xlu0 %1370
  %1372 = vrot.lane.b32.xlu0 %v225, 64
  %v1373 = vpop.permute.xlu0 %1372
  %1374 = vrot.lane.b32.xlu0 %v226, 64
  %v1375 = vpop.permute.xlu0 %1374
  %1376 = vrot.lane.b32.xlu0 %v227, 64
  %v1377 = vpop.permute.xlu0 %1376
  %1378 = vrot.lane.b32.xlu0 %v228, 64
  %v1379 = vpop.permute.xlu0 %1378
  %1380 = vrot.lane.b32.xlu0 %v229, 64
  %v1381 = vpop.permute.xlu0 %1380
  %1382 = vrot.lane.b32.xlu0 %v230, 64
  %v1383 = vpop.permute.xlu0 %1382
  %1384 = vrot.lane.b32.xlu0 %v231, 64
  %v1385 = vpop.permute.xlu0 %1384
  %1386 = vrot.lane.b32.xlu0 %v232, 64
  %v1387 = vpop.permute.xlu0 %1386
  %1388 = vrot.lane.b32.xlu0 %v233, 64
  %v1389 = vpop.permute.xlu0 %1388
  %1390 = vrot.lane.b32.xlu0 %v234, 64
  %v1391 = vpop.permute.xlu0 %1390
  %1392 = vrot.lane.b32.xlu0 %v235, 64
  %v1393 = vpop.permute.xlu0 %1392
  %1394 = vrot.lane.b32.xlu0 %v236, 64
  %v1395 = vpop.permute.xlu0 %1394
  %1396 = vrot.lane.b32.xlu0 %v237, 64
  %v1397 = vpop.permute.xlu0 %1396
  %1398 = vrot.lane.b32.xlu0 %v238, 64
  %v1399 = vpop.permute.xlu0 %1398
  %1400 = vrot.lane.b32.xlu0 %v239, 64
  %v1401 = vpop.permute.xlu0 %1400
  %1402 = vrot.lane.b32.xlu0 %v240, 64
  %v1403 = vpop.permute.xlu0 %1402
  %1404 = vrot.lane.b32.xlu0 %v241, 64
  %v1405 = vpop.permute.xlu0 %1404
  %1406 = vrot.lane.b32.xlu0 %v242, 64
  %v1407 = vpop.permute.xlu0 %1406
  %1408 = vrot.lane.b32.xlu0 %v243, 64
  %v1409 = vpop.permute.xlu0 %1408
  %1410 = vrot.lane.b32.xlu0 %v244, 64
  %v1411 = vpop.permute.xlu0 %1410
  %1412 = vrot.lane.b32.xlu0 %v245, 64
  %v1413 = vpop.permute.xlu0 %1412
  %1414 = vrot.lane.b32.xlu0 %v246, 64
  %v1415 = vpop.permute.xlu0 %1414
  %1416 = vrot.lane.b32.xlu0 %v247, 64
  %v1417 = vpop.permute.xlu0 %1416
  %1418 = vrot.lane.b32.xlu0 %v248, 64
  %v1419 = vpop.permute.xlu0 %1418
  %1420 = vrot.lane.b32.xlu0 %v249, 64
  %v1421 = vpop.permute.xlu0 %1420
  %1422 = vrot.lane.b32.xlu0 %v250, 64
  %v1423 = vpop.permute.xlu0 %1422
  %1424 = vrot.lane.b32.xlu0 %v251, 64
  %v1425 = vpop.permute.xlu0 %1424
  %1426 = vrot.lane.b32.xlu0 %v252, 64
  %v1427 = vpop.permute.xlu0 %1426
  %1428 = vrot.lane.b32.xlu0 %v253, 64
  %v1429 = vpop.permute.xlu0 %1428
  %1430 = vrot.lane.b32.xlu0 %v254, 64
  %v1431 = vpop.permute.xlu0 %1430
  %1432 = vrot.lane.b32.xlu0 %v255, 64
  %v1433 = vpop.permute.xlu0 %1432
  %v1472 = vmax.f32 %v1320, %v1359
  %v1473 = vmax.f32 %v1321, %v1361
  %v1474 = vmax.f32 %v1322, %v1363
  %v1475 = vmax.f32 %v1323, %v1365
  %v1476 = vmax.f32 %v1324, %v1367
  %v1477 = vmax.f32 %v1325, %v1369
  %v1478 = vmax.f32 %v1326, %v1371
  %v1479 = vmax.f32 %v1327, %v1373
  %v1480 = vmax.f32 %v1328, %v1375
  %v1481 = vmax.f32 %v1329, %v1377
  %v1482 = vmax.f32 %v1330, %v1379
  %v1483 = vmax.f32 %v1331, %v1381
  %v1484 = vmax.f32 %v1332, %v1383
  %v1485 = vmax.f32 %v1333, %v1385
  %v1486 = vmax.f32 %v1334, %v1387
  %v1487 = vmax.f32 %v1335, %v1389
  %v1488 = vmax.f32 %v1336, %v1391
  %v1489 = vmax.f32 %v1337, %v1393
  %v1490 = vmax.f32 %v1338, %v1395
  %v1491 = vmax.f32 %v1339, %v1397
  %v1492 = vmax.f32 %v1340, %v1399
  %v1493 = vmax.f32 %v1341, %v1401
  %v1494 = vmax.f32 %v1342, %v1403
  %v1495 = vmax.f32 %v1343, %v1405
  %v1496 = vmax.f32 %v1344, %v1407
  %v1497 = vmax.f32 %v1345, %v1409
  %v1498 = vmax.f32 %v1346, %v1411
  %v1499 = vmax.f32 %v1347, %v1413
  %v1500 = vmax.f32 %v1348, %v1415
  %v1501 = vmax.f32 %v1349, %v1417
  %v1502 = vmax.f32 %v1350, %v1419
  %v1503 = vmax.f32 %v1351, %v1421
  %v1504 = vmax.f32 %v1352, %v1423
  %v1505 = vmax.f32 %v1353, %v1425
  %v1506 = vmax.f32 %v1354, %v1427
  %v1507 = vmax.f32 %v1355, %v1429
  %v1508 = vmax.f32 %v1356, %v1431
  %v1509 = vmax.f32 %v1357, %v1433
  %1510 = vrot.lane.b32.xlu0 %v218, 56
  %v1511 = vpop.permute.xlu0 %1510
  %1512 = vrot.lane.b32.xlu0 %v219, 56
  %v1513 = vpop.permute.xlu0 %1512
  %1514 = vrot.lane.b32.xlu0 %v220, 56
  %v1515 = vpop.permute.xlu0 %1514
  %1516 = vrot.lane.b32.xlu0 %v221, 56
  %v1517 = vpop.permute.xlu0 %1516
  %1518 = vrot.lane.b32.xlu0 %v222, 56
  %v1519 = vpop.permute.xlu0 %1518
  %1520 = vrot.lane.b32.xlu0 %v223, 56
  %v1521 = vpop.permute.xlu0 %1520
  %1522 = vrot.lane.b32.xlu0 %v224, 56
  %v1523 = vpop.permute.xlu0 %1522
  %1524 = vrot.lane.b32.xlu0 %v225, 56
  %v1525 = vpop.permute.xlu0 %1524
  %1526 = vrot.lane.b32.xlu0 %v226, 56
  %v1527 = vpop.permute.xlu0 %1526
  %1528 = vrot.lane.b32.xlu0 %v227, 56
  %v1529 = vpop.permute.xlu0 %1528
  %1530 = vrot.lane.b32.xlu0 %v228, 56
  %v1531 = vpop.permute.xlu0 %1530
  %1532 = vrot.lane.b32.xlu0 %v229, 56
  %v1533 = vpop.permute.xlu0 %1532
  %1534 = vrot.lane.b32.xlu0 %v230, 56
  %v1535 = vpop.permute.xlu0 %1534
  %1536 = vrot.lane.b32.xlu0 %v231, 56
  %v1537 = vpop.permute.xlu0 %1536
  %1538 = vrot.lane.b32.xlu0 %v232, 56
  %v1539 = vpop.permute.xlu0 %1538
  %1540 = vrot.lane.b32.xlu0 %v233, 56
  %v1541 = vpop.permute.xlu0 %1540
  %1542 = vrot.lane.b32.xlu0 %v234, 56
  %v1543 = vpop.permute.xlu0 %1542
  %1544 = vrot.lane.b32.xlu0 %v235, 56
  %v1545 = vpop.permute.xlu0 %1544
  %1546 = vrot.lane.b32.xlu0 %v236, 56
  %v1547 = vpop.permute.xlu0 %1546
  %1548 = vrot.lane.b32.xlu0 %v237, 56
  %v1549 = vpop.permute.xlu0 %1548
  %1550 = vrot.lane.b32.xlu0 %v238, 56
  %v1551 = vpop.permute.xlu0 %1550
  %1552 = vrot.lane.b32.xlu0 %v239, 56
  %v1553 = vpop.permute.xlu0 %1552
  %1554 = vrot.lane.b32.xlu0 %v240, 56
  %v1555 = vpop.permute.xlu0 %1554
  %1556 = vrot.lane.b32.xlu0 %v241, 56
  %v1557 = vpop.permute.xlu0 %1556
  %1558 = vrot.lane.b32.xlu0 %v242, 56
  %v1559 = vpop.permute.xlu0 %1558
  %1560 = vrot.lane.b32.xlu0 %v243, 56
  %v1561 = vpop.permute.xlu0 %1560
  %1562 = vrot.lane.b32.xlu0 %v244, 56
  %v1563 = vpop.permute.xlu0 %1562
  %1564 = vrot.lane.b32.xlu0 %v245, 56
  %v1565 = vpop.permute.xlu0 %1564
  %1566 = vrot.lane.b32.xlu0 %v246, 56
  %v1567 = vpop.permute.xlu0 %1566
  %1568 = vrot.lane.b32.xlu0 %v247, 56
  %v1569 = vpop.permute.xlu0 %1568
  %1570 = vrot.lane.b32.xlu0 %v248, 56
  %v1571 = vpop.permute.xlu0 %1570
  %1572 = vrot.lane.b32.xlu0 %v249, 56
  %v1573 = vpop.permute.xlu0 %1572
  %1574 = vrot.lane.b32.xlu0 %v250, 56
  %v1575 = vpop.permute.xlu0 %1574
  %1576 = vrot.lane.b32.xlu0 %v251, 56
  %v1577 = vpop.permute.xlu0 %1576
  %1578 = vrot.lane.b32.xlu0 %v252, 56
  %v1579 = vpop.permute.xlu0 %1578
  %1580 = vrot.lane.b32.xlu0 %v253, 56
  %v1581 = vpop.permute.xlu0 %1580
  %1582 = vrot.lane.b32.xlu0 %v254, 56
  %v1583 = vpop.permute.xlu0 %1582
  %1584 = vrot.lane.b32.xlu0 %v255, 56
  %v1585 = vpop.permute.xlu0 %1584
  %v1624 = vmax.f32 %v1472, %v1511
  %v1625 = vmax.f32 %v1473, %v1513
  %v1626 = vmax.f32 %v1474, %v1515
  %v1627 = vmax.f32 %v1475, %v1517
  %v1628 = vmax.f32 %v1476, %v1519
  %v1629 = vmax.f32 %v1477, %v1521
  %v1630 = vmax.f32 %v1478, %v1523
  %v1631 = vmax.f32 %v1479, %v1525
  %v1632 = vmax.f32 %v1480, %v1527
  %v1633 = vmax.f32 %v1481, %v1529
  %v1634 = vmax.f32 %v1482, %v1531
  %v1635 = vmax.f32 %v1483, %v1533
  %v1636 = vmax.f32 %v1484, %v1535
  %v1637 = vmax.f32 %v1485, %v1537
  %v1638 = vmax.f32 %v1486, %v1539
  %v1639 = vmax.f32 %v1487, %v1541
  %v1640 = vmax.f32 %v1488, %v1543
  %v1641 = vmax.f32 %v1489, %v1545
  %v1642 = vmax.f32 %v1490, %v1547
  %v1643 = vmax.f32 %v1491, %v1549
  %v1644 = vmax.f32 %v1492, %v1551
  %v1645 = vmax.f32 %v1493, %v1553
  %v1646 = vmax.f32 %v1494, %v1555
  %v1647 = vmax.f32 %v1495, %v1557
  %v1648 = vmax.f32 %v1496, %v1559
  %v1649 = vmax.f32 %v1497, %v1561
  %v1650 = vmax.f32 %v1498, %v1563
  %v1651 = vmax.f32 %v1499, %v1565
  %v1652 = vmax.f32 %v1500, %v1567
  %v1653 = vmax.f32 %v1501, %v1569
  %v1654 = vmax.f32 %v1502, %v1571
  %v1655 = vmax.f32 %v1503, %v1573
  %v1656 = vmax.f32 %v1504, %v1575
  %v1657 = vmax.f32 %v1505, %v1577
  %v1658 = vmax.f32 %v1506, %v1579
  %v1659 = vmax.f32 %v1507, %v1581
  %v1660 = vmax.f32 %v1508, %v1583
  %v1661 = vmax.f32 %v1509, %v1585
  %1662 = vrot.lane.b32.xlu0 %v218, 48
  %v1663 = vpop.permute.xlu0 %1662
  %1664 = vrot.lane.b32.xlu0 %v219, 48
  %v1665 = vpop.permute.xlu0 %1664
  %1666 = vrot.lane.b32.xlu0 %v220, 48
  %v1667 = vpop.permute.xlu0 %1666
  %1668 = vrot.lane.b32.xlu0 %v221, 48
  %v1669 = vpop.permute.xlu0 %1668
  %1670 = vrot.lane.b32.xlu0 %v222, 48
  %v1671 = vpop.permute.xlu0 %1670
  %1672 = vrot.lane.b32.xlu0 %v223, 48
  %v1673 = vpop.permute.xlu0 %1672
  %1674 = vrot.lane.b32.xlu0 %v224, 48
  %v1675 = vpop.permute.xlu0 %1674
  %1676 = vrot.lane.b32.xlu0 %v225, 48
  %v1677 = vpop.permute.xlu0 %1676
  %1678 = vrot.lane.b32.xlu0 %v226, 48
  %v1679 = vpop.permute.xlu0 %1678
  %1680 = vrot.lane.b32.xlu0 %v227, 48
  %v1681 = vpop.permute.xlu0 %1680
  %1682 = vrot.lane.b32.xlu0 %v228, 48
  %v1683 = vpop.permute.xlu0 %1682
  %1684 = vrot.lane.b32.xlu0 %v229, 48
  %v1685 = vpop.permute.xlu0 %1684
  %1686 = vrot.lane.b32.xlu0 %v230, 48
  %v1687 = vpop.permute.xlu0 %1686
  %1688 = vrot.lane.b32.xlu0 %v231, 48
  %v1689 = vpop.permute.xlu0 %1688
  %1690 = vrot.lane.b32.xlu0 %v232, 48
  %v1691 = vpop.permute.xlu0 %1690
  %1692 = vrot.lane.b32.xlu0 %v233, 48
  %v1693 = vpop.permute.xlu0 %1692
  %1694 = vrot.lane.b32.xlu0 %v234, 48
  %v1695 = vpop.permute.xlu0 %1694
  %1696 = vrot.lane.b32.xlu0 %v235, 48
  %v1697 = vpop.permute.xlu0 %1696
  %1698 = vrot.lane.b32.xlu0 %v236, 48
  %v1699 = vpop.permute.xlu0 %1698
  %1700 = vrot.lane.b32.xlu0 %v237, 48
  %v1701 = vpop.permute.xlu0 %1700
  %1702 = vrot.lane.b32.xlu0 %v238, 48
  %v1703 = vpop.permute.xlu0 %1702
  %1704 = vrot.lane.b32.xlu0 %v239, 48
  %v1705 = vpop.permute.xlu0 %1704
  %1706 = vrot.lane.b32.xlu0 %v240, 48
  %v1707 = vpop.permute.xlu0 %1706
  %1708 = vrot.lane.b32.xlu0 %v241, 48
  %v1709 = vpop.permute.xlu0 %1708
  %1710 = vrot.lane.b32.xlu0 %v242, 48
  %v1711 = vpop.permute.xlu0 %1710
  %1712 = vrot.lane.b32.xlu0 %v243, 48
  %v1713 = vpop.permute.xlu0 %1712
  %1714 = vrot.lane.b32.xlu0 %v244, 48
  %v1715 = vpop.permute.xlu0 %1714
  %1716 = vrot.lane.b32.xlu0 %v245, 48
  %v1717 = vpop.permute.xlu0 %1716
  %1718 = vrot.lane.b32.xlu0 %v246, 48
  %v1719 = vpop.permute.xlu0 %1718
  %1720 = vrot.lane.b32.xlu0 %v247, 48
  %v1721 = vpop.permute.xlu0 %1720
  %1722 = vrot.lane.b32.xlu0 %v248, 48
  %v1723 = vpop.permute.xlu0 %1722
  %1724 = vrot.lane.b32.xlu0 %v249, 48
  %v1725 = vpop.permute.xlu0 %1724
  %1726 = vrot.lane.b32.xlu0 %v250, 48
  %v1727 = vpop.permute.xlu0 %1726
  %1728 = vrot.lane.b32.xlu0 %v251, 48
  %v1729 = vpop.permute.xlu0 %1728
  %1730 = vrot.lane.b32.xlu0 %v252, 48
  %v1731 = vpop.permute.xlu0 %1730
  %1732 = vrot.lane.b32.xlu0 %v253, 48
  %v1733 = vpop.permute.xlu0 %1732
  %1734 = vrot.lane.b32.xlu0 %v254, 48
  %v1735 = vpop.permute.xlu0 %1734
  %1736 = vrot.lane.b32.xlu0 %v255, 48
  %v1737 = vpop.permute.xlu0 %1736
  %v1776 = vmax.f32 %v1624, %v1663
  %v1777 = vmax.f32 %v1625, %v1665
  %v1778 = vmax.f32 %v1626, %v1667
  %v1779 = vmax.f32 %v1627, %v1669
  %v1780 = vmax.f32 %v1628, %v1671
  %v1781 = vmax.f32 %v1629, %v1673
  %v1782 = vmax.f32 %v1630, %v1675
  %v1783 = vmax.f32 %v1631, %v1677
  %v1784 = vmax.f32 %v1632, %v1679
  %v1785 = vmax.f32 %v1633, %v1681
  %v1786 = vmax.f32 %v1634, %v1683
  %v1787 = vmax.f32 %v1635, %v1685
  %v1788 = vmax.f32 %v1636, %v1687
  %v1789 = vmax.f32 %v1637, %v1689
  %v1790 = vmax.f32 %v1638, %v1691
  %v1791 = vmax.f32 %v1639, %v1693
  %v1792 = vmax.f32 %v1640, %v1695
  %v1793 = vmax.f32 %v1641, %v1697
  %v1794 = vmax.f32 %v1642, %v1699
  %v1795 = vmax.f32 %v1643, %v1701
  %v1796 = vmax.f32 %v1644, %v1703
  %v1797 = vmax.f32 %v1645, %v1705
  %v1798 = vmax.f32 %v1646, %v1707
  %v1799 = vmax.f32 %v1647, %v1709
  %v1800 = vmax.f32 %v1648, %v1711
  %v1801 = vmax.f32 %v1649, %v1713
  %v1802 = vmax.f32 %v1650, %v1715
  %v1803 = vmax.f32 %v1651, %v1717
  %v1804 = vmax.f32 %v1652, %v1719
  %v1805 = vmax.f32 %v1653, %v1721
  %v1806 = vmax.f32 %v1654, %v1723
  %v1807 = vmax.f32 %v1655, %v1725
  %v1808 = vmax.f32 %v1656, %v1727
  %v1809 = vmax.f32 %v1657, %v1729
  %v1810 = vmax.f32 %v1658, %v1731
  %v1811 = vmax.f32 %v1659, %v1733
  %v1812 = vmax.f32 %v1660, %v1735
  %v1813 = vmax.f32 %v1661, %v1737
  %1814 = vrot.lane.b32.xlu0 %v218, 40
  %v1815 = vpop.permute.xlu0 %1814
  %1816 = vrot.lane.b32.xlu0 %v219, 40
  %v1817 = vpop.permute.xlu0 %1816
  %1818 = vrot.lane.b32.xlu0 %v220, 40
  %v1819 = vpop.permute.xlu0 %1818
  %1820 = vrot.lane.b32.xlu0 %v221, 40
  %v1821 = vpop.permute.xlu0 %1820
  %1822 = vrot.lane.b32.xlu0 %v222, 40
  %v1823 = vpop.permute.xlu0 %1822
  %1824 = vrot.lane.b32.xlu0 %v223, 40
  %v1825 = vpop.permute.xlu0 %1824
  %1826 = vrot.lane.b32.xlu0 %v224, 40
  %v1827 = vpop.permute.xlu0 %1826
  %1828 = vrot.lane.b32.xlu0 %v225, 40
  %v1829 = vpop.permute.xlu0 %1828
  %1830 = vrot.lane.b32.xlu0 %v226, 40
  %v1831 = vpop.permute.xlu0 %1830
  %1832 = vrot.lane.b32.xlu0 %v227, 40
  %v1833 = vpop.permute.xlu0 %1832
  %1834 = vrot.lane.b32.xlu0 %v228, 40
  %v1835 = vpop.permute.xlu0 %1834
  %1836 = vrot.lane.b32.xlu0 %v229, 40
  %v1837 = vpop.permute.xlu0 %1836
  %1838 = vrot.lane.b32.xlu0 %v230, 40
  %v1839 = vpop.permute.xlu0 %1838
  %1840 = vrot.lane.b32.xlu0 %v231, 40
  %v1841 = vpop.permute.xlu0 %1840
  %1842 = vrot.lane.b32.xlu0 %v232, 40
  %v1843 = vpop.permute.xlu0 %1842
  %1844 = vrot.lane.b32.xlu0 %v233, 40
  %v1845 = vpop.permute.xlu0 %1844
  %1846 = vrot.lane.b32.xlu0 %v234, 40
  %v1847 = vpop.permute.xlu0 %1846
  %1848 = vrot.lane.b32.xlu0 %v235, 40
  %v1849 = vpop.permute.xlu0 %1848
  %1850 = vrot.lane.b32.xlu0 %v236, 40
  %v1851 = vpop.permute.xlu0 %1850
  %1852 = vrot.lane.b32.xlu0 %v237, 40
  %v1853 = vpop.permute.xlu0 %1852
  %1854 = vrot.lane.b32.xlu0 %v238, 40
  %v1855 = vpop.permute.xlu0 %1854
  %1856 = vrot.lane.b32.xlu0 %v239, 40
  %v1857 = vpop.permute.xlu0 %1856
  %1858 = vrot.lane.b32.xlu0 %v240, 40
  %v1859 = vpop.permute.xlu0 %1858
  %1860 = vrot.lane.b32.xlu0 %v241, 40
  %v1861 = vpop.permute.xlu0 %1860
  %1862 = vrot.lane.b32.xlu0 %v242, 40
  %v1863 = vpop.permute.xlu0 %1862
  %1864 = vrot.lane.b32.xlu0 %v243, 40
  %v1865 = vpop.permute.xlu0 %1864
  %1866 = vrot.lane.b32.xlu0 %v244, 40
  %v1867 = vpop.permute.xlu0 %1866
  %1868 = vrot.lane.b32.xlu0 %v245, 40
  %v1869 = vpop.permute.xlu0 %1868
  %1870 = vrot.lane.b32.xlu0 %v246, 40
  %v1871 = vpop.permute.xlu0 %1870
  %1872 = vrot.lane.b32.xlu0 %v247, 40
  %v1873 = vpop.permute.xlu0 %1872
  %1874 = vrot.lane.b32.xlu0 %v248, 40
  %v1875 = vpop.permute.xlu0 %1874
  %1876 = vrot.lane.b32.xlu0 %v249, 40
  %v1877 = vpop.permute.xlu0 %1876
  %1878 = vrot.lane.b32.xlu0 %v250, 40
  %v1879 = vpop.permute.xlu0 %1878
  %1880 = vrot.lane.b32.xlu0 %v251, 40
  %v1881 = vpop.permute.xlu0 %1880
  %1882 = vrot.lane.b32.xlu0 %v252, 40
  %v1883 = vpop.permute.xlu0 %1882
  %1884 = vrot.lane.b32.xlu0 %v253, 40
  %v1885 = vpop.permute.xlu0 %1884
  %1886 = vrot.lane.b32.xlu0 %v254, 40
  %v1887 = vpop.permute.xlu0 %1886
  %1888 = vrot.lane.b32.xlu0 %v255, 40
  %v1889 = vpop.permute.xlu0 %1888
  %v1928 = vmax.f32 %v1776, %v1815
  %v1929 = vmax.f32 %v1777, %v1817
  %v1930 = vmax.f32 %v1778, %v1819
  %v1931 = vmax.f32 %v1779, %v1821
  %v1932 = vmax.f32 %v1780, %v1823
  %v1933 = vmax.f32 %v1781, %v1825
  %v1934 = vmax.f32 %v1782, %v1827
  %v1935 = vmax.f32 %v1783, %v1829
  %v1936 = vmax.f32 %v1784, %v1831
  %v1937 = vmax.f32 %v1785, %v1833
  %v1938 = vmax.f32 %v1786, %v1835
  %v1939 = vmax.f32 %v1787, %v1837
  %v1940 = vmax.f32 %v1788, %v1839
  %v1941 = vmax.f32 %v1789, %v1841
  %v1942 = vmax.f32 %v1790, %v1843
  %v1943 = vmax.f32 %v1791, %v1845
  %v1944 = vmax.f32 %v1792, %v1847
  %v1945 = vmax.f32 %v1793, %v1849
  %v1946 = vmax.f32 %v1794, %v1851
  %v1947 = vmax.f32 %v1795, %v1853
  %v1948 = vmax.f32 %v1796, %v1855
  %v1949 = vmax.f32 %v1797, %v1857
  %v1950 = vmax.f32 %v1798, %v1859
  %v1951 = vmax.f32 %v1799, %v1861
  %v1952 = vmax.f32 %v1800, %v1863
  %v1953 = vmax.f32 %v1801, %v1865
  %v1954 = vmax.f32 %v1802, %v1867
  %v1955 = vmax.f32 %v1803, %v1869
  %v1956 = vmax.f32 %v1804, %v1871
  %v1957 = vmax.f32 %v1805, %v1873
  %v1958 = vmax.f32 %v1806, %v1875
  %v1959 = vmax.f32 %v1807, %v1877
  %v1960 = vmax.f32 %v1808, %v1879
  %v1961 = vmax.f32 %v1809, %v1881
  %v1962 = vmax.f32 %v1810, %v1883
  %v1963 = vmax.f32 %v1811, %v1885
  %v1964 = vmax.f32 %v1812, %v1887
  %v1965 = vmax.f32 %v1813, %v1889
  %1966 = vrot.lane.b32.xlu0 %v218, 32
  %v1967 = vpop.permute.xlu0 %1966
  %1968 = vrot.lane.b32.xlu0 %v219, 32
  %v1969 = vpop.permute.xlu0 %1968
  %1970 = vrot.lane.b32.xlu0 %v220, 32
  %v1971 = vpop.permute.xlu0 %1970
  %1972 = vrot.lane.b32.xlu0 %v221, 32
  %v1973 = vpop.permute.xlu0 %1972
  %1974 = vrot.lane.b32.xlu0 %v222, 32
  %v1975 = vpop.permute.xlu0 %1974
  %1976 = vrot.lane.b32.xlu0 %v223, 32
  %v1977 = vpop.permute.xlu0 %1976
  %1978 = vrot.lane.b32.xlu0 %v224, 32
  %v1979 = vpop.permute.xlu0 %1978
  %1980 = vrot.lane.b32.xlu0 %v225, 32
  %v1981 = vpop.permute.xlu0 %1980
  %1982 = vrot.lane.b32.xlu0 %v226, 32
  %v1983 = vpop.permute.xlu0 %1982
  %1984 = vrot.lane.b32.xlu0 %v227, 32
  %v1985 = vpop.permute.xlu0 %1984
  %1986 = vrot.lane.b32.xlu0 %v228, 32
  %v1987 = vpop.permute.xlu0 %1986
  %1988 = vrot.lane.b32.xlu0 %v229, 32
  %v1989 = vpop.permute.xlu0 %1988
  %1990 = vrot.lane.b32.xlu0 %v230, 32
  %v1991 = vpop.permute.xlu0 %1990
  %1992 = vrot.lane.b32.xlu0 %v231, 32
  %v1993 = vpop.permute.xlu0 %1992
  %1994 = vrot.lane.b32.xlu0 %v232, 32
  %v1995 = vpop.permute.xlu0 %1994
  %1996 = vrot.lane.b32.xlu0 %v233, 32
  %v1997 = vpop.permute.xlu0 %1996
  %1998 = vrot.lane.b32.xlu0 %v234, 32
  %v1999 = vpop.permute.xlu0 %1998
  %2000 = vrot.lane.b32.xlu0 %v235, 32
  %v2001 = vpop.permute.xlu0 %2000
  %2002 = vrot.lane.b32.xlu0 %v236, 32
  %v2003 = vpop.permute.xlu0 %2002
  %2004 = vrot.lane.b32.xlu0 %v237, 32
  %v2005 = vpop.permute.xlu0 %2004
  %2006 = vrot.lane.b32.xlu0 %v238, 32
  %v2007 = vpop.permute.xlu0 %2006
  %2008 = vrot.lane.b32.xlu0 %v239, 32
  %v2009 = vpop.permute.xlu0 %2008
  %2010 = vrot.lane.b32.xlu0 %v240, 32
  %v2011 = vpop.permute.xlu0 %2010
  %2012 = vrot.lane.b32.xlu0 %v241, 32
  %v2013 = vpop.permute.xlu0 %2012
  %2014 = vrot.lane.b32.xlu0 %v242, 32
  %v2015 = vpop.permute.xlu0 %2014
  %2016 = vrot.lane.b32.xlu0 %v243, 32
  %v2017 = vpop.permute.xlu0 %2016
  %2018 = vrot.lane.b32.xlu0 %v244, 32
  %v2019 = vpop.permute.xlu0 %2018
  %2020 = vrot.lane.b32.xlu0 %v245, 32
  %v2021 = vpop.permute.xlu0 %2020
  %2022 = vrot.lane.b32.xlu0 %v246, 32
  %v2023 = vpop.permute.xlu0 %2022
  %2024 = vrot.lane.b32.xlu0 %v247, 32
  %v2025 = vpop.permute.xlu0 %2024
  %2026 = vrot.lane.b32.xlu0 %v248, 32
  %v2027 = vpop.permute.xlu0 %2026
  %2028 = vrot.lane.b32.xlu0 %v249, 32
  %v2029 = vpop.permute.xlu0 %2028
  %2030 = vrot.lane.b32.xlu0 %v250, 32
  %v2031 = vpop.permute.xlu0 %2030
  %2032 = vrot.lane.b32.xlu0 %v251, 32
  %v2033 = vpop.permute.xlu0 %2032
  %2034 = vrot.lane.b32.xlu0 %v252, 32
  %v2035 = vpop.permute.xlu0 %2034
  %2036 = vrot.lane.b32.xlu0 %v253, 32
  %v2037 = vpop.permute.xlu0 %2036
  %2038 = vrot.lane.b32.xlu0 %v254, 32
  %v2039 = vpop.permute.xlu0 %2038
  %2040 = vrot.lane.b32.xlu0 %v255, 32
  %v2041 = vpop.permute.xlu0 %2040
  %v2080 = vmax.f32 %v1928, %v1967
  %v2081 = vmax.f32 %v1929, %v1969
  %v2082 = vmax.f32 %v1930, %v1971
  %v2083 = vmax.f32 %v1931, %v1973
  %v2084 = vmax.f32 %v1932, %v1975
  %v2085 = vmax.f32 %v1933, %v1977
  %v2086 = vmax.f32 %v1934, %v1979
  %v2087 = vmax.f32 %v1935, %v1981
  %v2088 = vmax.f32 %v1936, %v1983
  %v2089 = vmax.f32 %v1937, %v1985
  %v2090 = vmax.f32 %v1938, %v1987
  %v2091 = vmax.f32 %v1939, %v1989
  %v2092 = vmax.f32 %v1940, %v1991
  %v2093 = vmax.f32 %v1941, %v1993
  %v2094 = vmax.f32 %v1942, %v1995
  %v2095 = vmax.f32 %v1943, %v1997
  %v2096 = vmax.f32 %v1944, %v1999
  %v2097 = vmax.f32 %v1945, %v2001
  %v2098 = vmax.f32 %v1946, %v2003
  %v2099 = vmax.f32 %v1947, %v2005
  %v2100 = vmax.f32 %v1948, %v2007
  %v2101 = vmax.f32 %v1949, %v2009
  %v2102 = vmax.f32 %v1950, %v2011
  %v2103 = vmax.f32 %v1951, %v2013
  %v2104 = vmax.f32 %v1952, %v2015
  %v2105 = vmax.f32 %v1953, %v2017
  %v2106 = vmax.f32 %v1954, %v2019
  %v2107 = vmax.f32 %v1955, %v2021
  %v2108 = vmax.f32 %v1956, %v2023
  %v2109 = vmax.f32 %v1957, %v2025
  %v2110 = vmax.f32 %v1958, %v2027
  %v2111 = vmax.f32 %v1959, %v2029
  %v2112 = vmax.f32 %v1960, %v2031
  %v2113 = vmax.f32 %v1961, %v2033
  %v2114 = vmax.f32 %v1962, %v2035
  %v2115 = vmax.f32 %v1963, %v2037
  %v2116 = vmax.f32 %v1964, %v2039
  %v2117 = vmax.f32 %v1965, %v2041
  %2118 = vrot.lane.b32.xlu0 %v218, 24
  %v2119 = vpop.permute.xlu0 %2118
  %2120 = vrot.lane.b32.xlu0 %v219, 24
  %v2121 = vpop.permute.xlu0 %2120
  %2122 = vrot.lane.b32.xlu0 %v220, 24
  %v2123 = vpop.permute.xlu0 %2122
  %2124 = vrot.lane.b32.xlu0 %v221, 24
  %v2125 = vpop.permute.xlu0 %2124
  %2126 = vrot.lane.b32.xlu0 %v222, 24
  %v2127 = vpop.permute.xlu0 %2126
  %2128 = vrot.lane.b32.xlu0 %v223, 24
  %v2129 = vpop.permute.xlu0 %2128
  %2130 = vrot.lane.b32.xlu0 %v224, 24
  %v2131 = vpop.permute.xlu0 %2130
  %2132 = vrot.lane.b32.xlu0 %v225, 24
  %v2133 = vpop.permute.xlu0 %2132
  %2134 = vrot.lane.b32.xlu0 %v226, 24
  %v2135 = vpop.permute.xlu0 %2134
  %2136 = vrot.lane.b32.xlu0 %v227, 24
  %v2137 = vpop.permute.xlu0 %2136
  %2138 = vrot.lane.b32.xlu0 %v228, 24
  %v2139 = vpop.permute.xlu0 %2138
  %2140 = vrot.lane.b32.xlu0 %v229, 24
  %v2141 = vpop.permute.xlu0 %2140
  %2142 = vrot.lane.b32.xlu0 %v230, 24
  %v2143 = vpop.permute.xlu0 %2142
  %2144 = vrot.lane.b32.xlu0 %v231, 24
  %v2145 = vpop.permute.xlu0 %2144
  %2146 = vrot.lane.b32.xlu0 %v232, 24
  %v2147 = vpop.permute.xlu0 %2146
  %2148 = vrot.lane.b32.xlu0 %v233, 24
  %v2149 = vpop.permute.xlu0 %2148
  %2150 = vrot.lane.b32.xlu0 %v234, 24
  %v2151 = vpop.permute.xlu0 %2150
  %2152 = vrot.lane.b32.xlu0 %v235, 24
  %v2153 = vpop.permute.xlu0 %2152
  %2154 = vrot.lane.b32.xlu0 %v236, 24
  %v2155 = vpop.permute.xlu0 %2154
  %2156 = vrot.lane.b32.xlu0 %v237, 24
  %v2157 = vpop.permute.xlu0 %2156
  %2158 = vrot.lane.b32.xlu0 %v238, 24
  %v2159 = vpop.permute.xlu0 %2158
  %2160 = vrot.lane.b32.xlu0 %v239, 24
  %v2161 = vpop.permute.xlu0 %2160
  %2162 = vrot.lane.b32.xlu0 %v240, 24
  %v2163 = vpop.permute.xlu0 %2162
  %2164 = vrot.lane.b32.xlu0 %v241, 24
  %v2165 = vpop.permute.xlu0 %2164
  %2166 = vrot.lane.b32.xlu0 %v242, 24
  %v2167 = vpop.permute.xlu0 %2166
  %2168 = vrot.lane.b32.xlu0 %v243, 24
  %v2169 = vpop.permute.xlu0 %2168
  %2170 = vrot.lane.b32.xlu0 %v244, 24
  %v2171 = vpop.permute.xlu0 %2170
  %2172 = vrot.lane.b32.xlu0 %v245, 24
  %v2173 = vpop.permute.xlu0 %2172
  %2174 = vrot.lane.b32.xlu0 %v246, 24
  %v2175 = vpop.permute.xlu0 %2174
  %2176 = vrot.lane.b32.xlu0 %v247, 24
  %v2177 = vpop.permute.xlu0 %2176
  %2178 = vrot.lane.b32.xlu0 %v248, 24
  %v2179 = vpop.permute.xlu0 %2178
  %2180 = vrot.lane.b32.xlu0 %v249, 24
  %v2181 = vpop.permute.xlu0 %2180
  %2182 = vrot.lane.b32.xlu0 %v250, 24
  %v2183 = vpop.permute.xlu0 %2182
  %2184 = vrot.lane.b32.xlu0 %v251, 24
  %v2185 = vpop.permute.xlu0 %2184
  %2186 = vrot.lane.b32.xlu0 %v252, 24
  %v2187 = vpop.permute.xlu0 %2186
  %2188 = vrot.lane.b32.xlu0 %v253, 24
  %v2189 = vpop.permute.xlu0 %2188
  %2190 = vrot.lane.b32.xlu0 %v254, 24
  %v2191 = vpop.permute.xlu0 %2190
  %2192 = vrot.lane.b32.xlu0 %v255, 24
  %v2193 = vpop.permute.xlu0 %2192
  %v2232 = vmax.f32 %v2080, %v2119
  %v2233 = vmax.f32 %v2081, %v2121
  %v2234 = vmax.f32 %v2082, %v2123
  %v2235 = vmax.f32 %v2083, %v2125
  %v2236 = vmax.f32 %v2084, %v2127
  %v2237 = vmax.f32 %v2085, %v2129
  %v2238 = vmax.f32 %v2086, %v2131
  %v2239 = vmax.f32 %v2087, %v2133
  %v2240 = vmax.f32 %v2088, %v2135
  %v2241 = vmax.f32 %v2089, %v2137
  %v2242 = vmax.f32 %v2090, %v2139
  %v2243 = vmax.f32 %v2091, %v2141
  %v2244 = vmax.f32 %v2092, %v2143
  %v2245 = vmax.f32 %v2093, %v2145
  %v2246 = vmax.f32 %v2094, %v2147
  %v2247 = vmax.f32 %v2095, %v2149
  %v2248 = vmax.f32 %v2096, %v2151
  %v2249 = vmax.f32 %v2097, %v2153
  %v2250 = vmax.f32 %v2098, %v2155
  %v2251 = vmax.f32 %v2099, %v2157
  %v2252 = vmax.f32 %v2100, %v2159
  %v2253 = vmax.f32 %v2101, %v2161
  %v2254 = vmax.f32 %v2102, %v2163
  %v2255 = vmax.f32 %v2103, %v2165
  %v2256 = vmax.f32 %v2104, %v2167
  %v2257 = vmax.f32 %v2105, %v2169
  %v2258 = vmax.f32 %v2106, %v2171
  %v2259 = vmax.f32 %v2107, %v2173
  %v2260 = vmax.f32 %v2108, %v2175
  %v2261 = vmax.f32 %v2109, %v2177
  %v2262 = vmax.f32 %v2110, %v2179
  %v2263 = vmax.f32 %v2111, %v2181
  %v2264 = vmax.f32 %v2112, %v2183
  %v2265 = vmax.f32 %v2113, %v2185
  %v2266 = vmax.f32 %v2114, %v2187
  %v2267 = vmax.f32 %v2115, %v2189
  %v2268 = vmax.f32 %v2116, %v2191
  %v2269 = vmax.f32 %v2117, %v2193
  %2270 = vrot.lane.b32.xlu0 %v218, 16
  %v2271 = vpop.permute.xlu0 %2270
  %2272 = vrot.lane.b32.xlu0 %v219, 16
  %v2273 = vpop.permute.xlu0 %2272
  %2274 = vrot.lane.b32.xlu0 %v220, 16
  %v2275 = vpop.permute.xlu0 %2274
  %2276 = vrot.lane.b32.xlu0 %v221, 16
  %v2277 = vpop.permute.xlu0 %2276
  %2278 = vrot.lane.b32.xlu0 %v222, 16
  %v2279 = vpop.permute.xlu0 %2278
  %2280 = vrot.lane.b32.xlu0 %v223, 16
  %v2281 = vpop.permute.xlu0 %2280
  %2282 = vrot.lane.b32.xlu0 %v224, 16
  %v2283 = vpop.permute.xlu0 %2282
  %2284 = vrot.lane.b32.xlu0 %v225, 16
  %v2285 = vpop.permute.xlu0 %2284
  %2286 = vrot.lane.b32.xlu0 %v226, 16
  %v2287 = vpop.permute.xlu0 %2286
  %2288 = vrot.lane.b32.xlu0 %v227, 16
  %v2289 = vpop.permute.xlu0 %2288
  %2290 = vrot.lane.b32.xlu0 %v228, 16
  %v2291 = vpop.permute.xlu0 %2290
  %2292 = vrot.lane.b32.xlu0 %v229, 16
  %v2293 = vpop.permute.xlu0 %2292
  %2294 = vrot.lane.b32.xlu0 %v230, 16
  %v2295 = vpop.permute.xlu0 %2294
  %2296 = vrot.lane.b32.xlu0 %v231, 16
  %v2297 = vpop.permute.xlu0 %2296
  %2298 = vrot.lane.b32.xlu0 %v232, 16
  %v2299 = vpop.permute.xlu0 %2298
  %2300 = vrot.lane.b32.xlu0 %v233, 16
  %v2301 = vpop.permute.xlu0 %2300
  %2302 = vrot.lane.b32.xlu0 %v234, 16
  %v2303 = vpop.permute.xlu0 %2302
  %2304 = vrot.lane.b32.xlu0 %v235, 16
  %v2305 = vpop.permute.xlu0 %2304
  %2306 = vrot.lane.b32.xlu0 %v236, 16
  %v2307 = vpop.permute.xlu0 %2306
  %2308 = vrot.lane.b32.xlu0 %v237, 16
  %v2309 = vpop.permute.xlu0 %2308
  %2310 = vrot.lane.b32.xlu0 %v238, 16
  %v2311 = vpop.permute.xlu0 %2310
  %2312 = vrot.lane.b32.xlu0 %v239, 16
  %v2313 = vpop.permute.xlu0 %2312
  %2314 = vrot.lane.b32.xlu0 %v240, 16
  %v2315 = vpop.permute.xlu0 %2314
  %2316 = vrot.lane.b32.xlu0 %v241, 16
  %v2317 = vpop.permute.xlu0 %2316
  %2318 = vrot.lane.b32.xlu0 %v242, 16
  %v2319 = vpop.permute.xlu0 %2318
  %2320 = vrot.lane.b32.xlu0 %v243, 16
  %v2321 = vpop.permute.xlu0 %2320
  %2322 = vrot.lane.b32.xlu0 %v244, 16
  %v2323 = vpop.permute.xlu0 %2322
  %2324 = vrot.lane.b32.xlu0 %v245, 16
  %v2325 = vpop.permute.xlu0 %2324
  %2326 = vrot.lane.b32.xlu0 %v246, 16
  %v2327 = vpop.permute.xlu0 %2326
  %2328 = vrot.lane.b32.xlu0 %v247, 16
  %v2329 = vpop.permute.xlu0 %2328
  %2330 = vrot.lane.b32.xlu0 %v248, 16
  %v2331 = vpop.permute.xlu0 %2330
  %2332 = vrot.lane.b32.xlu0 %v249, 16
  %v2333 = vpop.permute.xlu0 %2332
  %2334 = vrot.lane.b32.xlu0 %v250, 16
  %v2335 = vpop.permute.xlu0 %2334
  %2336 = vrot.lane.b32.xlu0 %v251, 16
  %v2337 = vpop.permute.xlu0 %2336
  %2338 = vrot.lane.b32.xlu0 %v252, 16
  %v2339 = vpop.permute.xlu0 %2338
  %2340 = vrot.lane.b32.xlu0 %v253, 16
  %v2341 = vpop.permute.xlu0 %2340
  %2342 = vrot.lane.b32.xlu0 %v254, 16
  %v2343 = vpop.permute.xlu0 %2342
  %2344 = vrot.lane.b32.xlu0 %v255, 16
  %v2345 = vpop.permute.xlu0 %2344
  %v2384 = vmax.f32 %v2232, %v2271
  %v2385 = vmax.f32 %v2233, %v2273
  %v2386 = vmax.f32 %v2234, %v2275
  %v2387 = vmax.f32 %v2235, %v2277
  %v2388 = vmax.f32 %v2236, %v2279
  %v2389 = vmax.f32 %v2237, %v2281
  %v2390 = vmax.f32 %v2238, %v2283
  %v2391 = vmax.f32 %v2239, %v2285
  %v2392 = vmax.f32 %v2240, %v2287
  %v2393 = vmax.f32 %v2241, %v2289
  %v2394 = vmax.f32 %v2242, %v2291
  %v2395 = vmax.f32 %v2243, %v2293
  %v2396 = vmax.f32 %v2244, %v2295
  %v2397 = vmax.f32 %v2245, %v2297
  %v2398 = vmax.f32 %v2246, %v2299
  %v2399 = vmax.f32 %v2247, %v2301
  %v2400 = vmax.f32 %v2248, %v2303
  %v2401 = vmax.f32 %v2249, %v2305
  %v2402 = vmax.f32 %v2250, %v2307
  %v2403 = vmax.f32 %v2251, %v2309
  %v2404 = vmax.f32 %v2252, %v2311
  %v2405 = vmax.f32 %v2253, %v2313
  %v2406 = vmax.f32 %v2254, %v2315
  %v2407 = vmax.f32 %v2255, %v2317
  %v2408 = vmax.f32 %v2256, %v2319
  %v2409 = vmax.f32 %v2257, %v2321
  %v2410 = vmax.f32 %v2258, %v2323
  %v2411 = vmax.f32 %v2259, %v2325
  %v2412 = vmax.f32 %v2260, %v2327
  %v2413 = vmax.f32 %v2261, %v2329
  %v2414 = vmax.f32 %v2262, %v2331
  %v2415 = vmax.f32 %v2263, %v2333
  %v2416 = vmax.f32 %v2264, %v2335
  %v2417 = vmax.f32 %v2265, %v2337
  %v2418 = vmax.f32 %v2266, %v2339
  %v2419 = vmax.f32 %v2267, %v2341
  %v2420 = vmax.f32 %v2268, %v2343
  %v2421 = vmax.f32 %v2269, %v2345
  %2422 = vrot.lane.b32.xlu0 %v218, 8
  %v2423 = vpop.permute.xlu0 %2422
  %2424 = vrot.lane.b32.xlu0 %v219, 8
  %v2425 = vpop.permute.xlu0 %2424
  %2426 = vrot.lane.b32.xlu0 %v220, 8
  %v2427 = vpop.permute.xlu0 %2426
  %2428 = vrot.lane.b32.xlu0 %v221, 8
  %v2429 = vpop.permute.xlu0 %2428
  %2430 = vrot.lane.b32.xlu0 %v222, 8
  %v2431 = vpop.permute.xlu0 %2430
  %2432 = vrot.lane.b32.xlu0 %v223, 8
  %v2433 = vpop.permute.xlu0 %2432
  %2434 = vrot.lane.b32.xlu0 %v224, 8
  %v2435 = vpop.permute.xlu0 %2434
  %2436 = vrot.lane.b32.xlu0 %v225, 8
  %v2437 = vpop.permute.xlu0 %2436
  %2438 = vrot.lane.b32.xlu0 %v226, 8
  %v2439 = vpop.permute.xlu0 %2438
  %2440 = vrot.lane.b32.xlu0 %v227, 8
  %v2441 = vpop.permute.xlu0 %2440
  %2442 = vrot.lane.b32.xlu0 %v228, 8
  %v2443 = vpop.permute.xlu0 %2442
  %2444 = vrot.lane.b32.xlu0 %v229, 8
  %v2445 = vpop.permute.xlu0 %2444
  %2446 = vrot.lane.b32.xlu0 %v230, 8
  %v2447 = vpop.permute.xlu0 %2446
  %2448 = vrot.lane.b32.xlu0 %v231, 8
  %v2449 = vpop.permute.xlu0 %2448
  %2450 = vrot.lane.b32.xlu0 %v232, 8
  %v2451 = vpop.permute.xlu0 %2450
  %2452 = vrot.lane.b32.xlu0 %v233, 8
  %v2453 = vpop.permute.xlu0 %2452
  %2454 = vrot.lane.b32.xlu0 %v234, 8
  %v2455 = vpop.permute.xlu0 %2454
  %2456 = vrot.lane.b32.xlu0 %v235, 8
  %v2457 = vpop.permute.xlu0 %2456
  %2458 = vrot.lane.b32.xlu0 %v236, 8
  %v2459 = vpop.permute.xlu0 %2458
  %2460 = vrot.lane.b32.xlu0 %v237, 8
  %v2461 = vpop.permute.xlu0 %2460
  %2462 = vrot.lane.b32.xlu0 %v238, 8
  %v2463 = vpop.permute.xlu0 %2462
  %2464 = vrot.lane.b32.xlu0 %v239, 8
  %v2465 = vpop.permute.xlu0 %2464
  %2466 = vrot.lane.b32.xlu0 %v240, 8
  %v2467 = vpop.permute.xlu0 %2466
  %2468 = vrot.lane.b32.xlu0 %v241, 8
  %v2469 = vpop.permute.xlu0 %2468
  %2470 = vrot.lane.b32.xlu0 %v242, 8
  %v2471 = vpop.permute.xlu0 %2470
  %2472 = vrot.lane.b32.xlu0 %v243, 8
  %v2473 = vpop.permute.xlu0 %2472
  %2474 = vrot.lane.b32.xlu0 %v244, 8
  %v2475 = vpop.permute.xlu0 %2474
  %2476 = vrot.lane.b32.xlu0 %v245, 8
  %v2477 = vpop.permute.xlu0 %2476
  %2478 = vrot.lane.b32.xlu0 %v246, 8
  %v2479 = vpop.permute.xlu0 %2478
  %2480 = vrot.lane.b32.xlu0 %v247, 8
  %v2481 = vpop.permute.xlu0 %2480
  %2482 = vrot.lane.b32.xlu0 %v248, 8
  %v2483 = vpop.permute.xlu0 %2482
  %2484 = vrot.lane.b32.xlu0 %v249, 8
  %v2485 = vpop.permute.xlu0 %2484
  %2486 = vrot.lane.b32.xlu0 %v250, 8
  %v2487 = vpop.permute.xlu0 %2486
  %2488 = vrot.lane.b32.xlu0 %v251, 8
  %v2489 = vpop.permute.xlu0 %2488
  %2490 = vrot.lane.b32.xlu0 %v252, 8
  %v2491 = vpop.permute.xlu0 %2490
  %2492 = vrot.lane.b32.xlu0 %v253, 8
  %v2493 = vpop.permute.xlu0 %2492
  %2494 = vrot.lane.b32.xlu0 %v254, 8
  %v2495 = vpop.permute.xlu0 %2494
  %2496 = vrot.lane.b32.xlu0 %v255, 8
  %v2497 = vpop.permute.xlu0 %2496
  %v2536 = vmax.f32 %v2384, %v2423
  %v2537 = vmax.f32 %v2385, %v2425
  %v2538 = vmax.f32 %v2386, %v2427
  %v2539 = vmax.f32 %v2387, %v2429
  %v2540 = vmax.f32 %v2388, %v2431
  %v2541 = vmax.f32 %v2389, %v2433
  %v2542 = vmax.f32 %v2390, %v2435
  %v2543 = vmax.f32 %v2391, %v2437
  %v2544 = vmax.f32 %v2392, %v2439
  %v2545 = vmax.f32 %v2393, %v2441
  %v2546 = vmax.f32 %v2394, %v2443
  %v2547 = vmax.f32 %v2395, %v2445
  %v2548 = vmax.f32 %v2396, %v2447
  %v2549 = vmax.f32 %v2397, %v2449
  %v2550 = vmax.f32 %v2398, %v2451
  %v2551 = vmax.f32 %v2399, %v2453
  %v2552 = vmax.f32 %v2400, %v2455
  %v2553 = vmax.f32 %v2401, %v2457
  %v2554 = vmax.f32 %v2402, %v2459
  %v2555 = vmax.f32 %v2403, %v2461
  %v2556 = vmax.f32 %v2404, %v2463
  %v2557 = vmax.f32 %v2405, %v2465
  %v2558 = vmax.f32 %v2406, %v2467
  %v2559 = vmax.f32 %v2407, %v2469
  %v2560 = vmax.f32 %v2408, %v2471
  %v2561 = vmax.f32 %v2409, %v2473
  %v2562 = vmax.f32 %v2410, %v2475
  %v2563 = vmax.f32 %v2411, %v2477
  %v2564 = vmax.f32 %v2412, %v2479
  %v2565 = vmax.f32 %v2413, %v2481
  %v2566 = vmax.f32 %v2414, %v2483
  %v2567 = vmax.f32 %v2415, %v2485
  %v2568 = vmax.f32 %v2416, %v2487
  %v2569 = vmax.f32 %v2417, %v2489
  %v2570 = vmax.f32 %v2418, %v2491
  %v2571 = vmax.f32 %v2419, %v2493
  %v2572 = vmax.f32 %v2420, %v2495
  %v2573 = vmax.f32 %v2421, %v2497
  %vm2574 = vcmask 64512
  %2575 = vst.msk [vmem:[%s3] sm:$0xff] %vm2574, %v2536
  %2576 = vst.msk [vmem:[%s3 + $0x8] sm:$0xff] %vm2574, %v2537
  %2577 = vst.msk [vmem:[%s3 + $0x10] sm:$0xff] %vm2574, %v2538
  %2578 = vst.msk [vmem:[%s3 + $0x18] sm:$0xff] %vm2574, %v2539
  %2579 = vst.msk [vmem:[%s3 + $0x20] sm:$0xff] %vm2574, %v2540
  %2580 = vst.msk [vmem:[%s3 + $0x28] sm:$0xff] %vm2574, %v2541
  %2581 = vst.msk [vmem:[%s3 + $0x30] sm:$0xff] %vm2574, %v2542
  %2582 = vst.msk [vmem:[%s3 + $0x38] sm:$0xff] %vm2574, %v2543
  %2583 = vst.msk [vmem:[%s3 + $0x40] sm:$0xff] %vm2574, %v2544
  %2584 = vst.msk [vmem:[%s3 + $0x48] sm:$0xff] %vm2574, %v2545
  %2585 = vst.msk [vmem:[%s3 + $0x50] sm:$0xff] %vm2574, %v2546
  %2586 = vst.msk [vmem:[%s3 + $0x58] sm:$0xff] %vm2574, %v2547
  %2587 = vst.msk [vmem:[%s3 + $0x60] sm:$0xff] %vm2574, %v2548
  %2588 = vst.msk [vmem:[%s3 + $0x68] sm:$0xff] %vm2574, %v2549
  %2589 = vst.msk [vmem:[%s3 + $0x70] sm:$0xff] %vm2574, %v2550
  %2590 = vst.msk [vmem:[%s3 + $0x78] sm:$0xff] %vm2574, %v2551
  %2591 = vst.msk [vmem:[%s3 + $0x80] sm:$0xff] %vm2574, %v2552
  %2592 = vst.msk [vmem:[%s3 + $0x88] sm:$0xff] %vm2574, %v2553
  %2593 = vst.msk [vmem:[%s3 + $0x90] sm:$0xff] %vm2574, %v2554
  %2594 = vst.msk [vmem:[%s3 + $0x98] sm:$0xff] %vm2574, %v2555
  %2595 = vst.msk [vmem:[%s3 + $0xa0] sm:$0xff] %vm2574, %v2556
  %2596 = vst.msk [vmem:[%s3 + $0xa8] sm:$0xff] %vm2574, %v2557
  %2597 = vst.msk [vmem:[%s3 + $0xb0] sm:$0xff] %vm2574, %v2558
  %2598 = vst.msk [vmem:[%s3 + $0xb8] sm:$0xff] %vm2574, %v2559
  %2599 = vst.msk [vmem:[%s3 + $0xc0] sm:$0xff] %vm2574, %v2560
  %2600 = vst.msk [vmem:[%s3 + $0xc8] sm:$0xff] %vm2574, %v2561
  %2601 = vst.msk [vmem:[%s3 + $0xd0] sm:$0xff] %vm2574, %v2562
  %2602 = vst.msk [vmem:[%s3 + $0xd8] sm:$0xff] %vm2574, %v2563
  %2603 = vst.msk [vmem:[%s3 + $0xe0] sm:$0xff] %vm2574, %v2564
  %2604 = vst.msk [vmem:[%s3 + $0xe8] sm:$0xff] %vm2574, %v2565
  %2605 = vst.msk [vmem:[%s3 + $0xf0] sm:$0xff] %vm2574, %v2566
  %2606 = vst.msk [vmem:[%s3 + $0xf8] sm:$0xff] %vm2574, %v2567
  %2607 = vst.msk [vmem:[%s3 + $0x100] sm:$0xff] %vm2574, %v2568
  %2608 = vst.msk [vmem:[%s3 + $0x108] sm:$0xff] %vm2574, %v2569
  %2609 = vst.msk [vmem:[%s3 + $0x110] sm:$0xff] %vm2574, %v2570
  %2610 = vst.msk [vmem:[%s3 + $0x118] sm:$0xff] %vm2574, %v2571
  %2611 = vst.msk [vmem:[%s3 + $0x120] sm:$0xff] %vm2574, %v2572
  %2612 = vst.msk [vmem:[%s3 + $0x128] sm:$0xff] %vm2574, %v2573
  // Predicated region
  $region14: #{cnn_encoder_forward.25} parent=0 // pred_check
    _
  $region15: #{cnn_encoder_forward.25} parent=0 // pred_check_branch
    %2614 = sbr.rel (0) target = $region17
  $region16: #{cnn_encoder_forward.25} parent=0 // pred_region
    _
  $region17: #{cnn_encoder_forward.25} parent=0 // pred_fallthru
    _
  // Predicated region
  $region18: #{cnn_encoder_forward.25} parent=0 // pred_check
    _
  $region19: #{cnn_encoder_forward.25} parent=0 // pred_check_branch
    %2616 = sbr.rel (0) target = $region21
  $region20: #{cnn_encoder_forward.25} parent=0 // pred_region
    _
  $region21: #{cnn_encoder_forward.25} parent=0 // pred_fallthru
    _

// kernel: cnn_encoder_forward.26
$region0: #{cnn_encoder_forward.26}
  #allocation0 [shape = 'u32[]', space=smem, size = 0x4, offset = 0x4, fixed_abs, tag = 'smem constant byte address 0x4 - core index']
  #allocation1 [shape = 'u32[144,128]{1,0:T(1,128)}', space=vmem, size = 0x12000, scoped, tag = 'internal scratch']
  %s0 = inlined_call_operand.vmem [shape: bf16[304,216], index: 0, kind: input, shape index: {}]
  %s1 = inlined_call_operand.vmem [shape: bf16[216,16], index: 1, kind: input, shape index: {}]
  %s2 = inlined_call_operand.vmem [shape: f32[304,16], index: 2, kind: output, shape index: {0}]
  %s3 = inlined_call_operand.vmem [shape: f32[1,2,16], index: 3, kind: output, shape index: {1}]
  %4 = xla_tuple %s2, %s3
  %s5 = sld [smem:[#allocation0]]
  $region26: #{cnn_encoder_forward.26} parent=0
    _
  %s7 = ssub.s32 1, %s5
  %s8 = scalar_select 0, %s7, %s5
  // Predicated region
  $region2: #{cnn_encoder_forward.26} parent=0 // pred_check
    _
  $region3: #{cnn_encoder_forward.26} parent=0 // pred_check_branch
    %10 = sbr.rel (0) target = $region5
  $region4: #{cnn_encoder_forward.26} parent=0 // pred_region
    _
  $region5: #{cnn_encoder_forward.26} parent=0 // pred_fallthru
    _
  // Predicated region
  $region6: #{cnn_encoder_forward.26} parent=0 // pred_check
    _
  $region7: #{cnn_encoder_forward.26} parent=0 // pred_check_branch
    %12 = sbr.rel (0) target = $region9
  $region8: #{cnn_encoder_forward.26} parent=0 // pred_region
    _
  $region9: #{cnn_encoder_forward.26} parent=0 // pred_fallthru
    _
  %v14 = vld [vmem:[%s0] sm:$0xff]
  %v15 = vld [vmem:[%s0 + $0x8] sm:$0xff]
  %v16 = vld [vmem:[%s0 + $0x10] sm:$0xff]
  %v17 = vld [vmem:[%s0 + $0x18] sm:$0xff]
  %v18 = vld [vmem:[%s0 + $0x20] sm:$0xff]
  %v19 = vld [vmem:[%s0 + $0x28] sm:$0xff]
  %v20 = vld [vmem:[%s0 + $0x30] sm:$0xff]
  %v21 = vld [vmem:[%s0 + $0x38] sm:$0xff]
  %v22 = vld [vmem:[%s0 + $0x40] sm:$0xff]
  %v23 = vld [vmem:[%s0 + $0x48] sm:$0xff]
  %v24 = vld [vmem:[%s0 + $0x50] sm:$0xff]
  %v25 = vld [vmem:[%s0 + $0x58] sm:$0xff]
  %v26 = vld [vmem:[%s0 + $0x60] sm:$0xff]
  %v27 = vld [vmem:[%s0 + $0x68] sm:$0xff]
  %v28 = vld [vmem:[%s0 + $0x70] sm:$0xff]
  %v29 = vld [vmem:[%s0 + $0x78] sm:$0xff]
  %v30 = vld [vmem:[%s0 + $0x80] sm:$0xff]
  %v31 = vld [vmem:[%s0 + $0x88] sm:$0xff]
  %v32 = vld [vmem:[%s0 + $0x90] sm:$0xff]
  %v33 = vld [vmem:[%s0 + $0x98] sm:$0xff]
  %v34 = vld [vmem:[%s0 + $0xa0] sm:$0xff]
  %v35 = vld [vmem:[%s0 + $0xa8] sm:$0xff]
  %v36 = vld [vmem:[%s0 + $0xb0] sm:$0xff]
  %v37 = vld [vmem:[%s0 + $0xb8] sm:$0xff]
  %v38 = vld [vmem:[%s0 + $0xc0] sm:$0xff]
  %v39 = vld [vmem:[%s0 + $0xc8] sm:$0xff]
  %v40 = vld [vmem:[%s0 + $0xd0] sm:$0xff]
  %v41 = vld [vmem:[%s0 + $0xd8] sm:$0xff]
  %v42 = vld [vmem:[%s0 + $0xe0] sm:$0xff]
  %v43 = vld [vmem:[%s0 + $0xe8] sm:$0xff]
  %v44 = vld [vmem:[%s0 + $0xf0] sm:$0xff]
  %v45 = vld [vmem:[%s0 + $0xf8] sm:$0xff]
  %v46 = vld [vmem:[%s0 + $0x100] sm:$0xff]
  %v47 = vld [vmem:[%s0 + $0x108] sm:$0xff]
  %v48 = vld [vmem:[%s0 + $0x110] sm:$0xff]
  %v49 = vld [vmem:[%s0 + $0x118] sm:$0xff]
  %v50 = vld [vmem:[%s0 + $0x120] sm:$0xff]
  %v51 = vld [vmem:[%s0 + $0x128] sm:$0xff]
  %v52 = vld [vmem:[%s1] sm:$0xf]
  %v53 = vld [vmem:[%s1 + $0x4] sm:$0xf]
  %v54 = vld [vmem:[%s1 + $0x8] sm:$0xf]
  %v55 = vld [vmem:[%s1 + $0xc] sm:$0xf]
  %v56 = vld [vmem:[%s1 + $0x10] sm:$0xf]
  %v57 = vld [vmem:[%s1 + $0x14] sm:$0xf]
  %v58 = vld [vmem:[%s1 + $0x18] sm:$0xf]
  %v59 = vld [vmem:[%s1 + $0x1c] sm:$0xf]
  %v60 = vld [vmem:[%s1 + $0x20] sm:$0xf]
  %v61 = vld [vmem:[%s1 + $0x24] sm:$0xf]
  %v62 = vld [vmem:[%s1 + $0x28] sm:$0xf]
  %v63 = vld [vmem:[%s1 + $0x2c] sm:$0xf]
  %v64 = vld [vmem:[%s1 + $0x30] sm:$0xf]
  %v65 = vld [vmem:[%s1 + $0x34] sm:$0xf]
  %v66 = vld [vmem:[%s1 + $0x38] sm:$0xf]
  %v67 = vld [vmem:[%s1 + $0x3c] sm:$0xf]
  %v68 = vld [vmem:[%s1 + $0x40] sm:$0xf]
  %v69 = vld [vmem:[%s1 + $0x44] sm:$0xf]
  %v70 = vld [vmem:[%s1 + $0x48] sm:$0xf]
  %v71 = vld [vmem:[%s1 + $0x4c] sm:$0xf]
  %v72 = vld [vmem:[%s1 + $0x50] sm:$0xf]
  %v73 = vld [vmem:[%s1 + $0x54] sm:$0xf]
  %v74 = vld [vmem:[%s1 + $0x58] sm:$0xf]
  %v75 = vld [vmem:[%s1 + $0x5c] sm:$0xf]
  %v76 = vld [vmem:[%s1 + $0x60] sm:$0xf]
  %v77 = vld [vmem:[%s1 + $0x64] sm:$0xf]
  %v78 = vld [vmem:[%s1 + $0x68] sm:$0xf]
  %v117 = vunpack.c.l.b16 %v14
  %v118 = vunpack.c.h.b16 %v14
  %v119 = vunpack.c.l.b16 %v15
  %v120 = vunpack.c.h.b16 %v15
  %v121 = vunpack.c.l.b16 %v16
  %v122 = vunpack.c.h.b16 %v16
  %v123 = vunpack.c.l.b16 %v17
  %v124 = vunpack.c.h.b16 %v17
  %v125 = vunpack.c.l.b16 %v18
  %v126 = vunpack.c.h.b16 %v18
  %v127 = vunpack.c.l.b16 %v19
  %v128 = vunpack.c.h.b16 %v19
  %v129 = vunpack.c.l.b16 %v20
  %v130 = vunpack.c.h.b16 %v20
  %v131 = vunpack.c.l.b16 %v21
  %v132 = vunpack.c.h.b16 %v21
  %v133 = vunpack.c.l.b16 %v22
  %v134 = vunpack.c.h.b16 %v22
  %v135 = vunpack.c.l.b16 %v23
  %v136 = vunpack.c.h.b16 %v23
  %v137 = vunpack.c.l.b16 %v24
  %v138 = vunpack.c.h.b16 %v24
  %v139 = vunpack.c.l.b16 %v25
  %v140 = vunpack.c.h.b16 %v25
  %v141 = vunpack.c.l.b16 %v26
  %v142 = vunpack.c.h.b16 %v26
  %v143 = vunpack.c.l.b16 %v27
  %v144 = vunpack.c.h.b16 %v27
  %v145 = vunpack.c.l.b16 %v28
  %v146 = vunpack.c.h.b16 %v28
  %v147 = vunpack.c.l.b16 %v29
  %v148 = vunpack.c.h.b16 %v29
  %v149 = vunpack.c.l.b16 %v30
  %v150 = vunpack.c.h.b16 %v30
  %v151 = vunpack.c.l.b16 %v31
  %v152 = vunpack.c.h.b16 %v31
  %v153 = vunpack.c.l.b16 %v32
  %v154 = vunpack.c.h.b16 %v32
  %v155 = vunpack.c.l.b16 %v33
  %v156 = vunpack.c.h.b16 %v33
  %v157 = vunpack.c.l.b16 %v34
  %v158 = vunpack.c.h.b16 %v34
  %v159 = vunpack.c.l.b16 %v35
  %v160 = vunpack.c.h.b16 %v35
  %v161 = vunpack.c.l.b16 %v36
  %v162 = vunpack.c.h.b16 %v36
  %v163 = vunpack.c.l.b16 %v37
  %v164 = vunpack.c.h.b16 %v37
  %v165 = vunpack.c.l.b16 %v38
  %v166 = vunpack.c.h.b16 %v38
  %v167 = vunpack.c.l.b16 %v39
  %v168 = vunpack.c.h.b16 %v39
  %v169 = vunpack.c.l.b16 %v40
  %v170 = vunpack.c.h.b16 %v40
  %v171 = vunpack.c.l.b16 %v41
  %v172 = vunpack.c.h.b16 %v41
  %v173 = vunpack.c.l.b16 %v42
  %v174 = vunpack.c.h.b16 %v42
  %v175 = vunpack.c.l.b16 %v43
  %v176 = vunpack.c.h.b16 %v43
  %v177 = vunpack.c.l.b16 %v44
  %v178 = vunpack.c.h.b16 %v44
  %v179 = vunpack.c.l.b16 %v45
  %v180 = vunpack.c.h.b16 %v45
  %v181 = vunpack.c.l.b16 %v46
  %v182 = vunpack.c.h.b16 %v46
  %v183 = vunpack.c.l.b16 %v47
  %v184 = vunpack.c.h.b16 %v47
  %v185 = vunpack.c.l.b16 %v48
  %v186 = vunpack.c.h.b16 %v48
  %v187 = vunpack.c.l.b16 %v49
  %v188 = vunpack.c.h.b16 %v49
  %v189 = vunpack.c.l.b16 %v50
  %v190 = vunpack.c.h.b16 %v50
  %v191 = vunpack.c.l.b16 %v51
  %v192 = vunpack.c.h.b16 %v51
  %v193 = vpack.c.b16 %v119, %v117
  %v194 = vpack.c.b16 %v120, %v118
  %v195 = vpack.c.b16 %v123, %v121
  %v196 = vpack.c.b16 %v124, %v122
  %v197 = vpack.c.b16 %v127, %v125
  %v198 = vpack.c.b16 %v128, %v126
  %v199 = vpack.c.b16 %v131, %v129
  %v200 = vpack.c.b16 %v132, %v130
  %v201 = vpack.c.b16 %v135, %v133
  %v202 = vpack.c.b16 %v136, %v134
  %v203 = vpack.c.b16 %v139, %v137
  %v204 = vpack.c.b16 %v140, %v138
  %v205 = vpack.c.b16 %v143, %v141
  %v206 = vpack.c.b16 %v144, %v142
  %v207 = vpack.c.b16 %v147, %v145
  %v208 = vpack.c.b16 %v148, %v146
  %v209 = vpack.c.b16 %v151, %v149
  %v210 = vpack.c.b16 %v152, %v150
  %v211 = vpack.c.b16 %v155, %v153
  %v212 = vpack.c.b16 %v156, %v154
  %v213 = vpack.c.b16 %v159, %v157
  %v214 = vpack.c.b16 %v160, %v158
  %v215 = vpack.c.b16 %v163, %v161
  %v216 = vpack.c.b16 %v164, %v162
  %v217 = vpack.c.b16 %v167, %v165
  %v218 = vpack.c.b16 %v168, %v166
  %v219 = vpack.c.b16 %v171, %v169
  %v220 = vpack.c.b16 %v172, %v170
  %v221 = vpack.c.b16 %v175, %v173
  %v222 = vpack.c.b16 %v176, %v174
  %v223 = vpack.c.b16 %v179, %v177
  %v224 = vpack.c.b16 %v180, %v178
  %v225 = vpack.c.b16 %v183, %v181
  %v226 = vpack.c.b16 %v184, %v182
  %v227 = vpack.c.b16 %v187, %v185
  %v228 = vpack.c.b16 %v188, %v186
  %v229 = vpack.c.b16 %v191, %v189
  %v230 = vpack.c.b16 %v192, %v190
  %v277 = vunpack.c.l.b16 %v52
  %v278 = vunpack.c.l.b16 %v53
  %v279 = vunpack.c.l.b16 %v54
  %v280 = vunpack.c.l.b16 %v55
  %v281 = vunpack.c.l.b16 %v56
  %v282 = vunpack.c.l.b16 %v57
  %v283 = vunpack.c.l.b16 %v58
  %v284 = vunpack.c.l.b16 %v59
  %v285 = vunpack.c.l.b16 %v60
  %v286 = vunpack.c.l.b16 %v61
  %v287 = vunpack.c.l.b16 %v62
  %v288 = vunpack.c.l.b16 %v63
  %v289 = vunpack.c.l.b16 %v64
  %v290 = vunpack.c.l.b16 %v65
  %v291 = vunpack.c.l.b16 %v66
  %v292 = vunpack.c.l.b16 %v67
  %v293 = vunpack.c.l.b16 %v68
  %v294 = vunpack.c.l.b16 %v69
  %v295 = vunpack.c.l.b16 %v70
  %v296 = vunpack.c.l.b16 %v71
  %v297 = vunpack.c.l.b16 %v72
  %v298 = vunpack.c.l.b16 %v73
  %v299 = vunpack.c.l.b16 %v74
  %v300 = vunpack.c.l.b16 %v75
  %v301 = vunpack.c.l.b16 %v76
  %v302 = vunpack.c.l.b16 %v77
  %v303 = vunpack.c.l.b16 %v78
  %v304 = vpack.c.b16 %v278, %v277
  %v305 = vpack.c.b16 %v280, %v279
  %v306 = vpack.c.b16 %v282, %v281
  %v307 = vpack.c.b16 %v284, %v283
  %v308 = vpack.c.b16 %v286, %v285
  %v309 = vpack.c.b16 %v288, %v287
  %v310 = vpack.c.b16 %v290, %v289
  %v311 = vpack.c.b16 %v292, %v291
  %v312 = vpack.c.b16 %v294, %v293
  %v313 = vpack.c.b16 %v296, %v295
  %v314 = vpack.c.b16 %v298, %v297
  %v315 = vpack.c.b16 %v300, %v299
  %v316 = vpack.c.b16 %v302, %v301
  %v317 = vpack.c.b16 %v303, %v303
  %vm331 = vcmask 719872
  %v333 = vsel %vm331, %v194, 0
  %v336 = vsel %vm331, %v196, 0
  %v339 = vsel %vm331, %v198, 0
  %v342 = vsel %vm331, %v200, 0
  %v345 = vsel %vm331, %v202, 0
  %v348 = vsel %vm331, %v204, 0
  %v351 = vsel %vm331, %v206, 0
  %v354 = vsel %vm331, %v208, 0
  %v357 = vsel %vm331, %v210, 0
  %v360 = vsel %vm331, %v212, 0
  %v363 = vsel %vm331, %v214, 0
  %v366 = vsel %vm331, %v216, 0
  %v369 = vsel %vm331, %v218, 0
  %v372 = vsel %vm331, %v220, 0
  %v375 = vsel %vm331, %v222, 0
  %v378 = vsel %vm331, %v224, 0
  %v381 = vsel %vm331, %v226, 0
  %v384 = vsel %vm331, %v228, 0
  %v387 = vsel %vm331, %v230, 0
  %vm389 = vcmask 1043456
  %v391 = vsel %vm389, %v317, 0
  %393 = vmatprep.subr.bf16.mxu0 0
  %394 = vmatpush1.bf16.msra.mxu0 %v304
  %395 = vmatprep.subr.bf16.mxu0 0
  %396 = vmatpush1.bf16.msra.mxu0 %v305
  %397 = vmatprep.subr.bf16.mxu0 0
  %398 = vmatpush1.bf16.msra.mxu0 %v306
  %399 = vmatprep.subr.bf16.mxu0 0
  %400 = vmatpush1.bf16.msra.mxu0 %v307
  %401 = vmatprep.subr.bf16.mxu0 0
  %402 = vmatpush1.bf16.msra.mxu0 %v308
  %403 = vmatprep.subr.bf16.mxu0 0
  %404 = vmatpush1.bf16.msra.mxu0 %v309
  %405 = vmatprep.subr.bf16.mxu0 0
  %406 = vmatpush1.bf16.msra.mxu0 %v310
  %407 = vmatprep.subr.bf16.mxu0 0
  %408 = vmatpush1.bf16.msra.mxu0 %v311
  %409 = vmatprep.subr.bf16.mxu0 0
  %410 = vmatpush1.bf16.msra.mxu0 %v312
  %411 = vmatprep.subr.bf16.mxu0 0
  %412 = vmatpush1.bf16.msra.mxu0 %v313
  %413 = vmatprep.subr.bf16.mxu0 0
  %414 = vmatpush1.bf16.msra.mxu0 %v314
  %415 = vmatprep.subr.bf16.mxu0 0
  %416 = vmatpush1.bf16.msra.mxu0 %v315
  %417 = vmatprep.subr.bf16.mxu0 0
  %418 = vmatpush1.bf16.msra.mxu0 %v316
  %419 = vmatprep.subr.bf16.mxu0 0
  %420 = vmatpush1.bf16.msra.mxu0 %v391
  %421 = vmatprep.subr.bf16.mxu0 0
  %422 = vmatpush1.bf16.msra.mxu0 0
  %423 = vmatprep.subr.bf16.mxu0 0
  %424 = vmatpush1.bf16.msra.mxu0 0
  %425 = vmatprep.mubr.bf16.mxu0 %v333
  %426 = vmatmul.mubr.bf16.gmra.mrb[0].mxu0 %v193
  %v427 = vpop.f32.mrb[0].mxu0
  %v428 = vadd.f32 0.0, %v427
  %v429 = vpop.f32.mrb[0].mxu0
  %v430 = vpop.f32.mrb[0].mxu0
  %v431 = vadd.f32 0.0, %v430
  %v432 = vpop.f32.mrb[0].mxu0
  %433 = vmatprep.mubr.bf16.mxu0 %v336
  %434 = vmatmul.mubr.bf16.gmra.mrb[0].mxu0 %v195
  %v435 = vpop.f32.mrb[0].mxu0
  %v436 = vadd.f32 0.0, %v435
  %v437 = vpop.f32.mrb[0].mxu0
  %v438 = vpop.f32.mrb[0].mxu0
  %v439 = vadd.f32 0.0, %v438
  %v440 = vpop.f32.mrb[0].mxu0
  %441 = vmatprep.mubr.bf16.mxu0 %v339
  %442 = vmatmul.mubr.bf16.gmra.mrb[0].mxu0 %v197
  %v443 = vpop.f32.mrb[0].mxu0
  %v444 = vadd.f32 0.0, %v443
  %v445 = vpop.f32.mrb[0].mxu0
  %v446 = vpop.f32.mrb[0].mxu0
  %v447 = vadd.f32 0.0, %v446
  %v448 = vpop.f32.mrb[0].mxu0
  %449 = vmatprep.mubr.bf16.mxu0 %v342
  %450 = vmatmul.mubr.bf16.gmra.mrb[0].mxu0 %v199
  %v451 = vpop.f32.mrb[0].mxu0
  %v452 = vadd.f32 0.0, %v451
  %v453 = vpop.f32.mrb[0].mxu0
  %v454 = vpop.f32.mrb[0].mxu0
  %v455 = vadd.f32 0.0, %v454
  %v456 = vpop.f32.mrb[0].mxu0
  %457 = vmatprep.mubr.bf16.mxu0 %v345
  %458 = vmatmul.mubr.bf16.gmra.mrb[0].mxu0 %v201
  %v459 = vpop.f32.mrb[0].mxu0
  %v460 = vadd.f32 0.0, %v459
  %v461 = vpop.f32.mrb[0].mxu0
  %v462 = vpop.f32.mrb[0].mxu0
  %v463 = vadd.f32 0.0, %v462
  %v464 = vpop.f32.mrb[0].mxu0
  %465 = vmatprep.mubr.bf16.mxu0 %v348
  %466 = vmatmul.mubr.bf16.gmra.mrb[0].mxu0 %v203
  %v467 = vpop.f32.mrb[0].mxu0
  %v468 = vadd.f32 0.0, %v467
  %v469 = vpop.f32.mrb[0].mxu0
  %v470 = vpop.f32.mrb[0].mxu0
  %v471 = vadd.f32 0.0, %v470
  %v472 = vpop.f32.mrb[0].mxu0
  %473 = vmatprep.mubr.bf16.mxu0 %v351
  %474 = vmatmul.mubr.bf16.gmra.mrb[0].mxu0 %v205
  %v475 = vpop.f32.mrb[0].mxu0
  %v476 = vadd.f32 0.0, %v475
  %v477 = vpop.f32.mrb[0].mxu0
  %v478 = vpop.f32.mrb[0].mxu0
  %v479 = vadd.f32 0.0, %v478
  %v480 = vpop.f32.mrb[0].mxu0
  %481 = vmatprep.mubr.bf16.mxu0 %v354
  %482 = vmatmul.mubr.bf16.gmra.mrb[0].mxu0 %v207
  %v483 = vpop.f32.mrb[0].mxu0
  %v484 = vadd.f32 0.0, %v483
  %v485 = vpop.f32.mrb[0].mxu0
  %v486 = vpop.f32.mrb[0].mxu0
  %v487 = vadd.f32 0.0, %v486
  %v488 = vpop.f32.mrb[0].mxu0
  %489 = vmatprep.mubr.bf16.mxu0 %v357
  %490 = vmatmul.mubr.bf16.gmra.mrb[0].mxu0 %v209
  %v491 = vpop.f32.mrb[0].mxu0
  %v492 = vadd.f32 0.0, %v491
  %v493 = vpop.f32.mrb[0].mxu0
  %v494 = vpop.f32.mrb[0].mxu0
  %v495 = vadd.f32 0.0, %v494
  %v496 = vpop.f32.mrb[0].mxu0
  %497 = vmatprep.mubr.bf16.mxu0 %v360
  %498 = vmatmul.mubr.bf16.gmra.mrb[0].mxu0 %v211
  %v499 = vpop.f32.mrb[0].mxu0
  %v500 = vadd.f32 0.0, %v499
  %v501 = vpop.f32.mrb[0].mxu0
  %v502 = vpop.f32.mrb[0].mxu0
  %v503 = vadd.f32 0.0, %v502
  %v504 = vpop.f32.mrb[0].mxu0
  %505 = vmatprep.mubr.bf16.mxu0 %v363
  %506 = vmatmul.mubr.bf16.gmra.mrb[0].mxu0 %v213
  %v507 = vpop.f32.mrb[0].mxu0
  %v508 = vadd.f32 0.0, %v507
  %v509 = vpop.f32.mrb[0].mxu0
  %v510 = vpop.f32.mrb[0].mxu0
  %v511 = vadd.f32 0.0, %v510
  %v512 = vpop.f32.mrb[0].mxu0
  %513 = vmatprep.mubr.bf16.mxu0 %v366
  %514 = vmatmul.mubr.bf16.gmra.mrb[0].mxu0 %v215
  %v515 = vpop.f32.mrb[0].mxu0
  %v516 = vadd.f32 0.0, %v515
  %v517 = vpop.f32.mrb[0].mxu0
  %v518 = vpop.f32.mrb[0].mxu0
  %v519 = vadd.f32 0.0, %v518
  %v520 = vpop.f32.mrb[0].mxu0
  %521 = vmatprep.mubr.bf16.mxu0 %v369
  %522 = vmatmul.mubr.bf16.gmra.mrb[0].mxu0 %v217
  %v523 = vpop.f32.mrb[0].mxu0
  %v524 = vadd.f32 0.0, %v523
  %v525 = vpop.f32.mrb[0].mxu0
  %v526 = vpop.f32.mrb[0].mxu0
  %v527 = vadd.f32 0.0, %v526
  %v528 = vpop.f32.mrb[0].mxu0
  %529 = vmatprep.mubr.bf16.mxu0 %v372
  %530 = vmatmul.mubr.bf16.gmra.mrb[0].mxu0 %v219
  %v531 = vpop.f32.mrb[0].mxu0
  %v532 = vadd.f32 0.0, %v531
  %v533 = vpop.f32.mrb[0].mxu0
  %v534 = vpop.f32.mrb[0].mxu0
  %v535 = vadd.f32 0.0, %v534
  %v536 = vpop.f32.mrb[0].mxu0
  %537 = vmatprep.mubr.bf16.mxu0 %v375
  %538 = vmatmul.mubr.bf16.gmra.mrb[0].mxu0 %v221
  %v539 = vpop.f32.mrb[0].mxu0
  %v540 = vadd.f32 0.0, %v539
  %v541 = vpop.f32.mrb[0].mxu0
  %v542 = vpop.f32.mrb[0].mxu0
  %v543 = vadd.f32 0.0, %v542
  %v544 = vpop.f32.mrb[0].mxu0
  %545 = vmatprep.mubr.bf16.mxu0 %v378
  %546 = vmatmul.mubr.bf16.gmra.mrb[0].mxu0 %v223
  %v547 = vpop.f32.mrb[0].mxu0
  %v548 = vadd.f32 0.0, %v547
  %v549 = vpop.f32.mrb[0].mxu0
  %v550 = vpop.f32.mrb[0].mxu0
  %v551 = vadd.f32 0.0, %v550
  %v552 = vpop.f32.mrb[0].mxu0
  %553 = vmatprep.mubr.bf16.mxu0 %v381
  %554 = vmatmul.mubr.bf16.gmra.mrb[0].mxu0 %v225
  %v555 = vpop.f32.mrb[0].mxu0
  %v556 = vadd.f32 0.0, %v555
  %v557 = vpop.f32.mrb[0].mxu0
  %v558 = vpop.f32.mrb[0].mxu0
  %v559 = vadd.f32 0.0, %v558
  %v560 = vpop.f32.mrb[0].mxu0
  %561 = vmatprep.mubr.bf16.mxu0 %v384
  %562 = vmatmul.mubr.bf16.gmra.mrb[0].mxu0 %v227
  %v563 = vpop.f32.mrb[0].mxu0
  %v564 = vadd.f32 0.0, %v563
  %v565 = vpop.f32.mrb[0].mxu0
  %v566 = vpop.f32.mrb[0].mxu0
  %v567 = vadd.f32 0.0, %v566
  %v568 = vpop.f32.mrb[0].mxu0
  %569 = vmatprep.mubr.bf16.mxu0 %v387
  %570 = vmatmul.mubr.bf16.gmra.mrb[0].mxu0 %v229
  %v571 = vpop.f32.mrb[0].mxu0
  %v572 = vadd.f32 0.0, %v571
  %v573 = vpop.f32.mrb[0].mxu0
  %v574 = vpop.f32.mrb[0].mxu0
  %v575 = vadd.f32 0.0, %v574
  %v576 = vpop.f32.mrb[0].mxu0
  %577 = vdwg.mxu0
  %vm578 = vcmask 130048
  %579 = vst.msk [vmem:[%s2] sm:$0xff] %vm578, %v428
  %580 = vst.msk [vmem:[%s2 + $0x8] sm:$0xff] %vm578, %v431
  %581 = vst.msk [vmem:[%s2 + $0x10] sm:$0xff] %vm578, %v436
  %582 = vst.msk [vmem:[%s2 + $0x18] sm:$0xff] %vm578, %v439
  %583 = vst.msk [vmem:[%s2 + $0x20] sm:$0xff] %vm578, %v444
  %584 = vst.msk [vmem:[%s2 + $0x28] sm:$0xff] %vm578, %v447
  %585 = vst.msk [vmem:[%s2 + $0x30] sm:$0xff] %vm578, %v452
  %586 = vst.msk [vmem:[%s2 + $0x38] sm:$0xff] %vm578, %v455
  %587 = vst.msk [vmem:[%s2 + $0x40] sm:$0xff] %vm578, %v460
  %588 = vst.msk [vmem:[%s2 + $0x48] sm:$0xff] %vm578, %v463
  %589 = vst.msk [vmem:[%s2 + $0x50] sm:$0xff] %vm578, %v468
  %590 = vst.msk [vmem:[%s2 + $0x58] sm:$0xff] %vm578, %v471
  %591 = vst.msk [vmem:[%s2 + $0x60] sm:$0xff] %vm578, %v476
  %592 = vst.msk [vmem:[%s2 + $0x68] sm:$0xff] %vm578, %v479
  %593 = vst.msk [vmem:[%s2 + $0x70] sm:$0xff] %vm578, %v484
  %594 = vst.msk [vmem:[%s2 + $0x78] sm:$0xff] %vm578, %v487
  %595 = vst.msk [vmem:[%s2 + $0x80] sm:$0xff] %vm578, %v492
  %596 = vst.msk [vmem:[%s2 + $0x88] sm:$0xff] %vm578, %v495
  %597 = vst.msk [vmem:[%s2 + $0x90] sm:$0xff] %vm578, %v500
  %598 = vst.msk [vmem:[%s2 + $0x98] sm:$0xff] %vm578, %v503
  %599 = vst.msk [vmem:[%s2 + $0xa0] sm:$0xff] %vm578, %v508
  %600 = vst.msk [vmem:[%s2 + $0xa8] sm:$0xff] %vm578, %v511
  %601 = vst.msk [vmem:[%s2 + $0xb0] sm:$0xff] %vm578, %v516
  %602 = vst.msk [vmem:[%s2 + $0xb8] sm:$0xff] %vm578, %v519
  %603 = vst.msk [vmem:[%s2 + $0xc0] sm:$0xff] %vm578, %v524
  %604 = vst.msk [vmem:[%s2 + $0xc8] sm:$0xff] %vm578, %v527
  %605 = vst.msk [vmem:[%s2 + $0xd0] sm:$0xff] %vm578, %v532
  %606 = vst.msk [vmem:[%s2 + $0xd8] sm:$0xff] %vm578, %v535
  %607 = vst.msk [vmem:[%s2 + $0xe0] sm:$0xff] %vm578, %v540
  %608 = vst.msk [vmem:[%s2 + $0xe8] sm:$0xff] %vm578, %v543
  %609 = vst.msk [vmem:[%s2 + $0xf0] sm:$0xff] %vm578, %v548
  %610 = vst.msk [vmem:[%s2 + $0xf8] sm:$0xff] %vm578, %v551
  %611 = vst.msk [vmem:[%s2 + $0x100] sm:$0xff] %vm578, %v556
  %612 = vst.msk [vmem:[%s2 + $0x108] sm:$0xff] %vm578, %v559
  %613 = vst.msk [vmem:[%s2 + $0x110] sm:$0xff] %vm578, %v564
  %614 = vst.msk [vmem:[%s2 + $0x118] sm:$0xff] %vm578, %v567
  %615 = vst.msk [vmem:[%s2 + $0x120] sm:$0xff] %vm578, %v572
  %616 = vst.msk [vmem:[%s2 + $0x128] sm:$0xff] %vm578, %v575
  %v617 = vsel %vm578, %v428, 0.0
  %v618 = vsel %vm578, %v431, 0.0
  %v619 = vadd.f32 %v617, %v618
  %v620 = vsel %vm578, %v436, 0.0
  %v621 = vadd.f32 %v619, %v620
  %v622 = vsel %vm578, %v439, 0.0
  %v623 = vadd.f32 %v621, %v622
  %v624 = vsel %vm578, %v444, 0.0
  %v625 = vadd.f32 %v623, %v624
  %v626 = vsel %vm578, %v447, 0.0
  %v627 = vadd.f32 %v625, %v626
  %v628 = vsel %vm578, %v452, 0.0
  %v629 = vadd.f32 %v627, %v628
  %v630 = vsel %vm578, %v455, 0.0
  %v631 = vadd.f32 %v629, %v630
  %v632 = vsel %vm578, %v460, 0.0
  %v633 = vadd.f32 %v631, %v632
  %v634 = vsel %vm578, %v463, 0.0
  %v635 = vadd.f32 %v633, %v634
  %v636 = vsel %vm578, %v468, 0.0
  %v637 = vadd.f32 %v635, %v636
  %v638 = vsel %vm578, %v471, 0.0
  %v639 = vadd.f32 %v637, %v638
  %v640 = vsel %vm578, %v476, 0.0
  %v641 = vadd.f32 %v639, %v640
  %v642 = vsel %vm578, %v479, 0.0
  %v643 = vadd.f32 %v641, %v642
  %v644 = vsel %vm578, %v484, 0.0
  %v645 = vadd.f32 %v643, %v644
  %v646 = vsel %vm578, %v487, 0.0
  %v647 = vadd.f32 %v645, %v646
  %v648 = vsel %vm578, %v492, 0.0
  %v649 = vadd.f32 %v647, %v648
  %v650 = vsel %vm578, %v495, 0.0
  %v651 = vadd.f32 %v649, %v650
  %v652 = vsel %vm578, %v500, 0.0
  %v653 = vadd.f32 %v651, %v652
  %v654 = vsel %vm578, %v503, 0.0
  %v655 = vadd.f32 %v653, %v654
  %v656 = vsel %vm578, %v508, 0.0
  %v657 = vadd.f32 %v655, %v656
  %v658 = vsel %vm578, %v511, 0.0
  %v659 = vadd.f32 %v657, %v658
  %v660 = vsel %vm578, %v516, 0.0
  %v661 = vadd.f32 %v659, %v660
  %v662 = vsel %vm578, %v519, 0.0
  %v663 = vadd.f32 %v661, %v662
  %v664 = vsel %vm578, %v524, 0.0
  %v665 = vadd.f32 %v663, %v664
  %v666 = vsel %vm578, %v527, 0.0
  %v667 = vadd.f32 %v665, %v666
  %v668 = vsel %vm578, %v532, 0.0
  %v669 = vadd.f32 %v667, %v668
  %v670 = vsel %vm578, %v535, 0.0
  %v671 = vadd.f32 %v669, %v670
  %v672 = vsel %vm578, %v540, 0.0
  %v673 = vadd.f32 %v671, %v672
  %v674 = vsel %vm578, %v543, 0.0
  %v675 = vadd.f32 %v673, %v674
  %v676 = vsel %vm578, %v548, 0.0
  %v677 = vadd.f32 %v675, %v676
  %v678 = vsel %vm578, %v551, 0.0
  %v679 = vadd.f32 %v677, %v678
  %v680 = vsel %vm578, %v556, 0.0
  %v681 = vadd.f32 %v679, %v680
  %v682 = vsel %vm578, %v559, 0.0
  %v683 = vadd.f32 %v681, %v682
  %v684 = vsel %vm578, %v564, 0.0
  %v685 = vadd.f32 %v683, %v684
  %v686 = vsel %vm578, %v567, 0.0
  %v687 = vadd.f32 %v685, %v686
  %v688 = vsel %vm578, %v572, 0.0
  %v689 = vadd.f32 %v687, %v688
  %v690 = vsel %vm578, %v575, 0.0
  %v691 = vadd.f32 %v689, %v690
  %v692 = vrot.slane %v691, 4
  %v693 = vadd.f32 %v691, %v692
  %v694 = vrot.slane %v693, 2
  %v695 = vadd.f32 %v693, %v694
  %v696 = vrot.slane %v695, 1
  %v697 = vadd.f32 %v695, %v696
  %v698 = vmul.f32 %v428, %v428
  %v699 = vmul.f32 %v431, %v431
  %v700 = vmul.f32 %v436, %v436
  %v701 = vmul.f32 %v439, %v439
  %v702 = vmul.f32 %v444, %v444
  %v703 = vmul.f32 %v447, %v447
  %v704 = vmul.f32 %v452, %v452
  %v705 = vmul.f32 %v455, %v455
  %v706 = vmul.f32 %v460, %v460
  %v707 = vmul.f32 %v463, %v463
  %v708 = vmul.f32 %v468, %v468
  %v709 = vmul.f32 %v471, %v471
  %v710 = vmul.f32 %v476, %v476
  %v711 = vmul.f32 %v479, %v479
  %v712 = vmul.f32 %v484, %v484
  %v713 = vmul.f32 %v487, %v487
  %v714 = vmul.f32 %v492, %v492
  %v715 = vmul.f32 %v495, %v495
  %v716 = vmul.f32 %v500, %v500
  %v717 = vmul.f32 %v503, %v503
  %v718 = vmul.f32 %v508, %v508
  %v719 = vmul.f32 %v511, %v511
  %v720 = vmul.f32 %v516, %v516
  %v721 = vmul.f32 %v519, %v519
  %v722 = vmul.f32 %v524, %v524
  %v723 = vmul.f32 %v527, %v527
  %v724 = vmul.f32 %v532, %v532
  %v725 = vmul.f32 %v535, %v535
  %v726 = vmul.f32 %v540, %v540
  %v727 = vmul.f32 %v543, %v543
  %v728 = vmul.f32 %v548, %v548
  %v729 = vmul.f32 %v551, %v551
  %v730 = vmul.f32 %v556, %v556
  %v731 = vmul.f32 %v559, %v559
  %v732 = vmul.f32 %v564, %v564
  %v733 = vmul.f32 %v567, %v567
  %v734 = vmul.f32 %v572, %v572
  %v735 = vmul.f32 %v575, %v575
  %v736 = vsel %vm578, %v698, 0.0
  %v737 = vsel %vm578, %v699, 0.0
  %v738 = vadd.f32 %v736, %v737
  %v739 = vsel %vm578, %v700, 0.0
  %v740 = vadd.f32 %v738, %v739
  %v741 = vsel %vm578, %v701, 0.0
  %v742 = vadd.f32 %v740, %v741
  %v743 = vsel %vm578, %v702, 0.0
  %v744 = vadd.f32 %v742, %v743
  %v745 = vsel %vm578, %v703, 0.0
  %v746 = vadd.f32 %v744, %v745
  %v747 = vsel %vm578, %v704, 0.0
  %v748 = vadd.f32 %v746, %v747
  %v749 = vsel %vm578, %v705, 0.0
  %v750 = vadd.f32 %v748, %v749
  %v751 = vsel %vm578, %v706, 0.0
  %v752 = vadd.f32 %v750, %v751
  %v753 = vsel %vm578, %v707, 0.0
  %v754 = vadd.f32 %v752, %v753
  %v755 = vsel %vm578, %v708, 0.0
  %v756 = vadd.f32 %v754, %v755
  %v757 = vsel %vm578, %v709, 0.0
  %v758 = vadd.f32 %v756, %v757
  %v759 = vsel %vm578, %v710, 0.0
  %v760 = vadd.f32 %v758, %v759
  %v761 = vsel %vm578, %v711, 0.0
  %v762 = vadd.f32 %v760, %v761
  %v763 = vsel %vm578, %v712, 0.0
  %v764 = vadd.f32 %v762, %v763
  %v765 = vsel %vm578, %v713, 0.0
  %v766 = vadd.f32 %v764, %v765
  %v767 = vsel %vm578, %v714, 0.0
  %v768 = vadd.f32 %v766, %v767
  %v769 = vsel %vm578, %v715, 0.0
  %v770 = vadd.f32 %v768, %v769
  %v771 = vsel %vm578, %v716, 0.0
  %v772 = vadd.f32 %v770, %v771
  %v773 = vsel %vm578, %v717, 0.0
  %v774 = vadd.f32 %v772, %v773
  %v775 = vsel %vm578, %v718, 0.0
  %v776 = vadd.f32 %v774, %v775
  %v777 = vsel %vm578, %v719, 0.0
  %v778 = vadd.f32 %v776, %v777
  %v779 = vsel %vm578, %v720, 0.0
  %v780 = vadd.f32 %v778, %v779
  %v781 = vsel %vm578, %v721, 0.0
  %v782 = vadd.f32 %v780, %v781
  %v783 = vsel %vm578, %v722, 0.0
  %v784 = vadd.f32 %v782, %v783
  %v785 = vsel %vm578, %v723, 0.0
  %v786 = vadd.f32 %v784, %v785
  %v787 = vsel %vm578, %v724, 0.0
  %v788 = vadd.f32 %v786, %v787
  %v789 = vsel %vm578, %v725, 0.0
  %v790 = vadd.f32 %v788, %v789
  %v791 = vsel %vm578, %v726, 0.0
  %v792 = vadd.f32 %v790, %v791
  %v793 = vsel %vm578, %v727, 0.0
  %v794 = vadd.f32 %v792, %v793
  %v795 = vsel %vm578, %v728, 0.0
  %v796 = vadd.f32 %v794, %v795
  %v797 = vsel %vm578, %v729, 0.0
  %v798 = vadd.f32 %v796, %v797
  %v799 = vsel %vm578, %v730, 0.0
  %v800 = vadd.f32 %v798, %v799
  %v801 = vsel %vm578, %v731, 0.0
  %v802 = vadd.f32 %v800, %v801
  %v803 = vsel %vm578, %v732, 0.0
  %v804 = vadd.f32 %v802, %v803
  %v805 = vsel %vm578, %v733, 0.0
  %v806 = vadd.f32 %v804, %v805
  %v807 = vsel %vm578, %v734, 0.0
  %v808 = vadd.f32 %v806, %v807
  %v809 = vsel %vm578, %v735, 0.0
  %v810 = vadd.f32 %v808, %v809
  %v811 = vrot.slane %v810, 4
  %v812 = vadd.f32 %v810, %v811
  %v813 = vrot.slane %v812, 2
  %v814 = vadd.f32 %v812, %v813
  %v815 = vrot.slane %v814, 1
  %v816 = vadd.f32 %v814, %v815
  %vm817 = vcmask 1040384
  %v818 = vsel %vm817, %v697, %v816
  %vm819 = vcmask 123904
  %820 = vst.msk [vmem:[%s3] sm:$0x3] %vm819, %v818
  // Predicated region
  $region10: #{cnn_encoder_forward.26} parent=0 // pred_check
    _
  $region11: #{cnn_encoder_forward.26} parent=0 // pred_check_branch
    %822 = sbr.rel (0) target = $region13
  $region12: #{cnn_encoder_forward.26} parent=0 // pred_region
    _
  $region13: #{cnn_encoder_forward.26} parent=0 // pred_fallthru
    _
  // Predicated region
  $region14: #{cnn_encoder_forward.26} parent=0 // pred_check
    _
  $region15: #{cnn_encoder_forward.26} parent=0 // pred_check_branch
    %824 = sbr.rel (0) target = $region17
  $region16: #{cnn_encoder_forward.26} parent=0 // pred_region
    _
  $region17: #{cnn_encoder_forward.26} parent=0 // pred_fallthru
    _
  // Predicated region
  $region18: #{cnn_encoder_forward.26} parent=0 // pred_check
    _
  $region19: #{cnn_encoder_forward.26} parent=0 // pred_check_branch
    %826 = sbr.rel (0) target = $region21
  $region20: #{cnn_encoder_forward.26} parent=0 // pred_region
    _
  $region21: #{cnn_encoder_forward.26} parent=0 // pred_fallthru
    _
  // Predicated region
  $region22: #{cnn_encoder_forward.26} parent=0 // pred_check
    _
  $region23: #{cnn_encoder_forward.26} parent=0 // pred_check_branch
    %828 = sbr.rel (0) target = $region25
  $region24: #{cnn_encoder_forward.26} parent=0 // pred_region
    _
  $region25: #{cnn_encoder_forward.26} parent=0 // pred_fallthru
    _

// kernel: tile.53
$region0: #{tile.53}
  #allocation0 [shape = 's32[1]{0}', space=sflag, size = 0x4, scoped, tag = 'scoped memory for tile.53']
  %s0 = inlined_call_operand.vmem [shape: f32[16], index: 0, kind: input, shape index: {}]
  %s1 = inlined_call_operand.vmem [shape: f32[16,16], index: 1, kind: output, shape index: {}]
  // Predicated region
  $region2: #{tile.53} parent=0 // pred_check
    _
  $region3: #{tile.53} parent=0 // pred_check_branch
    %3 = sbr.rel (0) target = $region5
  $region4: #{tile.53} parent=0 // pred_region
    _
  $region5: #{tile.53} parent=0 // pred_fallthru
    _
  %v4 = vld [vmem:[%s0] ss:$0 sm:$0xff]
  %5 = vst [vmem:[%s1] sm:$0xff] %v4
  %s6 = scalar_lea.vmem %s1, 8
  %7 = vst [vmem:[%s6] sm:$0xff] %v4

// kernel: tile.54
$region0: #{tile.54}
  %s0 = inlined_call_operand.vmem [shape: f32[16,16], index: 0, kind: input, shape index: {}]
  %s1 = inlined_call_operand.vmem [shape: f32[1,256], index: 1, kind: output, shape index: {}]
  $region1: #{tile.54} parent=0
    #allocation0 [shape = 'u8[8192]{0}', space=vmem, size = 0x2000, scoped, tag = 'scoped mem for output reshape']
    %s2 = smov 3
    %v3 = vld [vmem:[%s0] ss:$8 sm:%s2]
    %vm4 = vcmask 130048
    %5 = vst.msk [vmem:[#allocation0] ss:$8 sm:$0x3] %vm4, %v3
    %s6 = scalar_lea.vmem %s0, 7
    %s7 = smov 3
    %v8 = vld [vmem:[%s6] ss:$8 sm:%s7]
    %9 = vrot.lane.b32.xlu0 %v8, 112
    %v10 = vpop.permute.xlu0 %9
    %vm11 = vcmask 1048448
    %12 = vst.msk [vmem:[#allocation0] ss:$8 sm:$0x3] %vm11, %v10
    %s13 = scalar_lea.vmem %s0, 6
    %s14 = smov 3
    %v15 = vld [vmem:[%s13] ss:$8 sm:%s14]
    %16 = vrot.lane.b32.xlu0 %v15, 96
    %v17 = vpop.permute.xlu0 %16
    %vm18 = vcmask 917248
    %19 = vst.msk [vmem:[#allocation0] ss:$8 sm:$0x3] %vm18, %v17
    %s20 = scalar_lea.vmem %s0, 5
    %s21 = smov 3
    %v22 = vld [vmem:[%s20] ss:$8 sm:%s21]
    %23 = vrot.lane.b32.xlu0 %v22, 80
    %v24 = vpop.permute.xlu0 %23
    %vm25 = vcmask 786048
    %26 = vst.msk [vmem:[#allocation0] ss:$8 sm:$0x3] %vm25, %v24
    %s27 = scalar_lea.vmem %s0, 4
    %s28 = smov 3
    %v29 = vld [vmem:[%s27] ss:$8 sm:%s28]
    %30 = vrot.lane.b32.xlu0 %v29, 64
    %v31 = vpop.permute.xlu0 %30
    %vm32 = vcmask 654848
    %33 = vst.msk [vmem:[#allocation0] ss:$8 sm:$0x3] %vm32, %v31
    %s34 = scalar_lea.vmem %s0, 3
    %s35 = smov 3
    %v36 = vld [vmem:[%s34] ss:$8 sm:%s35]
    %37 = vrot.lane.b32.xlu0 %v36, 48
    %v38 = vpop.permute.xlu0 %37
    %vm39 = vcmask 523648
    %40 = vst.msk [vmem:[#allocation0] ss:$8 sm:$0x3] %vm39, %v38
    %s41 = scalar_lea.vmem %s0, 2
    %s42 = smov 3
    %v43 = vld [vmem:[%s41] ss:$8 sm:%s42]
    %44 = vrot.lane.b32.xlu0 %v43, 32
    %v45 = vpop.permute.xlu0 %44
    %vm46 = vcmask 392448
    %47 = vst.msk [vmem:[#allocation0] ss:$8 sm:$0x3] %vm46, %v45
    %s48 = scalar_lea.vmem %s0, 1
    %s49 = smov 3
    %v50 = vld [vmem:[%s48] ss:$8 sm:%s49]
    %51 = vrot.lane.b32.xlu0 %v50, 16
    %v52 = vpop.permute.xlu0 %51
    %vm53 = vcmask 261248
    %54 = vst.msk [vmem:[#allocation0] ss:$8 sm:$0x3] %vm53, %v52
    %s56 = sshllo.u32 0, 1
    %v58 = vld [vmem:[#allocation0] sm:%s56]
    %s59 = sshllo.u32 0, 1
    %60 = vst [vmem:[%s1] sm:%s59] %v58
    %s61 = scalar_lea.vmem [#allocation0], 8
    %v62 = vld [vmem:[%s61] sm:%s56]
    %s63 = sshllo.u32 0, 1
    %s64 = scalar_lea.vmem %s1, 1
    %65 = vst [vmem:[%s64] sm:%s63] %v62

// kernel: cnn_encoder_forward.27
$region0: #{cnn_encoder_forward.27}
  #allocation0 [shape = 'u32[]', space=smem, size = 0x4, offset = 0x4, fixed_abs, tag = 'smem constant byte address 0x4 - core index']
  #allocation1 [shape = 'u32[144,128]{1,0:T(1,128)}', space=vmem, size = 0x12000, scoped, tag = 'internal scratch']
  %s0 = inlined_call_operand.vmem [shape: f32[40,256], index: 0, kind: input, shape index: {}]
  %s1 = inlined_call_operand.vmem [shape: f32[1,256], index: 1, kind: input, shape index: {}]
  %s2 = inlined_call_operand.vmem [shape: f32[1,256], index: 2, kind: input, shape index: {}]
  %s3 = inlined_call_operand.vmem [shape: f32[40,16], index: 3, kind: output, shape index: {}]
  %s4 = sld [smem:[#allocation0]]
  $region22: #{cnn_encoder_forward.27} parent=0
    _
  %s6 = ssub.s32 1, %s4
  %s7 = scalar_select 0, %s6, %s4
  // Predicated region
  $region2: #{cnn_encoder_forward.27} parent=0 // pred_check
    _
  $region3: #{cnn_encoder_forward.27} parent=0 // pred_check_branch
    %9 = sbr.rel (0) target = $region5
  $region4: #{cnn_encoder_forward.27} parent=0 // pred_region
    _
  $region5: #{cnn_encoder_forward.27} parent=0 // pred_fallthru
    _
  // Predicated region
  $region6: #{cnn_encoder_forward.27} parent=0 // pred_check
    _
  $region7: #{cnn_encoder_forward.27} parent=0 // pred_check_branch
    %11 = sbr.rel (0) target = $region9
  $region8: #{cnn_encoder_forward.27} parent=0 // pred_region
    _
  $region9: #{cnn_encoder_forward.27} parent=0 // pred_fallthru
    _
  // Predicated region
  $region10: #{cnn_encoder_forward.27} parent=0 // pred_check
    _
  $region11: #{cnn_encoder_forward.27} parent=0 // pred_check_branch
    %13 = sbr.rel (0) target = $region13
  $region12: #{cnn_encoder_forward.27} parent=0 // pred_region
    _
  $region13: #{cnn_encoder_forward.27} parent=0 // pred_fallthru
    _
  %v14 = vld [vmem:[%s0] sm:$0xff]
  %v15 = vld [vmem:[%s0 + $0x8] sm:$0xff]
  %v16 = vld [vmem:[%s0 + $0x10] sm:$0xff]
  %v17 = vld [vmem:[%s0 + $0x18] sm:$0xff]
  %v18 = vld [vmem:[%s0 + $0x20] sm:$0xff]
  %v19 = vld [vmem:[%s0 + $0x28] sm:$0xff]
  %v20 = vld [vmem:[%s0 + $0x30] sm:$0xff]
  %v21 = vld [vmem:[%s0 + $0x38] sm:$0xff]
  %v22 = vld [vmem:[%s0 + $0x40] sm:$0xff]
  %v23 = vld [vmem:[%s0 + $0x48] sm:$0xff]
  %v24 = vld [vmem:[%s1] sm:$0x3]
  %v26 = vlaneseq
  %v27 = vshrl.u32 %v26, 7
  %v28 = vsub.s32 0, %v27
  %v29 = vrot.slane %v24, %v28
  %v30 = vlaneseq
  %v31 = vshrl.u32 %v30, 7
  %v32 = vsub.s32 1, %v31
  %v33 = vrot.slane %v24, %v32
  %v36 = vmul.f32 %v14, %v29
  %v37 = vmul.f32 %v15, %v33
  %v38 = vmul.f32 %v16, %v29
  %v39 = vmul.f32 %v17, %v33
  %v40 = vmul.f32 %v18, %v29
  %v41 = vmul.f32 %v19, %v33
  %v42 = vmul.f32 %v20, %v29
  %v43 = vmul.f32 %v21, %v33
  %v44 = vmul.f32 %v22, %v29
  %v45 = vmul.f32 %v23, %v33
  %v46 = vld [vmem:[%s2] sm:$0x3]
  %v48 = vlaneseq
  %v49 = vshrl.u32 %v48, 7
  %v50 = vsub.s32 0, %v49
  %v51 = vrot.slane %v46, %v50
  %v52 = vlaneseq
  %v53 = vshrl.u32 %v52, 7
  %v54 = vsub.s32 1, %v53
  %v55 = vrot.slane %v46, %v54
  %v58 = vadd.f32 %v36, %v51
  %v59 = vadd.f32 %v37, %v55
  %v60 = vadd.f32 %v38, %v51
  %v61 = vadd.f32 %v39, %v55
  %v62 = vadd.f32 %v40, %v51
  %v63 = vadd.f32 %v41, %v55
  %v64 = vadd.f32 %v42, %v51
  %v65 = vadd.f32 %v43, %v55
  %v66 = vadd.f32 %v44, %v51
  %v67 = vadd.f32 %v45, %v55
  %v68 = vmax.f32 %v58, 0.0
  %v69 = vmax.f32 %v59, 0.0
  %v70 = vmax.f32 %v60, 0.0
  %v71 = vmax.f32 %v61, 0.0
  %v72 = vmax.f32 %v62, 0.0
  %v73 = vmax.f32 %v63, 0.0
  %v74 = vmax.f32 %v64, 0.0
  %v75 = vmax.f32 %v65, 0.0
  %v76 = vmax.f32 %v66, 0.0
  %v77 = vmax.f32 %v67, 0.0
  %vm78 = vcmp.le.f32.partialorder %v14, -5e+29
  %vm79 = vcmp.le.f32.partialorder %v15, -5e+29
  %vm80 = vcmp.le.f32.partialorder %v16, -5e+29
  %vm81 = vcmp.le.f32.partialorder %v17, -5e+29
  %vm82 = vcmp.le.f32.partialorder %v18, -5e+29
  %vm83 = vcmp.le.f32.partialorder %v19, -5e+29
  %vm84 = vcmp.le.f32.partialorder %v20, -5e+29
  %vm85 = vcmp.le.f32.partialorder %v21, -5e+29
  %vm86 = vcmp.le.f32.partialorder %v22, -5e+29
  %vm87 = vcmp.le.f32.partialorder %v23, -5e+29
  %v88 = vsel %vm78, 0.0, %v68
  %v89 = vsel %vm79, 0.0, %v69
  %v90 = vsel %vm80, 0.0, %v70
  %v91 = vsel %vm81, 0.0, %v71
  %v92 = vsel %vm82, 0.0, %v72
  %v93 = vsel %vm83, 0.0, %v73
  %v94 = vsel %vm84, 0.0, %v74
  %v95 = vsel %vm85, 0.0, %v75
  %v96 = vsel %vm86, 0.0, %v76
  %v97 = vsel %vm87, 0.0, %v77
  %103 = vrot.lane.b32.xlu0 %v88, 112
  %v104 = vpop.permute.xlu0 %103
  %105 = vrot.lane.b32.xlu0 %v90, 112
  %v106 = vpop.permute.xlu0 %105
  %107 = vrot.lane.b32.xlu0 %v92, 112
  %v108 = vpop.permute.xlu0 %107
  %109 = vrot.lane.b32.xlu0 %v94, 112
  %v110 = vpop.permute.xlu0 %109
  %111 = vrot.lane.b32.xlu0 %v96, 112
  %v112 = vpop.permute.xlu0 %111
  %v118 = vmax.f32 %v88, %v104
  %v119 = vmax.f32 %v90, %v106
  %v120 = vmax.f32 %v92, %v108
  %v121 = vmax.f32 %v94, %v110
  %v122 = vmax.f32 %v96, %v112
  %123 = vrot.lane.b32.xlu0 %v88, 96
  %v124 = vpop.permute.xlu0 %123
  %125 = vrot.lane.b32.xlu0 %v90, 96
  %v126 = vpop.permute.xlu0 %125
  %127 = vrot.lane.b32.xlu0 %v92, 96
  %v128 = vpop.permute.xlu0 %127
  %129 = vrot.lane.b32.xlu0 %v94, 96
  %v130 = vpop.permute.xlu0 %129
  %131 = vrot.lane.b32.xlu0 %v96, 96
  %v132 = vpop.permute.xlu0 %131
  %v138 = vmax.f32 %v118, %v124
  %v139 = vmax.f32 %v119, %v126
  %v140 = vmax.f32 %v120, %v128
  %v141 = vmax.f32 %v121, %v130
  %v142 = vmax.f32 %v122, %v132
  %143 = vrot.lane.b32.xlu0 %v88, 80
  %v144 = vpop.permute.xlu0 %143
  %145 = vrot.lane.b32.xlu0 %v90, 80
  %v146 = vpop.permute.xlu0 %145
  %147 = vrot.lane.b32.xlu0 %v92, 80
  %v148 = vpop.permute.xlu0 %147
  %149 = vrot.lane.b32.xlu0 %v94, 80
  %v150 = vpop.permute.xlu0 %149
  %151 = vrot.lane.b32.xlu0 %v96, 80
  %v152 = vpop.permute.xlu0 %151
  %v158 = vmax.f32 %v138, %v144
  %v159 = vmax.f32 %v139, %v146
  %v160 = vmax.f32 %v140, %v148
  %v161 = vmax.f32 %v141, %v150
  %v162 = vmax.f32 %v142, %v152
  %163 = vrot.lane.b32.xlu0 %v88, 64
  %v164 = vpop.permute.xlu0 %163
  %165 = vrot.lane.b32.xlu0 %v90, 64
  %v166 = vpop.permute.xlu0 %165
  %167 = vrot.lane.b32.xlu0 %v92, 64
  %v168 = vpop.permute.xlu0 %167
  %169 = vrot.lane.b32.xlu0 %v94, 64
  %v170 = vpop.permute.xlu0 %169
  %171 = vrot.lane.b32.xlu0 %v96, 64
  %v172 = vpop.permute.xlu0 %171
  %v178 = vmax.f32 %v158, %v164
  %v179 = vmax.f32 %v159, %v166
  %v180 = vmax.f32 %v160, %v168
  %v181 = vmax.f32 %v161, %v170
  %v182 = vmax.f32 %v162, %v172
  %183 = vrot.lane.b32.xlu0 %v88, 48
  %v184 = vpop.permute.xlu0 %183
  %185 = vrot.lane.b32.xlu0 %v90, 48
  %v186 = vpop.permute.xlu0 %185
  %187 = vrot.lane.b32.xlu0 %v92, 48
  %v188 = vpop.permute.xlu0 %187
  %189 = vrot.lane.b32.xlu0 %v94, 48
  %v190 = vpop.permute.xlu0 %189
  %191 = vrot.lane.b32.xlu0 %v96, 48
  %v192 = vpop.permute.xlu0 %191
  %v198 = vmax.f32 %v178, %v184
  %v199 = vmax.f32 %v179, %v186
  %v200 = vmax.f32 %v180, %v188
  %v201 = vmax.f32 %v181, %v190
  %v202 = vmax.f32 %v182, %v192
  %203 = vrot.lane.b32.xlu0 %v88, 32
  %v204 = vpop.permute.xlu0 %203
  %205 = vrot.lane.b32.xlu0 %v90, 32
  %v206 = vpop.permute.xlu0 %205
  %207 = vrot.lane.b32.xlu0 %v92, 32
  %v208 = vpop.permute.xlu0 %207
  %209 = vrot.lane.b32.xlu0 %v94, 32
  %v210 = vpop.permute.xlu0 %209
  %211 = vrot.lane.b32.xlu0 %v96, 32
  %v212 = vpop.permute.xlu0 %211
  %v218 = vmax.f32 %v198, %v204
  %v219 = vmax.f32 %v199, %v206
  %v220 = vmax.f32 %v200, %v208
  %v221 = vmax.f32 %v201, %v210
  %v222 = vmax.f32 %v202, %v212
  %223 = vrot.lane.b32.xlu0 %v88, 16
  %v224 = vpop.permute.xlu0 %223
  %225 = vrot.lane.b32.xlu0 %v90, 16
  %v226 = vpop.permute.xlu0 %225
  %227 = vrot.lane.b32.xlu0 %v92, 16
  %v228 = vpop.permute.xlu0 %227
  %229 = vrot.lane.b32.xlu0 %v94, 16
  %v230 = vpop.permute.xlu0 %229
  %231 = vrot.lane.b32.xlu0 %v96, 16
  %v232 = vpop.permute.xlu0 %231
  %v238 = vmax.f32 %v218, %v224
  %v239 = vmax.f32 %v219, %v226
  %v240 = vmax.f32 %v220, %v228
  %v241 = vmax.f32 %v221, %v230
  %v242 = vmax.f32 %v222, %v232
  %v243 = vmax.f32 %v238, %v89
  %v244 = vmax.f32 %v239, %v91
  %v245 = vmax.f32 %v240, %v93
  %v246 = vmax.f32 %v241, %v95
  %v247 = vmax.f32 %v242, %v97
  %253 = vrot.lane.b32.xlu0 %v89, 112
  %v254 = vpop.permute.xlu0 %253
  %255 = vrot.lane.b32.xlu0 %v91, 112
  %v256 = vpop.permute.xlu0 %255
  %257 = vrot.lane.b32.xlu0 %v93, 112
  %v258 = vpop.permute.xlu0 %257
  %259 = vrot.lane.b32.xlu0 %v95, 112
  %v260 = vpop.permute.xlu0 %259
  %261 = vrot.lane.b32.xlu0 %v97, 112
  %v262 = vpop.permute.xlu0 %261
  %v268 = vmax.f32 %v243, %v254
  %v269 = vmax.f32 %v244, %v256
  %v270 = vmax.f32 %v245, %v258
  %v271 = vmax.f32 %v246, %v260
  %v272 = vmax.f32 %v247, %v262
  %273 = vrot.lane.b32.xlu0 %v89, 96
  %v274 = vpop.permute.xlu0 %273
  %275 = vrot.lane.b32.xlu0 %v91, 96
  %v276 = vpop.permute.xlu0 %275
  %277 = vrot.lane.b32.xlu0 %v93, 96
  %v278 = vpop.permute.xlu0 %277
  %279 = vrot.lane.b32.xlu0 %v95, 96
  %v280 = vpop.permute.xlu0 %279
  %281 = vrot.lane.b32.xlu0 %v97, 96
  %v282 = vpop.permute.xlu0 %281
  %v288 = vmax.f32 %v268, %v274
  %v289 = vmax.f32 %v269, %v276
  %v290 = vmax.f32 %v270, %v278
  %v291 = vmax.f32 %v271, %v280
  %v292 = vmax.f32 %v272, %v282
  %293 = vrot.lane.b32.xlu0 %v89, 80
  %v294 = vpop.permute.xlu0 %293
  %295 = vrot.lane.b32.xlu0 %v91, 80
  %v296 = vpop.permute.xlu0 %295
  %297 = vrot.lane.b32.xlu0 %v93, 80
  %v298 = vpop.permute.xlu0 %297
  %299 = vrot.lane.b32.xlu0 %v95, 80
  %v300 = vpop.permute.xlu0 %299
  %301 = vrot.lane.b32.xlu0 %v97, 80
  %v302 = vpop.permute.xlu0 %301
  %v308 = vmax.f32 %v288, %v294
  %v309 = vmax.f32 %v289, %v296
  %v310 = vmax.f32 %v290, %v298
  %v311 = vmax.f32 %v291, %v300
  %v312 = vmax.f32 %v292, %v302
  %313 = vrot.lane.b32.xlu0 %v89, 64
  %v314 = vpop.permute.xlu0 %313
  %315 = vrot.lane.b32.xlu0 %v91, 64
  %v316 = vpop.permute.xlu0 %315
  %317 = vrot.lane.b32.xlu0 %v93, 64
  %v318 = vpop.permute.xlu0 %317
  %319 = vrot.lane.b32.xlu0 %v95, 64
  %v320 = vpop.permute.xlu0 %319
  %321 = vrot.lane.b32.xlu0 %v97, 64
  %v322 = vpop.permute.xlu0 %321
  %v328 = vmax.f32 %v308, %v314
  %v329 = vmax.f32 %v309, %v316
  %v330 = vmax.f32 %v310, %v318
  %v331 = vmax.f32 %v311, %v320
  %v332 = vmax.f32 %v312, %v322
  %333 = vrot.lane.b32.xlu0 %v89, 48
  %v334 = vpop.permute.xlu0 %333
  %335 = vrot.lane.b32.xlu0 %v91, 48
  %v336 = vpop.permute.xlu0 %335
  %337 = vrot.lane.b32.xlu0 %v93, 48
  %v338 = vpop.permute.xlu0 %337
  %339 = vrot.lane.b32.xlu0 %v95, 48
  %v340 = vpop.permute.xlu0 %339
  %341 = vrot.lane.b32.xlu0 %v97, 48
  %v342 = vpop.permute.xlu0 %341
  %v348 = vmax.f32 %v328, %v334
  %v349 = vmax.f32 %v329, %v336
  %v350 = vmax.f32 %v330, %v338
  %v351 = vmax.f32 %v331, %v340
  %v352 = vmax.f32 %v332, %v342
  %353 = vrot.lane.b32.xlu0 %v89, 32
  %v354 = vpop.permute.xlu0 %353
  %355 = vrot.lane.b32.xlu0 %v91, 32
  %v356 = vpop.permute.xlu0 %355
  %357 = vrot.lane.b32.xlu0 %v93, 32
  %v358 = vpop.permute.xlu0 %357
  %359 = vrot.lane.b32.xlu0 %v95, 32
  %v360 = vpop.permute.xlu0 %359
  %361 = vrot.lane.b32.xlu0 %v97, 32
  %v362 = vpop.permute.xlu0 %361
  %v368 = vmax.f32 %v348, %v354
  %v369 = vmax.f32 %v349, %v356
  %v370 = vmax.f32 %v350, %v358
  %v371 = vmax.f32 %v351, %v360
  %v372 = vmax.f32 %v352, %v362
  %373 = vrot.lane.b32.xlu0 %v89, 16
  %v374 = vpop.permute.xlu0 %373
  %375 = vrot.lane.b32.xlu0 %v91, 16
  %v376 = vpop.permute.xlu0 %375
  %377 = vrot.lane.b32.xlu0 %v93, 16
  %v378 = vpop.permute.xlu0 %377
  %379 = vrot.lane.b32.xlu0 %v95, 16
  %v380 = vpop.permute.xlu0 %379
  %381 = vrot.lane.b32.xlu0 %v97, 16
  %v382 = vpop.permute.xlu0 %381
  %v388 = vmax.f32 %v368, %v374
  %v389 = vmax.f32 %v369, %v376
  %v390 = vmax.f32 %v370, %v378
  %v391 = vmax.f32 %v371, %v380
  %v392 = vmax.f32 %v372, %v382
  %vm393 = vcmask 130048
  %394 = vst.msk [vmem:[%s3] sm:$0xff] %vm393, %v388
  %395 = vst.msk [vmem:[%s3 + $0x8] sm:$0xff] %vm393, %v389
  %396 = vst.msk [vmem:[%s3 + $0x10] sm:$0xff] %vm393, %v390
  %397 = vst.msk [vmem:[%s3 + $0x18] sm:$0xff] %vm393, %v391
  %398 = vst.msk [vmem:[%s3 + $0x20] sm:$0xff] %vm393, %v392
  // Predicated region
  $region14: #{cnn_encoder_forward.27} parent=0 // pred_check
    _
  $region15: #{cnn_encoder_forward.27} parent=0 // pred_check_branch
    %400 = sbr.rel (0) target = $region17
  $region16: #{cnn_encoder_forward.27} parent=0 // pred_region
    _
  $region17: #{cnn_encoder_forward.27} parent=0 // pred_fallthru
    _
  // Predicated region
  $region18: #{cnn_encoder_forward.27} parent=0 // pred_check
    _
  $region19: #{cnn_encoder_forward.27} parent=0 // pred_check_branch
    %402 = sbr.rel (0) target = $region21
  $region20: #{cnn_encoder_forward.27} parent=0 // pred_region
    _
  $region21: #{cnn_encoder_forward.27} parent=0 // pred_fallthru
    _

// kernel: cnn_encoder_forward.31
$region0: #{cnn_encoder_forward.31}
  #allocation0 [shape = 'u32[]', space=smem, size = 0x4, offset = 0x4, fixed_abs, tag = 'smem constant byte address 0x4 - core index']
  #allocation1 [shape = 'u32[144,128]{1,0:T(1,128)}', space=vmem, size = 0x12000, scoped, tag = 'internal scratch']
  %s0 = inlined_call_operand.vmem [shape: bf16[40,16], index: 0, kind: input, shape index: {}]
  %s1 = inlined_call_operand.vmem [shape: bf16[16,16], index: 1, kind: input, shape index: {}]
  %s2 = inlined_call_operand.vmem [shape: f32[1,16], index: 2, kind: input, shape index: {}]
  %s3 = inlined_call_operand.vmem [shape: f32[40,16], index: 3, kind: output, shape index: {}]
  %s4 = sld [smem:[#allocation0]]
  $region22: #{cnn_encoder_forward.31} parent=0
    _
  %s6 = ssub.s32 1, %s4
  %s7 = scalar_select 0, %s6, %s4
  // Predicated region
  $region2: #{cnn_encoder_forward.31} parent=0 // pred_check
    _
  $region3: #{cnn_encoder_forward.31} parent=0 // pred_check_branch
    %9 = sbr.rel (0) target = $region5
  $region4: #{cnn_encoder_forward.31} parent=0 // pred_region
    _
  $region5: #{cnn_encoder_forward.31} parent=0 // pred_fallthru
    _
  // Predicated region
  $region6: #{cnn_encoder_forward.31} parent=0 // pred_check
    _
  $region7: #{cnn_encoder_forward.31} parent=0 // pred_check_branch
    %11 = sbr.rel (0) target = $region9
  $region8: #{cnn_encoder_forward.31} parent=0 // pred_region
    _
  $region9: #{cnn_encoder_forward.31} parent=0 // pred_fallthru
    _
  // Predicated region
  $region10: #{cnn_encoder_forward.31} parent=0 // pred_check
    _
  $region11: #{cnn_encoder_forward.31} parent=0 // pred_check_branch
    %13 = sbr.rel (0) target = $region13
  $region12: #{cnn_encoder_forward.31} parent=0 // pred_region
    _
  $region13: #{cnn_encoder_forward.31} parent=0 // pred_fallthru
    _
  %v15 = vld [vmem:[%s0] sm:$0xf]
  %v16 = vld [vmem:[%s0 + $0x4] sm:$0xf]
  %v17 = vld [vmem:[%s0 + $0x8] sm:$0xf]
  %v18 = vld [vmem:[%s0 + $0xc] sm:$0xf]
  %v19 = vld [vmem:[%s0 + $0x10] sm:$0xf]
  %v20 = vld [vmem:[%s1] sm:$0xf]
  %v21 = vld [vmem:[%s1 + $0x4] sm:$0xf]
  %v22 = vld [vmem:[%s2] sm:$0x1]
  %v24 = vlaneseq
  %v25 = vshrl.u32 %v24, 7
  %v26 = vsub.s32 0, %v25
  %v27 = vrot.slane %v22, %v26
  %v34 = vunpack.c.l.b16 %v15
  %v35 = vunpack.c.l.b16 %v16
  %v36 = vunpack.c.l.b16 %v17
  %v37 = vunpack.c.l.b16 %v18
  %v38 = vunpack.c.l.b16 %v19
  %v39 = vpack.c.b16 %v35, %v34
  %v40 = vpack.c.b16 %v37, %v36
  %v41 = vpack.c.b16 %v38, %v38
  %v44 = vunpack.c.l.b16 %v20
  %v45 = vunpack.c.l.b16 %v21
  %v46 = vpack.c.b16 %v45, %v44
  %vm48 = vcmask 130048
  %v50 = vsel %vm48, %v39, 0
  %v53 = vsel %vm48, %v40, 0
  %v56 = vsel %vm48, %v41, 0
  %58 = vmatprep.subr.bf16.mxu0 0
  %59 = vmatpush1.bf16.msra.mxu0 %v46
  %60 = vmatprep.subr.bf16.mxu0 0
  %61 = vmatpush1.bf16.msra.mxu0 0
  %62 = vmatprep.subr.bf16.mxu0 0
  %63 = vmatpush1.bf16.msra.mxu0 0
  %64 = vmatprep.subr.bf16.mxu0 0
  %65 = vmatpush1.bf16.msra.mxu0 0
  %66 = vmatprep.subr.bf16.mxu0 0
  %67 = vmatpush1.bf16.msra.mxu0 0
  %68 = vmatprep.subr.bf16.mxu0 0
  %69 = vmatpush1.bf16.msra.mxu0 0
  %70 = vmatprep.subr.bf16.mxu0 0
  %71 = vmatpush1.bf16.msra.mxu0 0
  %72 = vmatprep.subr.bf16.mxu0 0
  %73 = vmatpush1.bf16.msra.mxu0 0
  %74 = vmatprep.subr.bf16.mxu0 0
  %75 = vmatpush1.bf16.msra.mxu0 0
  %76 = vmatprep.subr.bf16.mxu0 0
  %77 = vmatpush1.bf16.msra.mxu0 0
  %78 = vmatprep.subr.bf16.mxu0 0
  %79 = vmatpush1.bf16.msra.mxu0 0
  %80 = vmatprep.subr.bf16.mxu0 0
  %81 = vmatpush1.bf16.msra.mxu0 0
  %82 = vmatprep.subr.bf16.mxu0 0
  %83 = vmatpush1.bf16.msra.mxu0 0
  %84 = vmatprep.subr.bf16.mxu0 0
  %85 = vmatpush1.bf16.msra.mxu0 0
  %86 = vmatprep.subr.bf16.mxu0 0
  %87 = vmatpush1.bf16.msra.mxu0 0
  %88 = vmatprep.subr.bf16.mxu0 0
  %89 = vmatpush1.bf16.msra.mxu0 0
  %90 = vmatprep.mubr.bf16.mxu0 0
  %91 = vmatmul.mubr.bf16.gmra.mrb[0].mxu0 %v50
  %v92 = vpop.f32.mrb[0].mxu0
  %v93 = vadd.f32 %v27, %v92
  %v94 = vpop.f32.mrb[0].mxu0
  %v95 = vpop.f32.mrb[0].mxu0
  %v96 = vadd.f32 %v27, %v95
  %v97 = vpop.f32.mrb[0].mxu0
  %98 = vmatprep.mubr.bf16.mxu0 0
  %99 = vmatmul.mubr.bf16.gmra.mrb[0].mxu0 %v53
  %v100 = vpop.f32.mrb[0].mxu0
  %v101 = vadd.f32 %v27, %v100
  %v102 = vpop.f32.mrb[0].mxu0
  %v103 = vpop.f32.mrb[0].mxu0
  %v104 = vadd.f32 %v27, %v103
  %v105 = vpop.f32.mrb[0].mxu0
  %106 = vmatprep.mubr.bf16.mxu0 0
  %107 = vmatmul.mubr.bf16.gmra.mrb[0].mxu0 %v56
  %v108 = vpop.f32.mrb[0].mxu0
  %v109 = vadd.f32 %v27, %v108
  %v110 = vpop.f32.mrb[0].mxu0
  %v111 = vpop.f32.mrb[0].mxu0
  %v112 = vpop.f32.mrb[0].mxu0
  %113 = vdwg.mxu0
  %114 = vst.msk [vmem:[%s3] sm:$0xff] %vm48, %v93
  %115 = vst.msk [vmem:[%s3 + $0x8] sm:$0xff] %vm48, %v96
  %116 = vst.msk [vmem:[%s3 + $0x10] sm:$0xff] %vm48, %v101
  %117 = vst.msk [vmem:[%s3 + $0x18] sm:$0xff] %vm48, %v104
  %118 = vst.msk [vmem:[%s3 + $0x20] sm:$0xff] %vm48, %v109
  // Predicated region
  $region14: #{cnn_encoder_forward.31} parent=0 // pred_check
    _
  $region15: #{cnn_encoder_forward.31} parent=0 // pred_check_branch
    %120 = sbr.rel (0) target = $region17
  $region16: #{cnn_encoder_forward.31} parent=0 // pred_region
    _
  $region17: #{cnn_encoder_forward.31} parent=0 // pred_fallthru
    _
  // Predicated region
  $region18: #{cnn_encoder_forward.31} parent=0 // pred_check
    _
  $region19: #{cnn_encoder_forward.31} parent=0 // pred_check_branch
    %122 = sbr.rel (0) target = $region21
  $region20: #{cnn_encoder_forward.31} parent=0 // pred_region
    _
  $region21: #{cnn_encoder_forward.31} parent=0 // pred_fallthru
    _

// kernel: cnn_encoder_forward.33
$region0: #{cnn_encoder_forward.33}
  #allocation0 [shape = 'u32[]', space=smem, size = 0x4, offset = 0x4, fixed_abs, tag = 'smem constant byte address 0x4 - core index']
  #allocation1 [shape = 'u32[144,128]{1,0:T(1,128)}', space=vmem, size = 0x12000, scoped, tag = 'internal scratch']
  %s0 = inlined_call_operand.vmem [shape: f32[2,4,5,80], index: 0, kind: input, shape index: {}, may-alias: {0,1,2}]
  %s1 = inlined_call_operand.vmem [shape: f32[2,4,5,80], index: 1, kind: input, shape index: {}, may-alias: {0,1,2}]
  %s2 = inlined_call_operand.vmem [shape: f32[2,4,5,80], index: 2, kind: input, shape index: {}, may-alias: {0,1,2}]
  %s3 = inlined_call_operand.vmem [shape: f32[2,2,3,48], index: 3, kind: output, shape index: {}]
  %s4 = sld [smem:[#allocation0]]
  $region45: #{cnn_encoder_forward.33} parent=0
    _
  %s6 = ssub.s32 1, %s4
  %s7 = scalar_select 0, %s6, %s4
  loop: start=0, step=1, limit=6
  $region2: #{cnn_encoder_forward.33} parent=0 // loop_pre_header
    _
  $region3: #{cnn_encoder_forward.33} parent=0 // loop_header
    %s9 = sphi 0, %s13
    %p10 = scmp.ge.s32.totalorder %s9, 6
    %s16 = sphi 0, %s28
    %s17 = sphi 0, %s24
    %s18 = sphi 0, %s16
    %s19 = sphi 0, %s17
    %s20 = sphi 0, %s18
    %s21 = sphi 0, %s19
    %s33 = sphi 0, %s35
    %s36 = sphi 0, %s33
    %s37 = sphi 0, %s36
    %s53 = sphi 0, %s37
    %s63 = sphi 0, %s65
    %s66 = sphi 0, %s63
    %s67 = sphi 0, %s66
    %s83 = sphi 0, %s67
    %s93 = sphi 0, %s95
    %s96 = sphi 0, %s93
    %s97 = sphi 0, %s96
    %s113 = sphi 0, %s97
    %s121 = sphi 0, %s123
    %s124 = sphi 0, %s121
    %s125 = sphi 0, %s124
    %s141 = sphi 0, %s125
  $region4: #{cnn_encoder_forward.33} parent=0 // loop_header_branch
    %12 = sbr.rel (%p10) target = $region8
  $region5: #{cnn_encoder_forward.33} parent=0 // loop_body
    %s14 = ssub.s32 %s9, 1
    %s15 = ssub.s32 %s9, 2
    %s22 = sadd.s32 1, %s17
    %p23 = scmp.ge.s32.totalorder %s22, 2
    %s24 = scalar_select %p23, 0, %s22
    %s25 = sadd.s32 1, %s16
    %s26 = scalar_select %p23, %s25, %s16
    %p27 = scmp.ge.s32.totalorder %s26, 2
    %s28 = scalar_select %p27, 0, %s26
    %s29 = ssub.s32 %s16, %s28
    %s30 = ssub.s32 %s17, %s24
    %s31 = sor.u32 %s29, %s30
    %p32 = scmp.eq.s32.totalorder %s31, 0
    %s34 = sadd.s32 %s33, 1
    %s35 = scalar_select %p32, %s33, %s34
    %p38 = pneg %p32
    %p39 = scmp.eq.s32.totalorder %s9, 3
    %p40 = por %p38, %p39
    %p41 = scmp.ne.s32.totalorder %s33, %s36
    %p42 = scmp.eq.s32.totalorder %s9, 0
    %p43 = por %p41, %p42
    %p44 = scmp.ne.s32.totalorder %s33, %s36
    %p45 = scmp.eq.s32.totalorder %s14, 3
    %p46 = por %p44, %p45
    %p47 = scmp.ne.s32.totalorder %s36, %s37
    %p48 = scmp.eq.s32.totalorder %s14, 0
    %p49 = por %p47, %p48
    %p50 = scmp.ne.s32.totalorder %s36, %s37
    %p51 = scmp.eq.s32.totalorder %s15, 3
    %p52 = por %p50, %p51
    %p54 = scmp.ne.s32.totalorder %s37, %s53
    %p55 = scmp.eq.s32.totalorder %s15, 0
    %p56 = por %p54, %p55
    %s57 = sadd.s32 %s17, 1
    %s58 = sadd.s32 %s24, 1
    %s59 = ssub.s32 %s16, %s28
    %s60 = ssub.s32 %s57, %s58
    %s61 = sor.u32 %s59, %s60
    %p62 = scmp.eq.s32.totalorder %s61, 0
    %s64 = sadd.s32 %s63, 1
    %s65 = scalar_select %p62, %s63, %s64
    %p68 = pneg %p62
    %p69 = scmp.eq.s32.totalorder %s9, 3
    %p70 = por %p68, %p69
    %p71 = scmp.ne.s32.totalorder %s63, %s66
    %p72 = scmp.eq.s32.totalorder %s9, 0
    %p73 = por %p71, %p72
    %p74 = scmp.ne.s32.totalorder %s63, %s66
    %p75 = scmp.eq.s32.totalorder %s14, 3
    %p76 = por %p74, %p75
    %p77 = scmp.ne.s32.totalorder %s66, %s67
    %p78 = scmp.eq.s32.totalorder %s14, 0
    %p79 = por %p77, %p78
    %p80 = scmp.ne.s32.totalorder %s66, %s67
    %p81 = scmp.eq.s32.totalorder %s15, 3
    %p82 = por %p80, %p81
    %p84 = scmp.ne.s32.totalorder %s67, %s83
    %p85 = scmp.eq.s32.totalorder %s15, 0
    %p86 = por %p84, %p85
    %s87 = sadd.s32 %s17, 2
    %s88 = sadd.s32 %s24, 2
    %s89 = ssub.s32 %s16, %s28
    %s90 = ssub.s32 %s87, %s88
    %s91 = sor.u32 %s89, %s90
    %p92 = scmp.eq.s32.totalorder %s91, 0
    %s94 = sadd.s32 %s93, 1
    %s95 = scalar_select %p92, %s93, %s94
    %p98 = pneg %p92
    %p99 = scmp.eq.s32.totalorder %s9, 3
    %p100 = por %p98, %p99
    %p101 = scmp.ne.s32.totalorder %s93, %s96
    %p102 = scmp.eq.s32.totalorder %s9, 0
    %p103 = por %p101, %p102
    %p104 = scmp.ne.s32.totalorder %s93, %s96
    %p105 = scmp.eq.s32.totalorder %s14, 3
    %p106 = por %p104, %p105
    %p107 = scmp.ne.s32.totalorder %s96, %s97
    %p108 = scmp.eq.s32.totalorder %s14, 0
    %p109 = por %p107, %p108
    %p110 = scmp.ne.s32.totalorder %s96, %s97
    %p111 = scmp.eq.s32.totalorder %s15, 3
    %p112 = por %p110, %p111
    %p114 = scmp.ne.s32.totalorder %s97, %s113
    %p115 = scmp.eq.s32.totalorder %s15, 0
    %p116 = por %p114, %p115
    %s117 = ssub.s32 %s16, %s28
    %s118 = ssub.s32 %s17, %s24
    %s119 = sor.u32 %s117, %s118
    %p120 = scmp.eq.s32.totalorder %s119, 0
    %s122 = sadd.s32 %s121, 1
    %s123 = scalar_select %p120, %s121, %s122
    %p126 = pneg %p120
    %p127 = scmp.eq.s32.totalorder %s9, 3
    %p128 = por %p126, %p127
    %p129 = scmp.ne.s32.totalorder %s121, %s124
    %p130 = scmp.eq.s32.totalorder %s9, 0
    %p131 = por %p129, %p130
    %p132 = scmp.ne.s32.totalorder %s121, %s124
    %p133 = scmp.eq.s32.totalorder %s14, 3
    %p134 = por %p132, %p133
    %p135 = scmp.ne.s32.totalorder %s124, %s125
    %p136 = scmp.eq.s32.totalorder %s14, 0
    %p137 = por %p135, %p136
    %p138 = scmp.ne.s32.totalorder %s124, %s125
    %p139 = scmp.eq.s32.totalorder %s15, 3
    %p140 = por %p138, %p139
    %p142 = scmp.ne.s32.totalorder %s125, %s141
    %p143 = scmp.eq.s32.totalorder %s15, 0
    %p144 = por %p142, %p143
    %p145 = scmp.le.s32.totalorder 1, %s9
    %p146 = scmp.lt.s32.totalorder %s9, 5
    %p147 = pnand %p145, %p146
    %p148 = pneg %p147
    // Predicated region
    $region9: #{cnn_encoder_forward.33} parent=5 // pred_check
      _
    $region10: #{cnn_encoder_forward.33} parent=5 // pred_check_branch
      %150 = sbr.rel (%p147) target = $region12
    $region11: #{cnn_encoder_forward.33} parent=5 // pred_region
      %s151 = ssub.s32 %s9, 1
    $region12: #{cnn_encoder_forward.33} parent=5 // pred_fallthru
      _
    %p152 = scmp.lt.s32.totalorder %s9, 4
    // Predicated region
    $region13: #{cnn_encoder_forward.33} parent=5 // pred_check
      %p153 = pneg %p152
    $region14: #{cnn_encoder_forward.33} parent=5 // pred_check_branch
      %155 = sbr.rel (%p153) target = $region16
    $region15: #{cnn_encoder_forward.33} parent=5 // pred_region
      // Predicated region
      $region17: #{cnn_encoder_forward.33} parent=15 // pred_check
        %p156 = pneg %p43
      $region18: #{cnn_encoder_forward.33} parent=15 // pred_check_branch
        %158 = sbr.rel (%p156) target = $region20
      $region19: #{cnn_encoder_forward.33} parent=15 // pred_region
        %p159 = scmp.lt.s32.totalorder %s16, 1
        %s160 = scalar_select %p159, %s16, 1
        %p161 = scmp.lt.s32.totalorder %s17, 3
        %s162 = scalar_select %p161, %s17, 3
        %s163 = smul.addr %s160, 4
        %s164 = sadd.s32 %s162, %s163
        %s165 = smul.addr %s164, 8
        %s166 = scalar_lea.vmem %s0, %s165
      $region20: #{cnn_encoder_forward.33} parent=15 // pred_fallthru
        _
      // Predicated region
      $region21: #{cnn_encoder_forward.33} parent=15 // pred_check
        %p167 = pneg %p73
      $region22: #{cnn_encoder_forward.33} parent=15 // pred_check_branch
        %169 = sbr.rel (%p167) target = $region24
      $region23: #{cnn_encoder_forward.33} parent=15 // pred_region
        %s170 = sadd.s32 %s17, 1
        %p171 = scmp.lt.s32.totalorder %s16, 1
        %s172 = scalar_select %p171, %s16, 1
        %p173 = scmp.lt.s32.totalorder %s170, 3
        %s174 = scalar_select %p173, %s170, 3
        %s175 = smul.addr %s172, 4
        %s176 = sadd.s32 %s174, %s175
        %s177 = smul.addr %s176, 8
        %s178 = scalar_lea.vmem %s1, %s177
        %s179 = sadd.s32 %s17, 1
      $region24: #{cnn_encoder_forward.33} parent=15 // pred_fallthru
        _
      // Predicated region
      $region25: #{cnn_encoder_forward.33} parent=15 // pred_check
        %p180 = pneg %p103
      $region26: #{cnn_encoder_forward.33} parent=15 // pred_check_branch
        %182 = sbr.rel (%p180) target = $region28
      $region27: #{cnn_encoder_forward.33} parent=15 // pred_region
        %s183 = sadd.s32 %s17, 2
        %p184 = scmp.lt.s32.totalorder %s16, 1
        %s185 = scalar_select %p184, %s16, 1
        %p186 = scmp.lt.s32.totalorder %s183, 3
        %s187 = scalar_select %p186, %s183, 3
        %s188 = smul.addr %s185, 4
        %s189 = sadd.s32 %s187, %s188
        %s190 = smul.addr %s189, 8
        %s191 = scalar_lea.vmem %s2, %s190
        %s192 = sadd.s32 %s17, 2
      $region28: #{cnn_encoder_forward.33} parent=15 // pred_fallthru
        _
    $region16: #{cnn_encoder_forward.33} parent=5 // pred_fallthru
      _
    %p193 = scmp.le.s32.totalorder 1, %s9
    %p194 = scmp.lt.s32.totalorder %s9, 5
    %p195 = pnand %p193, %p194
    %p196 = pneg %p195
    // Predicated region
    $region29: #{cnn_encoder_forward.33} parent=5 // pred_check
      _
    $region30: #{cnn_encoder_forward.33} parent=5 // pred_check_branch
      %198 = sbr.rel (%p195) target = $region32
    $region31: #{cnn_encoder_forward.33} parent=5 // pred_region
      %s199 = ssub.s32 %s9, 1
      %p200 = scmp.lt.s32.totalorder %s18, 1
      %s201 = scalar_select %p200, %s18, 1
      %p202 = scmp.lt.s32.totalorder %s19, 3
      %s203 = scalar_select %p202, %s19, 3
      %s204 = smul.addr %s201, 4
      %s205 = sadd.s32 %s203, %s204
      %s206 = smul.addr %s205, 8
      %s207 = scalar_lea.vmem %s0, %s206
      %p208 = pneg %p49
      %p209 = pneg %p46
      %s210 = sadd.s32 %s19, 1
      %p211 = scmp.lt.s32.totalorder %s18, 1
      %s212 = scalar_select %p211, %s18, 1
      %p213 = scmp.lt.s32.totalorder %s210, 3
      %s214 = scalar_select %p213, %s210, 3
      %s215 = smul.addr %s212, 4
      %s216 = sadd.s32 %s214, %s215
      %s217 = smul.addr %s216, 8
      %s218 = scalar_lea.vmem %s1, %s217
      %p219 = pneg %p79
      %p220 = pneg %p76
      %s221 = sadd.s32 %s19, 2
      %p222 = scmp.lt.s32.totalorder %s18, 1
      %s223 = scalar_select %p222, %s18, 1
      %p224 = scmp.lt.s32.totalorder %s221, 3
      %s225 = scalar_select %p224, %s221, 3
      %s226 = smul.addr %s223, 4
      %s227 = sadd.s32 %s225, %s226
      %s228 = smul.addr %s227, 8
      %s229 = scalar_lea.vmem %s2, %s228
      %p230 = pneg %p109
      %p231 = pneg %p106
      %p232 = pneg %p137
      %p233 = pneg %p134
      %p234 = scmp.lt.s32.totalorder %s18, 1
      %s235 = scalar_select %p234, %s18, 1
      %p236 = scmp.lt.s32.totalorder %s19, 1
      %s237 = scalar_select %p236, %s19, 1
      %s238 = smul.addr %s235, 2
      %s239 = sadd.s32 %s237, %s238
      %s240 = smul.addr %s239, 4
      %s241 = scalar_lea.vmem %s3, %s240
      %p242 = scmp.lt.s32.totalorder %s18, 1
      %s243 = scalar_select %p242, %s18, 1
      %p244 = scmp.lt.s32.totalorder %s19, 3
      %s245 = scalar_select %p244, %s19, 3
      %s246 = smul.addr %s243, 4
      %s247 = sadd.s32 %s245, %s246
      %s248 = smul.addr %s247, 8
      %s249 = scalar_lea.vmem %s0, %s248
      %s250 = sadd.s32 %s19, 1
      %p251 = scmp.lt.s32.totalorder %s18, 1
      %s252 = scalar_select %p251, %s18, 1
      %p253 = scmp.lt.s32.totalorder %s250, 3
      %s254 = scalar_select %p253, %s250, 3
      %s255 = smul.addr %s252, 4
      %s256 = sadd.s32 %s254, %s255
      %s257 = smul.addr %s256, 8
      %s258 = scalar_lea.vmem %s1, %s257
      %s259 = sadd.s32 %s19, 1
      %s260 = sadd.s32 %s19, 2
      %p261 = scmp.lt.s32.totalorder %s18, 1
      %s262 = scalar_select %p261, %s18, 1
      %p263 = scmp.lt.s32.totalorder %s260, 3
      %s264 = scalar_select %p263, %s260, 3
      %s265 = smul.addr %s262, 4
      %s266 = sadd.s32 %s264, %s265
      %s267 = smul.addr %s266, 8
      %s268 = scalar_lea.vmem %s2, %s267
      %s269 = sadd.s32 %s19, 2
      %p270 = scmp.lt.s32.totalorder %s18, 1
      %s271 = scalar_select %p270, %s18, 1
      %p272 = scmp.lt.s32.totalorder %s19, 1
      %s273 = scalar_select %p272, %s19, 1
      %s274 = smul.addr %s271, 2
      %s275 = sadd.s32 %s273, %s274
      %s276 = smul.addr %s275, 4
      %s277 = scalar_lea.vmem %s3, %s276
      %v278 = vld [vmem:[%s249] sm:$0x1f]
      %v279 = vld [vmem:[%s258] sm:$0x1f]
      %v280 = vmax.f32 %v278, %v279
      %v281 = vld [vmem:[%s268] sm:$0x1f]
      %v282 = vmax.f32 %v280, %v281
      %284 = vrot.lane.b32.xlu0 %v282, 112
      %v285 = vpop.permute.xlu0 %284
      %v287 = vmax.f32 %v282, %v285
      %288 = vrot.lane.b32.xlu0 %v282, 96
      %v289 = vpop.permute.xlu0 %288
      %v291 = vmax.f32 %v287, %v289
      %v292 = vrot.slane %v282, 1
      %v294 = vmax.f32 %v291, %v292
      %295 = vrot.lane.b32.xlu0 %v292, 112
      %v296 = vpop.permute.xlu0 %295
      %v298 = vmax.f32 %v294, %v296
      %299 = vrot.lane.b32.xlu0 %v292, 96
      %v300 = vpop.permute.xlu0 %299
      %v302 = vmax.f32 %v298, %v300
      %v303 = vrot.slane %v282, 2
      %v305 = vmax.f32 %v302, %v303
      %306 = vrot.lane.b32.xlu0 %v303, 112
      %v307 = vpop.permute.xlu0 %306
      %v309 = vmax.f32 %v305, %v307
      %310 = vrot.lane.b32.xlu0 %v303, 96
      %v311 = vpop.permute.xlu0 %310
      %v313 = vmax.f32 %v309, %v311
      %vm314 = vcmask 387072
      %315 = vst.msk [vmem:[%s277] sm:$0x7] %vm314, %v313
      %p316 = scmp.lt.s32.totalorder %s18, 1
      %s317 = scalar_select %p316, %s18, 1
      %p318 = scmp.lt.s32.totalorder %s19, 1
      %s319 = scalar_select %p318, %s19, 1
      %s320 = smul.addr %s317, 2
      %s321 = sadd.s32 %s319, %s320
      %s322 = smul.addr %s321, 4
      %s323 = scalar_lea.vmem %s3, %s322
      // Predicated region
      $region33: #{cnn_encoder_forward.33} parent=31 // pred_check
        %p324 = pneg %p134
      $region34: #{cnn_encoder_forward.33} parent=31 // pred_check_branch
        %326 = sbr.rel (%p324) target = $region36
      $region35: #{cnn_encoder_forward.33} parent=31 // pred_region
        _
      $region36: #{cnn_encoder_forward.33} parent=31 // pred_fallthru
        _
    $region32: #{cnn_encoder_forward.33} parent=5 // pred_fallthru
      _
    %p327 = scmp.le.s32.totalorder 2, %s9
    // Predicated region
    $region37: #{cnn_encoder_forward.33} parent=5 // pred_check
      %p328 = pneg %p327
    $region38: #{cnn_encoder_forward.33} parent=5 // pred_check_branch
      %330 = sbr.rel (%p328) target = $region40
    $region39: #{cnn_encoder_forward.33} parent=5 // pred_region
      %s331 = ssub.s32 %s9, 2
      // Predicated region
      $region41: #{cnn_encoder_forward.33} parent=39 // pred_check
        %p332 = pneg %p140
      $region42: #{cnn_encoder_forward.33} parent=39 // pred_check_branch
        %334 = sbr.rel (%p332) target = $region44
      $region43: #{cnn_encoder_forward.33} parent=39 // pred_region
        %p335 = scmp.lt.s32.totalorder %s20, 1
        %s336 = scalar_select %p335, %s20, 1
        %p337 = scmp.lt.s32.totalorder %s21, 1
        %s338 = scalar_select %p337, %s21, 1
        %s339 = smul.addr %s336, 2
        %s340 = sadd.s32 %s338, %s339
        %s341 = smul.addr %s340, 4
        %s342 = scalar_lea.vmem %s3, %s341
      $region44: #{cnn_encoder_forward.33} parent=39 // pred_fallthru
        _
    $region40: #{cnn_encoder_forward.33} parent=5 // pred_fallthru
      _
  $region6: #{cnn_encoder_forward.33} parent=0 // loop_footer
    %s13 = sadd.s32 1, %s9
  $region7: #{cnn_encoder_forward.33} parent=0 // loop_footer_branch
    %8 = sbr.rel target = $region3
  $region8: #{cnn_encoder_forward.33} parent=0 // loop_exit
    _

// kernel: cnn_encoder_forward.32
$region0: #{cnn_encoder_forward.32}
  #allocation0 [shape = 'u32[]', space=smem, size = 0x4, offset = 0x4, fixed_abs, tag = 'smem constant byte address 0x4 - core index']
  #allocation1 [shape = 'u32[144,128]{1,0:T(1,128)}', space=vmem, size = 0x12000, scoped, tag = 'internal scratch']
  %s0 = inlined_call_operand.vmem [shape: bf16[40,2000], index: 0, kind: input, shape index: {}]
  %s1 = inlined_call_operand.vmem [shape: bf16[2000,16], index: 1, kind: input, shape index: {}]
  %s2 = inlined_call_operand.vmem [shape: f32[1,16], index: 2, kind: input, shape index: {}]
  %s3 = inlined_call_operand.vmem [shape: f32[40,16], index: 3, kind: output, shape index: {}]
  %s4 = sld [smem:[#allocation0]]
  $region22: #{cnn_encoder_forward.32} parent=0
    _
  %s6 = ssub.s32 1, %s4
  %s7 = scalar_select 0, %s6, %s4
  // Predicated region
  $region2: #{cnn_encoder_forward.32} parent=0 // pred_check
    _
  $region3: #{cnn_encoder_forward.32} parent=0 // pred_check_branch
    %9 = sbr.rel (0) target = $region5
  $region4: #{cnn_encoder_forward.32} parent=0 // pred_region
    _
  $region5: #{cnn_encoder_forward.32} parent=0 // pred_fallthru
    _
  // Predicated region
  $region6: #{cnn_encoder_forward.32} parent=0 // pred_check
    _
  $region7: #{cnn_encoder_forward.32} parent=0 // pred_check_branch
    %11 = sbr.rel (0) target = $region9
  $region8: #{cnn_encoder_forward.32} parent=0 // pred_region
    _
  $region9: #{cnn_encoder_forward.32} parent=0 // pred_fallthru
    _
  // Predicated region
  $region10: #{cnn_encoder_forward.32} parent=0 // pred_check
    _
  $region11: #{cnn_encoder_forward.32} parent=0 // pred_check_branch
    %13 = sbr.rel (0) target = $region13
  $region12: #{cnn_encoder_forward.32} parent=0 // pred_region
    _
  $region13: #{cnn_encoder_forward.32} parent=0 // pred_fallthru
    _
  %v15 = vld [vmem:[%s0] sm:$0xff]
  %v16 = vld [vmem:[%s0 + $0x8] sm:$0xff]
  %v17 = vld [vmem:[%s0 + $0x10] sm:$0xff]
  %v18 = vld [vmem:[%s0 + $0x18] sm:$0xff]
  %v19 = vld [vmem:[%s0 + $0x20] sm:$0xff]
  %v20 = vld [vmem:[%s0 + $0x28] sm:$0xff]
  %v21 = vld [vmem:[%s0 + $0x30] sm:$0xff]
  %v22 = vld [vmem:[%s0 + $0x38] sm:$0xff]
  %v23 = vld [vmem:[%s0 + $0x40] sm:$0xff]
  %v24 = vld [vmem:[%s0 + $0x48] sm:$0xff]
  %v25 = vld [vmem:[%s0 + $0x50] sm:$0xff]
  %v26 = vld [vmem:[%s0 + $0x58] sm:$0xff]
  %v27 = vld [vmem:[%s0 + $0x60] sm:$0xff]
  %v28 = vld [vmem:[%s0 + $0x68] sm:$0xff]
  %v29 = vld [vmem:[%s0 + $0x70] sm:$0xff]
  %v30 = vld [vmem:[%s0 + $0x78] sm:$0xff]
  %v31 = vld [vmem:[%s0 + $0x80] sm:$0xff]
  %v32 = vld [vmem:[%s0 + $0x88] sm:$0xff]
  %v33 = vld [vmem:[%s0 + $0x90] sm:$0xff]
  %v34 = vld [vmem:[%s0 + $0x98] sm:$0xff]
  %v35 = vld [vmem:[%s0 + $0xa0] sm:$0xff]
  %v36 = vld [vmem:[%s0 + $0xa8] sm:$0xff]
  %v37 = vld [vmem:[%s0 + $0xb0] sm:$0xff]
  %v38 = vld [vmem:[%s0 + $0xb8] sm:$0xff]
  %v39 = vld [vmem:[%s0 + $0xc0] sm:$0xff]
  %v40 = vld [vmem:[%s0 + $0xc8] sm:$0xff]
  %v41 = vld [vmem:[%s0 + $0xd0] sm:$0xff]
  %v42 = vld [vmem:[%s0 + $0xd8] sm:$0xff]
  %v43 = vld [vmem:[%s0 + $0xe0] sm:$0xff]
  %v44 = vld [vmem:[%s0 + $0xe8] sm:$0xff]
  %v45 = vld [vmem:[%s0 + $0xf0] sm:$0xff]
  %v46 = vld [vmem:[%s0 + $0xf8] sm:$0xff]
  %v47 = vld [vmem:[%s0 + $0x100] sm:$0xff]
  %v48 = vld [vmem:[%s0 + $0x108] sm:$0xff]
  %v49 = vld [vmem:[%s0 + $0x110] sm:$0xff]
  %v50 = vld [vmem:[%s0 + $0x118] sm:$0xff]
  %v51 = vld [vmem:[%s0 + $0x120] sm:$0xff]
  %v52 = vld [vmem:[%s0 + $0x128] sm:$0xff]
  %v53 = vld [vmem:[%s0 + $0x130] sm:$0xff]
  %v54 = vld [vmem:[%s0 + $0x138] sm:$0xff]
  %v55 = vld [vmem:[%s1] sm:$0xf]
  %v56 = vld [vmem:[%s1 + $0x4] sm:$0xf]
  %v57 = vld [vmem:[%s1 + $0x8] sm:$0xf]
  %v58 = vld [vmem:[%s1 + $0xc] sm:$0xf]
  %v59 = vld [vmem:[%s1 + $0x10] sm:$0xf]
  %v60 = vld [vmem:[%s1 + $0x14] sm:$0xf]
  %v61 = vld [vmem:[%s1 + $0x18] sm:$0xf]
  %v62 = vld [vmem:[%s1 + $0x1c] sm:$0xf]
  %v63 = vld [vmem:[%s1 + $0x20] sm:$0xf]
  %v64 = vld [vmem:[%s1 + $0x24] sm:$0xf]
  %v65 = vld [vmem:[%s1 + $0x28] sm:$0xf]
  %v66 = vld [vmem:[%s1 + $0x2c] sm:$0xf]
  %v67 = vld [vmem:[%s1 + $0x30] sm:$0xf]
  %v68 = vld [vmem:[%s1 + $0x34] sm:$0xf]
  %v69 = vld [vmem:[%s1 + $0x38] sm:$0xf]
  %v70 = vld [vmem:[%s1 + $0x3c] sm:$0xf]
  %v71 = vld [vmem:[%s1 + $0x40] sm:$0xf]
  %v72 = vld [vmem:[%s1 + $0x44] sm:$0xf]
  %v73 = vld [vmem:[%s1 + $0x48] sm:$0xf]
  %v74 = vld [vmem:[%s1 + $0x4c] sm:$0xf]
  %v75 = vld [vmem:[%s1 + $0x50] sm:$0xf]
  %v76 = vld [vmem:[%s1 + $0x54] sm:$0xf]
  %v77 = vld [vmem:[%s1 + $0x58] sm:$0xf]
  %v78 = vld [vmem:[%s1 + $0x5c] sm:$0xf]
  %v79 = vld [vmem:[%s1 + $0x60] sm:$0xf]
  %v80 = vld [vmem:[%s1 + $0x64] sm:$0xf]
  %v81 = vld [vmem:[%s1 + $0x68] sm:$0xf]
  %v82 = vld [vmem:[%s1 + $0x6c] sm:$0xf]
  %v83 = vld [vmem:[%s1 + $0x70] sm:$0xf]
  %v84 = vld [vmem:[%s1 + $0x74] sm:$0xf]
  %v85 = vld [vmem:[%s1 + $0x78] sm:$0xf]
  %v86 = vld [vmem:[%s1 + $0x7c] sm:$0xf]
  %v87 = vld [vmem:[%s1 + $0x80] sm:$0xf]
  %v88 = vld [vmem:[%s1 + $0x84] sm:$0xf]
  %v89 = vld [vmem:[%s1 + $0x88] sm:$0xf]
  %v90 = vld [vmem:[%s1 + $0x8c] sm:$0xf]
  %v91 = vld [vmem:[%s1 + $0x90] sm:$0xf]
  %v92 = vld [vmem:[%s1 + $0x94] sm:$0xf]
  %v93 = vld [vmem:[%s1 + $0x98] sm:$0xf]
  %v94 = vld [vmem:[%s1 + $0x9c] sm:$0xf]
  %v95 = vld [vmem:[%s1 + $0xa0] sm:$0xf]
  %v96 = vld [vmem:[%s1 + $0xa4] sm:$0xf]
  %v97 = vld [vmem:[%s1 + $0xa8] sm:$0xf]
  %v98 = vld [vmem:[%s1 + $0xac] sm:$0xf]
  %v99 = vld [vmem:[%s1 + $0xb0] sm:$0xf]
  %v100 = vld [vmem:[%s1 + $0xb4] sm:$0xf]
  %v101 = vld [vmem:[%s1 + $0xb8] sm:$0xf]
  %v102 = vld [vmem:[%s1 + $0xbc] sm:$0xf]
  %v103 = vld [vmem:[%s1 + $0xc0] sm:$0xf]
  %v104 = vld [vmem:[%s1 + $0xc4] sm:$0xf]
  %v105 = vld [vmem:[%s1 + $0xc8] sm:$0xf]
  %v106 = vld [vmem:[%s1 + $0xcc] sm:$0xf]
  %v107 = vld [vmem:[%s1 + $0xd0] sm:$0xf]
  %v108 = vld [vmem:[%s1 + $0xd4] sm:$0xf]
  %v109 = vld [vmem:[%s1 + $0xd8] sm:$0xf]
  %v110 = vld [vmem:[%s1 + $0xdc] sm:$0xf]
  %v111 = vld [vmem:[%s1 + $0xe0] sm:$0xf]
  %v112 = vld [vmem:[%s1 + $0xe4] sm:$0xf]
  %v113 = vld [vmem:[%s1 + $0xe8] sm:$0xf]
  %v114 = vld [vmem:[%s1 + $0xec] sm:$0xf]
  %v115 = vld [vmem:[%s1 + $0xf0] sm:$0xf]
  %v116 = vld [vmem:[%s1 + $0xf4] sm:$0xf]
  %v117 = vld [vmem:[%s1 + $0xf8] sm:$0xf]
  %v118 = vld [vmem:[%s1 + $0xfc] sm:$0xf]
  %v119 = vld [vmem:[%s1 + $0x100] sm:$0xf]
  %v120 = vld [vmem:[%s1 + $0x104] sm:$0xf]
  %v121 = vld [vmem:[%s1 + $0x108] sm:$0xf]
  %v122 = vld [vmem:[%s1 + $0x10c] sm:$0xf]
  %v123 = vld [vmem:[%s1 + $0x110] sm:$0xf]
  %v124 = vld [vmem:[%s1 + $0x114] sm:$0xf]
  %v125 = vld [vmem:[%s1 + $0x118] sm:$0xf]
  %v126 = vld [vmem:[%s1 + $0x11c] sm:$0xf]
  %v127 = vld [vmem:[%s1 + $0x120] sm:$0xf]
  %v128 = vld [vmem:[%s1 + $0x124] sm:$0xf]
  %v129 = vld [vmem:[%s1 + $0x128] sm:$0xf]
  %v130 = vld [vmem:[%s1 + $0x12c] sm:$0xf]
  %v131 = vld [vmem:[%s1 + $0x130] sm:$0xf]
  %v132 = vld [vmem:[%s1 + $0x134] sm:$0xf]
  %v133 = vld [vmem:[%s1 + $0x138] sm:$0xf]
  %v134 = vld [vmem:[%s1 + $0x13c] sm:$0xf]
  %v135 = vld [vmem:[%s1 + $0x140] sm:$0xf]
  %v136 = vld [vmem:[%s1 + $0x144] sm:$0xf]
  %v137 = vld [vmem:[%s1 + $0x148] sm:$0xf]
  %v138 = vld [vmem:[%s1 + $0x14c] sm:$0xf]
  %v139 = vld [vmem:[%s1 + $0x150] sm:$0xf]
  %v140 = vld [vmem:[%s1 + $0x154] sm:$0xf]
  %v141 = vld [vmem:[%s1 + $0x158] sm:$0xf]
  %v142 = vld [vmem:[%s1 + $0x15c] sm:$0xf]
  %v143 = vld [vmem:[%s1 + $0x160] sm:$0xf]
  %v144 = vld [vmem:[%s1 + $0x164] sm:$0xf]
  %v145 = vld [vmem:[%s1 + $0x168] sm:$0xf]
  %v146 = vld [vmem:[%s1 + $0x16c] sm:$0xf]
  %v147 = vld [vmem:[%s1 + $0x170] sm:$0xf]
  %v148 = vld [vmem:[%s1 + $0x174] sm:$0xf]
  %v149 = vld [vmem:[%s1 + $0x178] sm:$0xf]
  %v150 = vld [vmem:[%s1 + $0x17c] sm:$0xf]
  %v151 = vld [vmem:[%s1 + $0x180] sm:$0xf]
  %v152 = vld [vmem:[%s1 + $0x184] sm:$0xf]
  %v153 = vld [vmem:[%s1 + $0x188] sm:$0xf]
  %v154 = vld [vmem:[%s1 + $0x18c] sm:$0xf]
  %v155 = vld [vmem:[%s1 + $0x190] sm:$0xf]
  %v156 = vld [vmem:[%s1 + $0x194] sm:$0xf]
  %v157 = vld [vmem:[%s1 + $0x198] sm:$0xf]
  %v158 = vld [vmem:[%s1 + $0x19c] sm:$0xf]
  %v159 = vld [vmem:[%s1 + $0x1a0] sm:$0xf]
  %v160 = vld [vmem:[%s1 + $0x1a4] sm:$0xf]
  %v161 = vld [vmem:[%s1 + $0x1a8] sm:$0xf]
  %v162 = vld [vmem:[%s1 + $0x1ac] sm:$0xf]
  %v163 = vld [vmem:[%s1 + $0x1b0] sm:$0xf]
  %v164 = vld [vmem:[%s1 + $0x1b4] sm:$0xf]
  %v165 = vld [vmem:[%s1 + $0x1b8] sm:$0xf]
  %v166 = vld [vmem:[%s1 + $0x1bc] sm:$0xf]
  %v167 = vld [vmem:[%s1 + $0x1c0] sm:$0xf]
  %v168 = vld [vmem:[%s1 + $0x1c4] sm:$0xf]
  %v169 = vld [vmem:[%s1 + $0x1c8] sm:$0xf]
  %v170 = vld [vmem:[%s1 + $0x1cc] sm:$0xf]
  %v171 = vld [vmem:[%s1 + $0x1d0] sm:$0xf]
  %v172 = vld [vmem:[%s1 + $0x1d4] sm:$0xf]
  %v173 = vld [vmem:[%s1 + $0x1d8] sm:$0xf]
  %v174 = vld [vmem:[%s1 + $0x1dc] sm:$0xf]
  %v175 = vld [vmem:[%s1 + $0x1e0] sm:$0xf]
  %v176 = vld [vmem:[%s1 + $0x1e4] sm:$0xf]
  %v177 = vld [vmem:[%s1 + $0x1e8] sm:$0xf]
  %v178 = vld [vmem:[%s1 + $0x1ec] sm:$0xf]
  %v179 = vld [vmem:[%s1 + $0x1f0] sm:$0xf]
  %v180 = vld [vmem:[%s1 + $0x1f4] sm:$0xf]
  %v181 = vld [vmem:[%s1 + $0x1f8] sm:$0xf]
  %v182 = vld [vmem:[%s1 + $0x1fc] sm:$0xf]
  %v183 = vld [vmem:[%s1 + $0x200] sm:$0xf]
  %v184 = vld [vmem:[%s1 + $0x204] sm:$0xf]
  %v185 = vld [vmem:[%s1 + $0x208] sm:$0xf]
  %v186 = vld [vmem:[%s1 + $0x20c] sm:$0xf]
  %v187 = vld [vmem:[%s1 + $0x210] sm:$0xf]
  %v188 = vld [vmem:[%s1 + $0x214] sm:$0xf]
  %v189 = vld [vmem:[%s1 + $0x218] sm:$0xf]
  %v190 = vld [vmem:[%s1 + $0x21c] sm:$0xf]
  %v191 = vld [vmem:[%s1 + $0x220] sm:$0xf]
  %v192 = vld [vmem:[%s1 + $0x224] sm:$0xf]
  %v193 = vld [vmem:[%s1 + $0x228] sm:$0xf]
  %v194 = vld [vmem:[%s1 + $0x22c] sm:$0xf]
  %v195 = vld [vmem:[%s1 + $0x230] sm:$0xf]
  %v196 = vld [vmem:[%s1 + $0x234] sm:$0xf]
  %v197 = vld [vmem:[%s1 + $0x238] sm:$0xf]
  %v198 = vld [vmem:[%s1 + $0x23c] sm:$0xf]
  %v199 = vld [vmem:[%s1 + $0x240] sm:$0xf]
  %v200 = vld [vmem:[%s1 + $0x244] sm:$0xf]
  %v201 = vld [vmem:[%s1 + $0x248] sm:$0xf]
  %v202 = vld [vmem:[%s1 + $0x24c] sm:$0xf]
  %v203 = vld [vmem:[%s1 + $0x250] sm:$0xf]
  %v204 = vld [vmem:[%s1 + $0x254] sm:$0xf]
  %v205 = vld [vmem:[%s1 + $0x258] sm:$0xf]
  %v206 = vld [vmem:[%s1 + $0x25c] sm:$0xf]
  %v207 = vld [vmem:[%s1 + $0x260] sm:$0xf]
  %v208 = vld [vmem:[%s1 + $0x264] sm:$0xf]
  %v209 = vld [vmem:[%s1 + $0x268] sm:$0xf]
  %v210 = vld [vmem:[%s1 + $0x26c] sm:$0xf]
  %v211 = vld [vmem:[%s1 + $0x270] sm:$0xf]
  %v212 = vld [vmem:[%s1 + $0x274] sm:$0xf]
  %v213 = vld [vmem:[%s1 + $0x278] sm:$0xf]
  %v214 = vld [vmem:[%s1 + $0x27c] sm:$0xf]
  %v215 = vld [vmem:[%s1 + $0x280] sm:$0xf]
  %v216 = vld [vmem:[%s1 + $0x284] sm:$0xf]
  %v217 = vld [vmem:[%s1 + $0x288] sm:$0xf]
  %v218 = vld [vmem:[%s1 + $0x28c] sm:$0xf]
  %v219 = vld [vmem:[%s1 + $0x290] sm:$0xf]
  %v220 = vld [vmem:[%s1 + $0x294] sm:$0xf]
  %v221 = vld [vmem:[%s1 + $0x298] sm:$0xf]
  %v222 = vld [vmem:[%s1 + $0x29c] sm:$0xf]
  %v223 = vld [vmem:[%s1 + $0x2a0] sm:$0xf]
  %v224 = vld [vmem:[%s1 + $0x2a4] sm:$0xf]
  %v225 = vld [vmem:[%s1 + $0x2a8] sm:$0xf]
  %v226 = vld [vmem:[%s1 + $0x2ac] sm:$0xf]
  %v227 = vld [vmem:[%s1 + $0x2b0] sm:$0xf]
  %v228 = vld [vmem:[%s1 + $0x2b4] sm:$0xf]
  %v229 = vld [vmem:[%s1 + $0x2b8] sm:$0xf]
  %v230 = vld [vmem:[%s1 + $0x2bc] sm:$0xf]
  %v231 = vld [vmem:[%s1 + $0x2c0] sm:$0xf]
  %v232 = vld [vmem:[%s1 + $0x2c4] sm:$0xf]
  %v233 = vld [vmem:[%s1 + $0x2c8] sm:$0xf]
  %v234 = vld [vmem:[%s1 + $0x2cc] sm:$0xf]
  %v235 = vld [vmem:[%s1 + $0x2d0] sm:$0xf]
  %v236 = vld [vmem:[%s1 + $0x2d4] sm:$0xf]
  %v237 = vld [vmem:[%s1 + $0x2d8] sm:$0xf]
  %v238 = vld [vmem:[%s1 + $0x2dc] sm:$0xf]
  %v239 = vld [vmem:[%s1 + $0x2e0] sm:$0xf]
  %v240 = vld [vmem:[%s1 + $0x2e4] sm:$0xf]
  %v241 = vld [vmem:[%s1 + $0x2e8] sm:$0xf]
  %v242 = vld [vmem:[%s1 + $0x2ec] sm:$0xf]
  %v243 = vld [vmem:[%s1 + $0x2f0] sm:$0xf]
  %v244 = vld [vmem:[%s1 + $0x2f4] sm:$0xf]
  %v245 = vld [vmem:[%s1 + $0x2f8] sm:$0xf]
  %v246 = vld [vmem:[%s1 + $0x2fc] sm:$0xf]
  %v247 = vld [vmem:[%s1 + $0x300] sm:$0xf]
  %v248 = vld [vmem:[%s1 + $0x304] sm:$0xf]
  %v249 = vld [vmem:[%s1 + $0x308] sm:$0xf]
  %v250 = vld [vmem:[%s1 + $0x30c] sm:$0xf]
  %v251 = vld [vmem:[%s1 + $0x310] sm:$0xf]
  %v252 = vld [vmem:[%s1 + $0x314] sm:$0xf]
  %v253 = vld [vmem:[%s1 + $0x318] sm:$0xf]
  %v254 = vld [vmem:[%s1 + $0x31c] sm:$0xf]
  %v255 = vld [vmem:[%s1 + $0x320] sm:$0xf]
  %v256 = vld [vmem:[%s1 + $0x324] sm:$0xf]
  %v257 = vld [vmem:[%s1 + $0x328] sm:$0xf]
  %v258 = vld [vmem:[%s1 + $0x32c] sm:$0xf]
  %v259 = vld [vmem:[%s1 + $0x330] sm:$0xf]
  %v260 = vld [vmem:[%s1 + $0x334] sm:$0xf]
  %v261 = vld [vmem:[%s1 + $0x338] sm:$0xf]
  %v262 = vld [vmem:[%s1 + $0x33c] sm:$0xf]
  %v263 = vld [vmem:[%s1 + $0x340] sm:$0xf]
  %v264 = vld [vmem:[%s1 + $0x344] sm:$0xf]
  %v265 = vld [vmem:[%s1 + $0x348] sm:$0xf]
  %v266 = vld [vmem:[%s1 + $0x34c] sm:$0xf]
  %v267 = vld [vmem:[%s1 + $0x350] sm:$0xf]
  %v268 = vld [vmem:[%s1 + $0x354] sm:$0xf]
  %v269 = vld [vmem:[%s1 + $0x358] sm:$0xf]
  %v270 = vld [vmem:[%s1 + $0x35c] sm:$0xf]
  %v271 = vld [vmem:[%s1 + $0x360] sm:$0xf]
  %v272 = vld [vmem:[%s1 + $0x364] sm:$0xf]
  %v273 = vld [vmem:[%s1 + $0x368] sm:$0xf]
  %v274 = vld [vmem:[%s1 + $0x36c] sm:$0xf]
  %v275 = vld [vmem:[%s1 + $0x370] sm:$0xf]
  %v276 = vld [vmem:[%s1 + $0x374] sm:$0xf]
  %v277 = vld [vmem:[%s1 + $0x378] sm:$0xf]
  %v278 = vld [vmem:[%s1 + $0x37c] sm:$0xf]
  %v279 = vld [vmem:[%s1 + $0x380] sm:$0xf]
  %v280 = vld [vmem:[%s1 + $0x384] sm:$0xf]
  %v281 = vld [vmem:[%s1 + $0x388] sm:$0xf]
  %v282 = vld [vmem:[%s1 + $0x38c] sm:$0xf]
  %v283 = vld [vmem:[%s1 + $0x390] sm:$0xf]
  %v284 = vld [vmem:[%s1 + $0x394] sm:$0xf]
  %v285 = vld [vmem:[%s1 + $0x398] sm:$0xf]
  %v286 = vld [vmem:[%s1 + $0x39c] sm:$0xf]
  %v287 = vld [vmem:[%s1 + $0x3a0] sm:$0xf]
  %v288 = vld [vmem:[%s1 + $0x3a4] sm:$0xf]
  %v289 = vld [vmem:[%s1 + $0x3a8] sm:$0xf]
  %v290 = vld [vmem:[%s1 + $0x3ac] sm:$0xf]
  %v291 = vld [vmem:[%s1 + $0x3b0] sm:$0xf]
  %v292 = vld [vmem:[%s1 + $0x3b4] sm:$0xf]
  %v293 = vld [vmem:[%s1 + $0x3b8] sm:$0xf]
  %v294 = vld [vmem:[%s1 + $0x3bc] sm:$0xf]
  %v295 = vld [vmem:[%s1 + $0x3c0] sm:$0xf]
  %v296 = vld [vmem:[%s1 + $0x3c4] sm:$0xf]
  %v297 = vld [vmem:[%s1 + $0x3c8] sm:$0xf]
  %v298 = vld [vmem:[%s1 + $0x3cc] sm:$0xf]
  %v299 = vld [vmem:[%s1 + $0x3d0] sm:$0xf]
  %v300 = vld [vmem:[%s1 + $0x3d4] sm:$0xf]
  %v301 = vld [vmem:[%s1 + $0x3d8] sm:$0xf]
  %v302 = vld [vmem:[%s1 + $0x3dc] sm:$0xf]
  %v303 = vld [vmem:[%s1 + $0x3e0] sm:$0xf]
  %v304 = vld [vmem:[%s1 + $0x3e4] sm:$0xf]
  %v305 = vld [vmem:[%s2] sm:$0x1]
  %v307 = vlaneseq
  %v308 = vshrl.u32 %v307, 7
  %v309 = vsub.s32 0, %v308
  %v310 = vrot.slane %v305, %v309
  %v352 = vunpack.c.l.b16 %v15
  %v353 = vunpack.c.h.b16 %v15
  %v354 = vunpack.c.l.b16 %v16
  %v355 = vunpack.c.h.b16 %v16
  %v356 = vunpack.c.l.b16 %v17
  %v357 = vunpack.c.h.b16 %v17
  %v358 = vunpack.c.l.b16 %v18
  %v359 = vunpack.c.h.b16 %v18
  %v360 = vunpack.c.l.b16 %v19
  %v361 = vunpack.c.h.b16 %v19
  %v362 = vunpack.c.l.b16 %v20
  %v363 = vunpack.c.h.b16 %v20
  %v364 = vunpack.c.l.b16 %v21
  %v365 = vunpack.c.h.b16 %v21
  %v366 = vunpack.c.l.b16 %v22
  %v367 = vunpack.c.h.b16 %v22
  %v368 = vunpack.c.l.b16 %v23
  %v369 = vunpack.c.h.b16 %v23
  %v370 = vunpack.c.l.b16 %v24
  %v371 = vunpack.c.h.b16 %v24
  %v372 = vunpack.c.l.b16 %v25
  %v373 = vunpack.c.h.b16 %v25
  %v374 = vunpack.c.l.b16 %v26
  %v375 = vunpack.c.h.b16 %v26
  %v376 = vunpack.c.l.b16 %v27
  %v377 = vunpack.c.h.b16 %v27
  %v378 = vunpack.c.l.b16 %v28
  %v379 = vunpack.c.h.b16 %v28
  %v380 = vunpack.c.l.b16 %v29
  %v381 = vunpack.c.h.b16 %v29
  %v382 = vunpack.c.l.b16 %v30
  %v383 = vunpack.c.h.b16 %v30
  %v384 = vunpack.c.l.b16 %v31
  %v385 = vunpack.c.h.b16 %v31
  %v386 = vunpack.c.l.b16 %v32
  %v387 = vunpack.c.h.b16 %v32
  %v388 = vunpack.c.l.b16 %v33
  %v389 = vunpack.c.h.b16 %v33
  %v390 = vunpack.c.l.b16 %v34
  %v391 = vunpack.c.h.b16 %v34
  %v392 = vunpack.c.l.b16 %v35
  %v393 = vunpack.c.h.b16 %v35
  %v394 = vunpack.c.l.b16 %v36
  %v395 = vunpack.c.h.b16 %v36
  %v396 = vunpack.c.l.b16 %v37
  %v397 = vunpack.c.h.b16 %v37
  %v398 = vunpack.c.l.b16 %v38
  %v399 = vunpack.c.h.b16 %v38
  %v400 = vunpack.c.l.b16 %v39
  %v401 = vunpack.c.h.b16 %v39
  %v402 = vunpack.c.l.b16 %v40
  %v403 = vunpack.c.h.b16 %v40
  %v404 = vunpack.c.l.b16 %v41
  %v405 = vunpack.c.h.b16 %v41
  %v406 = vunpack.c.l.b16 %v42
  %v407 = vunpack.c.h.b16 %v42
  %v408 = vunpack.c.l.b16 %v43
  %v409 = vunpack.c.h.b16 %v43
  %v410 = vunpack.c.l.b16 %v44
  %v411 = vunpack.c.h.b16 %v44
  %v412 = vunpack.c.l.b16 %v45
  %v413 = vunpack.c.h.b16 %v45
  %v414 = vunpack.c.l.b16 %v46
  %v415 = vunpack.c.h.b16 %v46
  %v416 = vunpack.c.l.b16 %v47
  %v417 = vunpack.c.h.b16 %v47
  %v418 = vunpack.c.l.b16 %v48
  %v419 = vunpack.c.h.b16 %v48
  %v420 = vunpack.c.l.b16 %v49
  %v421 = vunpack.c.h.b16 %v49
  %v422 = vunpack.c.l.b16 %v50
  %v423 = vunpack.c.h.b16 %v50
  %v424 = vunpack.c.l.b16 %v51
  %v425 = vunpack.c.h.b16 %v51
  %v426 = vunpack.c.l.b16 %v52
  %v427 = vunpack.c.h.b16 %v52
  %v428 = vunpack.c.l.b16 %v53
  %v429 = vunpack.c.h.b16 %v53
  %v430 = vunpack.c.l.b16 %v54
  %v431 = vunpack.c.h.b16 %v54
  %v432 = vpack.c.b16 %v368, %v352
  %v433 = vpack.c.b16 %v369, %v353
  %v434 = vpack.c.b16 %v370, %v354
  %v435 = vpack.c.b16 %v371, %v355
  %v436 = vpack.c.b16 %v372, %v356
  %v437 = vpack.c.b16 %v373, %v357
  %v438 = vpack.c.b16 %v374, %v358
  %v439 = vpack.c.b16 %v375, %v359
  %v440 = vpack.c.b16 %v376, %v360
  %v441 = vpack.c.b16 %v377, %v361
  %v442 = vpack.c.b16 %v378, %v362
  %v443 = vpack.c.b16 %v379, %v363
  %v444 = vpack.c.b16 %v380, %v364
  %v445 = vpack.c.b16 %v381, %v365
  %v446 = vpack.c.b16 %v382, %v366
  %v447 = vpack.c.b16 %v383, %v367
  %v448 = vpack.c.b16 %v400, %v384
  %v449 = vpack.c.b16 %v401, %v385
  %v450 = vpack.c.b16 %v402, %v386
  %v451 = vpack.c.b16 %v403, %v387
  %v452 = vpack.c.b16 %v404, %v388
  %v453 = vpack.c.b16 %v405, %v389
  %v454 = vpack.c.b16 %v406, %v390
  %v455 = vpack.c.b16 %v407, %v391
  %v456 = vpack.c.b16 %v408, %v392
  %v457 = vpack.c.b16 %v409, %v393
  %v458 = vpack.c.b16 %v410, %v394
  %v459 = vpack.c.b16 %v411, %v395
  %v460 = vpack.c.b16 %v412, %v396
  %v461 = vpack.c.b16 %v413, %v397
  %v462 = vpack.c.b16 %v414, %v398
  %v463 = vpack.c.b16 %v415, %v399
  %v464 = vpack.c.b16 %v416, %v416
  %v465 = vpack.c.b16 %v417, %v417
  %v466 = vpack.c.b16 %v418, %v418
  %v467 = vpack.c.b16 %v419, %v419
  %v468 = vpack.c.b16 %v420, %v420
  %v469 = vpack.c.b16 %v421, %v421
  %v470 = vpack.c.b16 %v422, %v422
  %v471 = vpack.c.b16 %v423, %v423
  %v472 = vpack.c.b16 %v424, %v424
  %v473 = vpack.c.b16 %v425, %v425
  %v474 = vpack.c.b16 %v426, %v426
  %v475 = vpack.c.b16 %v427, %v427
  %v476 = vpack.c.b16 %v428, %v428
  %v477 = vpack.c.b16 %v429, %v429
  %v478 = vpack.c.b16 %v430, %v430
  %v479 = vpack.c.b16 %v431, %v431
  %v775 = vunpack.c.l.b16 %v55
  %v776 = vunpack.c.l.b16 %v56
  %v777 = vunpack.c.l.b16 %v57
  %v778 = vunpack.c.l.b16 %v58
  %v779 = vunpack.c.l.b16 %v59
  %v780 = vunpack.c.l.b16 %v60
  %v781 = vunpack.c.l.b16 %v61
  %v782 = vunpack.c.l.b16 %v62
  %v783 = vunpack.c.l.b16 %v63
  %v784 = vunpack.c.l.b16 %v64
  %v785 = vunpack.c.l.b16 %v65
  %v786 = vunpack.c.l.b16 %v66
  %v787 = vunpack.c.l.b16 %v67
  %v788 = vunpack.c.l.b16 %v68
  %v789 = vunpack.c.l.b16 %v69
  %v790 = vunpack.c.l.b16 %v70
  %v791 = vunpack.c.l.b16 %v71
  %v792 = vunpack.c.l.b16 %v72
  %v793 = vunpack.c.l.b16 %v73
  %v794 = vunpack.c.l.b16 %v74
  %v795 = vunpack.c.l.b16 %v75
  %v796 = vunpack.c.l.b16 %v76
  %v797 = vunpack.c.l.b16 %v77
  %v798 = vunpack.c.l.b16 %v78
  %v799 = vunpack.c.l.b16 %v79
  %v800 = vunpack.c.l.b16 %v80
  %v801 = vunpack.c.l.b16 %v81
  %v802 = vunpack.c.l.b16 %v82
  %v803 = vunpack.c.l.b16 %v83
  %v804 = vunpack.c.l.b16 %v84
  %v805 = vunpack.c.l.b16 %v85
  %v806 = vunpack.c.l.b16 %v86
  %v807 = vunpack.c.l.b16 %v87
  %v808 = vunpack.c.l.b16 %v88
  %v809 = vunpack.c.l.b16 %v89
  %v810 = vunpack.c.l.b16 %v90
  %v811 = vunpack.c.l.b16 %v91
  %v812 = vunpack.c.l.b16 %v92
  %v813 = vunpack.c.l.b16 %v93
  %v814 = vunpack.c.l.b16 %v94
  %v815 = vunpack.c.l.b16 %v95
  %v816 = vunpack.c.l.b16 %v96
  %v817 = vunpack.c.l.b16 %v97
  %v818 = vunpack.c.l.b16 %v98
  %v819 = vunpack.c.l.b16 %v99
  %v820 = vunpack.c.l.b16 %v100
  %v821 = vunpack.c.l.b16 %v101
  %v822 = vunpack.c.l.b16 %v102
  %v823 = vunpack.c.l.b16 %v103
  %v824 = vunpack.c.l.b16 %v104
  %v825 = vunpack.c.l.b16 %v105
  %v826 = vunpack.c.l.b16 %v106
  %v827 = vunpack.c.l.b16 %v107
  %v828 = vunpack.c.l.b16 %v108
  %v829 = vunpack.c.l.b16 %v109
  %v830 = vunpack.c.l.b16 %v110
  %v831 = vunpack.c.l.b16 %v111
  %v832 = vunpack.c.l.b16 %v112
  %v833 = vunpack.c.l.b16 %v113
  %v834 = vunpack.c.l.b16 %v114
  %v835 = vunpack.c.l.b16 %v115
  %v836 = vunpack.c.l.b16 %v116
  %v837 = vunpack.c.l.b16 %v117
  %v838 = vunpack.c.l.b16 %v118
  %v839 = vunpack.c.l.b16 %v119
  %v840 = vunpack.c.l.b16 %v120
  %v841 = vunpack.c.l.b16 %v121
  %v842 = vunpack.c.l.b16 %v122
  %v843 = vunpack.c.l.b16 %v123
  %v844 = vunpack.c.l.b16 %v124
  %v845 = vunpack.c.l.b16 %v125
  %v846 = vunpack.c.l.b16 %v126
  %v847 = vunpack.c.l.b16 %v127
  %v848 = vunpack.c.l.b16 %v128
  %v849 = vunpack.c.l.b16 %v129
  %v850 = vunpack.c.l.b16 %v130
  %v851 = vunpack.c.l.b16 %v131
  %v852 = vunpack.c.l.b16 %v132
  %v853 = vunpack.c.l.b16 %v133
  %v854 = vunpack.c.l.b16 %v134
  %v855 = vunpack.c.l.b16 %v135
  %v856 = vunpack.c.l.b16 %v136
  %v857 = vunpack.c.l.b16 %v137
  %v858 = vunpack.c.l.b16 %v138
  %v859 = vunpack.c.l.b16 %v139
  %v860 = vunpack.c.l.b16 %v140
  %v861 = vunpack.c.l.b16 %v141
  %v862 = vunpack.c.l.b16 %v142
  %v863 = vunpack.c.l.b16 %v143
  %v864 = vunpack.c.l.b16 %v144
  %v865 = vunpack.c.l.b16 %v145
  %v866 = vunpack.c.l.b16 %v146
  %v867 = vunpack.c.l.b16 %v147
  %v868 = vunpack.c.l.b16 %v148
  %v869 = vunpack.c.l.b16 %v149
  %v870 = vunpack.c.l.b16 %v150
  %v871 = vunpack.c.l.b16 %v151
  %v872 = vunpack.c.l.b16 %v152
  %v873 = vunpack.c.l.b16 %v153
  %v874 = vunpack.c.l.b16 %v154
  %v875 = vunpack.c.l.b16 %v155
  %v876 = vunpack.c.l.b16 %v156
  %v877 = vunpack.c.l.b16 %v157
  %v878 = vunpack.c.l.b16 %v158
  %v879 = vunpack.c.l.b16 %v159
  %v880 = vunpack.c.l.b16 %v160
  %v881 = vunpack.c.l.b16 %v161
  %v882 = vunpack.c.l.b16 %v162
  %v883 = vunpack.c.l.b16 %v163
  %v884 = vunpack.c.l.b16 %v164
  %v885 = vunpack.c.l.b16 %v165
  %v886 = vunpack.c.l.b16 %v166
  %v887 = vunpack.c.l.b16 %v167
  %v888 = vunpack.c.l.b16 %v168
  %v889 = vunpack.c.l.b16 %v169
  %v890 = vunpack.c.l.b16 %v170
  %v891 = vunpack.c.l.b16 %v171
  %v892 = vunpack.c.l.b16 %v172
  %v893 = vunpack.c.l.b16 %v173
  %v894 = vunpack.c.l.b16 %v174
  %v895 = vunpack.c.l.b16 %v175
  %v896 = vunpack.c.l.b16 %v176
  %v897 = vunpack.c.l.b16 %v177
  %v898 = vunpack.c.l.b16 %v178
  %v899 = vunpack.c.l.b16 %v179
  %v900 = vunpack.c.l.b16 %v180
  %v901 = vunpack.c.l.b16 %v181
  %v902 = vunpack.c.l.b16 %v182
  %v903 = vunpack.c.l.b16 %v183
  %v904 = vunpack.c.l.b16 %v184
  %v905 = vunpack.c.l.b16 %v185
  %v906 = vunpack.c.l.b16 %v186
  %v907 = vunpack.c.l.b16 %v187
  %v908 = vunpack.c.l.b16 %v188
  %v909 = vunpack.c.l.b16 %v189
  %v910 = vunpack.c.l.b16 %v190
  %v911 = vunpack.c.l.b16 %v191
  %v912 = vunpack.c.l.b16 %v192
  %v913 = vunpack.c.l.b16 %v193
  %v914 = vunpack.c.l.b16 %v194
  %v915 = vunpack.c.l.b16 %v195
  %v916 = vunpack.c.l.b16 %v196
  %v917 = vunpack.c.l.b16 %v197
  %v918 = vunpack.c.l.b16 %v198
  %v919 = vunpack.c.l.b16 %v199
  %v920 = vunpack.c.l.b16 %v200
  %v921 = vunpack.c.l.b16 %v201
  %v922 = vunpack.c.l.b16 %v202
  %v923 = vunpack.c.l.b16 %v203
  %v924 = vunpack.c.l.b16 %v204
  %v925 = vunpack.c.l.b16 %v205
  %v926 = vunpack.c.l.b16 %v206
  %v927 = vunpack.c.l.b16 %v207
  %v928 = vunpack.c.l.b16 %v208
  %v929 = vunpack.c.l.b16 %v209
  %v930 = vunpack.c.l.b16 %v210
  %v931 = vunpack.c.l.b16 %v211
  %v932 = vunpack.c.l.b16 %v212
  %v933 = vunpack.c.l.b16 %v213
  %v934 = vunpack.c.l.b16 %v214
  %v935 = vunpack.c.l.b16 %v215
  %v936 = vunpack.c.l.b16 %v216
  %v937 = vunpack.c.l.b16 %v217
  %v938 = vunpack.c.l.b16 %v218
  %v939 = vunpack.c.l.b16 %v219
  %v940 = vunpack.c.l.b16 %v220
  %v941 = vunpack.c.l.b16 %v221
  %v942 = vunpack.c.l.b16 %v222
  %v943 = vunpack.c.l.b16 %v223
  %v944 = vunpack.c.l.b16 %v224
  %v945 = vunpack.c.l.b16 %v225
  %v946 = vunpack.c.l.b16 %v226
  %v947 = vunpack.c.l.b16 %v227
  %v948 = vunpack.c.l.b16 %v228
  %v949 = vunpack.c.l.b16 %v229
  %v950 = vunpack.c.l.b16 %v230
  %v951 = vunpack.c.l.b16 %v231
  %v952 = vunpack.c.l.b16 %v232
  %v953 = vunpack.c.l.b16 %v233
  %v954 = vunpack.c.l.b16 %v234
  %v955 = vunpack.c.l.b16 %v235
  %v956 = vunpack.c.l.b16 %v236
  %v957 = vunpack.c.l.b16 %v237
  %v958 = vunpack.c.l.b16 %v238
  %v959 = vunpack.c.l.b16 %v239
  %v960 = vunpack.c.l.b16 %v240
  %v961 = vunpack.c.l.b16 %v241
  %v962 = vunpack.c.l.b16 %v242
  %v963 = vunpack.c.l.b16 %v243
  %v964 = vunpack.c.l.b16 %v244
  %v965 = vunpack.c.l.b16 %v245
  %v966 = vunpack.c.l.b16 %v246
  %v967 = vunpack.c.l.b16 %v247
  %v968 = vunpack.c.l.b16 %v248
  %v969 = vunpack.c.l.b16 %v249
  %v970 = vunpack.c.l.b16 %v250
  %v971 = vunpack.c.l.b16 %v251
  %v972 = vunpack.c.l.b16 %v252
  %v973 = vunpack.c.l.b16 %v253
  %v974 = vunpack.c.l.b16 %v254
  %v975 = vunpack.c.l.b16 %v255
  %v976 = vunpack.c.l.b16 %v256
  %v977 = vunpack.c.l.b16 %v257
  %v978 = vunpack.c.l.b16 %v258
  %v979 = vunpack.c.l.b16 %v259
  %v980 = vunpack.c.l.b16 %v260
  %v981 = vunpack.c.l.b16 %v261
  %v982 = vunpack.c.l.b16 %v262
  %v983 = vunpack.c.l.b16 %v263
  %v984 = vunpack.c.l.b16 %v264
  %v985 = vunpack.c.l.b16 %v265
  %v986 = vunpack.c.l.b16 %v266
  %v987 = vunpack.c.l.b16 %v267
  %v988 = vunpack.c.l.b16 %v268
  %v989 = vunpack.c.l.b16 %v269
  %v990 = vunpack.c.l.b16 %v270
  %v991 = vunpack.c.l.b16 %v271
  %v992 = vunpack.c.l.b16 %v272
  %v993 = vunpack.c.l.b16 %v273
  %v994 = vunpack.c.l.b16 %v274
  %v995 = vunpack.c.l.b16 %v275
  %v996 = vunpack.c.l.b16 %v276
  %v997 = vunpack.c.l.b16 %v277
  %v998 = vunpack.c.l.b16 %v278
  %v999 = vunpack.c.l.b16 %v279
  %v1000 = vunpack.c.l.b16 %v280
  %v1001 = vunpack.c.l.b16 %v281
  %v1002 = vunpack.c.l.b16 %v282
  %v1003 = vunpack.c.l.b16 %v283
  %v1004 = vunpack.c.l.b16 %v284
  %v1005 = vunpack.c.l.b16 %v285
  %v1006 = vunpack.c.l.b16 %v286
  %v1007 = vunpack.c.l.b16 %v287
  %v1008 = vunpack.c.l.b16 %v288
  %v1009 = vunpack.c.l.b16 %v289
  %v1010 = vunpack.c.l.b16 %v290
  %v1011 = vunpack.c.l.b16 %v291
  %v1012 = vunpack.c.l.b16 %v292
  %v1013 = vunpack.c.l.b16 %v293
  %v1014 = vunpack.c.l.b16 %v294
  %v1015 = vunpack.c.l.b16 %v295
  %v1016 = vunpack.c.l.b16 %v296
  %v1017 = vunpack.c.l.b16 %v297
  %v1018 = vunpack.c.l.b16 %v298
  %v1019 = vunpack.c.l.b16 %v299
  %v1020 = vunpack.c.l.b16 %v300
  %v1021 = vunpack.c.l.b16 %v301
  %v1022 = vunpack.c.l.b16 %v302
  %v1023 = vunpack.c.l.b16 %v303
  %v1024 = vunpack.c.l.b16 %v304
  %v1025 = vpack.c.b16 %v776, %v775
  %v1026 = vpack.c.b16 %v778, %v777
  %v1027 = vpack.c.b16 %v780, %v779
  %v1028 = vpack.c.b16 %v782, %v781
  %v1029 = vpack.c.b16 %v784, %v783
  %v1030 = vpack.c.b16 %v786, %v785
  %v1031 = vpack.c.b16 %v788, %v787
  %v1032 = vpack.c.b16 %v790, %v789
  %v1033 = vpack.c.b16 %v792, %v791
  %v1034 = vpack.c.b16 %v794, %v793
  %v1035 = vpack.c.b16 %v796, %v795
  %v1036 = vpack.c.b16 %v798, %v797
  %v1037 = vpack.c.b16 %v800, %v799
  %v1038 = vpack.c.b16 %v802, %v801
  %v1039 = vpack.c.b16 %v804, %v803
  %v1040 = vpack.c.b16 %v806, %v805
  %v1041 = vpack.c.b16 %v808, %v807
  %v1042 = vpack.c.b16 %v810, %v809
  %v1043 = vpack.c.b16 %v812, %v811
  %v1044 = vpack.c.b16 %v814, %v813
  %v1045 = vpack.c.b16 %v816, %v815
  %v1046 = vpack.c.b16 %v818, %v817
  %v1047 = vpack.c.b16 %v820, %v819
  %v1048 = vpack.c.b16 %v822, %v821
  %v1049 = vpack.c.b16 %v824, %v823
  %v1050 = vpack.c.b16 %v826, %v825
  %v1051 = vpack.c.b16 %v828, %v827
  %v1052 = vpack.c.b16 %v830, %v829
  %v1053 = vpack.c.b16 %v832, %v831
  %v1054 = vpack.c.b16 %v834, %v833
  %v1055 = vpack.c.b16 %v836, %v835
  %v1056 = vpack.c.b16 %v838, %v837
  %v1057 = vpack.c.b16 %v840, %v839
  %v1058 = vpack.c.b16 %v842, %v841
  %v1059 = vpack.c.b16 %v844, %v843
  %v1060 = vpack.c.b16 %v846, %v845
  %v1061 = vpack.c.b16 %v848, %v847
  %v1062 = vpack.c.b16 %v850, %v849
  %v1063 = vpack.c.b16 %v852, %v851
  %v1064 = vpack.c.b16 %v854, %v853
  %v1065 = vpack.c.b16 %v856, %v855
  %v1066 = vpack.c.b16 %v858, %v857
  %v1067 = vpack.c.b16 %v860, %v859
  %v1068 = vpack.c.b16 %v862, %v861
  %v1069 = vpack.c.b16 %v864, %v863
  %v1070 = vpack.c.b16 %v866, %v865
  %v1071 = vpack.c.b16 %v868, %v867
  %v1072 = vpack.c.b16 %v870, %v869
  %v1073 = vpack.c.b16 %v872, %v871
  %v1074 = vpack.c.b16 %v874, %v873
  %v1075 = vpack.c.b16 %v876, %v875
  %v1076 = vpack.c.b16 %v878, %v877
  %v1077 = vpack.c.b16 %v880, %v879
  %v1078 = vpack.c.b16 %v882, %v881
  %v1079 = vpack.c.b16 %v884, %v883
  %v1080 = vpack.c.b16 %v886, %v885
  %v1081 = vpack.c.b16 %v888, %v887
  %v1082 = vpack.c.b16 %v890, %v889
  %v1083 = vpack.c.b16 %v892, %v891
  %v1084 = vpack.c.b16 %v894, %v893
  %v1085 = vpack.c.b16 %v896, %v895
  %v1086 = vpack.c.b16 %v898, %v897
  %v1087 = vpack.c.b16 %v900, %v899
  %v1088 = vpack.c.b16 %v902, %v901
  %v1089 = vpack.c.b16 %v904, %v903
  %v1090 = vpack.c.b16 %v906, %v905
  %v1091 = vpack.c.b16 %v908, %v907
  %v1092 = vpack.c.b16 %v910, %v909
  %v1093 = vpack.c.b16 %v912, %v911
  %v1094 = vpack.c.b16 %v914, %v913
  %v1095 = vpack.c.b16 %v916, %v915
  %v1096 = vpack.c.b16 %v918, %v917
  %v1097 = vpack.c.b16 %v920, %v919
  %v1098 = vpack.c.b16 %v922, %v921
  %v1099 = vpack.c.b16 %v924, %v923
  %v1100 = vpack.c.b16 %v926, %v925
  %v1101 = vpack.c.b16 %v928, %v927
  %v1102 = vpack.c.b16 %v930, %v929
  %v1103 = vpack.c.b16 %v932, %v931
  %v1104 = vpack.c.b16 %v934, %v933
  %v1105 = vpack.c.b16 %v936, %v935
  %v1106 = vpack.c.b16 %v938, %v937
  %v1107 = vpack.c.b16 %v940, %v939
  %v1108 = vpack.c.b16 %v942, %v941
  %v1109 = vpack.c.b16 %v944, %v943
  %v1110 = vpack.c.b16 %v946, %v945
  %v1111 = vpack.c.b16 %v948, %v947
  %v1112 = vpack.c.b16 %v950, %v949
  %v1113 = vpack.c.b16 %v952, %v951
  %v1114 = vpack.c.b16 %v954, %v953
  %v1115 = vpack.c.b16 %v956, %v955
  %v1116 = vpack.c.b16 %v958, %v957
  %v1117 = vpack.c.b16 %v960, %v959
  %v1118 = vpack.c.b16 %v962, %v961
  %v1119 = vpack.c.b16 %v964, %v963
  %v1120 = vpack.c.b16 %v966, %v965
  %v1121 = vpack.c.b16 %v968, %v967
  %v1122 = vpack.c.b16 %v970, %v969
  %v1123 = vpack.c.b16 %v972, %v971
  %v1124 = vpack.c.b16 %v974, %v973
  %v1125 = vpack.c.b16 %v976, %v975
  %v1126 = vpack.c.b16 %v978, %v977
  %v1127 = vpack.c.b16 %v980, %v979
  %v1128 = vpack.c.b16 %v982, %v981
  %v1129 = vpack.c.b16 %v984, %v983
  %v1130 = vpack.c.b16 %v986, %v985
  %v1131 = vpack.c.b16 %v988, %v987
  %v1132 = vpack.c.b16 %v990, %v989
  %v1133 = vpack.c.b16 %v992, %v991
  %v1134 = vpack.c.b16 %v994, %v993
  %v1135 = vpack.c.b16 %v996, %v995
  %v1136 = vpack.c.b16 %v998, %v997
  %v1137 = vpack.c.b16 %v1000, %v999
  %v1138 = vpack.c.b16 %v1002, %v1001
  %v1139 = vpack.c.b16 %v1004, %v1003
  %v1140 = vpack.c.b16 %v1006, %v1005
  %v1141 = vpack.c.b16 %v1008, %v1007
  %v1142 = vpack.c.b16 %v1010, %v1009
  %v1143 = vpack.c.b16 %v1012, %v1011
  %v1144 = vpack.c.b16 %v1014, %v1013
  %v1145 = vpack.c.b16 %v1016, %v1015
  %v1146 = vpack.c.b16 %v1018, %v1017
  %v1147 = vpack.c.b16 %v1020, %v1019
  %v1148 = vpack.c.b16 %v1022, %v1021
  %v1149 = vpack.c.b16 %v1024, %v1023
  %vm1275 = vcmask 654336
  %v1277 = vsel %vm1275, %v447, 0
  %v1280 = vsel %vm1275, %v463, 0
  %v1283 = vsel %vm1275, %v479, 0
  %1285 = vmatprep.subr.bf16.mxu0 0
  %1286 = vmatpush1.bf16.msra.mxu0 %v1025
  %1287 = vmatprep.subr.bf16.mxu0 0
  %1288 = vmatpush1.bf16.msra.mxu0 %v1026
  %1289 = vmatprep.subr.bf16.mxu0 0
  %1290 = vmatpush1.bf16.msra.mxu0 %v1027
  %1291 = vmatprep.subr.bf16.mxu0 0
  %1292 = vmatpush1.bf16.msra.mxu0 %v1028
  %1293 = vmatprep.subr.bf16.mxu0 0
  %1294 = vmatpush1.bf16.msra.mxu0 %v1029
  %1295 = vmatprep.subr.bf16.mxu0 0
  %1296 = vmatpush1.bf16.msra.mxu0 %v1030
  %1297 = vmatprep.subr.bf16.mxu0 0
  %1298 = vmatpush1.bf16.msra.mxu0 %v1031
  %1299 = vmatprep.subr.bf16.mxu0 0
  %1300 = vmatpush1.bf16.msra.mxu0 %v1032
  %1301 = vmatprep.subr.bf16.mxu0 0
  %1302 = vmatpush1.bf16.msra.mxu0 %v1033
  %1303 = vmatprep.subr.bf16.mxu0 0
  %1304 = vmatpush1.bf16.msra.mxu0 %v1034
  %1305 = vmatprep.subr.bf16.mxu0 0
  %1306 = vmatpush1.bf16.msra.mxu0 %v1035
  %1307 = vmatprep.subr.bf16.mxu0 0
  %1308 = vmatpush1.bf16.msra.mxu0 %v1036
  %1309 = vmatprep.subr.bf16.mxu0 0
  %1310 = vmatpush1.bf16.msra.mxu0 %v1037
  %1311 = vmatprep.subr.bf16.mxu0 0
  %1312 = vmatpush1.bf16.msra.mxu0 %v1038
  %1313 = vmatprep.subr.bf16.mxu0 0
  %1314 = vmatpush1.bf16.msra.mxu0 %v1039
  %1315 = vmatprep.subr.bf16.mxu0 0
  %1316 = vmatpush1.bf16.msra.mxu0 %v1040
  %1317 = vmatprep.mubr.bf16.mxu0 %v433
  %1318 = vmatmul.mubr.bf16.gmra.mrb[0].mxu0 %v432
  %v1319 = vpop.f32.mrb[0].mxu0
  %v1320 = vadd.f32 %v310, %v1319
  %v1321 = vpop.f32.mrb[0].mxu0
  %v1322 = vpop.f32.mrb[0].mxu0
  %v1323 = vadd.f32 %v310, %v1322
  %v1324 = vpop.f32.mrb[0].mxu0
  %1325 = vmatprep.mubr.bf16.mxu0 %v449
  %1326 = vmatmul.mubr.bf16.gmra.mrb[0].mxu0 %v448
  %v1327 = vpop.f32.mrb[0].mxu0
  %v1328 = vadd.f32 %v310, %v1327
  %v1329 = vpop.f32.mrb[0].mxu0
  %v1330 = vpop.f32.mrb[0].mxu0
  %v1331 = vadd.f32 %v310, %v1330
  %v1332 = vpop.f32.mrb[0].mxu0
  %1333 = vmatprep.mubr.bf16.mxu0 %v465
  %1334 = vmatmul.mubr.bf16.gmra.mrb[0].mxu0 %v464
  %v1335 = vpop.f32.mrb[0].mxu0
  %v1336 = vadd.f32 %v310, %v1335
  %v1337 = vpop.f32.mrb[0].mxu0
  %v1338 = vpop.f32.mrb[0].mxu0
  %v1339 = vpop.f32.mrb[0].mxu0
  %1340 = vdwg.mxu0
  %1341 = vmatprep.subr.bf16.mxu0 0
  %1342 = vmatpush1.bf16.msra.mxu0 %v1041
  %1343 = vmatprep.subr.bf16.mxu0 0
  %1344 = vmatpush1.bf16.msra.mxu0 %v1042
  %1345 = vmatprep.subr.bf16.mxu0 0
  %1346 = vmatpush1.bf16.msra.mxu0 %v1043
  %1347 = vmatprep.subr.bf16.mxu0 0
  %1348 = vmatpush1.bf16.msra.mxu0 %v1044
  %1349 = vmatprep.subr.bf16.mxu0 0
  %1350 = vmatpush1.bf16.msra.mxu0 %v1045
  %1351 = vmatprep.subr.bf16.mxu0 0
  %1352 = vmatpush1.bf16.msra.mxu0 %v1046
  %1353 = vmatprep.subr.bf16.mxu0 0
  %1354 = vmatpush1.bf16.msra.mxu0 %v1047
  %1355 = vmatprep.subr.bf16.mxu0 0
  %1356 = vmatpush1.bf16.msra.mxu0 %v1048
  %1357 = vmatprep.subr.bf16.mxu0 0
  %1358 = vmatpush1.bf16.msra.mxu0 %v1049
  %1359 = vmatprep.subr.bf16.mxu0 0
  %1360 = vmatpush1.bf16.msra.mxu0 %v1050
  %1361 = vmatprep.subr.bf16.mxu0 0
  %1362 = vmatpush1.bf16.msra.mxu0 %v1051
  %1363 = vmatprep.subr.bf16.mxu0 0
  %1364 = vmatpush1.bf16.msra.mxu0 %v1052
  %1365 = vmatprep.subr.bf16.mxu0 0
  %1366 = vmatpush1.bf16.msra.mxu0 %v1053
  %1367 = vmatprep.subr.bf16.mxu0 0
  %1368 = vmatpush1.bf16.msra.mxu0 %v1054
  %1369 = vmatprep.subr.bf16.mxu0 0
  %1370 = vmatpush1.bf16.msra.mxu0 %v1055
  %1371 = vmatprep.subr.bf16.mxu0 0
  %1372 = vmatpush1.bf16.msra.mxu0 %v1056
  %1373 = vmatprep.mubr.bf16.mxu0 %v435
  %1374 = vmatmul.mubr.bf16.gmra.mrb[0].mxu0 %v434
  %v1375 = vpop.f32.mrb[0].mxu0
  %v1376 = vadd.f32 %v1320, %v1375
  %v1377 = vpop.f32.mrb[0].mxu0
  %v1378 = vpop.f32.mrb[0].mxu0
  %v1379 = vadd.f32 %v1323, %v1378
  %v1380 = vpop.f32.mrb[0].mxu0
  %1381 = vmatprep.mubr.bf16.mxu0 %v451
  %1382 = vmatmul.mubr.bf16.gmra.mrb[0].mxu0 %v450
  %v1383 = vpop.f32.mrb[0].mxu0
  %v1384 = vadd.f32 %v1328, %v1383
  %v1385 = vpop.f32.mrb[0].mxu0
  %v1386 = vpop.f32.mrb[0].mxu0
  %v1387 = vadd.f32 %v1331, %v1386
  %v1388 = vpop.f32.mrb[0].mxu0
  %1389 = vmatprep.mubr.bf16.mxu0 %v467
  %1390 = vmatmul.mubr.bf16.gmra.mrb[0].mxu0 %v466
  %v1391 = vpop.f32.mrb[0].mxu0
  %v1392 = vadd.f32 %v1336, %v1391
  %v1393 = vpop.f32.mrb[0].mxu0
  %v1394 = vpop.f32.mrb[0].mxu0
  %v1395 = vpop.f32.mrb[0].mxu0
  %1396 = vdwg.mxu0
  %1397 = vmatprep.subr.bf16.mxu0 0
  %1398 = vmatpush1.bf16.msra.mxu0 %v1057
  %1399 = vmatprep.subr.bf16.mxu0 0
  %1400 = vmatpush1.bf16.msra.mxu0 %v1058
  %1401 = vmatprep.subr.bf16.mxu0 0
  %1402 = vmatpush1.bf16.msra.mxu0 %v1059
  %1403 = vmatprep.subr.bf16.mxu0 0
  %1404 = vmatpush1.bf16.msra.mxu0 %v1060
  %1405 = vmatprep.subr.bf16.mxu0 0
  %1406 = vmatpush1.bf16.msra.mxu0 %v1061
  %1407 = vmatprep.subr.bf16.mxu0 0
  %1408 = vmatpush1.bf16.msra.mxu0 %v1062
  %1409 = vmatprep.subr.bf16.mxu0 0
  %1410 = vmatpush1.bf16.msra.mxu0 %v1063
  %1411 = vmatprep.subr.bf16.mxu0 0
  %1412 = vmatpush1.bf16.msra.mxu0 %v1064
  %1413 = vmatprep.subr.bf16.mxu0 0
  %1414 = vmatpush1.bf16.msra.mxu0 %v1065
  %1415 = vmatprep.subr.bf16.mxu0 0
  %1416 = vmatpush1.bf16.msra.mxu0 %v1066
  %1417 = vmatprep.subr.bf16.mxu0 0
  %1418 = vmatpush1.bf16.msra.mxu0 %v1067
  %1419 = vmatprep.subr.bf16.mxu0 0
  %1420 = vmatpush1.bf16.msra.mxu0 %v1068
  %1421 = vmatprep.subr.bf16.mxu0 0
  %1422 = vmatpush1.bf16.msra.mxu0 %v1069
  %1423 = vmatprep.subr.bf16.mxu0 0
  %1424 = vmatpush1.bf16.msra.mxu0 %v1070
  %1425 = vmatprep.subr.bf16.mxu0 0
  %1426 = vmatpush1.bf16.msra.mxu0 %v1071
  %1427 = vmatprep.subr.bf16.mxu0 0
  %1428 = vmatpush1.bf16.msra.mxu0 %v1072
  %1429 = vmatprep.mubr.bf16.mxu0 %v437
  %1430 = vmatmul.mubr.bf16.gmra.mrb[0].mxu0 %v436
  %v1431 = vpop.f32.mrb[0].mxu0
  %v1432 = vadd.f32 %v1376, %v1431
  %v1433 = vpop.f32.mrb[0].mxu0
  %v1434 = vpop.f32.mrb[0].mxu0
  %v1435 = vadd.f32 %v1379, %v1434
  %v1436 = vpop.f32.mrb[0].mxu0
  %1437 = vmatprep.mubr.bf16.mxu0 %v453
  %1438 = vmatmul.mubr.bf16.gmra.mrb[0].mxu0 %v452
  %v1439 = vpop.f32.mrb[0].mxu0
  %v1440 = vadd.f32 %v1384, %v1439
  %v1441 = vpop.f32.mrb[0].mxu0
  %v1442 = vpop.f32.mrb[0].mxu0
  %v1443 = vadd.f32 %v1387, %v1442
  %v1444 = vpop.f32.mrb[0].mxu0
  %1445 = vmatprep.mubr.bf16.mxu0 %v469
  %1446 = vmatmul.mubr.bf16.gmra.mrb[0].mxu0 %v468
  %v1447 = vpop.f32.mrb[0].mxu0
  %v1448 = vadd.f32 %v1392, %v1447
  %v1449 = vpop.f32.mrb[0].mxu0
  %v1450 = vpop.f32.mrb[0].mxu0
  %v1451 = vpop.f32.mrb[0].mxu0
  %1452 = vdwg.mxu0
  %1453 = vmatprep.subr.bf16.mxu0 0
  %1454 = vmatpush1.bf16.msra.mxu0 %v1073
  %1455 = vmatprep.subr.bf16.mxu0 0
  %1456 = vmatpush1.bf16.msra.mxu0 %v1074
  %1457 = vmatprep.subr.bf16.mxu0 0
  %1458 = vmatpush1.bf16.msra.mxu0 %v1075
  %1459 = vmatprep.subr.bf16.mxu0 0
  %1460 = vmatpush1.bf16.msra.mxu0 %v1076
  %1461 = vmatprep.subr.bf16.mxu0 0
  %1462 = vmatpush1.bf16.msra.mxu0 %v1077
  %1463 = vmatprep.subr.bf16.mxu0 0
  %1464 = vmatpush1.bf16.msra.mxu0 %v1078
  %1465 = vmatprep.subr.bf16.mxu0 0
  %1466 = vmatpush1.bf16.msra.mxu0 %v1079
  %1467 = vmatprep.subr.bf16.mxu0 0
  %1468 = vmatpush1.bf16.msra.mxu0 %v1080
  %1469 = vmatprep.subr.bf16.mxu0 0
  %1470 = vmatpush1.bf16.msra.mxu0 %v1081
  %1471 = vmatprep.subr.bf16.mxu0 0
  %1472 = vmatpush1.bf16.msra.mxu0 %v1082
  %1473 = vmatprep.subr.bf16.mxu0 0
  %1474 = vmatpush1.bf16.msra.mxu0 %v1083
  %1475 = vmatprep.subr.bf16.mxu0 0
  %1476 = vmatpush1.bf16.msra.mxu0 %v1084
  %1477 = vmatprep.subr.bf16.mxu0 0
  %1478 = vmatpush1.bf16.msra.mxu0 %v1085
  %1479 = vmatprep.subr.bf16.mxu0 0
  %1480 = vmatpush1.bf16.msra.mxu0 %v1086
  %1481 = vmatprep.subr.bf16.mxu0 0
  %1482 = vmatpush1.bf16.msra.mxu0 %v1087
  %1483 = vmatprep.subr.bf16.mxu0 0
  %1484 = vmatpush1.bf16.msra.mxu0 %v1088
  %1485 = vmatprep.mubr.bf16.mxu0 %v439
  %1486 = vmatmul.mubr.bf16.gmra.mrb[0].mxu0 %v438
  %v1487 = vpop.f32.mrb[0].mxu0
  %v1488 = vadd.f32 %v1432, %v1487
  %v1489 = vpop.f32.mrb[0].mxu0
  %v1490 = vpop.f32.mrb[0].mxu0
  %v1491 = vadd.f32 %v1435, %v1490
  %v1492 = vpop.f32.mrb[0].mxu0
  %1493 = vmatprep.mubr.bf16.mxu0 %v455
  %1494 = vmatmul.mubr.bf16.gmra.mrb[0].mxu0 %v454
  %v1495 = vpop.f32.mrb[0].mxu0
  %v1496 = vadd.f32 %v1440, %v1495
  %v1497 = vpop.f32.mrb[0].mxu0
  %v1498 = vpop.f32.mrb[0].mxu0
  %v1499 = vadd.f32 %v1443, %v1498
  %v1500 = vpop.f32.mrb[0].mxu0
  %1501 = vmatprep.mubr.bf16.mxu0 %v471
  %1502 = vmatmul.mubr.bf16.gmra.mrb[0].mxu0 %v470
  %v1503 = vpop.f32.mrb[0].mxu0
  %v1504 = vadd.f32 %v1448, %v1503
  %v1505 = vpop.f32.mrb[0].mxu0
  %v1506 = vpop.f32.mrb[0].mxu0
  %v1507 = vpop.f32.mrb[0].mxu0
  %1508 = vdwg.mxu0
  %1509 = vmatprep.subr.bf16.mxu0 0
  %1510 = vmatpush1.bf16.msra.mxu0 %v1089
  %1511 = vmatprep.subr.bf16.mxu0 0
  %1512 = vmatpush1.bf16.msra.mxu0 %v1090
  %1513 = vmatprep.subr.bf16.mxu0 0
  %1514 = vmatpush1.bf16.msra.mxu0 %v1091
  %1515 = vmatprep.subr.bf16.mxu0 0
  %1516 = vmatpush1.bf16.msra.mxu0 %v1092
  %1517 = vmatprep.subr.bf16.mxu0 0
  %1518 = vmatpush1.bf16.msra.mxu0 %v1093
  %1519 = vmatprep.subr.bf16.mxu0 0
  %1520 = vmatpush1.bf16.msra.mxu0 %v1094
  %1521 = vmatprep.subr.bf16.mxu0 0
  %1522 = vmatpush1.bf16.msra.mxu0 %v1095
  %1523 = vmatprep.subr.bf16.mxu0 0
  %1524 = vmatpush1.bf16.msra.mxu0 %v1096
  %1525 = vmatprep.subr.bf16.mxu0 0
  %1526 = vmatpush1.bf16.msra.mxu0 %v1097
  %1527 = vmatprep.subr.bf16.mxu0 0
  %1528 = vmatpush1.bf16.msra.mxu0 %v1098
  %1529 = vmatprep.subr.bf16.mxu0 0
  %1530 = vmatpush1.bf16.msra.mxu0 %v1099
  %1531 = vmatprep.subr.bf16.mxu0 0
  %1532 = vmatpush1.bf16.msra.mxu0 %v1100
  %1533 = vmatprep.subr.bf16.mxu0 0
  %1534 = vmatpush1.bf16.msra.mxu0 %v1101
  %1535 = vmatprep.subr.bf16.mxu0 0
  %1536 = vmatpush1.bf16.msra.mxu0 %v1102
  %1537 = vmatprep.subr.bf16.mxu0 0
  %1538 = vmatpush1.bf16.msra.mxu0 %v1103
  %1539 = vmatprep.subr.bf16.mxu0 0
  %1540 = vmatpush1.bf16.msra.mxu0 %v1104
  %1541 = vmatprep.mubr.bf16.mxu0 %v441
  %1542 = vmatmul.mubr.bf16.gmra.mrb[0].mxu0 %v440
  %v1543 = vpop.f32.mrb[0].mxu0
  %v1544 = vadd.f32 %v1488, %v1543
  %v1545 = vpop.f32.mrb[0].mxu0
  %v1546 = vpop.f32.mrb[0].mxu0
  %v1547 = vadd.f32 %v1491, %v1546
  %v1548 = vpop.f32.mrb[0].mxu0
  %1549 = vmatprep.mubr.bf16.mxu0 %v457
  %1550 = vmatmul.mubr.bf16.gmra.mrb[0].mxu0 %v456
  %v1551 = vpop.f32.mrb[0].mxu0
  %v1552 = vadd.f32 %v1496, %v1551
  %v1553 = vpop.f32.mrb[0].mxu0
  %v1554 = vpop.f32.mrb[0].mxu0
  %v1555 = vadd.f32 %v1499, %v1554
  %v1556 = vpop.f32.mrb[0].mxu0
  %1557 = vmatprep.mubr.bf16.mxu0 %v473
  %1558 = vmatmul.mubr.bf16.gmra.mrb[0].mxu0 %v472
  %v1559 = vpop.f32.mrb[0].mxu0
  %v1560 = vadd.f32 %v1504, %v1559
  %v1561 = vpop.f32.mrb[0].mxu0
  %v1562 = vpop.f32.mrb[0].mxu0
  %v1563 = vpop.f32.mrb[0].mxu0
  %1564 = vdwg.mxu0
  %1565 = vmatprep.subr.bf16.mxu0 0
  %1566 = vmatpush1.bf16.msra.mxu0 %v1105
  %1567 = vmatprep.subr.bf16.mxu0 0
  %1568 = vmatpush1.bf16.msra.mxu0 %v1106
  %1569 = vmatprep.subr.bf16.mxu0 0
  %1570 = vmatpush1.bf16.msra.mxu0 %v1107
  %1571 = vmatprep.subr.bf16.mxu0 0
  %1572 = vmatpush1.bf16.msra.mxu0 %v1108
  %1573 = vmatprep.subr.bf16.mxu0 0
  %1574 = vmatpush1.bf16.msra.mxu0 %v1109
  %1575 = vmatprep.subr.bf16.mxu0 0
  %1576 = vmatpush1.bf16.msra.mxu0 %v1110
  %1577 = vmatprep.subr.bf16.mxu0 0
  %1578 = vmatpush1.bf16.msra.mxu0 %v1111
  %1579 = vmatprep.subr.bf16.mxu0 0
  %1580 = vmatpush1.bf16.msra.mxu0 %v1112
  %1581 = vmatprep.subr.bf16.mxu0 0
  %1582 = vmatpush1.bf16.msra.mxu0 %v1113
  %1583 = vmatprep.subr.bf16.mxu0 0
  %1584 = vmatpush1.bf16.msra.mxu0 %v1114
  %1585 = vmatprep.subr.bf16.mxu0 0
  %1586 = vmatpush1.bf16.msra.mxu0 %v1115
  %1587 = vmatprep.subr.bf16.mxu0 0
  %1588 = vmatpush1.bf16.msra.mxu0 %v1116
  %1589 = vmatprep.subr.bf16.mxu0 0
  %1590 = vmatpush1.bf16.msra.mxu0 %v1117
  %1591 = vmatprep.subr.bf16.mxu0 0
  %1592 = vmatpush1.bf16.msra.mxu0 %v1118
  %1593 = vmatprep.subr.bf16.mxu0 0
  %1594 = vmatpush1.bf16.msra.mxu0 %v1119
  %1595 = vmatprep.subr.bf16.mxu0 0
  %1596 = vmatpush1.bf16.msra.mxu0 %v1120
  %1597 = vmatprep.mubr.bf16.mxu0 %v443
  %1598 = vmatmul.mubr.bf16.gmra.mrb[0].mxu0 %v442
  %v1599 = vpop.f32.mrb[0].mxu0
  %v1600 = vadd.f32 %v1544, %v1599
  %v1601 = vpop.f32.mrb[0].mxu0
  %v1602 = vpop.f32.mrb[0].mxu0
  %v1603 = vadd.f32 %v1547, %v1602
  %v1604 = vpop.f32.mrb[0].mxu0
  %1605 = vmatprep.mubr.bf16.mxu0 %v459
  %1606 = vmatmul.mubr.bf16.gmra.mrb[0].mxu0 %v458
  %v1607 = vpop.f32.mrb[0].mxu0
  %v1608 = vadd.f32 %v1552, %v1607
  %v1609 = vpop.f32.mrb[0].mxu0
  %v1610 = vpop.f32.mrb[0].mxu0
  %v1611 = vadd.f32 %v1555, %v1610
  %v1612 = vpop.f32.mrb[0].mxu0
  %1613 = vmatprep.mubr.bf16.mxu0 %v475
  %1614 = vmatmul.mubr.bf16.gmra.mrb[0].mxu0 %v474
  %v1615 = vpop.f32.mrb[0].mxu0
  %v1616 = vadd.f32 %v1560, %v1615
  %v1617 = vpop.f32.mrb[0].mxu0
  %v1618 = vpop.f32.mrb[0].mxu0
  %v1619 = vpop.f32.mrb[0].mxu0
  %1620 = vdwg.mxu0
  %1621 = vmatprep.subr.bf16.mxu0 0
  %1622 = vmatpush1.bf16.msra.mxu0 %v1121
  %1623 = vmatprep.subr.bf16.mxu0 0
  %1624 = vmatpush1.bf16.msra.mxu0 %v1122
  %1625 = vmatprep.subr.bf16.mxu0 0
  %1626 = vmatpush1.bf16.msra.mxu0 %v1123
  %1627 = vmatprep.subr.bf16.mxu0 0
  %1628 = vmatpush1.bf16.msra.mxu0 %v1124
  %1629 = vmatprep.subr.bf16.mxu0 0
  %1630 = vmatpush1.bf16.msra.mxu0 %v1125
  %1631 = vmatprep.subr.bf16.mxu0 0
  %1632 = vmatpush1.bf16.msra.mxu0 %v1126
  %1633 = vmatprep.subr.bf16.mxu0 0
  %1634 = vmatpush1.bf16.msra.mxu0 %v1127
  %1635 = vmatprep.subr.bf16.mxu0 0
  %1636 = vmatpush1.bf16.msra.mxu0 %v1128
  %1637 = vmatprep.subr.bf16.mxu0 0
  %1638 = vmatpush1.bf16.msra.mxu0 %v1129
  %1639 = vmatprep.subr.bf16.mxu0 0
  %1640 = vmatpush1.bf16.msra.mxu0 %v1130
  %1641 = vmatprep.subr.bf16.mxu0 0
  %1642 = vmatpush1.bf16.msra.mxu0 %v1131
  %1643 = vmatprep.subr.bf16.mxu0 0
  %1644 = vmatpush1.bf16.msra.mxu0 %v1132
  %1645 = vmatprep.subr.bf16.mxu0 0
  %1646 = vmatpush1.bf16.msra.mxu0 %v1133
  %1647 = vmatprep.subr.bf16.mxu0 0
  %1648 = vmatpush1.bf16.msra.mxu0 %v1134
  %1649 = vmatprep.subr.bf16.mxu0 0
  %1650 = vmatpush1.bf16.msra.mxu0 %v1135
  %1651 = vmatprep.subr.bf16.mxu0 0
  %1652 = vmatpush1.bf16.msra.mxu0 %v1136
  %1653 = vmatprep.mubr.bf16.mxu0 %v445
  %1654 = vmatmul.mubr.bf16.gmra.mrb[0].mxu0 %v444
  %v1655 = vpop.f32.mrb[0].mxu0
  %v1656 = vadd.f32 %v1600, %v1655
  %v1657 = vpop.f32.mrb[0].mxu0
  %v1658 = vpop.f32.mrb[0].mxu0
  %v1659 = vadd.f32 %v1603, %v1658
  %v1660 = vpop.f32.mrb[0].mxu0
  %1661 = vmatprep.mubr.bf16.mxu0 %v461
  %1662 = vmatmul.mubr.bf16.gmra.mrb[0].mxu0 %v460
  %v1663 = vpop.f32.mrb[0].mxu0
  %v1664 = vadd.f32 %v1608, %v1663
  %v1665 = vpop.f32.mrb[0].mxu0
  %v1666 = vpop.f32.mrb[0].mxu0
  %v1667 = vadd.f32 %v1611, %v1666
  %v1668 = vpop.f32.mrb[0].mxu0
  %1669 = vmatprep.mubr.bf16.mxu0 %v477
  %1670 = vmatmul.mubr.bf16.gmra.mrb[0].mxu0 %v476
  %v1671 = vpop.f32.mrb[0].mxu0
  %v1672 = vadd.f32 %v1616, %v1671
  %v1673 = vpop.f32.mrb[0].mxu0
  %v1674 = vpop.f32.mrb[0].mxu0
  %v1675 = vpop.f32.mrb[0].mxu0
  %1676 = vdwg.mxu0
  %1677 = vmatprep.subr.bf16.mxu0 0
  %1678 = vmatpush1.bf16.msra.mxu0 %v1137
  %1679 = vmatprep.subr.bf16.mxu0 0
  %1680 = vmatpush1.bf16.msra.mxu0 %v1138
  %1681 = vmatprep.subr.bf16.mxu0 0
  %1682 = vmatpush1.bf16.msra.mxu0 %v1139
  %1683 = vmatprep.subr.bf16.mxu0 0
  %1684 = vmatpush1.bf16.msra.mxu0 %v1140
  %1685 = vmatprep.subr.bf16.mxu0 0
  %1686 = vmatpush1.bf16.msra.mxu0 %v1141
  %1687 = vmatprep.subr.bf16.mxu0 0
  %1688 = vmatpush1.bf16.msra.mxu0 %v1142
  %1689 = vmatprep.subr.bf16.mxu0 0
  %1690 = vmatpush1.bf16.msra.mxu0 %v1143
  %1691 = vmatprep.subr.bf16.mxu0 0
  %1692 = vmatpush1.bf16.msra.mxu0 %v1144
  %1693 = vmatprep.subr.bf16.mxu0 0
  %1694 = vmatpush1.bf16.msra.mxu0 %v1145
  %1695 = vmatprep.subr.bf16.mxu0 0
  %1696 = vmatpush1.bf16.msra.mxu0 %v1146
  %1697 = vmatprep.subr.bf16.mxu0 0
  %1698 = vmatpush1.bf16.msra.mxu0 %v1147
  %1699 = vmatprep.subr.bf16.mxu0 0
  %1700 = vmatpush1.bf16.msra.mxu0 %v1148
  %1701 = vmatprep.subr.bf16.mxu0 0
  %1702 = vmatpush1.bf16.msra.mxu0 %v1149
  %1703 = vmatprep.subr.bf16.mxu0 0
  %1704 = vmatpush1.bf16.msra.mxu0 0
  %1705 = vmatprep.subr.bf16.mxu0 0
  %1706 = vmatpush1.bf16.msra.mxu0 0
  %1707 = vmatprep.subr.bf16.mxu0 0
  %1708 = vmatpush1.bf16.msra.mxu0 0
  %1709 = vmatprep.mubr.bf16.mxu0 %v1277
  %1710 = vmatmul.mubr.bf16.gmra.mrb[0].mxu0 %v446
  %v1711 = vpop.f32.mrb[0].mxu0
  %v1712 = vadd.f32 %v1656, %v1711
  %v1713 = vpop.f32.mrb[0].mxu0
  %v1714 = vpop.f32.mrb[0].mxu0
  %v1715 = vadd.f32 %v1659, %v1714
  %v1716 = vpop.f32.mrb[0].mxu0
  %1717 = vmatprep.mubr.bf16.mxu0 %v1280
  %1718 = vmatmul.mubr.bf16.gmra.mrb[0].mxu0 %v462
  %v1719 = vpop.f32.mrb[0].mxu0
  %v1720 = vadd.f32 %v1664, %v1719
  %v1721 = vpop.f32.mrb[0].mxu0
  %v1722 = vpop.f32.mrb[0].mxu0
  %v1723 = vadd.f32 %v1667, %v1722
  %v1724 = vpop.f32.mrb[0].mxu0
  %1725 = vmatprep.mubr.bf16.mxu0 %v1283
  %1726 = vmatmul.mubr.bf16.gmra.mrb[0].mxu0 %v478
  %v1727 = vpop.f32.mrb[0].mxu0
  %v1728 = vadd.f32 %v1672, %v1727
  %v1729 = vpop.f32.mrb[0].mxu0
  %v1730 = vpop.f32.mrb[0].mxu0
  %v1731 = vpop.f32.mrb[0].mxu0
  %1732 = vdwg.mxu0
  %vm1733 = vcmask 130048
  %1734 = vst.msk [vmem:[%s3] sm:$0xff] %vm1733, %v1712
  %1735 = vst.msk [vmem:[%s3 + $0x8] sm:$0xff] %vm1733, %v1715
  %1736 = vst.msk [vmem:[%s3 + $0x10] sm:$0xff] %vm1733, %v1720
  %1737 = vst.msk [vmem:[%s3 + $0x18] sm:$0xff] %vm1733, %v1723
  %1738 = vst.msk [vmem:[%s3 + $0x20] sm:$0xff] %vm1733, %v1728
  // Predicated region
  $region14: #{cnn_encoder_forward.32} parent=0 // pred_check
    _
  $region15: #{cnn_encoder_forward.32} parent=0 // pred_check_branch
    %1740 = sbr.rel (0) target = $region17
  $region16: #{cnn_encoder_forward.32} parent=0 // pred_region
    _
  $region17: #{cnn_encoder_forward.32} parent=0 // pred_fallthru
    _
  // Predicated region
  $region18: #{cnn_encoder_forward.32} parent=0 // pred_check
    _
  $region19: #{cnn_encoder_forward.32} parent=0 // pred_check_branch
    %1742 = sbr.rel (0) target = $region21
  $region20: #{cnn_encoder_forward.32} parent=0 // pred_region
    _
  $region21: #{cnn_encoder_forward.32} parent=0 // pred_fallthru
    _

// kernel: cnn_encoder_forward.35
$region0: #{cnn_encoder_forward.35}
  #allocation0 [shape = 'u32[]', space=smem, size = 0x4, offset = 0x4, fixed_abs, tag = 'smem constant byte address 0x4 - core index']
  #allocation1 [shape = 'u32[144,128]{1,0:T(1,128)}', space=vmem, size = 0x12000, scoped, tag = 'internal scratch']
  %s0 = inlined_call_operand.vmem [shape: f32[8,128], index: 0, kind: input, shape index: {}]
  %s1 = inlined_call_operand.vmem [shape: f32[8,128], index: 1, kind: input, shape index: {}]
  %s2 = inlined_call_operand.vmem [shape: f32[8,128], index: 2, kind: input, shape index: {}]
  %s3 = inlined_call_operand.vmem [shape: f32[8,128], index: 3, kind: input, shape index: {}]
  %s4 = inlined_call_operand.vmem [shape: f32[8,128], index: 4, kind: output, shape index: {}]
  %s5 = sld [smem:[#allocation0]]
  $region26: #{cnn_encoder_forward.35} parent=0
    _
  %s7 = ssub.s32 1, %s5
  %s8 = scalar_select 0, %s7, %s5
  // Predicated region
  $region2: #{cnn_encoder_forward.35} parent=0 // pred_check
    _
  $region3: #{cnn_encoder_forward.35} parent=0 // pred_check_branch
    %10 = sbr.rel (0) target = $region5
  $region4: #{cnn_encoder_forward.35} parent=0 // pred_region
    _
  $region5: #{cnn_encoder_forward.35} parent=0 // pred_fallthru
    _
  // Predicated region
  $region6: #{cnn_encoder_forward.35} parent=0 // pred_check
    _
  $region7: #{cnn_encoder_forward.35} parent=0 // pred_check_branch
    %12 = sbr.rel (0) target = $region9
  $region8: #{cnn_encoder_forward.35} parent=0 // pred_region
    _
  $region9: #{cnn_encoder_forward.35} parent=0 // pred_fallthru
    _
  // Predicated region
  $region10: #{cnn_encoder_forward.35} parent=0 // pred_check
    _
  $region11: #{cnn_encoder_forward.35} parent=0 // pred_check_branch
    %14 = sbr.rel (0) target = $region13
  $region12: #{cnn_encoder_forward.35} parent=0 // pred_region
    _
  $region13: #{cnn_encoder_forward.35} parent=0 // pred_fallthru
    _
  // Predicated region
  $region14: #{cnn_encoder_forward.35} parent=0 // pred_check
    _
  $region15: #{cnn_encoder_forward.35} parent=0 // pred_check_branch
    %16 = sbr.rel (0) target = $region17
  $region16: #{cnn_encoder_forward.35} parent=0 // pred_region
    _
  $region17: #{cnn_encoder_forward.35} parent=0 // pred_fallthru
    _
  %v17 = vld [vmem:[%s0] sm:$0xff]
  %v18 = vld [vmem:[%s1] sm:$0xff]
  %v19 = vadd.f32 %v17, %v18
  %v20 = vld [vmem:[%s2] sm:$0xff]
  %v21 = vadd.f32 %v19, %v20
  %v22 = vld [vmem:[%s3] sm:$0xff]
  %v23 = vadd.f32 %v21, %v22
  %v24 = vmax.f32 %v23, 0.0
  %25 = vst [vmem:[%s4] sm:$0xff] %v24
  // Predicated region
  $region18: #{cnn_encoder_forward.35} parent=0 // pred_check
    _
  $region19: #{cnn_encoder_forward.35} parent=0 // pred_check_branch
    %27 = sbr.rel (0) target = $region21
  $region20: #{cnn_encoder_forward.35} parent=0 // pred_region
    _
  $region21: #{cnn_encoder_forward.35} parent=0 // pred_fallthru
    _
  // Predicated region
  $region22: #{cnn_encoder_forward.35} parent=0 // pred_check
    _
  $region23: #{cnn_encoder_forward.35} parent=0 // pred_check_branch
    %29 = sbr.rel (0) target = $region25
  $region24: #{cnn_encoder_forward.35} parent=0 // pred_region
    _
  $region25: #{cnn_encoder_forward.35} parent=0 // pred_fallthru
    _

// kernel: cnn_encoder_forward.30
$region0: #{cnn_encoder_forward.30}
  #allocation0 [shape = 'u32[]', space=smem, size = 0x4, offset = 0x4, fixed_abs, tag = 'smem constant byte address 0x4 - core index']
  #allocation1 [shape = 'u32[144,128]{1,0:T(1,128)}', space=vmem, size = 0x12000, scoped, tag = 'internal scratch']
  %s0 = inlined_call_operand.vmem [shape: bf16[40,432], index: 0, kind: input, shape index: {}]
  %s1 = inlined_call_operand.vmem [shape: bf16[432,16], index: 1, kind: input, shape index: {}]
  %s2 = inlined_call_operand.vmem [shape: f32[1,16], index: 2, kind: input, shape index: {}]
  %s3 = inlined_call_operand.vmem [shape: f32[40,16], index: 3, kind: output, shape index: {}]
  %s4 = sld [smem:[#allocation0]]
  $region22: #{cnn_encoder_forward.30} parent=0
    _
  %s6 = ssub.s32 1, %s4
  %s7 = scalar_select 0, %s6, %s4
  // Predicated region
  $region2: #{cnn_encoder_forward.30} parent=0 // pred_check
    _
  $region3: #{cnn_encoder_forward.30} parent=0 // pred_check_branch
    %9 = sbr.rel (0) target = $region5
  $region4: #{cnn_encoder_forward.30} parent=0 // pred_region
    _
  $region5: #{cnn_encoder_forward.30} parent=0 // pred_fallthru
    _
  // Predicated region
  $region6: #{cnn_encoder_forward.30} parent=0 // pred_check
    _
  $region7: #{cnn_encoder_forward.30} parent=0 // pred_check_branch
    %11 = sbr.rel (0) target = $region9
  $region8: #{cnn_encoder_forward.30} parent=0 // pred_region
    _
  $region9: #{cnn_encoder_forward.30} parent=0 // pred_fallthru
    _
  // Predicated region
  $region10: #{cnn_encoder_forward.30} parent=0 // pred_check
    _
  $region11: #{cnn_encoder_forward.30} parent=0 // pred_check_branch
    %13 = sbr.rel (0) target = $region13
  $region12: #{cnn_encoder_forward.30} parent=0 // pred_region
    _
  $region13: #{cnn_encoder_forward.30} parent=0 // pred_fallthru
    _
  %v15 = vld [vmem:[%s0] sm:$0xff]
  %v16 = vld [vmem:[%s0 + $0x8] sm:$0xff]
  %v17 = vld [vmem:[%s0 + $0x10] sm:$0xff]
  %v18 = vld [vmem:[%s0 + $0x18] sm:$0xff]
  %v19 = vld [vmem:[%s0 + $0x20] sm:$0xff]
  %v20 = vld [vmem:[%s0 + $0x28] sm:$0xff]
  %v21 = vld [vmem:[%s0 + $0x30] sm:$0xff]
  %v22 = vld [vmem:[%s0 + $0x38] sm:$0xff]
  %v23 = vld [vmem:[%s0 + $0x40] sm:$0xff]
  %v24 = vld [vmem:[%s0 + $0x48] sm:$0xff]
  %v25 = vld [vmem:[%s1] sm:$0xf]
  %v26 = vld [vmem:[%s1 + $0x4] sm:$0xf]
  %v27 = vld [vmem:[%s1 + $0x8] sm:$0xf]
  %v28 = vld [vmem:[%s1 + $0xc] sm:$0xf]
  %v29 = vld [vmem:[%s1 + $0x10] sm:$0xf]
  %v30 = vld [vmem:[%s1 + $0x14] sm:$0xf]
  %v31 = vld [vmem:[%s1 + $0x18] sm:$0xf]
  %v32 = vld [vmem:[%s1 + $0x1c] sm:$0xf]
  %v33 = vld [vmem:[%s1 + $0x20] sm:$0xf]
  %v34 = vld [vmem:[%s1 + $0x24] sm:$0xf]
  %v35 = vld [vmem:[%s1 + $0x28] sm:$0xf]
  %v36 = vld [vmem:[%s1 + $0x2c] sm:$0xf]
  %v37 = vld [vmem:[%s1 + $0x30] sm:$0xf]
  %v38 = vld [vmem:[%s1 + $0x34] sm:$0xf]
  %v39 = vld [vmem:[%s1 + $0x38] sm:$0xf]
  %v40 = vld [vmem:[%s1 + $0x3c] sm:$0xf]
  %v41 = vld [vmem:[%s1 + $0x40] sm:$0xf]
  %v42 = vld [vmem:[%s1 + $0x44] sm:$0xf]
  %v43 = vld [vmem:[%s1 + $0x48] sm:$0xf]
  %v44 = vld [vmem:[%s1 + $0x4c] sm:$0xf]
  %v45 = vld [vmem:[%s1 + $0x50] sm:$0xf]
  %v46 = vld [vmem:[%s1 + $0x54] sm:$0xf]
  %v47 = vld [vmem:[%s1 + $0x58] sm:$0xf]
  %v48 = vld [vmem:[%s1 + $0x5c] sm:$0xf]
  %v49 = vld [vmem:[%s1 + $0x60] sm:$0xf]
  %v50 = vld [vmem:[%s1 + $0x64] sm:$0xf]
  %v51 = vld [vmem:[%s1 + $0x68] sm:$0xf]
  %v52 = vld [vmem:[%s1 + $0x6c] sm:$0xf]
  %v53 = vld [vmem:[%s1 + $0x70] sm:$0xf]
  %v54 = vld [vmem:[%s1 + $0x74] sm:$0xf]
  %v55 = vld [vmem:[%s1 + $0x78] sm:$0xf]
  %v56 = vld [vmem:[%s1 + $0x7c] sm:$0xf]
  %v57 = vld [vmem:[%s1 + $0x80] sm:$0xf]
  %v58 = vld [vmem:[%s1 + $0x84] sm:$0xf]
  %v59 = vld [vmem:[%s1 + $0x88] sm:$0xf]
  %v60 = vld [vmem:[%s1 + $0x8c] sm:$0xf]
  %v61 = vld [vmem:[%s1 + $0x90] sm:$0xf]
  %v62 = vld [vmem:[%s1 + $0x94] sm:$0xf]
  %v63 = vld [vmem:[%s1 + $0x98] sm:$0xf]
  %v64 = vld [vmem:[%s1 + $0x9c] sm:$0xf]
  %v65 = vld [vmem:[%s1 + $0xa0] sm:$0xf]
  %v66 = vld [vmem:[%s1 + $0xa4] sm:$0xf]
  %v67 = vld [vmem:[%s1 + $0xa8] sm:$0xf]
  %v68 = vld [vmem:[%s1 + $0xac] sm:$0xf]
  %v69 = vld [vmem:[%s1 + $0xb0] sm:$0xf]
  %v70 = vld [vmem:[%s1 + $0xb4] sm:$0xf]
  %v71 = vld [vmem:[%s1 + $0xb8] sm:$0xf]
  %v72 = vld [vmem:[%s1 + $0xbc] sm:$0xf]
  %v73 = vld [vmem:[%s1 + $0xc0] sm:$0xf]
  %v74 = vld [vmem:[%s1 + $0xc4] sm:$0xf]
  %v75 = vld [vmem:[%s1 + $0xc8] sm:$0xf]
  %v76 = vld [vmem:[%s1 + $0xcc] sm:$0xf]
  %v77 = vld [vmem:[%s1 + $0xd0] sm:$0xf]
  %v78 = vld [vmem:[%s1 + $0xd4] sm:$0xf]
  %v79 = vld [vmem:[%s2] sm:$0x1]
  %v81 = vlaneseq
  %v82 = vshrl.u32 %v81, 7
  %v83 = vsub.s32 0, %v82
  %v84 = vrot.slane %v79, %v83
  %v96 = vunpack.c.l.b16 %v15
  %v97 = vunpack.c.h.b16 %v15
  %v98 = vunpack.c.l.b16 %v16
  %v99 = vunpack.c.h.b16 %v16
  %v100 = vunpack.c.l.b16 %v17
  %v101 = vunpack.c.h.b16 %v17
  %v102 = vunpack.c.l.b16 %v18
  %v103 = vunpack.c.h.b16 %v18
  %v104 = vunpack.c.l.b16 %v19
  %v105 = vunpack.c.h.b16 %v19
  %v106 = vunpack.c.l.b16 %v20
  %v107 = vunpack.c.h.b16 %v20
  %v108 = vunpack.c.l.b16 %v21
  %v109 = vunpack.c.h.b16 %v21
  %v110 = vunpack.c.l.b16 %v22
  %v111 = vunpack.c.h.b16 %v22
  %v112 = vunpack.c.l.b16 %v23
  %v113 = vunpack.c.h.b16 %v23
  %v114 = vunpack.c.l.b16 %v24
  %v115 = vunpack.c.h.b16 %v24
  %v116 = vpack.c.b16 %v100, %v96
  %v117 = vpack.c.b16 %v101, %v97
  %v118 = vpack.c.b16 %v102, %v98
  %v119 = vpack.c.b16 %v103, %v99
  %v120 = vpack.c.b16 %v108, %v104
  %v121 = vpack.c.b16 %v109, %v105
  %v122 = vpack.c.b16 %v110, %v106
  %v123 = vpack.c.b16 %v111, %v107
  %v124 = vpack.c.b16 %v112, %v112
  %v125 = vpack.c.b16 %v113, %v113
  %v126 = vpack.c.b16 %v114, %v114
  %v127 = vpack.c.b16 %v115, %v115
  %v191 = vunpack.c.l.b16 %v25
  %v192 = vunpack.c.l.b16 %v26
  %v193 = vunpack.c.l.b16 %v27
  %v194 = vunpack.c.l.b16 %v28
  %v195 = vunpack.c.l.b16 %v29
  %v196 = vunpack.c.l.b16 %v30
  %v197 = vunpack.c.l.b16 %v31
  %v198 = vunpack.c.l.b16 %v32
  %v199 = vunpack.c.l.b16 %v33
  %v200 = vunpack.c.l.b16 %v34
  %v201 = vunpack.c.l.b16 %v35
  %v202 = vunpack.c.l.b16 %v36
  %v203 = vunpack.c.l.b16 %v37
  %v204 = vunpack.c.l.b16 %v38
  %v205 = vunpack.c.l.b16 %v39
  %v206 = vunpack.c.l.b16 %v40
  %v207 = vunpack.c.l.b16 %v41
  %v208 = vunpack.c.l.b16 %v42
  %v209 = vunpack.c.l.b16 %v43
  %v210 = vunpack.c.l.b16 %v44
  %v211 = vunpack.c.l.b16 %v45
  %v212 = vunpack.c.l.b16 %v46
  %v213 = vunpack.c.l.b16 %v47
  %v214 = vunpack.c.l.b16 %v48
  %v215 = vunpack.c.l.b16 %v49
  %v216 = vunpack.c.l.b16 %v50
  %v217 = vunpack.c.l.b16 %v51
  %v218 = vunpack.c.l.b16 %v52
  %v219 = vunpack.c.l.b16 %v53
  %v220 = vunpack.c.l.b16 %v54
  %v221 = vunpack.c.l.b16 %v55
  %v222 = vunpack.c.l.b16 %v56
  %v223 = vunpack.c.l.b16 %v57
  %v224 = vunpack.c.l.b16 %v58
  %v225 = vunpack.c.l.b16 %v59
  %v226 = vunpack.c.l.b16 %v60
  %v227 = vunpack.c.l.b16 %v61
  %v228 = vunpack.c.l.b16 %v62
  %v229 = vunpack.c.l.b16 %v63
  %v230 = vunpack.c.l.b16 %v64
  %v231 = vunpack.c.l.b16 %v65
  %v232 = vunpack.c.l.b16 %v66
  %v233 = vunpack.c.l.b16 %v67
  %v234 = vunpack.c.l.b16 %v68
  %v235 = vunpack.c.l.b16 %v69
  %v236 = vunpack.c.l.b16 %v70
  %v237 = vunpack.c.l.b16 %v71
  %v238 = vunpack.c.l.b16 %v72
  %v239 = vunpack.c.l.b16 %v73
  %v240 = vunpack.c.l.b16 %v74
  %v241 = vunpack.c.l.b16 %v75
  %v242 = vunpack.c.l.b16 %v76
  %v243 = vunpack.c.l.b16 %v77
  %v244 = vunpack.c.l.b16 %v78
  %v245 = vpack.c.b16 %v192, %v191
  %v246 = vpack.c.b16 %v194, %v193
  %v247 = vpack.c.b16 %v196, %v195
  %v248 = vpack.c.b16 %v198, %v197
  %v249 = vpack.c.b16 %v200, %v199
  %v250 = vpack.c.b16 %v202, %v201
  %v251 = vpack.c.b16 %v204, %v203
  %v252 = vpack.c.b16 %v206, %v205
  %v253 = vpack.c.b16 %v208, %v207
  %v254 = vpack.c.b16 %v210, %v209
  %v255 = vpack.c.b16 %v212, %v211
  %v256 = vpack.c.b16 %v214, %v213
  %v257 = vpack.c.b16 %v216, %v215
  %v258 = vpack.c.b16 %v218, %v217
  %v259 = vpack.c.b16 %v220, %v219
  %v260 = vpack.c.b16 %v222, %v221
  %v261 = vpack.c.b16 %v224, %v223
  %v262 = vpack.c.b16 %v226, %v225
  %v263 = vpack.c.b16 %v228, %v227
  %v264 = vpack.c.b16 %v230, %v229
  %v265 = vpack.c.b16 %v232, %v231
  %v266 = vpack.c.b16 %v234, %v233
  %v267 = vpack.c.b16 %v236, %v235
  %v268 = vpack.c.b16 %v238, %v237
  %v269 = vpack.c.b16 %v240, %v239
  %v270 = vpack.c.b16 %v242, %v241
  %v271 = vpack.c.b16 %v244, %v243
  %vm299 = vcmask 392192
  %v301 = vsel %vm299, %v119, 0
  %v304 = vsel %vm299, %v123, 0
  %v307 = vsel %vm299, %v127, 0
  %309 = vmatprep.subr.bf16.mxu0 0
  %310 = vmatpush1.bf16.msra.mxu0 %v245
  %311 = vmatprep.subr.bf16.mxu0 0
  %312 = vmatpush1.bf16.msra.mxu0 %v246
  %313 = vmatprep.subr.bf16.mxu0 0
  %314 = vmatpush1.bf16.msra.mxu0 %v247
  %315 = vmatprep.subr.bf16.mxu0 0
  %316 = vmatpush1.bf16.msra.mxu0 %v248
  %317 = vmatprep.subr.bf16.mxu0 0
  %318 = vmatpush1.bf16.msra.mxu0 %v249
  %319 = vmatprep.subr.bf16.mxu0 0
  %320 = vmatpush1.bf16.msra.mxu0 %v250
  %321 = vmatprep.subr.bf16.mxu0 0
  %322 = vmatpush1.bf16.msra.mxu0 %v251
  %323 = vmatprep.subr.bf16.mxu0 0
  %324 = vmatpush1.bf16.msra.mxu0 %v252
  %325 = vmatprep.subr.bf16.mxu0 0
  %326 = vmatpush1.bf16.msra.mxu0 %v253
  %327 = vmatprep.subr.bf16.mxu0 0
  %328 = vmatpush1.bf16.msra.mxu0 %v254
  %329 = vmatprep.subr.bf16.mxu0 0
  %330 = vmatpush1.bf16.msra.mxu0 %v255
  %331 = vmatprep.subr.bf16.mxu0 0
  %332 = vmatpush1.bf16.msra.mxu0 %v256
  %333 = vmatprep.subr.bf16.mxu0 0
  %334 = vmatpush1.bf16.msra.mxu0 %v257
  %335 = vmatprep.subr.bf16.mxu0 0
  %336 = vmatpush1.bf16.msra.mxu0 %v258
  %337 = vmatprep.subr.bf16.mxu0 0
  %338 = vmatpush1.bf16.msra.mxu0 %v259
  %339 = vmatprep.subr.bf16.mxu0 0
  %340 = vmatpush1.bf16.msra.mxu0 %v260
  %341 = vmatprep.mubr.bf16.mxu0 %v117
  %342 = vmatmul.mubr.bf16.gmra.mrb[0].mxu0 %v116
  %v343 = vpop.f32.mrb[0].mxu0
  %v344 = vadd.f32 %v84, %v343
  %v345 = vpop.f32.mrb[0].mxu0
  %v346 = vpop.f32.mrb[0].mxu0
  %v347 = vadd.f32 %v84, %v346
  %v348 = vpop.f32.mrb[0].mxu0
  %349 = vmatprep.mubr.bf16.mxu0 %v121
  %350 = vmatmul.mubr.bf16.gmra.mrb[0].mxu0 %v120
  %v351 = vpop.f32.mrb[0].mxu0
  %v352 = vadd.f32 %v84, %v351
  %v353 = vpop.f32.mrb[0].mxu0
  %v354 = vpop.f32.mrb[0].mxu0
  %v355 = vadd.f32 %v84, %v354
  %v356 = vpop.f32.mrb[0].mxu0
  %357 = vmatprep.mubr.bf16.mxu0 %v125
  %358 = vmatmul.mubr.bf16.gmra.mrb[0].mxu0 %v124
  %v359 = vpop.f32.mrb[0].mxu0
  %v360 = vadd.f32 %v84, %v359
  %v361 = vpop.f32.mrb[0].mxu0
  %v362 = vpop.f32.mrb[0].mxu0
  %v363 = vpop.f32.mrb[0].mxu0
  %364 = vdwg.mxu0
  %365 = vmatprep.subr.bf16.mxu0 0
  %366 = vmatpush1.bf16.msra.mxu0 %v261
  %367 = vmatprep.subr.bf16.mxu0 0
  %368 = vmatpush1.bf16.msra.mxu0 %v262
  %369 = vmatprep.subr.bf16.mxu0 0
  %370 = vmatpush1.bf16.msra.mxu0 %v263
  %371 = vmatprep.subr.bf16.mxu0 0
  %372 = vmatpush1.bf16.msra.mxu0 %v264
  %373 = vmatprep.subr.bf16.mxu0 0
  %374 = vmatpush1.bf16.msra.mxu0 %v265
  %375 = vmatprep.subr.bf16.mxu0 0
  %376 = vmatpush1.bf16.msra.mxu0 %v266
  %377 = vmatprep.subr.bf16.mxu0 0
  %378 = vmatpush1.bf16.msra.mxu0 %v267
  %379 = vmatprep.subr.bf16.mxu0 0
  %380 = vmatpush1.bf16.msra.mxu0 %v268
  %381 = vmatprep.subr.bf16.mxu0 0
  %382 = vmatpush1.bf16.msra.mxu0 %v269
  %383 = vmatprep.subr.bf16.mxu0 0
  %384 = vmatpush1.bf16.msra.mxu0 %v270
  %385 = vmatprep.subr.bf16.mxu0 0
  %386 = vmatpush1.bf16.msra.mxu0 %v271
  %387 = vmatprep.subr.bf16.mxu0 0
  %388 = vmatpush1.bf16.msra.mxu0 0
  %389 = vmatprep.subr.bf16.mxu0 0
  %390 = vmatpush1.bf16.msra.mxu0 0
  %391 = vmatprep.subr.bf16.mxu0 0
  %392 = vmatpush1.bf16.msra.mxu0 0
  %393 = vmatprep.subr.bf16.mxu0 0
  %394 = vmatpush1.bf16.msra.mxu0 0
  %395 = vmatprep.subr.bf16.mxu0 0
  %396 = vmatpush1.bf16.msra.mxu0 0
  %397 = vmatprep.mubr.bf16.mxu0 %v301
  %398 = vmatmul.mubr.bf16.gmra.mrb[0].mxu0 %v118
  %v399 = vpop.f32.mrb[0].mxu0
  %v400 = vadd.f32 %v344, %v399
  %v401 = vpop.f32.mrb[0].mxu0
  %v402 = vpop.f32.mrb[0].mxu0
  %v403 = vadd.f32 %v347, %v402
  %v404 = vpop.f32.mrb[0].mxu0
  %405 = vmatprep.mubr.bf16.mxu0 %v304
  %406 = vmatmul.mubr.bf16.gmra.mrb[0].mxu0 %v122
  %v407 = vpop.f32.mrb[0].mxu0
  %v408 = vadd.f32 %v352, %v407
  %v409 = vpop.f32.mrb[0].mxu0
  %v410 = vpop.f32.mrb[0].mxu0
  %v411 = vadd.f32 %v355, %v410
  %v412 = vpop.f32.mrb[0].mxu0
  %413 = vmatprep.mubr.bf16.mxu0 %v307
  %414 = vmatmul.mubr.bf16.gmra.mrb[0].mxu0 %v126
  %v415 = vpop.f32.mrb[0].mxu0
  %v416 = vadd.f32 %v360, %v415
  %v417 = vpop.f32.mrb[0].mxu0
  %v418 = vpop.f32.mrb[0].mxu0
  %v419 = vpop.f32.mrb[0].mxu0
  %420 = vdwg.mxu0
  %vm421 = vcmask 130048
  %422 = vst.msk [vmem:[%s3] sm:$0xff] %vm421, %v400
  %423 = vst.msk [vmem:[%s3 + $0x8] sm:$0xff] %vm421, %v403
  %424 = vst.msk [vmem:[%s3 + $0x10] sm:$0xff] %vm421, %v408
  %425 = vst.msk [vmem:[%s3 + $0x18] sm:$0xff] %vm421, %v411
  %426 = vst.msk [vmem:[%s3 + $0x20] sm:$0xff] %vm421, %v416
  // Predicated region
  $region14: #{cnn_encoder_forward.30} parent=0 // pred_check
    _
  $region15: #{cnn_encoder_forward.30} parent=0 // pred_check_branch
    %428 = sbr.rel (0) target = $region17
  $region16: #{cnn_encoder_forward.30} parent=0 // pred_region
    _
  $region17: #{cnn_encoder_forward.30} parent=0 // pred_fallthru
    _
  // Predicated region
  $region18: #{cnn_encoder_forward.30} parent=0 // pred_check
    _
  $region19: #{cnn_encoder_forward.30} parent=0 // pred_check_branch
    %430 = sbr.rel (0) target = $region21
  $region20: #{cnn_encoder_forward.30} parent=0 // pred_region
    _
  $region21: #{cnn_encoder_forward.30} parent=0 // pred_fallthru
    _

// kernel: tile.63
$region0: #{tile.63}
  #allocation0 [shape = 's32[1]{0}', space=sflag, size = 0x4, scoped, tag = 'scoped memory for tile.63']
  %s0 = inlined_call_operand.vmem [shape: f32[32], index: 0, kind: input, shape index: {}]
  %s1 = inlined_call_operand.vmem [shape: f32[16,32], index: 1, kind: output, shape index: {}]
  // Predicated region
  $region2: #{tile.63} parent=0 // pred_check
    _
  $region3: #{tile.63} parent=0 // pred_check_branch
    %3 = sbr.rel (0) target = $region5
  $region4: #{tile.63} parent=0 // pred_region
    _
  $region5: #{tile.63} parent=0 // pred_fallthru
    _
  %v4 = vld [vmem:[%s0] ss:$0 sm:$0xff]
  %5 = vst [vmem:[%s1] sm:$0xff] %v4
  %s6 = scalar_lea.vmem %s1, 8
  %7 = vst [vmem:[%s6] sm:$0xff] %v4

// kernel: tile.64
$region0: #{tile.64}
  %s0 = inlined_call_operand.vmem [shape: f32[16,32], index: 0, kind: input, shape index: {}]
  %s1 = inlined_call_operand.vmem [shape: f32[1,512], index: 1, kind: output, shape index: {}]
  $region1: #{tile.64} parent=0
    #allocation0 [shape = 'u8[16384]{0}', space=vmem, size = 0x4000, scoped, tag = 'scoped mem for output reshape']
    %v2 = vld [vmem:[%s0] ss:$4 sm:$0xf]
    %vm3 = vcmask 261120
    %4 = vst.msk [vmem:[#allocation0] ss:$8 sm:$0xf] %vm3, %v2
    %s5 = scalar_lea.vmem %s0, 3
    %v6 = vld [vmem:[%s5] ss:$4 sm:$0xf]
    %7 = vrot.lane.b32.xlu0 %v6, 96
    %v8 = vpop.permute.xlu0 %7
    %vm9 = vcmask 1048320
    %10 = vst.msk [vmem:[#allocation0] ss:$8 sm:$0xf] %vm9, %v8
    %s11 = scalar_lea.vmem %s0, 2
    %v12 = vld [vmem:[%s11] ss:$4 sm:$0xf]
    %13 = vrot.lane.b32.xlu0 %v12, 64
    %v14 = vpop.permute.xlu0 %13
    %vm15 = vcmask 785920
    %16 = vst.msk [vmem:[#allocation0] ss:$8 sm:$0xf] %vm15, %v14
    %s17 = scalar_lea.vmem %s0, 1
    %v18 = vld [vmem:[%s17] ss:$4 sm:$0xf]
    %19 = vrot.lane.b32.xlu0 %v18, 32
    %v20 = vpop.permute.xlu0 %19
    %vm21 = vcmask 523520
    %22 = vst.msk [vmem:[#allocation0] ss:$8 sm:$0xf] %vm21, %v20
    %s24 = sshllo.u32 0, 1
    %v26 = vld [vmem:[#allocation0] sm:%s24]
    %s27 = sshllo.u32 0, 1
    %28 = vst [vmem:[%s1] sm:%s27] %v26
    %s29 = scalar_lea.vmem [#allocation0], 8
    %v30 = vld [vmem:[%s29] sm:%s24]
    %s31 = sshllo.u32 0, 1
    %s32 = scalar_lea.vmem %s1, 1
    %33 = vst [vmem:[%s32] sm:%s31] %v30
    %s34 = scalar_lea.vmem [#allocation0], 16
    %v35 = vld [vmem:[%s34] sm:%s24]
    %s36 = sshllo.u32 0, 1
    %s37 = smul.addr 1, 2
    %s38 = scalar_lea.vmem %s1, %s37
    %39 = vst [vmem:[%s38] sm:%s36] %v35
    %s40 = scalar_lea.vmem [#allocation0], 24
    %v41 = vld [vmem:[%s40] sm:%s24]
    %s42 = sshllo.u32 0, 1
    %s43 = smul.addr 1, 3
    %s44 = scalar_lea.vmem %s1, %s43
    %45 = vst [vmem:[%s44] sm:%s42] %v41

// kernel: cnn_encoder_forward.44
$region0: #{cnn_encoder_forward.44}
  #allocation0 [shape = 'u32[]', space=smem, size = 0x4, offset = 0x4, fixed_abs, tag = 'smem constant byte address 0x4 - core index']
  #allocation1 [shape = 'u32[144,128]{1,0:T(1,128)}', space=vmem, size = 0x12000, scoped, tag = 'internal scratch']
  %s0 = inlined_call_operand.vmem [shape: bf16[40,432], index: 0, kind: input, shape index: {}]
  %s1 = inlined_call_operand.vmem [shape: bf16[432,32], index: 1, kind: input, shape index: {}]
  %s2 = inlined_call_operand.vmem [shape: f32[40,32], index: 2, kind: output, shape index: {0}]
  %s3 = inlined_call_operand.vmem [shape: f32[1,2,32], index: 3, kind: output, shape index: {1}]
  %4 = xla_tuple %s2, %s3
  %s5 = sld [smem:[#allocation0]]
  $region26: #{cnn_encoder_forward.44} parent=0
    _
  %s7 = ssub.s32 1, %s5
  %s8 = scalar_select 0, %s7, %s5
  // Predicated region
  $region2: #{cnn_encoder_forward.44} parent=0 // pred_check
    _
  $region3: #{cnn_encoder_forward.44} parent=0 // pred_check_branch
    %10 = sbr.rel (0) target = $region5
  $region4: #{cnn_encoder_forward.44} parent=0 // pred_region
    _
  $region5: #{cnn_encoder_forward.44} parent=0 // pred_fallthru
    _
  // Predicated region
  $region6: #{cnn_encoder_forward.44} parent=0 // pred_check
    _
  $region7: #{cnn_encoder_forward.44} parent=0 // pred_check_branch
    %12 = sbr.rel (0) target = $region9
  $region8: #{cnn_encoder_forward.44} parent=0 // pred_region
    _
  $region9: #{cnn_encoder_forward.44} parent=0 // pred_fallthru
    _
  %v14 = vld [vmem:[%s0] sm:$0xff]
  %v15 = vld [vmem:[%s0 + $0x8] sm:$0xff]
  %v16 = vld [vmem:[%s0 + $0x10] sm:$0xff]
  %v17 = vld [vmem:[%s0 + $0x18] sm:$0xff]
  %v18 = vld [vmem:[%s0 + $0x20] sm:$0xff]
  %v19 = vld [vmem:[%s0 + $0x28] sm:$0xff]
  %v20 = vld [vmem:[%s0 + $0x30] sm:$0xff]
  %v21 = vld [vmem:[%s0 + $0x38] sm:$0xff]
  %v22 = vld [vmem:[%s0 + $0x40] sm:$0xff]
  %v23 = vld [vmem:[%s0 + $0x48] sm:$0xff]
  %v24 = vld [vmem:[%s1] sm:$0xf]
  %v25 = vld [vmem:[%s1 + $0x4] sm:$0xf]
  %v26 = vld [vmem:[%s1 + $0x8] sm:$0xf]
  %v27 = vld [vmem:[%s1 + $0xc] sm:$0xf]
  %v28 = vld [vmem:[%s1 + $0x10] sm:$0xf]
  %v29 = vld [vmem:[%s1 + $0x14] sm:$0xf]
  %v30 = vld [vmem:[%s1 + $0x18] sm:$0xf]
  %v31 = vld [vmem:[%s1 + $0x1c] sm:$0xf]
  %v32 = vld [vmem:[%s1 + $0x20] sm:$0xf]
  %v33 = vld [vmem:[%s1 + $0x24] sm:$0xf]
  %v34 = vld [vmem:[%s1 + $0x28] sm:$0xf]
  %v35 = vld [vmem:[%s1 + $0x2c] sm:$0xf]
  %v36 = vld [vmem:[%s1 + $0x30] sm:$0xf]
  %v37 = vld [vmem:[%s1 + $0x34] sm:$0xf]
  %v38 = vld [vmem:[%s1 + $0x38] sm:$0xf]
  %v39 = vld [vmem:[%s1 + $0x3c] sm:$0xf]
  %v40 = vld [vmem:[%s1 + $0x40] sm:$0xf]
  %v41 = vld [vmem:[%s1 + $0x44] sm:$0xf]
  %v42 = vld [vmem:[%s1 + $0x48] sm:$0xf]
  %v43 = vld [vmem:[%s1 + $0x4c] sm:$0xf]
  %v44 = vld [vmem:[%s1 + $0x50] sm:$0xf]
  %v45 = vld [vmem:[%s1 + $0x54] sm:$0xf]
  %v46 = vld [vmem:[%s1 + $0x58] sm:$0xf]
  %v47 = vld [vmem:[%s1 + $0x5c] sm:$0xf]
  %v48 = vld [vmem:[%s1 + $0x60] sm:$0xf]
  %v49 = vld [vmem:[%s1 + $0x64] sm:$0xf]
  %v50 = vld [vmem:[%s1 + $0x68] sm:$0xf]
  %v51 = vld [vmem:[%s1 + $0x6c] sm:$0xf]
  %v52 = vld [vmem:[%s1 + $0x70] sm:$0xf]
  %v53 = vld [vmem:[%s1 + $0x74] sm:$0xf]
  %v54 = vld [vmem:[%s1 + $0x78] sm:$0xf]
  %v55 = vld [vmem:[%s1 + $0x7c] sm:$0xf]
  %v56 = vld [vmem:[%s1 + $0x80] sm:$0xf]
  %v57 = vld [vmem:[%s1 + $0x84] sm:$0xf]
  %v58 = vld [vmem:[%s1 + $0x88] sm:$0xf]
  %v59 = vld [vmem:[%s1 + $0x8c] sm:$0xf]
  %v60 = vld [vmem:[%s1 + $0x90] sm:$0xf]
  %v61 = vld [vmem:[%s1 + $0x94] sm:$0xf]
  %v62 = vld [vmem:[%s1 + $0x98] sm:$0xf]
  %v63 = vld [vmem:[%s1 + $0x9c] sm:$0xf]
  %v64 = vld [vmem:[%s1 + $0xa0] sm:$0xf]
  %v65 = vld [vmem:[%s1 + $0xa4] sm:$0xf]
  %v66 = vld [vmem:[%s1 + $0xa8] sm:$0xf]
  %v67 = vld [vmem:[%s1 + $0xac] sm:$0xf]
  %v68 = vld [vmem:[%s1 + $0xb0] sm:$0xf]
  %v69 = vld [vmem:[%s1 + $0xb4] sm:$0xf]
  %v70 = vld [vmem:[%s1 + $0xb8] sm:$0xf]
  %v71 = vld [vmem:[%s1 + $0xbc] sm:$0xf]
  %v72 = vld [vmem:[%s1 + $0xc0] sm:$0xf]
  %v73 = vld [vmem:[%s1 + $0xc4] sm:$0xf]
  %v74 = vld [vmem:[%s1 + $0xc8] sm:$0xf]
  %v75 = vld [vmem:[%s1 + $0xcc] sm:$0xf]
  %v76 = vld [vmem:[%s1 + $0xd0] sm:$0xf]
  %v77 = vld [vmem:[%s1 + $0xd4] sm:$0xf]
  %v88 = vunpack.c.l.b16 %v14
  %v89 = vunpack.c.h.b16 %v14
  %v90 = vunpack.c.l.b16 %v15
  %v91 = vunpack.c.h.b16 %v15
  %v92 = vunpack.c.l.b16 %v16
  %v93 = vunpack.c.h.b16 %v16
  %v94 = vunpack.c.l.b16 %v17
  %v95 = vunpack.c.h.b16 %v17
  %v96 = vunpack.c.l.b16 %v18
  %v97 = vunpack.c.h.b16 %v18
  %v98 = vunpack.c.l.b16 %v19
  %v99 = vunpack.c.h.b16 %v19
  %v100 = vunpack.c.l.b16 %v20
  %v101 = vunpack.c.h.b16 %v20
  %v102 = vunpack.c.l.b16 %v21
  %v103 = vunpack.c.h.b16 %v21
  %v104 = vunpack.c.l.b16 %v22
  %v105 = vunpack.c.h.b16 %v22
  %v106 = vunpack.c.l.b16 %v23
  %v107 = vunpack.c.h.b16 %v23
  %v108 = vpack.c.b16 %v92, %v88
  %v109 = vpack.c.b16 %v93, %v89
  %v110 = vpack.c.b16 %v94, %v90
  %v111 = vpack.c.b16 %v95, %v91
  %v112 = vpack.c.b16 %v100, %v96
  %v113 = vpack.c.b16 %v101, %v97
  %v114 = vpack.c.b16 %v102, %v98
  %v115 = vpack.c.b16 %v103, %v99
  %v116 = vpack.c.b16 %v104, %v104
  %v117 = vpack.c.b16 %v105, %v105
  %v118 = vpack.c.b16 %v106, %v106
  %v119 = vpack.c.b16 %v107, %v107
  %v183 = vunpack.c.l.b16 %v24
  %v184 = vunpack.c.l.b16 %v25
  %v185 = vunpack.c.l.b16 %v26
  %v186 = vunpack.c.l.b16 %v27
  %v187 = vunpack.c.l.b16 %v28
  %v188 = vunpack.c.l.b16 %v29
  %v189 = vunpack.c.l.b16 %v30
  %v190 = vunpack.c.l.b16 %v31
  %v191 = vunpack.c.l.b16 %v32
  %v192 = vunpack.c.l.b16 %v33
  %v193 = vunpack.c.l.b16 %v34
  %v194 = vunpack.c.l.b16 %v35
  %v195 = vunpack.c.l.b16 %v36
  %v196 = vunpack.c.l.b16 %v37
  %v197 = vunpack.c.l.b16 %v38
  %v198 = vunpack.c.l.b16 %v39
  %v199 = vunpack.c.l.b16 %v40
  %v200 = vunpack.c.l.b16 %v41
  %v201 = vunpack.c.l.b16 %v42
  %v202 = vunpack.c.l.b16 %v43
  %v203 = vunpack.c.l.b16 %v44
  %v204 = vunpack.c.l.b16 %v45
  %v205 = vunpack.c.l.b16 %v46
  %v206 = vunpack.c.l.b16 %v47
  %v207 = vunpack.c.l.b16 %v48
  %v208 = vunpack.c.l.b16 %v49
  %v209 = vunpack.c.l.b16 %v50
  %v210 = vunpack.c.l.b16 %v51
  %v211 = vunpack.c.l.b16 %v52
  %v212 = vunpack.c.l.b16 %v53
  %v213 = vunpack.c.l.b16 %v54
  %v214 = vunpack.c.l.b16 %v55
  %v215 = vunpack.c.l.b16 %v56
  %v216 = vunpack.c.l.b16 %v57
  %v217 = vunpack.c.l.b16 %v58
  %v218 = vunpack.c.l.b16 %v59
  %v219 = vunpack.c.l.b16 %v60
  %v220 = vunpack.c.l.b16 %v61
  %v221 = vunpack.c.l.b16 %v62
  %v222 = vunpack.c.l.b16 %v63
  %v223 = vunpack.c.l.b16 %v64
  %v224 = vunpack.c.l.b16 %v65
  %v225 = vunpack.c.l.b16 %v66
  %v226 = vunpack.c.l.b16 %v67
  %v227 = vunpack.c.l.b16 %v68
  %v228 = vunpack.c.l.b16 %v69
  %v229 = vunpack.c.l.b16 %v70
  %v230 = vunpack.c.l.b16 %v71
  %v231 = vunpack.c.l.b16 %v72
  %v232 = vunpack.c.l.b16 %v73
  %v233 = vunpack.c.l.b16 %v74
  %v234 = vunpack.c.l.b16 %v75
  %v235 = vunpack.c.l.b16 %v76
  %v236 = vunpack.c.l.b16 %v77
  %v237 = vpack.c.b16 %v184, %v183
  %v238 = vpack.c.b16 %v186, %v185
  %v239 = vpack.c.b16 %v188, %v187
  %v240 = vpack.c.b16 %v190, %v189
  %v241 = vpack.c.b16 %v192, %v191
  %v242 = vpack.c.b16 %v194, %v193
  %v243 = vpack.c.b16 %v196, %v195
  %v244 = vpack.c.b16 %v198, %v197
  %v245 = vpack.c.b16 %v200, %v199
  %v246 = vpack.c.b16 %v202, %v201
  %v247 = vpack.c.b16 %v204, %v203
  %v248 = vpack.c.b16 %v206, %v205
  %v249 = vpack.c.b16 %v208, %v207
  %v250 = vpack.c.b16 %v210, %v209
  %v251 = vpack.c.b16 %v212, %v211
  %v252 = vpack.c.b16 %v214, %v213
  %v253 = vpack.c.b16 %v216, %v215
  %v254 = vpack.c.b16 %v218, %v217
  %v255 = vpack.c.b16 %v220, %v219
  %v256 = vpack.c.b16 %v222, %v221
  %v257 = vpack.c.b16 %v224, %v223
  %v258 = vpack.c.b16 %v226, %v225
  %v259 = vpack.c.b16 %v228, %v227
  %v260 = vpack.c.b16 %v230, %v229
  %v261 = vpack.c.b16 %v232, %v231
  %v262 = vpack.c.b16 %v234, %v233
  %v263 = vpack.c.b16 %v236, %v235
  %vm291 = vcmask 392192
  %v293 = vsel %vm291, %v111, 0
  %v296 = vsel %vm291, %v115, 0
  %v299 = vsel %vm291, %v119, 0
  %301 = vmatprep.subr.bf16.mxu0 0
  %302 = vmatpush1.bf16.msra.mxu0 %v237
  %303 = vmatprep.subr.bf16.mxu0 0
  %304 = vmatpush1.bf16.msra.mxu0 %v238
  %305 = vmatprep.subr.bf16.mxu0 0
  %306 = vmatpush1.bf16.msra.mxu0 %v239
  %307 = vmatprep.subr.bf16.mxu0 0
  %308 = vmatpush1.bf16.msra.mxu0 %v240
  %309 = vmatprep.subr.bf16.mxu0 0
  %310 = vmatpush1.bf16.msra.mxu0 %v241
  %311 = vmatprep.subr.bf16.mxu0 0
  %312 = vmatpush1.bf16.msra.mxu0 %v242
  %313 = vmatprep.subr.bf16.mxu0 0
  %314 = vmatpush1.bf16.msra.mxu0 %v243
  %315 = vmatprep.subr.bf16.mxu0 0
  %316 = vmatpush1.bf16.msra.mxu0 %v244
  %317 = vmatprep.subr.bf16.mxu0 0
  %318 = vmatpush1.bf16.msra.mxu0 %v245
  %319 = vmatprep.subr.bf16.mxu0 0
  %320 = vmatpush1.bf16.msra.mxu0 %v246
  %321 = vmatprep.subr.bf16.mxu0 0
  %322 = vmatpush1.bf16.msra.mxu0 %v247
  %323 = vmatprep.subr.bf16.mxu0 0
  %324 = vmatpush1.bf16.msra.mxu0 %v248
  %325 = vmatprep.subr.bf16.mxu0 0
  %326 = vmatpush1.bf16.msra.mxu0 %v249
  %327 = vmatprep.subr.bf16.mxu0 0
  %328 = vmatpush1.bf16.msra.mxu0 %v250
  %329 = vmatprep.subr.bf16.mxu0 0
  %330 = vmatpush1.bf16.msra.mxu0 %v251
  %331 = vmatprep.subr.bf16.mxu0 0
  %332 = vmatpush1.bf16.msra.mxu0 %v252
  %333 = vmatprep.mubr.bf16.mxu0 %v109
  %334 = vmatmul.mubr.bf16.gmra.mrb[0].mxu0 %v108
  %v335 = vpop.f32.mrb[0].mxu0
  %v336 = vadd.f32 0.0, %v335
  %v337 = vpop.f32.mrb[0].mxu0
  %v338 = vpop.f32.mrb[0].mxu0
  %v339 = vadd.f32 0.0, %v338
  %v340 = vpop.f32.mrb[0].mxu0
  %341 = vmatprep.mubr.bf16.mxu0 %v113
  %342 = vmatmul.mubr.bf16.gmra.mrb[0].mxu0 %v112
  %v343 = vpop.f32.mrb[0].mxu0
  %v344 = vadd.f32 0.0, %v343
  %v345 = vpop.f32.mrb[0].mxu0
  %v346 = vpop.f32.mrb[0].mxu0
  %v347 = vadd.f32 0.0, %v346
  %v348 = vpop.f32.mrb[0].mxu0
  %349 = vmatprep.mubr.bf16.mxu0 %v117
  %350 = vmatmul.mubr.bf16.gmra.mrb[0].mxu0 %v116
  %v351 = vpop.f32.mrb[0].mxu0
  %v352 = vadd.f32 0.0, %v351
  %v353 = vpop.f32.mrb[0].mxu0
  %v354 = vpop.f32.mrb[0].mxu0
  %v355 = vpop.f32.mrb[0].mxu0
  %356 = vdwg.mxu0
  %357 = vmatprep.subr.bf16.mxu0 0
  %358 = vmatpush1.bf16.msra.mxu0 %v253
  %359 = vmatprep.subr.bf16.mxu0 0
  %360 = vmatpush1.bf16.msra.mxu0 %v254
  %361 = vmatprep.subr.bf16.mxu0 0
  %362 = vmatpush1.bf16.msra.mxu0 %v255
  %363 = vmatprep.subr.bf16.mxu0 0
  %364 = vmatpush1.bf16.msra.mxu0 %v256
  %365 = vmatprep.subr.bf16.mxu0 0
  %366 = vmatpush1.bf16.msra.mxu0 %v257
  %367 = vmatprep.subr.bf16.mxu0 0
  %368 = vmatpush1.bf16.msra.mxu0 %v258
  %369 = vmatprep.subr.bf16.mxu0 0
  %370 = vmatpush1.bf16.msra.mxu0 %v259
  %371 = vmatprep.subr.bf16.mxu0 0
  %372 = vmatpush1.bf16.msra.mxu0 %v260
  %373 = vmatprep.subr.bf16.mxu0 0
  %374 = vmatpush1.bf16.msra.mxu0 %v261
  %375 = vmatprep.subr.bf16.mxu0 0
  %376 = vmatpush1.bf16.msra.mxu0 %v262
  %377 = vmatprep.subr.bf16.mxu0 0
  %378 = vmatpush1.bf16.msra.mxu0 %v263
  %379 = vmatprep.subr.bf16.mxu0 0
  %380 = vmatpush1.bf16.msra.mxu0 0
  %381 = vmatprep.subr.bf16.mxu0 0
  %382 = vmatpush1.bf16.msra.mxu0 0
  %383 = vmatprep.subr.bf16.mxu0 0
  %384 = vmatpush1.bf16.msra.mxu0 0
  %385 = vmatprep.subr.bf16.mxu0 0
  %386 = vmatpush1.bf16.msra.mxu0 0
  %387 = vmatprep.subr.bf16.mxu0 0
  %388 = vmatpush1.bf16.msra.mxu0 0
  %389 = vmatprep.mubr.bf16.mxu0 %v293
  %390 = vmatmul.mubr.bf16.gmra.mrb[0].mxu0 %v110
  %v391 = vpop.f32.mrb[0].mxu0
  %v392 = vadd.f32 %v336, %v391
  %v393 = vpop.f32.mrb[0].mxu0
  %v394 = vpop.f32.mrb[0].mxu0
  %v395 = vadd.f32 %v339, %v394
  %v396 = vpop.f32.mrb[0].mxu0
  %397 = vmatprep.mubr.bf16.mxu0 %v296
  %398 = vmatmul.mubr.bf16.gmra.mrb[0].mxu0 %v114
  %v399 = vpop.f32.mrb[0].mxu0
  %v400 = vadd.f32 %v344, %v399
  %v401 = vpop.f32.mrb[0].mxu0
  %v402 = vpop.f32.mrb[0].mxu0
  %v403 = vadd.f32 %v347, %v402
  %v404 = vpop.f32.mrb[0].mxu0
  %405 = vmatprep.mubr.bf16.mxu0 %v299
  %406 = vmatmul.mubr.bf16.gmra.mrb[0].mxu0 %v118
  %v407 = vpop.f32.mrb[0].mxu0
  %v408 = vadd.f32 %v352, %v407
  %v409 = vpop.f32.mrb[0].mxu0
  %v410 = vpop.f32.mrb[0].mxu0
  %v411 = vpop.f32.mrb[0].mxu0
  %412 = vdwg.mxu0
  %vm413 = vcmask 261120
  %414 = vst.msk [vmem:[%s2] sm:$0xff] %vm413, %v392
  %415 = vst.msk [vmem:[%s2 + $0x8] sm:$0xff] %vm413, %v395
  %416 = vst.msk [vmem:[%s2 + $0x10] sm:$0xff] %vm413, %v400
  %417 = vst.msk [vmem:[%s2 + $0x18] sm:$0xff] %vm413, %v403
  %418 = vst.msk [vmem:[%s2 + $0x20] sm:$0xff] %vm413, %v408
  %v419 = vsel %vm413, %v392, 0.0
  %v420 = vsel %vm413, %v395, 0.0
  %v421 = vadd.f32 %v419, %v420
  %v422 = vsel %vm413, %v400, 0.0
  %v423 = vadd.f32 %v421, %v422
  %v424 = vsel %vm413, %v403, 0.0
  %v425 = vadd.f32 %v423, %v424
  %v426 = vsel %vm413, %v408, 0.0
  %v427 = vadd.f32 %v425, %v426
  %v428 = vrot.slane %v427, 4
  %v429 = vadd.f32 %v427, %v428
  %v430 = vrot.slane %v429, 2
  %v431 = vadd.f32 %v429, %v430
  %v432 = vrot.slane %v431, 1
  %v433 = vadd.f32 %v431, %v432
  %v434 = vmul.f32 %v392, %v392
  %v435 = vmul.f32 %v395, %v395
  %v436 = vmul.f32 %v400, %v400
  %v437 = vmul.f32 %v403, %v403
  %v438 = vmul.f32 %v408, %v408
  %v439 = vsel %vm413, %v434, 0.0
  %v440 = vsel %vm413, %v435, 0.0
  %v441 = vadd.f32 %v439, %v440
  %v442 = vsel %vm413, %v436, 0.0
  %v443 = vadd.f32 %v441, %v442
  %v444 = vsel %vm413, %v437, 0.0
  %v445 = vadd.f32 %v443, %v444
  %v446 = vsel %vm413, %v438, 0.0
  %v447 = vadd.f32 %v445, %v446
  %v448 = vrot.slane %v447, 4
  %v449 = vadd.f32 %v447, %v448
  %v450 = vrot.slane %v449, 2
  %v451 = vadd.f32 %v449, %v450
  %v452 = vrot.slane %v451, 1
  %v453 = vadd.f32 %v451, %v452
  %vm454 = vcmask 1040384
  %v455 = vsel %vm454, %v433, %v453
  %vm456 = vcmask 254976
  %457 = vst.msk [vmem:[%s3] sm:$0x3] %vm456, %v455
  // Predicated region
  $region10: #{cnn_encoder_forward.44} parent=0 // pred_check
    _
  $region11: #{cnn_encoder_forward.44} parent=0 // pred_check_branch
    %459 = sbr.rel (0) target = $region13
  $region12: #{cnn_encoder_forward.44} parent=0 // pred_region
    _
  $region13: #{cnn_encoder_forward.44} parent=0 // pred_fallthru
    _
  // Predicated region
  $region14: #{cnn_encoder_forward.44} parent=0 // pred_check
    _
  $region15: #{cnn_encoder_forward.44} parent=0 // pred_check_branch
    %461 = sbr.rel (0) target = $region17
  $region16: #{cnn_encoder_forward.44} parent=0 // pred_region
    _
  $region17: #{cnn_encoder_forward.44} parent=0 // pred_fallthru
    _
  // Predicated region
  $region18: #{cnn_encoder_forward.44} parent=0 // pred_check
    _
  $region19: #{cnn_encoder_forward.44} parent=0 // pred_check_branch
    %463 = sbr.rel (0) target = $region21
  $region20: #{cnn_encoder_forward.44} parent=0 // pred_region
    _
  $region21: #{cnn_encoder_forward.44} parent=0 // pred_fallthru
    _
  // Predicated region
  $region22: #{cnn_encoder_forward.44} parent=0 // pred_check
    _
  $region23: #{cnn_encoder_forward.44} parent=0 // pred_check_branch
    %465 = sbr.rel (0) target = $region25
  $region24: #{cnn_encoder_forward.44} parent=0 // pred_region
    _
  $region25: #{cnn_encoder_forward.44} parent=0 // pred_fallthru
    _

// kernel: cnn_encoder_forward.45
$region0: #{cnn_encoder_forward.45}
  #allocation0 [shape = 'u32[]', space=smem, size = 0x4, offset = 0x4, fixed_abs, tag = 'smem constant byte address 0x4 - core index']
  #allocation1 [shape = 'u32[144,128]{1,0:T(1,128)}', space=vmem, size = 0x12000, scoped, tag = 'internal scratch']
  %s0 = inlined_call_operand.vmem [shape: f32[8,512], index: 0, kind: input, shape index: {}]
  %s1 = inlined_call_operand.vmem [shape: f32[1,512], index: 1, kind: input, shape index: {}]
  %s2 = inlined_call_operand.vmem [shape: f32[1,512], index: 2, kind: input, shape index: {}]
  %s3 = inlined_call_operand.vmem [shape: f32[8,32], index: 3, kind: output, shape index: {}]
  %s4 = sld [smem:[#allocation0]]
  $region22: #{cnn_encoder_forward.45} parent=0
    _
  %s6 = ssub.s32 1, %s4
  %s7 = scalar_select 0, %s6, %s4
  // Predicated region
  $region2: #{cnn_encoder_forward.45} parent=0 // pred_check
    _
  $region3: #{cnn_encoder_forward.45} parent=0 // pred_check_branch
    %9 = sbr.rel (0) target = $region5
  $region4: #{cnn_encoder_forward.45} parent=0 // pred_region
    _
  $region5: #{cnn_encoder_forward.45} parent=0 // pred_fallthru
    _
  // Predicated region
  $region6: #{cnn_encoder_forward.45} parent=0 // pred_check
    _
  $region7: #{cnn_encoder_forward.45} parent=0 // pred_check_branch
    %11 = sbr.rel (0) target = $region9
  $region8: #{cnn_encoder_forward.45} parent=0 // pred_region
    _
  $region9: #{cnn_encoder_forward.45} parent=0 // pred_fallthru
    _
  // Predicated region
  $region10: #{cnn_encoder_forward.45} parent=0 // pred_check
    _
  $region11: #{cnn_encoder_forward.45} parent=0 // pred_check_branch
    %13 = sbr.rel (0) target = $region13
  $region12: #{cnn_encoder_forward.45} parent=0 // pred_region
    _
  $region13: #{cnn_encoder_forward.45} parent=0 // pred_fallthru
    _
  %v14 = vld [vmem:[%s0] sm:$0xff]
  %v15 = vld [vmem:[%s0 + $0x8] sm:$0xff]
  %v16 = vld [vmem:[%s0 + $0x10] sm:$0xff]
  %v17 = vld [vmem:[%s0 + $0x18] sm:$0xff]
  %v18 = vld [vmem:[%s1] sm:$0xf]
  %v20 = vlaneseq
  %v21 = vshrl.u32 %v20, 7
  %v22 = vsub.s32 0, %v21
  %v23 = vrot.slane %v18, %v22
  %v24 = vlaneseq
  %v25 = vshrl.u32 %v24, 7
  %v26 = vsub.s32 1, %v25
  %v27 = vrot.slane %v18, %v26
  %v28 = vlaneseq
  %v29 = vshrl.u32 %v28, 7
  %v30 = vsub.s32 2, %v29
  %v31 = vrot.slane %v18, %v30
  %v32 = vlaneseq
  %v33 = vshrl.u32 %v32, 7
  %v34 = vsub.s32 3, %v33
  %v35 = vrot.slane %v18, %v34
  %v40 = vmul.f32 %v14, %v23
  %v41 = vmul.f32 %v15, %v27
  %v42 = vmul.f32 %v16, %v31
  %v43 = vmul.f32 %v17, %v35
  %v44 = vld [vmem:[%s2] sm:$0xf]
  %v46 = vlaneseq
  %v47 = vshrl.u32 %v46, 7
  %v48 = vsub.s32 0, %v47
  %v49 = vrot.slane %v44, %v48
  %v50 = vlaneseq
  %v51 = vshrl.u32 %v50, 7
  %v52 = vsub.s32 1, %v51
  %v53 = vrot.slane %v44, %v52
  %v54 = vlaneseq
  %v55 = vshrl.u32 %v54, 7
  %v56 = vsub.s32 2, %v55
  %v57 = vrot.slane %v44, %v56
  %v58 = vlaneseq
  %v59 = vshrl.u32 %v58, 7
  %v60 = vsub.s32 3, %v59
  %v61 = vrot.slane %v44, %v60
  %v66 = vadd.f32 %v40, %v49
  %v67 = vadd.f32 %v41, %v53
  %v68 = vadd.f32 %v42, %v57
  %v69 = vadd.f32 %v43, %v61
  %v70 = vmax.f32 %v66, 0.0
  %v71 = vmax.f32 %v67, 0.0
  %v72 = vmax.f32 %v68, 0.0
  %v73 = vmax.f32 %v69, 0.0
  %vm74 = vcmp.le.f32.partialorder %v14, -5e+29
  %vm75 = vcmp.le.f32.partialorder %v15, -5e+29
  %vm76 = vcmp.le.f32.partialorder %v16, -5e+29
  %vm77 = vcmp.le.f32.partialorder %v17, -5e+29
  %v78 = vsel %vm74, 0.0, %v70
  %v79 = vsel %vm75, 0.0, %v71
  %v80 = vsel %vm76, 0.0, %v72
  %v81 = vsel %vm77, 0.0, %v73
  %83 = vrot.lane.b32.xlu0 %v78, 96
  %v84 = vpop.permute.xlu0 %83
  %v86 = vmax.f32 %v78, %v84
  %87 = vrot.lane.b32.xlu0 %v78, 64
  %v88 = vpop.permute.xlu0 %87
  %v90 = vmax.f32 %v86, %v88
  %91 = vrot.lane.b32.xlu0 %v78, 32
  %v92 = vpop.permute.xlu0 %91
  %v94 = vmax.f32 %v90, %v92
  %v95 = vmax.f32 %v94, %v79
  %97 = vrot.lane.b32.xlu0 %v79, 96
  %v98 = vpop.permute.xlu0 %97
  %v100 = vmax.f32 %v95, %v98
  %101 = vrot.lane.b32.xlu0 %v79, 64
  %v102 = vpop.permute.xlu0 %101
  %v104 = vmax.f32 %v100, %v102
  %105 = vrot.lane.b32.xlu0 %v79, 32
  %v106 = vpop.permute.xlu0 %105
  %v108 = vmax.f32 %v104, %v106
  %v109 = vmax.f32 %v108, %v80
  %111 = vrot.lane.b32.xlu0 %v80, 96
  %v112 = vpop.permute.xlu0 %111
  %v114 = vmax.f32 %v109, %v112
  %115 = vrot.lane.b32.xlu0 %v80, 64
  %v116 = vpop.permute.xlu0 %115
  %v118 = vmax.f32 %v114, %v116
  %119 = vrot.lane.b32.xlu0 %v80, 32
  %v120 = vpop.permute.xlu0 %119
  %v122 = vmax.f32 %v118, %v120
  %v123 = vmax.f32 %v122, %v81
  %125 = vrot.lane.b32.xlu0 %v81, 96
  %v126 = vpop.permute.xlu0 %125
  %v128 = vmax.f32 %v123, %v126
  %129 = vrot.lane.b32.xlu0 %v81, 64
  %v130 = vpop.permute.xlu0 %129
  %v132 = vmax.f32 %v128, %v130
  %133 = vrot.lane.b32.xlu0 %v81, 32
  %v134 = vpop.permute.xlu0 %133
  %v136 = vmax.f32 %v132, %v134
  %vm137 = vcmask 261120
  %138 = vst.msk [vmem:[%s3] sm:$0xff] %vm137, %v136
  // Predicated region
  $region14: #{cnn_encoder_forward.45} parent=0 // pred_check
    _
  $region15: #{cnn_encoder_forward.45} parent=0 // pred_check_branch
    %140 = sbr.rel (0) target = $region17
  $region16: #{cnn_encoder_forward.45} parent=0 // pred_region
    _
  $region17: #{cnn_encoder_forward.45} parent=0 // pred_fallthru
    _
  // Predicated region
  $region18: #{cnn_encoder_forward.45} parent=0 // pred_check
    _
  $region19: #{cnn_encoder_forward.45} parent=0 // pred_check_branch
    %142 = sbr.rel (0) target = $region21
  $region20: #{cnn_encoder_forward.45} parent=0 // pred_region
    _
  $region21: #{cnn_encoder_forward.45} parent=0 // pred_fallthru
    _

// kernel: tile.73
$region0: #{tile.73}
  #allocation0 [shape = 's32[1]{0}', space=sflag, size = 0x4, scoped, tag = 'scoped memory for tile.73']
  %s0 = inlined_call_operand.vmem [shape: f32[64], index: 0, kind: input, shape index: {}]
  %s1 = inlined_call_operand.vmem [shape: f32[2,64], index: 1, kind: output, shape index: {}]
  // Predicated region
  $region2: #{tile.73} parent=0 // pred_check
    _
  $region3: #{tile.73} parent=0 // pred_check_branch
    %3 = sbr.rel (0) target = $region5
  $region4: #{tile.73} parent=0 // pred_region
    _
  $region5: #{tile.73} parent=0 // pred_fallthru
    _
  %v4 = vld [vmem:[%s0] ss:$0 sm:$0xff]
  %5 = vst [vmem:[%s1] sm:$0x3] %v4

// kernel: tile.74
$region0: #{tile.74}
  %s0 = inlined_call_operand.vmem [shape: f32[2,64], index: 0, kind: input, shape index: {}]
  %s1 = inlined_call_operand.vmem [shape: f32[1,128], index: 1, kind: output, shape index: {}]
  $region1: #{tile.74} parent=0
    #allocation0 [shape = 'u8[4096]{0}', space=vmem, size = 0x1000, scoped, tag = 'scoped mem for output reshape']
    #allocation1 [shape = 'u8[4096]{0}', space=vmem, size = 0x1000, scoped, tag = 'scoped mem for input reshape']
    %s3 = sshllo.u32 0, 2
    %v4 = vld [vmem:[%s0] sm:%s3]
    %5 = vst [vmem:[#allocation1] sm:%s3] %v4
    %v6 = vld [vmem:[#allocation1] sm:$0x1]
    %vm7 = vcmask 523264
    %8 = vst.msk [vmem:[#allocation0] sm:$0x1] %vm7, %v6
    %s9 = scalar_lea.vmem [#allocation1], 1
    %v10 = vld [vmem:[%s9] sm:$0x1]
    %11 = vrot.lane.b32.xlu0 %v10, 64
    %v12 = vpop.permute.xlu0 %11
    %vm13 = vcmask 1048064
    %14 = vst.msk [vmem:[#allocation0] sm:$0x1] %vm13, %v12
    %s16 = sshllo.u32 0, 1
    %v18 = vld [vmem:[#allocation0] sm:%s16]
    %s19 = sshllo.u32 0, 1
    %20 = vst [vmem:[%s1] sm:%s19] %v18

// kernel: cnn_encoder_forward.47
$region0: #{cnn_encoder_forward.47}
  #allocation0 [shape = 'u32[]', space=smem, size = 0x4, offset = 0x4, fixed_abs, tag = 'smem constant byte address 0x4 - core index']
  #allocation1 [shape = 'u32[144,128]{1,0:T(1,128)}', space=vmem, size = 0x12000, scoped, tag = 'internal scratch']
  %s0 = inlined_call_operand.vmem [shape: f32[8,128], index: 0, kind: input, shape index: {}]
  %s1 = inlined_call_operand.vmem [shape: f32[1,128], index: 1, kind: input, shape index: {}]
  %s2 = inlined_call_operand.vmem [shape: f32[1,128], index: 2, kind: input, shape index: {}]
  %s3 = inlined_call_operand.vmem [shape: f32[8,128], index: 3, kind: output, shape index: {}]
  %s4 = sld [smem:[#allocation0]]
  $region22: #{cnn_encoder_forward.47} parent=0
    _
  %s6 = ssub.s32 1, %s4
  %s7 = scalar_select 0, %s6, %s4
  // Predicated region
  $region2: #{cnn_encoder_forward.47} parent=0 // pred_check
    _
  $region3: #{cnn_encoder_forward.47} parent=0 // pred_check_branch
    %9 = sbr.rel (0) target = $region5
  $region4: #{cnn_encoder_forward.47} parent=0 // pred_region
    _
  $region5: #{cnn_encoder_forward.47} parent=0 // pred_fallthru
    _
  // Predicated region
  $region6: #{cnn_encoder_forward.47} parent=0 // pred_check
    _
  $region7: #{cnn_encoder_forward.47} parent=0 // pred_check_branch
    %11 = sbr.rel (0) target = $region9
  $region8: #{cnn_encoder_forward.47} parent=0 // pred_region
    _
  $region9: #{cnn_encoder_forward.47} parent=0 // pred_fallthru
    _
  // Predicated region
  $region10: #{cnn_encoder_forward.47} parent=0 // pred_check
    _
  $region11: #{cnn_encoder_forward.47} parent=0 // pred_check_branch
    %13 = sbr.rel (0) target = $region13
  $region12: #{cnn_encoder_forward.47} parent=0 // pred_region
    _
  $region13: #{cnn_encoder_forward.47} parent=0 // pred_fallthru
    _
  %v14 = vld [vmem:[%s0] sm:$0xff]
  %v15 = vld [vmem:[%s1] sm:$0x1]
  %v17 = vlaneseq
  %v18 = vshrl.u32 %v17, 7
  %v19 = vsub.s32 0, %v18
  %v20 = vrot.slane %v15, %v19
  %v22 = vmul.f32 %v14, %v20
  %v23 = vld [vmem:[%s2] sm:$0x1]
  %v25 = vlaneseq
  %v26 = vshrl.u32 %v25, 7
  %v27 = vsub.s32 0, %v26
  %v28 = vrot.slane %v23, %v27
  %v30 = vadd.f32 %v22, %v28
  %v31 = vmax.f32 %v30, 0.0
  %32 = vst [vmem:[%s3] sm:$0xff] %v31
  // Predicated region
  $region14: #{cnn_encoder_forward.47} parent=0 // pred_check
    _
  $region15: #{cnn_encoder_forward.47} parent=0 // pred_check_branch
    %34 = sbr.rel (0) target = $region17
  $region16: #{cnn_encoder_forward.47} parent=0 // pred_region
    _
  $region17: #{cnn_encoder_forward.47} parent=0 // pred_fallthru
    _
  // Predicated region
  $region18: #{cnn_encoder_forward.47} parent=0 // pred_check
    _
  $region19: #{cnn_encoder_forward.47} parent=0 // pred_check_branch
    %36 = sbr.rel (0) target = $region21
  $region20: #{cnn_encoder_forward.47} parent=0 // pred_region
    _
  $region21: #{cnn_encoder_forward.47} parent=0 // pred_fallthru
    _

// kernel: cnn_encoder_forward.46
$region0: #{cnn_encoder_forward.46}
  #allocation0 [shape = 'u32[]', space=smem, size = 0x4, offset = 0x4, fixed_abs, tag = 'smem constant byte address 0x4 - core index']
  #allocation1 [shape = 'u32[144,128]{1,0:T(1,128)}', space=vmem, size = 0x12000, scoped, tag = 'internal scratch']
  %s0 = inlined_call_operand.vmem [shape: bf16[8,864], index: 0, kind: input, shape index: {}]
  %s1 = inlined_call_operand.vmem [shape: bf16[864,64], index: 1, kind: input, shape index: {}]
  %s2 = inlined_call_operand.vmem [shape: f32[8,64], index: 2, kind: output, shape index: {0}]
  %s3 = inlined_call_operand.vmem [shape: f32[1,2,64], index: 3, kind: output, shape index: {1}]
  %4 = xla_tuple %s2, %s3
  %s5 = sld [smem:[#allocation0]]
  $region26: #{cnn_encoder_forward.46} parent=0
    _
  %s7 = ssub.s32 1, %s5
  %s8 = scalar_select 0, %s7, %s5
  // Predicated region
  $region2: #{cnn_encoder_forward.46} parent=0 // pred_check
    _
  $region3: #{cnn_encoder_forward.46} parent=0 // pred_check_branch
    %10 = sbr.rel (0) target = $region5
  $region4: #{cnn_encoder_forward.46} parent=0 // pred_region
    _
  $region5: #{cnn_encoder_forward.46} parent=0 // pred_fallthru
    _
  // Predicated region
  $region6: #{cnn_encoder_forward.46} parent=0 // pred_check
    _
  $region7: #{cnn_encoder_forward.46} parent=0 // pred_check_branch
    %12 = sbr.rel (0) target = $region9
  $region8: #{cnn_encoder_forward.46} parent=0 // pred_region
    _
  $region9: #{cnn_encoder_forward.46} parent=0 // pred_fallthru
    _
  %v14 = vld [vmem:[%s0] sm:$0xff]
  %v15 = vld [vmem:[%s0 + $0x8] sm:$0xff]
  %v16 = vld [vmem:[%s0 + $0x10] sm:$0xff]
  %v17 = vld [vmem:[%s0 + $0x18] sm:$0xf]
  %v18 = vld [vmem:[%s1] sm:$0xf]
  %v19 = vld [vmem:[%s1 + $0x4] sm:$0xf]
  %v20 = vld [vmem:[%s1 + $0x8] sm:$0xf]
  %v21 = vld [vmem:[%s1 + $0xc] sm:$0xf]
  %v22 = vld [vmem:[%s1 + $0x10] sm:$0xf]
  %v23 = vld [vmem:[%s1 + $0x14] sm:$0xf]
  %v24 = vld [vmem:[%s1 + $0x18] sm:$0xf]
  %v25 = vld [vmem:[%s1 + $0x1c] sm:$0xf]
  %v26 = vld [vmem:[%s1 + $0x20] sm:$0xf]
  %v27 = vld [vmem:[%s1 + $0x24] sm:$0xf]
  %v28 = vld [vmem:[%s1 + $0x28] sm:$0xf]
  %v29 = vld [vmem:[%s1 + $0x2c] sm:$0xf]
  %v30 = vld [vmem:[%s1 + $0x30] sm:$0xf]
  %v31 = vld [vmem:[%s1 + $0x34] sm:$0xf]
  %v32 = vld [vmem:[%s1 + $0x38] sm:$0xf]
  %v33 = vld [vmem:[%s1 + $0x3c] sm:$0xf]
  %v34 = vld [vmem:[%s1 + $0x40] sm:$0xf]
  %v35 = vld [vmem:[%s1 + $0x44] sm:$0xf]
  %v36 = vld [vmem:[%s1 + $0x48] sm:$0xf]
  %v37 = vld [vmem:[%s1 + $0x4c] sm:$0xf]
  %v38 = vld [vmem:[%s1 + $0x50] sm:$0xf]
  %v39 = vld [vmem:[%s1 + $0x54] sm:$0xf]
  %v40 = vld [vmem:[%s1 + $0x58] sm:$0xf]
  %v41 = vld [vmem:[%s1 + $0x5c] sm:$0xf]
  %v42 = vld [vmem:[%s1 + $0x60] sm:$0xf]
  %v43 = vld [vmem:[%s1 + $0x64] sm:$0xf]
  %v44 = vld [vmem:[%s1 + $0x68] sm:$0xf]
  %v45 = vld [vmem:[%s1 + $0x6c] sm:$0xf]
  %v46 = vld [vmem:[%s1 + $0x70] sm:$0xf]
  %v47 = vld [vmem:[%s1 + $0x74] sm:$0xf]
  %v48 = vld [vmem:[%s1 + $0x78] sm:$0xf]
  %v49 = vld [vmem:[%s1 + $0x7c] sm:$0xf]
  %v50 = vld [vmem:[%s1 + $0x80] sm:$0xf]
  %v51 = vld [vmem:[%s1 + $0x84] sm:$0xf]
  %v52 = vld [vmem:[%s1 + $0x88] sm:$0xf]
  %v53 = vld [vmem:[%s1 + $0x8c] sm:$0xf]
  %v54 = vld [vmem:[%s1 + $0x90] sm:$0xf]
  %v55 = vld [vmem:[%s1 + $0x94] sm:$0xf]
  %v56 = vld [vmem:[%s1 + $0x98] sm:$0xf]
  %v57 = vld [vmem:[%s1 + $0x9c] sm:$0xf]
  %v58 = vld [vmem:[%s1 + $0xa0] sm:$0xf]
  %v59 = vld [vmem:[%s1 + $0xa4] sm:$0xf]
  %v60 = vld [vmem:[%s1 + $0xa8] sm:$0xf]
  %v61 = vld [vmem:[%s1 + $0xac] sm:$0xf]
  %v62 = vld [vmem:[%s1 + $0xb0] sm:$0xf]
  %v63 = vld [vmem:[%s1 + $0xb4] sm:$0xf]
  %v64 = vld [vmem:[%s1 + $0xb8] sm:$0xf]
  %v65 = vld [vmem:[%s1 + $0xbc] sm:$0xf]
  %v66 = vld [vmem:[%s1 + $0xc0] sm:$0xf]
  %v67 = vld [vmem:[%s1 + $0xc4] sm:$0xf]
  %v68 = vld [vmem:[%s1 + $0xc8] sm:$0xf]
  %v69 = vld [vmem:[%s1 + $0xcc] sm:$0xf]
  %v70 = vld [vmem:[%s1 + $0xd0] sm:$0xf]
  %v71 = vld [vmem:[%s1 + $0xd4] sm:$0xf]
  %v72 = vld [vmem:[%s1 + $0xd8] sm:$0xf]
  %v73 = vld [vmem:[%s1 + $0xdc] sm:$0xf]
  %v74 = vld [vmem:[%s1 + $0xe0] sm:$0xf]
  %v75 = vld [vmem:[%s1 + $0xe4] sm:$0xf]
  %v76 = vld [vmem:[%s1 + $0xe8] sm:$0xf]
  %v77 = vld [vmem:[%s1 + $0xec] sm:$0xf]
  %v78 = vld [vmem:[%s1 + $0xf0] sm:$0xf]
  %v79 = vld [vmem:[%s1 + $0xf4] sm:$0xf]
  %v80 = vld [vmem:[%s1 + $0xf8] sm:$0xf]
  %v81 = vld [vmem:[%s1 + $0xfc] sm:$0xf]
  %v82 = vld [vmem:[%s1 + $0x100] sm:$0xf]
  %v83 = vld [vmem:[%s1 + $0x104] sm:$0xf]
  %v84 = vld [vmem:[%s1 + $0x108] sm:$0xf]
  %v85 = vld [vmem:[%s1 + $0x10c] sm:$0xf]
  %v86 = vld [vmem:[%s1 + $0x110] sm:$0xf]
  %v87 = vld [vmem:[%s1 + $0x114] sm:$0xf]
  %v88 = vld [vmem:[%s1 + $0x118] sm:$0xf]
  %v89 = vld [vmem:[%s1 + $0x11c] sm:$0xf]
  %v90 = vld [vmem:[%s1 + $0x120] sm:$0xf]
  %v91 = vld [vmem:[%s1 + $0x124] sm:$0xf]
  %v92 = vld [vmem:[%s1 + $0x128] sm:$0xf]
  %v93 = vld [vmem:[%s1 + $0x12c] sm:$0xf]
  %v94 = vld [vmem:[%s1 + $0x130] sm:$0xf]
  %v95 = vld [vmem:[%s1 + $0x134] sm:$0xf]
  %v96 = vld [vmem:[%s1 + $0x138] sm:$0xf]
  %v97 = vld [vmem:[%s1 + $0x13c] sm:$0xf]
  %v98 = vld [vmem:[%s1 + $0x140] sm:$0xf]
  %v99 = vld [vmem:[%s1 + $0x144] sm:$0xf]
  %v100 = vld [vmem:[%s1 + $0x148] sm:$0xf]
  %v101 = vld [vmem:[%s1 + $0x14c] sm:$0xf]
  %v102 = vld [vmem:[%s1 + $0x150] sm:$0xf]
  %v103 = vld [vmem:[%s1 + $0x154] sm:$0xf]
  %v104 = vld [vmem:[%s1 + $0x158] sm:$0xf]
  %v105 = vld [vmem:[%s1 + $0x15c] sm:$0xf]
  %v106 = vld [vmem:[%s1 + $0x160] sm:$0xf]
  %v107 = vld [vmem:[%s1 + $0x164] sm:$0xf]
  %v108 = vld [vmem:[%s1 + $0x168] sm:$0xf]
  %v109 = vld [vmem:[%s1 + $0x16c] sm:$0xf]
  %v110 = vld [vmem:[%s1 + $0x170] sm:$0xf]
  %v111 = vld [vmem:[%s1 + $0x174] sm:$0xf]
  %v112 = vld [vmem:[%s1 + $0x178] sm:$0xf]
  %v113 = vld [vmem:[%s1 + $0x17c] sm:$0xf]
  %v114 = vld [vmem:[%s1 + $0x180] sm:$0xf]
  %v115 = vld [vmem:[%s1 + $0x184] sm:$0xf]
  %v116 = vld [vmem:[%s1 + $0x188] sm:$0xf]
  %v117 = vld [vmem:[%s1 + $0x18c] sm:$0xf]
  %v118 = vld [vmem:[%s1 + $0x190] sm:$0xf]
  %v119 = vld [vmem:[%s1 + $0x194] sm:$0xf]
  %v120 = vld [vmem:[%s1 + $0x198] sm:$0xf]
  %v121 = vld [vmem:[%s1 + $0x19c] sm:$0xf]
  %v122 = vld [vmem:[%s1 + $0x1a0] sm:$0xf]
  %v123 = vld [vmem:[%s1 + $0x1a4] sm:$0xf]
  %v124 = vld [vmem:[%s1 + $0x1a8] sm:$0xf]
  %v125 = vld [vmem:[%s1 + $0x1ac] sm:$0xf]
  %v130 = vunpack.c.l.b16 %v14
  %v131 = vunpack.c.h.b16 %v14
  %v132 = vunpack.c.l.b16 %v15
  %v133 = vunpack.c.h.b16 %v15
  %v134 = vunpack.c.l.b16 %v16
  %v135 = vunpack.c.h.b16 %v16
  %v136 = vunpack.c.l.b16 %v17
  %v137 = vpack.c.b16 %v130, %v130
  %v138 = vpack.c.b16 %v131, %v131
  %v139 = vpack.c.b16 %v132, %v132
  %v140 = vpack.c.b16 %v133, %v133
  %v141 = vpack.c.b16 %v134, %v134
  %v142 = vpack.c.b16 %v135, %v135
  %v143 = vpack.c.b16 %v136, %v136
  %v258 = vunpack.c.l.b16 %v18
  %v259 = vunpack.c.l.b16 %v19
  %v260 = vunpack.c.l.b16 %v20
  %v261 = vunpack.c.l.b16 %v21
  %v262 = vunpack.c.l.b16 %v22
  %v263 = vunpack.c.l.b16 %v23
  %v264 = vunpack.c.l.b16 %v24
  %v265 = vunpack.c.l.b16 %v25
  %v266 = vunpack.c.l.b16 %v26
  %v267 = vunpack.c.l.b16 %v27
  %v268 = vunpack.c.l.b16 %v28
  %v269 = vunpack.c.l.b16 %v29
  %v270 = vunpack.c.l.b16 %v30
  %v271 = vunpack.c.l.b16 %v31
  %v272 = vunpack.c.l.b16 %v32
  %v273 = vunpack.c.l.b16 %v33
  %v274 = vunpack.c.l.b16 %v34
  %v275 = vunpack.c.l.b16 %v35
  %v276 = vunpack.c.l.b16 %v36
  %v277 = vunpack.c.l.b16 %v37
  %v278 = vunpack.c.l.b16 %v38
  %v279 = vunpack.c.l.b16 %v39
  %v280 = vunpack.c.l.b16 %v40
  %v281 = vunpack.c.l.b16 %v41
  %v282 = vunpack.c.l.b16 %v42
  %v283 = vunpack.c.l.b16 %v43
  %v284 = vunpack.c.l.b16 %v44
  %v285 = vunpack.c.l.b16 %v45
  %v286 = vunpack.c.l.b16 %v46
  %v287 = vunpack.c.l.b16 %v47
  %v288 = vunpack.c.l.b16 %v48
  %v289 = vunpack.c.l.b16 %v49
  %v290 = vunpack.c.l.b16 %v50
  %v291 = vunpack.c.l.b16 %v51
  %v292 = vunpack.c.l.b16 %v52
  %v293 = vunpack.c.l.b16 %v53
  %v294 = vunpack.c.l.b16 %v54
  %v295 = vunpack.c.l.b16 %v55
  %v296 = vunpack.c.l.b16 %v56
  %v297 = vunpack.c.l.b16 %v57
  %v298 = vunpack.c.l.b16 %v58
  %v299 = vunpack.c.l.b16 %v59
  %v300 = vunpack.c.l.b16 %v60
  %v301 = vunpack.c.l.b16 %v61
  %v302 = vunpack.c.l.b16 %v62
  %v303 = vunpack.c.l.b16 %v63
  %v304 = vunpack.c.l.b16 %v64
  %v305 = vunpack.c.l.b16 %v65
  %v306 = vunpack.c.l.b16 %v66
  %v307 = vunpack.c.l.b16 %v67
  %v308 = vunpack.c.l.b16 %v68
  %v309 = vunpack.c.l.b16 %v69
  %v310 = vunpack.c.l.b16 %v70
  %v311 = vunpack.c.l.b16 %v71
  %v312 = vunpack.c.l.b16 %v72
  %v313 = vunpack.c.l.b16 %v73
  %v314 = vunpack.c.l.b16 %v74
  %v315 = vunpack.c.l.b16 %v75
  %v316 = vunpack.c.l.b16 %v76
  %v317 = vunpack.c.l.b16 %v77
  %v318 = vunpack.c.l.b16 %v78
  %v319 = vunpack.c.l.b16 %v79
  %v320 = vunpack.c.l.b16 %v80
  %v321 = vunpack.c.l.b16 %v81
  %v322 = vunpack.c.l.b16 %v82
  %v323 = vunpack.c.l.b16 %v83
  %v324 = vunpack.c.l.b16 %v84
  %v325 = vunpack.c.l.b16 %v85
  %v326 = vunpack.c.l.b16 %v86
  %v327 = vunpack.c.l.b16 %v87
  %v328 = vunpack.c.l.b16 %v88
  %v329 = vunpack.c.l.b16 %v89
  %v330 = vunpack.c.l.b16 %v90
  %v331 = vunpack.c.l.b16 %v91
  %v332 = vunpack.c.l.b16 %v92
  %v333 = vunpack.c.l.b16 %v93
  %v334 = vunpack.c.l.b16 %v94
  %v335 = vunpack.c.l.b16 %v95
  %v336 = vunpack.c.l.b16 %v96
  %v337 = vunpack.c.l.b16 %v97
  %v338 = vunpack.c.l.b16 %v98
  %v339 = vunpack.c.l.b16 %v99
  %v340 = vunpack.c.l.b16 %v100
  %v341 = vunpack.c.l.b16 %v101
  %v342 = vunpack.c.l.b16 %v102
  %v343 = vunpack.c.l.b16 %v103
  %v344 = vunpack.c.l.b16 %v104
  %v345 = vunpack.c.l.b16 %v105
  %v346 = vunpack.c.l.b16 %v106
  %v347 = vunpack.c.l.b16 %v107
  %v348 = vunpack.c.l.b16 %v108
  %v349 = vunpack.c.l.b16 %v109
  %v350 = vunpack.c.l.b16 %v110
  %v351 = vunpack.c.l.b16 %v111
  %v352 = vunpack.c.l.b16 %v112
  %v353 = vunpack.c.l.b16 %v113
  %v354 = vunpack.c.l.b16 %v114
  %v355 = vunpack.c.l.b16 %v115
  %v356 = vunpack.c.l.b16 %v116
  %v357 = vunpack.c.l.b16 %v117
  %v358 = vunpack.c.l.b16 %v118
  %v359 = vunpack.c.l.b16 %v119
  %v360 = vunpack.c.l.b16 %v120
  %v361 = vunpack.c.l.b16 %v121
  %v362 = vunpack.c.l.b16 %v122
  %v363 = vunpack.c.l.b16 %v123
  %v364 = vunpack.c.l.b16 %v124
  %v365 = vunpack.c.l.b16 %v125
  %v366 = vpack.c.b16 %v259, %v258
  %v367 = vpack.c.b16 %v261, %v260
  %v368 = vpack.c.b16 %v263, %v262
  %v369 = vpack.c.b16 %v265, %v264
  %v370 = vpack.c.b16 %v267, %v266
  %v371 = vpack.c.b16 %v269, %v268
  %v372 = vpack.c.b16 %v271, %v270
  %v373 = vpack.c.b16 %v273, %v272
  %v374 = vpack.c.b16 %v275, %v274
  %v375 = vpack.c.b16 %v277, %v276
  %v376 = vpack.c.b16 %v279, %v278
  %v377 = vpack.c.b16 %v281, %v280
  %v378 = vpack.c.b16 %v283, %v282
  %v379 = vpack.c.b16 %v285, %v284
  %v380 = vpack.c.b16 %v287, %v286
  %v381 = vpack.c.b16 %v289, %v288
  %v382 = vpack.c.b16 %v291, %v290
  %v383 = vpack.c.b16 %v293, %v292
  %v384 = vpack.c.b16 %v295, %v294
  %v385 = vpack.c.b16 %v297, %v296
  %v386 = vpack.c.b16 %v299, %v298
  %v387 = vpack.c.b16 %v301, %v300
  %v388 = vpack.c.b16 %v303, %v302
  %v389 = vpack.c.b16 %v305, %v304
  %v390 = vpack.c.b16 %v307, %v306
  %v391 = vpack.c.b16 %v309, %v308
  %v392 = vpack.c.b16 %v311, %v310
  %v393 = vpack.c.b16 %v313, %v312
  %v394 = vpack.c.b16 %v315, %v314
  %v395 = vpack.c.b16 %v317, %v316
  %v396 = vpack.c.b16 %v319, %v318
  %v397 = vpack.c.b16 %v321, %v320
  %v398 = vpack.c.b16 %v323, %v322
  %v399 = vpack.c.b16 %v325, %v324
  %v400 = vpack.c.b16 %v327, %v326
  %v401 = vpack.c.b16 %v329, %v328
  %v402 = vpack.c.b16 %v331, %v330
  %v403 = vpack.c.b16 %v333, %v332
  %v404 = vpack.c.b16 %v335, %v334
  %v405 = vpack.c.b16 %v337, %v336
  %v406 = vpack.c.b16 %v339, %v338
  %v407 = vpack.c.b16 %v341, %v340
  %v408 = vpack.c.b16 %v343, %v342
  %v409 = vpack.c.b16 %v345, %v344
  %v410 = vpack.c.b16 %v347, %v346
  %v411 = vpack.c.b16 %v349, %v348
  %v412 = vpack.c.b16 %v351, %v350
  %v413 = vpack.c.b16 %v353, %v352
  %v414 = vpack.c.b16 %v355, %v354
  %v415 = vpack.c.b16 %v357, %v356
  %v416 = vpack.c.b16 %v359, %v358
  %v417 = vpack.c.b16 %v361, %v360
  %v418 = vpack.c.b16 %v363, %v362
  %v419 = vpack.c.b16 %v365, %v364
  %vm474 = vcmask 785408
  %v476 = vsel %vm474, %v143, 0
  %478 = vmatprep.subr.bf16.mxu0 0
  %479 = vmatpush1.bf16.msra.mxu0 %v366
  %480 = vmatprep.subr.bf16.mxu0 0
  %481 = vmatpush1.bf16.msra.mxu0 %v367
  %482 = vmatprep.subr.bf16.mxu0 0
  %483 = vmatpush1.bf16.msra.mxu0 %v368
  %484 = vmatprep.subr.bf16.mxu0 0
  %485 = vmatpush1.bf16.msra.mxu0 %v369
  %486 = vmatprep.subr.bf16.mxu0 0
  %487 = vmatpush1.bf16.msra.mxu0 %v370
  %488 = vmatprep.subr.bf16.mxu0 0
  %489 = vmatpush1.bf16.msra.mxu0 %v371
  %490 = vmatprep.subr.bf16.mxu0 0
  %491 = vmatpush1.bf16.msra.mxu0 %v372
  %492 = vmatprep.subr.bf16.mxu0 0
  %493 = vmatpush1.bf16.msra.mxu0 %v373
  %494 = vmatprep.subr.bf16.mxu0 0
  %495 = vmatpush1.bf16.msra.mxu0 %v374
  %496 = vmatprep.subr.bf16.mxu0 0
  %497 = vmatpush1.bf16.msra.mxu0 %v375
  %498 = vmatprep.subr.bf16.mxu0 0
  %499 = vmatpush1.bf16.msra.mxu0 %v376
  %500 = vmatprep.subr.bf16.mxu0 0
  %501 = vmatpush1.bf16.msra.mxu0 %v377
  %502 = vmatprep.subr.bf16.mxu0 0
  %503 = vmatpush1.bf16.msra.mxu0 %v378
  %504 = vmatprep.subr.bf16.mxu0 0
  %505 = vmatpush1.bf16.msra.mxu0 %v379
  %506 = vmatprep.subr.bf16.mxu0 0
  %507 = vmatpush1.bf16.msra.mxu0 %v380
  %508 = vmatprep.subr.bf16.mxu0 0
  %509 = vmatpush1.bf16.msra.mxu0 %v381
  %510 = vmatprep.mubr.bf16.mxu0 %v138
  %511 = vmatmul.mubr.bf16.gmra.mrb[0].mxu0 %v137
  %v512 = vpop.f32.mrb[0].mxu0
  %v513 = vadd.f32 0.0, %v512
  %v514 = vpop.f32.mrb[0].mxu0
  %v515 = vpop.f32.mrb[0].mxu0
  %v516 = vpop.f32.mrb[0].mxu0
  %517 = vdwg.mxu0
  %518 = vmatprep.subr.bf16.mxu0 0
  %519 = vmatpush1.bf16.msra.mxu0 %v382
  %520 = vmatprep.subr.bf16.mxu0 0
  %521 = vmatpush1.bf16.msra.mxu0 %v383
  %522 = vmatprep.subr.bf16.mxu0 0
  %523 = vmatpush1.bf16.msra.mxu0 %v384
  %524 = vmatprep.subr.bf16.mxu0 0
  %525 = vmatpush1.bf16.msra.mxu0 %v385
  %526 = vmatprep.subr.bf16.mxu0 0
  %527 = vmatpush1.bf16.msra.mxu0 %v386
  %528 = vmatprep.subr.bf16.mxu0 0
  %529 = vmatpush1.bf16.msra.mxu0 %v387
  %530 = vmatprep.subr.bf16.mxu0 0
  %531 = vmatpush1.bf16.msra.mxu0 %v388
  %532 = vmatprep.subr.bf16.mxu0 0
  %533 = vmatpush1.bf16.msra.mxu0 %v389
  %534 = vmatprep.subr.bf16.mxu0 0
  %535 = vmatpush1.bf16.msra.mxu0 %v390
  %536 = vmatprep.subr.bf16.mxu0 0
  %537 = vmatpush1.bf16.msra.mxu0 %v391
  %538 = vmatprep.subr.bf16.mxu0 0
  %539 = vmatpush1.bf16.msra.mxu0 %v392
  %540 = vmatprep.subr.bf16.mxu0 0
  %541 = vmatpush1.bf16.msra.mxu0 %v393
  %542 = vmatprep.subr.bf16.mxu0 0
  %543 = vmatpush1.bf16.msra.mxu0 %v394
  %544 = vmatprep.subr.bf16.mxu0 0
  %545 = vmatpush1.bf16.msra.mxu0 %v395
  %546 = vmatprep.subr.bf16.mxu0 0
  %547 = vmatpush1.bf16.msra.mxu0 %v396
  %548 = vmatprep.subr.bf16.mxu0 0
  %549 = vmatpush1.bf16.msra.mxu0 %v397
  %550 = vmatprep.mubr.bf16.mxu0 %v140
  %551 = vmatmul.mubr.bf16.gmra.mrb[0].mxu0 %v139
  %v552 = vpop.f32.mrb[0].mxu0
  %v553 = vadd.f32 %v513, %v552
  %v554 = vpop.f32.mrb[0].mxu0
  %v555 = vpop.f32.mrb[0].mxu0
  %v556 = vpop.f32.mrb[0].mxu0
  %557 = vdwg.mxu0
  %558 = vmatprep.subr.bf16.mxu0 0
  %559 = vmatpush1.bf16.msra.mxu0 %v398
  %560 = vmatprep.subr.bf16.mxu0 0
  %561 = vmatpush1.bf16.msra.mxu0 %v399
  %562 = vmatprep.subr.bf16.mxu0 0
  %563 = vmatpush1.bf16.msra.mxu0 %v400
  %564 = vmatprep.subr.bf16.mxu0 0
  %565 = vmatpush1.bf16.msra.mxu0 %v401
  %566 = vmatprep.subr.bf16.mxu0 0
  %567 = vmatpush1.bf16.msra.mxu0 %v402
  %568 = vmatprep.subr.bf16.mxu0 0
  %569 = vmatpush1.bf16.msra.mxu0 %v403
  %570 = vmatprep.subr.bf16.mxu0 0
  %571 = vmatpush1.bf16.msra.mxu0 %v404
  %572 = vmatprep.subr.bf16.mxu0 0
  %573 = vmatpush1.bf16.msra.mxu0 %v405
  %574 = vmatprep.subr.bf16.mxu0 0
  %575 = vmatpush1.bf16.msra.mxu0 %v406
  %576 = vmatprep.subr.bf16.mxu0 0
  %577 = vmatpush1.bf16.msra.mxu0 %v407
  %578 = vmatprep.subr.bf16.mxu0 0
  %579 = vmatpush1.bf16.msra.mxu0 %v408
  %580 = vmatprep.subr.bf16.mxu0 0
  %581 = vmatpush1.bf16.msra.mxu0 %v409
  %582 = vmatprep.subr.bf16.mxu0 0
  %583 = vmatpush1.bf16.msra.mxu0 %v410
  %584 = vmatprep.subr.bf16.mxu0 0
  %585 = vmatpush1.bf16.msra.mxu0 %v411
  %586 = vmatprep.subr.bf16.mxu0 0
  %587 = vmatpush1.bf16.msra.mxu0 %v412
  %588 = vmatprep.subr.bf16.mxu0 0
  %589 = vmatpush1.bf16.msra.mxu0 %v413
  %590 = vmatprep.mubr.bf16.mxu0 %v142
  %591 = vmatmul.mubr.bf16.gmra.mrb[0].mxu0 %v141
  %v592 = vpop.f32.mrb[0].mxu0
  %v593 = vadd.f32 %v553, %v592
  %v594 = vpop.f32.mrb[0].mxu0
  %v595 = vpop.f32.mrb[0].mxu0
  %v596 = vpop.f32.mrb[0].mxu0
  %597 = vdwg.mxu0
  %598 = vmatprep.subr.bf16.mxu0 0
  %599 = vmatpush1.bf16.msra.mxu0 %v414
  %600 = vmatprep.subr.bf16.mxu0 0
  %601 = vmatpush1.bf16.msra.mxu0 %v415
  %602 = vmatprep.subr.bf16.mxu0 0
  %603 = vmatpush1.bf16.msra.mxu0 %v416
  %604 = vmatprep.subr.bf16.mxu0 0
  %605 = vmatpush1.bf16.msra.mxu0 %v417
  %606 = vmatprep.subr.bf16.mxu0 0
  %607 = vmatpush1.bf16.msra.mxu0 %v418
  %608 = vmatprep.subr.bf16.mxu0 0
  %609 = vmatpush1.bf16.msra.mxu0 %v419
  %610 = vmatprep.subr.bf16.mxu0 0
  %611 = vmatpush1.bf16.msra.mxu0 0
  %612 = vmatprep.subr.bf16.mxu0 0
  %613 = vmatpush1.bf16.msra.mxu0 0
  %614 = vmatprep.subr.bf16.mxu0 0
  %615 = vmatpush1.bf16.msra.mxu0 0
  %616 = vmatprep.subr.bf16.mxu0 0
  %617 = vmatpush1.bf16.msra.mxu0 0
  %618 = vmatprep.subr.bf16.mxu0 0
  %619 = vmatpush1.bf16.msra.mxu0 0
  %620 = vmatprep.subr.bf16.mxu0 0
  %621 = vmatpush1.bf16.msra.mxu0 0
  %622 = vmatprep.subr.bf16.mxu0 0
  %623 = vmatpush1.bf16.msra.mxu0 0
  %624 = vmatprep.subr.bf16.mxu0 0
  %625 = vmatpush1.bf16.msra.mxu0 0
  %626 = vmatprep.subr.bf16.mxu0 0
  %627 = vmatpush1.bf16.msra.mxu0 0
  %628 = vmatprep.subr.bf16.mxu0 0
  %629 = vmatpush1.bf16.msra.mxu0 0
  %630 = vmatprep.mubr.bf16.mxu0 0
  %631 = vmatmul.mubr.bf16.gmra.mrb[0].mxu0 %v476
  %v632 = vpop.f32.mrb[0].mxu0
  %v633 = vadd.f32 %v593, %v632
  %v634 = vpop.f32.mrb[0].mxu0
  %v635 = vpop.f32.mrb[0].mxu0
  %v636 = vpop.f32.mrb[0].mxu0
  %637 = vdwg.mxu0
  %vm638 = vcmask 523264
  %639 = vst.msk [vmem:[%s2] sm:$0xff] %vm638, %v633
  %v640 = vsel %vm638, %v633, 0.0
  %v641 = vrot.slane %v640, 4
  %v642 = vadd.f32 %v640, %v641
  %v643 = vrot.slane %v642, 2
  %v644 = vadd.f32 %v642, %v643
  %v645 = vrot.slane %v644, 1
  %v646 = vadd.f32 %v644, %v645
  %v647 = vmul.f32 %v633, %v633
  %v648 = vsel %vm638, %v647, 0.0
  %v649 = vrot.slane %v648, 4
  %v650 = vadd.f32 %v648, %v649
  %v651 = vrot.slane %v650, 2
  %v652 = vadd.f32 %v650, %v651
  %v653 = vrot.slane %v652, 1
  %v654 = vadd.f32 %v652, %v653
  %vm655 = vcmask 1040384
  %v656 = vsel %vm655, %v646, %v654
  %vm657 = vcmask 517120
  %658 = vst.msk [vmem:[%s3] sm:$0x3] %vm657, %v656
  // Predicated region
  $region10: #{cnn_encoder_forward.46} parent=0 // pred_check
    _
  $region11: #{cnn_encoder_forward.46} parent=0 // pred_check_branch
    %660 = sbr.rel (0) target = $region13
  $region12: #{cnn_encoder_forward.46} parent=0 // pred_region
    _
  $region13: #{cnn_encoder_forward.46} parent=0 // pred_fallthru
    _
  // Predicated region
  $region14: #{cnn_encoder_forward.46} parent=0 // pred_check
    _
  $region15: #{cnn_encoder_forward.46} parent=0 // pred_check_branch
    %662 = sbr.rel (0) target = $region17
  $region16: #{cnn_encoder_forward.46} parent=0 // pred_region
    _
  $region17: #{cnn_encoder_forward.46} parent=0 // pred_fallthru
    _
  // Predicated region
  $region18: #{cnn_encoder_forward.46} parent=0 // pred_check
    _
  $region19: #{cnn_encoder_forward.46} parent=0 // pred_check_branch
    %664 = sbr.rel (0) target = $region21
  $region20: #{cnn_encoder_forward.46} parent=0 // pred_region
    _
  $region21: #{cnn_encoder_forward.46} parent=0 // pred_fallthru
    _
  // Predicated region
  $region22: #{cnn_encoder_forward.46} parent=0 // pred_check
    _
  $region23: #{cnn_encoder_forward.46} parent=0 // pred_check_branch
    %666 = sbr.rel (0) target = $region25
  $region24: #{cnn_encoder_forward.46} parent=0 // pred_region
    _
  $region25: #{cnn_encoder_forward.46} parent=0 // pred_fallthru
    _

</llo_original>
